<compile_context>
chip_gen: v7x
topology: tpu7x:2x2x1
jax: 0.10.0
libtpu: 0.0.40
codegen_flags: <defaults>
</compile_context>

<pallas_src>
import functools
import jax
import jax.numpy as jnp
from jax import lax
from jax.experimental import pallas as pl
from jax.experimental.pallas import tpu as pltpu


# ----------------------------------------------------------------------------
# helpers
# ----------------------------------------------------------------------------

def _round_up(x, m):
    return ((x + m - 1) // m) * m


def _pad_to(x, shape, dtype):
    """Cast to dtype and zero-pad up to `shape` (trailing pad only)."""
    x = x.astype(dtype)
    if tuple(x.shape) == tuple(shape):
        return x
    pads = [(0, s - d) for d, s in zip(x.shape, shape)]
    return jnp.pad(x, pads)


_VMEM_LIMIT = 32 * 1024 * 1024  # safe on v5e/v6e/v7x (64 MiB physical on v7x)


# ----------------------------------------------------------------------------
# Tiled matmul + bias + activation  (the workhorse: all convs via im2col, all
# linear layers).  bf16 operands, fp32 accumulation, 128-aligned lane dims.
# ----------------------------------------------------------------------------

def _matmul_kernel(a_ref, b_ref, bias_ref, o_ref, acc_ref, *, act):
    @pl.when(pl.program_id(2) == 0)
    def _init():
        acc_ref[...] = jnp.zeros_like(acc_ref)

    acc_ref[...] += jnp.dot(a_ref[...], b_ref[...],
                            preferred_element_type=jnp.float32)

    @pl.when(pl.program_id(2) == pl.num_programs(2) - 1)
    def _finalize():
        y = acc_ref[...] + bias_ref[...]
        if act == "relu":
            y = jnp.maximum(y, 0.0)
        elif act == "leaky_relu":
            y = jnp.where(y >= 0.0, y, 0.01 * y)
        o_ref[...] = y.astype(o_ref.dtype)


def linear_pallas(a, b, bias=None, act="none", tm=256, tn=256, tk=512):
    """y = act(a @ b + bias); a: (M,K), b: (K,N), bias: (N,) or None."""
    M, K = a.shape
    K2, N = b.shape
    assert K == K2
    tm = min(tm, _round_up(M, 8))
    tn = min(tn, _round_up(N, 128))
    tk = min(tk, _round_up(K, 128))
    Mp, Kp, Np = _round_up(M, tm), _round_up(K, tk), _round_up(N, tn)

    a_p = _pad_to(a, (Mp, Kp), jnp.bfloat16)
    b_p = _pad_to(b, (Kp, Np), jnp.bfloat16)
    if bias is None:
        bias_p = jnp.zeros((1, Np), jnp.float32)
    else:
        bias_p = _pad_to(bias.reshape(1, N), (1, Np), jnp.float32)

    out = pl.pallas_call(
        functools.partial(_matmul_kernel, act=act),
        out_shape=jax.ShapeDtypeStruct((Mp, Np), jnp.float32),
        grid=(Mp // tm, Np // tn, Kp // tk),
        in_specs=[pl.BlockSpec((tm, tk), lambda i, j, k: (i, k)),
                  pl.BlockSpec((tk, tn), lambda i, j, k: (k, j)),
                  pl.BlockSpec((1, tn), lambda i, j, k: (0, j))],
        out_specs=pl.BlockSpec((tm, tn), lambda i, j, k: (i, j)),
        scratch_shapes=[pltpu.VMEM((tm, tn), jnp.float32)],
        compiler_params=pltpu.CompilerParams(
            dimension_semantics=("parallel", "parallel", "arbitrary"),
            vmem_limit_bytes=_VMEM_LIMIT),
    )(a_p, b_p, bias_p)
    return out[:M, :N]


# ----------------------------------------------------------------------------
# Fused multi-head attention (per batch, all heads in-kernel)
# ----------------------------------------------------------------------------

def _mha_kernel(q_ref, k_ref, v_ref, o_ref, *, scale):
    q = q_ref[0]                                              # (H, S, hd) bf16
    k = k_ref[0]
    v = v_ref[0]
    s = jnp.einsum("hqd,hkd->hqk", q, k,
                   preferred_element_type=jnp.float32) * scale
    m = jnp.max(s, axis=-1, keepdims=True)
    p = jnp.exp(s - m)
    p = p / jnp.sum(p, axis=-1, keepdims=True)
    o_ref[0] = jnp.einsum("hqk,hkd->hqd", p.astype(jnp.bfloat16), v,
                          preferred_element_type=jnp.float32)


def mha_pallas(q, k, v):
    """q,k,v: (N, H, S, hd) -> softmax(q k^T / sqrt(hd)) v : (N, H, S, hd)."""
    # TODO(synk): for long sequences tile KV with an online-softmax (flash) loop;
    # at SQLdepth's S = (H/patch)*(W/patch) the full-KV fused kernel fits VMEM.
    N, H, S, hd = q.shape
    scale = 1.0 / float(hd) ** 0.5
    spec = pl.BlockSpec((1, H, S, hd), lambda i: (i, 0, 0, 0))
    return pl.pallas_call(
        functools.partial(_mha_kernel, scale=scale),
        out_shape=jax.ShapeDtypeStruct((N, H, S, hd), jnp.float32),
        grid=(N,),
        in_specs=[spec, spec, spec],
        out_specs=spec,
        compiler_params=pltpu.CompilerParams(
            dimension_semantics=("parallel",), vmem_limit_bytes=_VMEM_LIMIT),
    )(q.astype(jnp.bfloat16), k.astype(jnp.bfloat16), v.astype(jnp.bfloat16))


# ----------------------------------------------------------------------------
# Fused residual-add + LayerNorm, row-tiled
# ----------------------------------------------------------------------------

def _add_ln_kernel(x_ref, y_ref, g_ref, b_ref, o_ref):
    s = x_ref[...] + y_ref[...]
    mu = jnp.mean(s, axis=-1, keepdims=True)
    var = jnp.mean(jnp.square(s - mu), axis=-1, keepdims=True)
    o_ref[...] = (s - mu) * lax.rsqrt(var + 1e-5) * g_ref[...] + b_ref[...]


def add_layernorm_pallas(x, y, gamma, beta, tr=512):
    R, C = x.shape
    tr = min(tr, _round_up(R, 8))
    Rp = _round_up(R, tr)
    xp = _pad_to(x, (Rp, C), jnp.float32)
    yp = _pad_to(y, (Rp, C), jnp.float32)
    g = gamma.reshape(1, C).astype(jnp.float32)
    b = beta.reshape(1, C).astype(jnp.float32)
    out = pl.pallas_call(
        _add_ln_kernel,
        out_shape=jax.ShapeDtypeStruct((Rp, C), jnp.float32),
        grid=(Rp // tr,),
        in_specs=[pl.BlockSpec((tr, C), lambda i: (i, 0)),
                  pl.BlockSpec((tr, C), lambda i: (i, 0)),
                  pl.BlockSpec((1, C), lambda i: (0, 0)),
                  pl.BlockSpec((1, C), lambda i: (0, 0))],
        out_specs=pl.BlockSpec((tr, C), lambda i: (i, 0)),
        compiler_params=pltpu.CompilerParams(
            dimension_semantics=("parallel",), vmem_limit_bytes=_VMEM_LIMIT),
    )(xp, yp, g, b)
    return out[:R]


# ----------------------------------------------------------------------------
# Row-wise softmax over the last axis, row-tiled
# ----------------------------------------------------------------------------

def _softmax_rows_kernel(x_ref, o_ref):
    x = x_ref[...]
    m = jnp.max(x, axis=-1, keepdims=True)
    e = jnp.exp(x - m)
    o_ref[...] = e / jnp.sum(e, axis=-1, keepdims=True)


def softmax_rows_pallas(x2d, tr=512):
    R, C = x2d.shape
    tr = min(tr, _round_up(R, 8))
    Rp = _round_up(R, tr)
    xp = _pad_to(x2d, (Rp, C), jnp.float32)
    out = pl.pallas_call(
        _softmax_rows_kernel,
        out_shape=jax.ShapeDtypeStruct((Rp, C), jnp.float32),
        grid=(Rp // tr,),
        in_specs=[pl.BlockSpec((tr, C), lambda i: (i, 0))],
        out_specs=pl.BlockSpec((tr, C), lambda i: (i, 0)),
        compiler_params=pltpu.CompilerParams(
            dimension_semantics=("parallel",), vmem_limit_bytes=_VMEM_LIMIT),
    )(xp)
    return out[:R]


# ----------------------------------------------------------------------------
# Batched matmuls for the FullQueryLayer
# ----------------------------------------------------------------------------

def _bmm_nt_kernel(a_ref, b_ref, o_ref):
    # (M,K) @ (tn,K)^T -> (M,tn)
    o_ref[0] = lax.dot_general(a_ref[0], b_ref[0], (((1,), (1,)), ((), ())),
                               preferred_element_type=jnp.float32)


def bmm_nt_pallas(a, b, tn=512):
    """a:(B,M,K), b:(B,Nb,K) -> a @ b^T : (B,M,Nb). Output lane dim = Nb."""
    B, M, K = a.shape
    B2, Nb, K2 = b.shape
    assert B == B2 and K == K2
    tn = min(tn, _round_up(Nb, 128))
    Nbp = _round_up(Nb, tn)
    a_b = a.astype(jnp.bfloat16)
    b_p = _pad_to(b, (B, Nbp, K), jnp.bfloat16)
    out = pl.pallas_call(
        _bmm_nt_kernel,
        out_shape=jax.ShapeDtypeStruct((B, M, Nbp), jnp.float32),
        grid=(B, Nbp // tn),
        in_specs=[pl.BlockSpec((1, M, K), lambda i, j: (i, 0, 0)),
                  pl.BlockSpec((1, tn, K), lambda i, j: (i, j, 0))],
        out_specs=pl.BlockSpec((1, M, tn), lambda i, j: (i, 0, j)),
        compiler_params=pltpu.CompilerParams(
            dimension_semantics=("parallel", "parallel"),
            vmem_limit_bytes=_VMEM_LIMIT),
    )(a_b, b_p)
    return out[:, :, :Nb]


def _bmm_kacc_kernel(a_ref, b_ref, o_ref, acc_ref):
    @pl.when(pl.program_id(1) == 0)
    def _init():
        acc_ref[...] = jnp.zeros_like(acc_ref)

    acc_ref[...] += jnp.dot(a_ref[0], b_ref[0],
                            preferred_element_type=jnp.float32)

    @pl.when(pl.program_id(1) == pl.num_programs(1) - 1)
    def _finalize():
        o_ref[0] = acc_ref[...]


def bmm_kacc_pallas(a, b, tk=512):
    """a:(B,M,K) @ b:(B,K,Nc) -> (B,M,Nc), K tiled with fp32 accumulation."""
    B, M, K = a.shape
    B2, K2, Nc = b.shape
    assert B == B2 and K == K2
    tk = min(tk, _round_up(K, 128))
    Kp = _round_up(K, tk)
    a_p = _pad_to(a, (B, M, Kp), jnp.bfloat16)
    b_p = _pad_to(b, (B, Kp, Nc), jnp.bfloat16)
    return pl.pallas_call(
        _bmm_kacc_kernel,
        out_shape=jax.ShapeDtypeStruct((B, M, Nc), jnp.float32),
        grid=(B, Kp // tk),
        in_specs=[pl.BlockSpec((1, M, tk), lambda i, k: (i, 0, k)),
                  pl.BlockSpec((1, tk, Nc), lambda i, k: (i, k, 0))],
        out_specs=pl.BlockSpec((1, M, Nc), lambda i, k: (i, 0, 0)),
        scratch_shapes=[pltpu.VMEM((M, Nc), jnp.float32)],
        compiler_params=pltpu.CompilerParams(
            dimension_semantics=("parallel", "arbitrary"),
            vmem_limit_bytes=_VMEM_LIMIT),
    )(a_p, b_p)


# ----------------------------------------------------------------------------
# Fused convert_to_prob (1x1 conv over queries) + channel softmax + bin-center
# expectation.  HW on lanes -> lane-dense output, no probs tensor materialized.
# ----------------------------------------------------------------------------

def _prob_expect_kernel(e_ref, w_ref, b_ref, c_ref, o_ref):
    e = e_ref[0]                                               # (Q, t_hw) bf16
    logits = jnp.dot(w_ref[...], e,
                     preferred_element_type=jnp.float32) + b_ref[...]  # (dout, t_hw)
    m = jnp.max(logits, axis=0, keepdims=True)
    p = jnp.exp(logits - m)
    p = p / jnp.sum(p, axis=0, keepdims=True)
    o_ref[0] = jnp.dot(c_ref[0], p, preferred_element_type=jnp.float32)  # (1, t_hw)


def prob_expect_pallas(energy, cp_w, cp_b, centers, t_hw=512):
    """pred[n,hw] = sum_c softmax_c(cp_w @ energy[n,:,hw] + cp_b)[c] * centers[n,c]."""
    N, Q, HW = energy.shape
    dout = cp_w.shape[0]
    t_hw = min(t_hw, _round_up(HW, 128))
    HWp = _round_up(HW, t_hw)
    e_p = _pad_to(energy, (N, Q, HWp), jnp.bfloat16)
    w = cp_w.astype(jnp.bfloat16)                              # (dout, Q)
    b = cp_b.reshape(dout, 1).astype(jnp.float32)
    c = centers.reshape(N, 1, dout).astype(jnp.float32)
    out = pl.pallas_call(
        _prob_expect_kernel,
        out_shape=jax.ShapeDtypeStruct((N, 1, HWp), jnp.float32),
        grid=(N, HWp // t_hw),
        in_specs=[pl.BlockSpec((1, Q, t_hw), lambda n, j: (n, 0, j)),
                  pl.BlockSpec((dout, Q), lambda n, j: (0, 0)),
                  pl.BlockSpec((dout, 1), lambda n, j: (0, 0)),
                  pl.BlockSpec((1, 1, dout), lambda n, j: (n, 0, 0))],
        out_specs=pl.BlockSpec((1, 1, t_hw), lambda n, j: (n, 0, j)),
        compiler_params=pltpu.CompilerParams(
            dimension_semantics=("parallel", "parallel"),
            vmem_limit_bytes=_VMEM_LIMIT),
    )(e_p, w, b, c)
    return out[:, :, :HW]


# ----------------------------------------------------------------------------
# Conv via NHWC im2col (channel-last patches, no NCHW<->NHWC shuffles);
# the matmul runs in the tiled Pallas kernel.
# ----------------------------------------------------------------------------

def conv2d_nhwc(x, w, b, stride=1, padding=0, act="none"):
    """x: (N,H,W,C) NHWC; w: (O,C,kh,kw) torch OIHW; b: (O,). Returns NHWC."""
    # TODO(synk): a fully fused conv kernel (in-kernel shifted reads of an NHWC
    # tile) would avoid the kh*kw im2col expansion in HBM for overlapping convs.
    N, H, W, C = x.shape
    O, _, kh, kw = w.shape
    if padding > 0:
        x = jnp.pad(x, ((0, 0), (padding, padding), (padding, padding), (0, 0)))
    Hp, Wp = x.shape[1], x.shape[2]
    Ho = (Hp - kh) // stride + 1
    Wo = (Wp - kw) // stride + 1

    if kh == 1 and kw == 1 and stride == 1:
        patches = x.reshape(N * Ho * Wo, C)
        wmat = w.reshape(O, C).T
    elif padding == 0 and stride == kh and stride == kw and Hp % kh == 0 and Wp % kw == 0:
        # non-overlapping patchify (patch-embedding conv): pure reshape, no im2col
        patches = x.reshape(N, Ho, kh, Wo, kw, C).transpose(0, 1, 3, 2, 4, 5)
        patches = patches.reshape(N * Ho * Wo, kh * kw * C)
        wmat = jnp.transpose(w, (2, 3, 1, 0)).reshape(kh * kw * C, O)
    else:
        cols = []
        for di in range(kh):
            for dj in range(kw):
                cols.append(x[:, di:di + stride * Ho:stride,
                              dj:dj + stride * Wo:stride, :])
        patches = jnp.concatenate(cols, axis=-1).reshape(N * Ho * Wo, kh * kw * C)
        wmat = jnp.transpose(w, (2, 3, 1, 0)).reshape(kh * kw * C, O)

    out = linear_pallas(patches, wmat, b, act=act)             # (N*Ho*Wo, O)
    return out.reshape(N, Ho, Wo, O)


# ----------------------------------------------------------------------------
# Transformer encoder layer (nn.TransformerEncoderLayer, post-norm, eval)
# ----------------------------------------------------------------------------

def transformer_encoder_layer(lp, src, num_heads):
    S, N, E = src.shape
    hd = E // num_heads
    x2 = src.reshape(S * N, E)

    qkv = linear_pallas(x2, lp["in_proj_w"], lp["in_proj_b"])  # (S*N, 3E)
    q, k, v = qkv[:, :E], qkv[:, E:2 * E], qkv[:, 2 * E:]

    def to_heads(t):                                           # -> (N, H, S, hd)
        return jnp.transpose(t.reshape(S, N, num_heads, hd), (1, 2, 0, 3))

    ctx = mha_pallas(to_heads(q), to_heads(k), to_heads(v))    # (N, H, S, hd)
    ctx = jnp.transpose(ctx, (2, 0, 1, 3)).reshape(S * N, E)
    attn_out = linear_pallas(ctx, lp["out_proj_w"], lp["out_proj_b"])

    h = add_layernorm_pallas(x2, attn_out, lp["ln1_g"], lp["ln1_b"])
    ff = linear_pallas(h, lp["ff_w1"], lp["ff_b1"], act="relu")
    ff = linear_pallas(ff, lp["ff_w2"], lp["ff_b2"])
    out = add_layernorm_pallas(h, ff, lp["ln2_g"], lp["ln2_b"])
    return out.reshape(S, N, E)


# ----------------------------------------------------------------------------
# SQLdepth forward
# ----------------------------------------------------------------------------

def encoder_forward(params, x_nhwc):
    # TODO(synk): networks.ResnetEncoderDecoder topology lives outside this module;
    # a small conv stack with the same I/O contract (3 -> model_dim channels at
    # half resolution) stands in for it here.
    h = conv2d_nhwc(x_nhwc, params["e1_w"], params["e1_b"],
                    stride=2, padding=1, act="relu")
    h = conv2d_nhwc(h, params["e2_w"], params["e2_b"],
                    stride=1, padding=1, act="relu")
    return h


def depth_decoder_forward(params, x0, *, patch_size, embedding_dim, query_nums,
                          dim_out, num_heads, min_val, max_val):
    N, H, W, C = x0.shape                                      # NHWC features
    E = embedding_dim

    # embedding_convPxP (kernel = stride = patch_size, no padding)
    emb = conv2d_nhwc(x0, params["emb_w"], params["emb_b"],
                      stride=patch_size, padding=0)            # (N, Hp, Wp, E)
    Hp, Wp = emb.shape[1], emb.shape[2]
    S = Hp * Wp
    emb = emb.reshape(N, S, E) + params["pos_enc"][None, :S, :]
    src = jnp.transpose(emb, (1, 0, 2))                        # (S, N, E)

    for lp in params["tx_layers"]:
        src = transformer_encoder_layer(lp, src, num_heads)
    total_queries = src                                        # (S, N, E)

    xf = conv2d_nhwc(x0, params["c33_w"], params["c33_b"],
                     stride=1, padding=1)                      # (N, H, W, E)
    queries = jnp.transpose(total_queries[:query_nums], (1, 0, 2))  # (N, Q, E)

    # FullQueryLayer — energy computed directly as (N, Q, HW), lane-dense
    Q = query_nums
    x_hw_e = xf.reshape(N, H * W, E)                           # (N, HW, E)
    energy = bmm_nt_pallas(queries, x_hw_e)                    # (N, Q, HW)
    y_norm = softmax_rows_pallas(energy.reshape(N * Q, H * W)).reshape(N, Q, H * W)
    summarys = bmm_kacc_pallas(y_norm, x_hw_e)                 # (N, Q, E)

    # bins_regressor
    flat = summarys.reshape(N, Q * E)
    h1 = linear_pallas(flat, params["br_w1"], params["br_b1"], act="leaky_relu")
    h2 = linear_pallas(h1, params["br_w2"], params["br_b2"], act="leaky_relu")
    yb = linear_pallas(h2, params["br_w3"], params["br_b3"])
    yb = jnp.maximum(yb, 0.0) + 0.1                            # norm == 'linear'
    yb = yb / jnp.sum(yb, axis=1, keepdims=True)

    # bin edges / centers (tiny glue math in plain JAX)
    bin_widths = (max_val - min_val) * yb
    bin_widths = jnp.concatenate(
        [jnp.full((N, 1), min_val, jnp.float32), bin_widths], axis=1)
    bin_edges = jnp.cumsum(bin_widths, axis=1)
    centers = 0.5 * (bin_edges[:, :-1] + bin_edges[:, 1:])     # (N, dim_out)

    # convert_to_prob + softmax over channels + expectation, fused
    pred = prob_expect_pallas(energy, params["cp_w"], params["cp_b"], centers)
    return pred.reshape(N, 1, H, W)                            # NCHW, like PyTorch


def sqldepth_forward(params, x, cfg):
    x_nhwc = jnp.transpose(x, (0, 2, 3, 1))                    # NCHW -> NHWC once
    feat = encoder_forward(params, x_nhwc)
    return depth_decoder_forward(
        params, feat,
        patch_size=cfg["patch_size"], embedding_dim=cfg["model_dim"],
        query_nums=cfg["query_nums"], dim_out=cfg["dim_out"],
        num_heads=cfg["num_heads"], min_val=cfg["min_depth"], max_val=cfg["max_depth"])


# ----------------------------------------------------------------------------
# Deterministic parameter init (shapes follow the PyTorch module's __init__)
# ----------------------------------------------------------------------------

def init_params(key, cfg):
    nf, md, p = cfg["num_features"], cfg["model_dim"], cfg["patch_size"]
    E, Q, dout, dff = cfg["model_dim"], cfg["query_nums"], cfg["dim_out"], 1024
    keys = iter(jax.random.split(key, 128))

    def w(shape, scale=0.05):
        return scale * jax.random.normal(next(keys), shape, jnp.float32)

    params = {
        # encoder stand-in
        "e1_w": w((nf, 3, 3, 3)), "e1_b": w((nf,), 0.01),
        "e2_w": w((md, nf, 3, 3)), "e2_b": w((md,), 0.01),
        # embedding_convPxP
        "emb_w": w((E, md, p, p)), "emb_b": w((E,), 0.01),
        # positional encodings ~ torch.rand(500, E)
        "pos_enc": jax.random.uniform(next(keys), (500, E), jnp.float32),
        # conv3_3
        "c33_w": w((E, md, 3, 3)), "c33_b": w((E,), 0.01),
        # bins_regressor (stored matmul-ready, i.e. (in, out))
        "br_w1": w((E * Q, 16 * Q)), "br_b1": w((16 * Q,), 0.01),
        "br_w2": w((16 * Q, 16 * 16)), "br_b2": w((16 * 16,), 0.01),
        "br_w3": w((16 * 16, dout)), "br_b3": w((dout,), 0.01),
        # convert_to_prob 1x1 conv (torch weight layout (dout, Q))
        "cp_w": w((dout, Q)), "cp_b": w((dout,), 0.01),
    }
    layers = []
    for _ in range(4):  # nn.TransformerEncoder(num_layers=4)
        layers.append(dict(
            in_proj_w=w((E, 3 * E)), in_proj_b=jnp.zeros((3 * E,), jnp.float32),
            out_proj_w=w((E, E)), out_proj_b=jnp.zeros((E,), jnp.float32),
            ln1_g=jnp.ones((E,), jnp.float32), ln1_b=jnp.zeros((E,), jnp.float32),
            ff_w1=w((E, dff)), ff_b1=jnp.zeros((dff,), jnp.float32),
            ff_w2=w((dff, E)), ff_b2=jnp.zeros((E,), jnp.float32),
            ln2_g=jnp.ones((E,), jnp.float32), ln2_b=jnp.zeros((E,), jnp.float32),
        ))
    params["tx_layers"] = layers
    return params


# ----------------------------------------------------------------------------

if __name__ == "__main__":
    cfg = dict(num_layers=18, num_features=16, model_dim=32, patch_size=8,
               dim_out=16, query_nums=4, num_heads=4, min_depth=0.001, max_depth=10.0)

    key = jax.random.PRNGKey(0)
    pkey, xkey = jax.random.split(key)
    params = init_params(pkey, cfg)

    # NCHW input, matching the PyTorch module
    x = jax.random.normal(xkey, (2, 3, 32, 32), jnp.float32)

    fwd = jax.jit(functools.partial(sqldepth_forward, cfg=cfg))
    pred = fwd(params, x)
    pred = jax.block_until_ready(pred)

    assert pred.shape == (2, 1, 16, 16), pred.shape
    assert bool(jnp.all(jnp.isfinite(pred)))
    assert bool(jnp.all(pred >= cfg["min_depth"] - 1e-4))
    assert bool(jnp.all(pred <= cfg["max_depth"] + 1e-4))
    print("KERNEL_OK")
</pallas_src>

<mosaic_0001>
module attributes {stable_mosaic.version = 11 : i64} {
  func.func @_matmul_kernel(%arg0: i32, %arg1: i32, %arg2: i32, %arg3: memref<256x128xbf16, #tpu.memory_space<vmem>>, %arg4: memref<128x128xbf16, #tpu.memory_space<vmem>>, %arg5: memref<1x128xf32, #tpu.memory_space<vmem>>, %arg6: memref<256x128xf32, #tpu.memory_space<vmem>>, %arg7: memref<256x128xf32, #tpu.memory_space<vmem>>) attributes {dimension_semantics = [#tpu.dimension_semantics<parallel>, #tpu.dimension_semantics<parallel>, #tpu.dimension_semantics<arbitrary>], iteration_bounds = array<i64: 2, 1, 1>, scalar_prefetch = 0 : i64, scratch_operands = 1 : i64, tpu.core_type = #tpu.core_type<tc>, window_params = [{transform_indices = @transform_0, window_bounds = array<i64: 256, 128>}, {transform_indices = @transform_1, window_bounds = array<i64: 128, 128>}, {transform_indices = @transform_2, window_bounds = array<i64: 1, 128>}, {transform_indices = @transform_3, window_bounds = array<i64: 256, 128>}]} {
    %c0_i32 = arith.constant 0 : i32
    %0 = arith.cmpi eq, %arg2, %c0_i32 : i32
    %1 = arith.extui %0 : i1 to i32
    %c0_i32_0 = arith.constant 0 : i32
    %2 = arith.cmpi ne, %1, %c0_i32_0 : i32
    scf.if %2 {
      %cst_10 = arith.constant 0.000000e+00 : f32
      %12 = vector.broadcast %cst_10 : f32 to vector<256x128xf32>
      %c0_11 = arith.constant 0 : index
      %c0_12 = arith.constant 0 : index
      %13 = vector.load %arg7[%c0_11, %c0_12] : memref<256x128xf32, #tpu.memory_space<vmem>>, vector<256x128xf32>
      tpu.vector_store %arg7[%c0_11, %c0_12], %12 {strides = array<i32>} : memref<256x128xf32, #tpu.memory_space<vmem>>, vector<256x128xf32>,
    } else {
    }
    %c0 = arith.constant 0 : index
    %c0_1 = arith.constant 0 : index
    %3 = vector.load %arg7[%c0, %c0_1] : memref<256x128xf32, #tpu.memory_space<vmem>>, vector<256x128xf32>
    %c0_2 = arith.constant 0 : index
    %c0_3 = arith.constant 0 : index
    %4 = vector.load %arg3[%c0_2, %c0_3] : memref<256x128xbf16, #tpu.memory_space<vmem>>, vector<256x128xbf16>
    %c0_4 = arith.constant 0 : index
    %c0_5 = arith.constant 0 : index
    %5 = vector.load %arg4[%c0_4, %c0_5] : memref<128x128xbf16, #tpu.memory_space<vmem>>, vector<128x128xbf16>
    %cst = arith.constant dense<0.000000e+00> : vector<256x128xf32>
    %6 = tpu.matmul %4, %5, %cst {dimension_numbers = #tpu.dot_dimension_numbers<[1], [0], [0], [1], [0, 0, 1, 1], [], []>} : vector<256x128xbf16>, vector<128x128xbf16>, vector<256x128xf32> -> vector<256x128xf32>
    %7 = arith.addf %3, %6 : vector<256x128xf32>
    %c0_6 = arith.constant 0 : index
    %c0_7 = arith.constant 0 : index
    %8 = vector.load %arg7[%c0_6, %c0_7] : memref<256x128xf32, #tpu.memory_space<vmem>>, vector<256x128xf32>
    tpu.vector_store %arg7[%c0_6, %c0_7], %7 {strides = array<i32>} : memref<256x128xf32, #tpu.memory_space<vmem>>, vector<256x128xf32>,
    %c0_i32_8 = arith.constant 0 : i32
    %9 = arith.cmpi eq, %arg2, %c0_i32_8 : i32
    %10 = arith.extui %9 : i1 to i32
    %c0_i32_9 = arith.constant 0 : i32
    %11 = arith.cmpi ne, %10, %c0_i32_9 : i32
    scf.if %11 {
      %c0_10 = arith.constant 0 : index
      %c0_11 = arith.constant 0 : index
      %12 = vector.load %arg7[%c0_10, %c0_11] : memref<256x128xf32, #tpu.memory_space<vmem>>, vector<256x128xf32>
      %c0_12 = arith.constant 0 : index
      %c0_13 = arith.constant 0 : index
      %13 = vector.load %arg5[%c0_12, %c0_13] : memref<1x128xf32, #tpu.memory_space<vmem>>, vector<1x128xf32>
      %14 = vector.broadcast %13 : vector<1x128xf32> to vector<256x128xf32>
      %15 = arith.addf %12, %14 : vector<256x128xf32>
      %cst_14 = arith.constant 0.000000e+00 : f32
      %16 = vector.broadcast %cst_14 : f32 to vector<256x128xf32>
      %17 = arith.maximumf %15, %16 : vector<256x128xf32>
      %c0_15 = arith.constant 0 : index
      %c0_16 = arith.constant 0 : index
      %18 = vector.load %arg6[%c0_15, %c0_16] : memref<256x128xf32, #tpu.memory_space<vmem>>, vector<256x128xf32>
      tpu.vector_store %arg6[%c0_15, %c0_16], %17 {strides = array<i32>} : memref<256x128xf32, #tpu.memory_space<vmem>>, vector<256x128xf32>,
    } else {
    }
    return
  }
  func.func @transform_0(%arg0: i32, %arg1: i32, %arg2: i32) -> (i32, i32) {
    %c0_i32 = arith.constant 0 : i32
    return %arg0, %arg2 : i32, i32
  }
  func.func @transform_1(%arg0: i32, %arg1: i32, %arg2: i32) -> (i32, i32) {
    %c0_i32 = arith.constant 0 : i32
    return %arg2, %arg1 : i32, i32
  }
  func.func @transform_2(%arg0: i32, %arg1: i32, %arg2: i32) -> (i32, i32) {
    %c0_i32 = arith.constant 0 : i32
    %c0_i32_0 = arith.constant 0 : i32
    return %c0_i32, %arg1 : i32, i32
  }
  func.func @transform_3(%arg0: i32, %arg1: i32, %arg2: i32) -> (i32, i32) {
    %c0_i32 = arith.constant 0 : i32
    return %arg0, %arg1 : i32, i32
  }
}

module attributes {stable_mosaic.version = 11 : i64} {
  func.func @_matmul_kernel(%arg0: i32, %arg1: i32, %arg2: i32, %arg3: memref<256x256xbf16, #tpu.memory_space<vmem>>, %arg4: memref<256x128xbf16, #tpu.memory_space<vmem>>, %arg5: memref<1x128xf32, #tpu.memory_space<vmem>>, %arg6: memref<256x128xf32, #tpu.memory_space<vmem>>, %arg7: memref<256x128xf32, #tpu.memory_space<vmem>>) attributes {dimension_semantics = [#tpu.dimension_semantics<parallel>, #tpu.dimension_semantics<parallel>, #tpu.dimension_semantics<arbitrary>], iteration_bounds = array<i64: 2, 1, 1>, scalar_prefetch = 0 : i64, scratch_operands = 1 : i64, tpu.core_type = #tpu.core_type<tc>, window_params = [{transform_indices = @transform_0, window_bounds = array<i64: 256, 256>}, {transform_indices = @transform_1, window_bounds = array<i64: 256, 128>}, {transform_indices = @transform_2, window_bounds = array<i64: 1, 128>}, {transform_indices = @transform_3, window_bounds = array<i64: 256, 128>}]} {
    %c0_i32 = arith.constant 0 : i32
    %0 = arith.cmpi eq, %arg2, %c0_i32 : i32
    %1 = arith.extui %0 : i1 to i32
    %c0_i32_0 = arith.constant 0 : i32
    %2 = arith.cmpi ne, %1, %c0_i32_0 : i32
    scf.if %2 {
      %cst_10 = arith.constant 0.000000e+00 : f32
      %12 = vector.broadcast %cst_10 : f32 to vector<256x128xf32>
      %c0_11 = arith.constant 0 : index
      %c0_12 = arith.constant 0 : index
      %13 = vector.load %arg7[%c0_11, %c0_12] : memref<256x128xf32, #tpu.memory_space<vmem>>, vector<256x128xf32>
      tpu.vector_store %arg7[%c0_11, %c0_12], %12 {strides = array<i32>} : memref<256x128xf32, #tpu.memory_space<vmem>>, vector<256x128xf32>,
    } else {
    }
    %c0 = arith.constant 0 : index
    %c0_1 = arith.constant 0 : index
    %3 = vector.load %arg7[%c0, %c0_1] : memref<256x128xf32, #tpu.memory_space<vmem>>, vector<256x128xf32>
    %c0_2 = arith.constant 0 : index
    %c0_3 = arith.constant 0 : index
    %4 = vector.load %arg3[%c0_2, %c0_3] : memref<256x256xbf16, #tpu.memory_space<vmem>>, vector<256x256xbf16>
    %c0_4 = arith.constant 0 : index
    %c0_5 = arith.constant 0 : index
    %5 = vector.load %arg4[%c0_4, %c0_5] : memref<256x128xbf16, #tpu.memory_space<vmem>>, vector<256x128xbf16>
    %cst = arith.constant dense<0.000000e+00> : vector<256x128xf32>
    %6 = tpu.matmul %4, %5, %cst {dimension_numbers = #tpu.dot_dimension_numbers<[1], [0], [0], [1], [0, 0, 1, 1], [], []>} : vector<256x256xbf16>, vector<256x128xbf16>, vector<256x128xf32> -> vector<256x128xf32>
    %7 = arith.addf %3, %6 : vector<256x128xf32>
    %c0_6 = arith.constant 0 : index
    %c0_7 = arith.constant 0 : index
    %8 = vector.load %arg7[%c0_6, %c0_7] : memref<256x128xf32, #tpu.memory_space<vmem>>, vector<256x128xf32>
    tpu.vector_store %arg7[%c0_6, %c0_7], %7 {strides = array<i32>} : memref<256x128xf32, #tpu.memory_space<vmem>>, vector<256x128xf32>,
    %c0_i32_8 = arith.constant 0 : i32
    %9 = arith.cmpi eq, %arg2, %c0_i32_8 : i32
    %10 = arith.extui %9 : i1 to i32
    %c0_i32_9 = arith.constant 0 : i32
    %11 = arith.cmpi ne, %10, %c0_i32_9 : i32
    scf.if %11 {
      %c0_10 = arith.constant 0 : index
      %c0_11 = arith.constant 0 : index
      %12 = vector.load %arg7[%c0_10, %c0_11] : memref<256x128xf32, #tpu.memory_space<vmem>>, vector<256x128xf32>
      %c0_12 = arith.constant 0 : index
      %c0_13 = arith.constant 0 : index
      %13 = vector.load %arg5[%c0_12, %c0_13] : memref<1x128xf32, #tpu.memory_space<vmem>>, vector<1x128xf32>
      %14 = vector.broadcast %13 : vector<1x128xf32> to vector<256x128xf32>
      %15 = arith.addf %12, %14 : vector<256x128xf32>
      %cst_14 = arith.constant 0.000000e+00 : f32
      %16 = vector.broadcast %cst_14 : f32 to vector<256x128xf32>
      %17 = arith.maximumf %15, %16 : vector<256x128xf32>
      %c0_15 = arith.constant 0 : index
      %c0_16 = arith.constant 0 : index
      %18 = vector.load %arg6[%c0_15, %c0_16] : memref<256x128xf32, #tpu.memory_space<vmem>>, vector<256x128xf32>
      tpu.vector_store %arg6[%c0_15, %c0_16], %17 {strides = array<i32>} : memref<256x128xf32, #tpu.memory_space<vmem>>, vector<256x128xf32>,
    } else {
    }
    return
  }
  func.func @transform_0(%arg0: i32, %arg1: i32, %arg2: i32) -> (i32, i32) {
    %c0_i32 = arith.constant 0 : i32
    return %arg0, %arg2 : i32, i32
  }
  func.func @transform_1(%arg0: i32, %arg1: i32, %arg2: i32) -> (i32, i32) {
    %c0_i32 = arith.constant 0 : i32
    return %arg2, %arg1 : i32, i32
  }
  func.func @transform_2(%arg0: i32, %arg1: i32, %arg2: i32) -> (i32, i32) {
    %c0_i32 = arith.constant 0 : i32
    %c0_i32_0 = arith.constant 0 : i32
    return %c0_i32, %arg1 : i32, i32
  }
  func.func @transform_3(%arg0: i32, %arg1: i32, %arg2: i32) -> (i32, i32) {
    %c0_i32 = arith.constant 0 : i32
    return %arg0, %arg1 : i32, i32
  }
}

module attributes {stable_mosaic.version = 11 : i64} {
  func.func @_matmul_kernel(%arg0: i32, %arg1: i32, %arg2: i32, %arg3: memref<256x384xbf16, #tpu.memory_space<vmem>>, %arg4: memref<384x128xbf16, #tpu.memory_space<vmem>>, %arg5: memref<1x128xf32, #tpu.memory_space<vmem>>, %arg6: memref<256x128xf32, #tpu.memory_space<vmem>>, %arg7: memref<256x128xf32, #tpu.memory_space<vmem>>) attributes {dimension_semantics = [#tpu.dimension_semantics<parallel>, #tpu.dimension_semantics<parallel>, #tpu.dimension_semantics<arbitrary>], iteration_bounds = array<i64: 2, 1, 1>, scalar_prefetch = 0 : i64, scratch_operands = 1 : i64, tpu.core_type = #tpu.core_type<tc>, window_params = [{transform_indices = @transform_0, window_bounds = array<i64: 256, 384>}, {transform_indices = @transform_1, window_bounds = array<i64: 384, 128>}, {transform_indices = @transform_2, window_bounds = array<i64: 1, 128>}, {transform_indices = @transform_3, window_bounds = array<i64: 256, 128>}]} {
    %c0_i32 = arith.constant 0 : i32
    %0 = arith.cmpi eq, %arg2, %c0_i32 : i32
    %1 = arith.extui %0 : i1 to i32
    %c0_i32_0 = arith.constant 0 : i32
    %2 = arith.cmpi ne, %1, %c0_i32_0 : i32
    scf.if %2 {
      %cst_10 = arith.constant 0.000000e+00 : f32
      %12 = vector.broadcast %cst_10 : f32 to vector<256x128xf32>
      %c0_11 = arith.constant 0 : index
      %c0_12 = arith.constant 0 : index
      %13 = vector.load %arg7[%c0_11, %c0_12] : memref<256x128xf32, #tpu.memory_space<vmem>>, vector<256x128xf32>
      tpu.vector_store %arg7[%c0_11, %c0_12], %12 {strides = array<i32>} : memref<256x128xf32, #tpu.memory_space<vmem>>, vector<256x128xf32>,
    } else {
    }
    %c0 = arith.constant 0 : index
    %c0_1 = arith.constant 0 : index
    %3 = vector.load %arg7[%c0, %c0_1] : memref<256x128xf32, #tpu.memory_space<vmem>>, vector<256x128xf32>
    %c0_2 = arith.constant 0 : index
    %c0_3 = arith.constant 0 : index
    %4 = vector.load %arg3[%c0_2, %c0_3] : memref<256x384xbf16, #tpu.memory_space<vmem>>, vector<256x384xbf16>
    %c0_4 = arith.constant 0 : index
    %c0_5 = arith.constant 0 : index
    %5 = vector.load %arg4[%c0_4, %c0_5] : memref<384x128xbf16, #tpu.memory_space<vmem>>, vector<384x128xbf16>
    %cst = arith.constant dense<0.000000e+00> : vector<256x128xf32>
    %6 = tpu.matmul %4, %5, %cst {dimension_numbers = #tpu.dot_dimension_numbers<[1], [0], [0], [1], [0, 0, 1, 1], [], []>} : vector<256x384xbf16>, vector<384x128xbf16>, vector<256x128xf32> -> vector<256x128xf32>
    %7 = arith.addf %3, %6 : vector<256x128xf32>
    %c0_6 = arith.constant 0 : index
    %c0_7 = arith.constant 0 : index
    %8 = vector.load %arg7[%c0_6, %c0_7] : memref<256x128xf32, #tpu.memory_space<vmem>>, vector<256x128xf32>
    tpu.vector_store %arg7[%c0_6, %c0_7], %7 {strides = array<i32>} : memref<256x128xf32, #tpu.memory_space<vmem>>, vector<256x128xf32>,
    %c0_i32_8 = arith.constant 0 : i32
    %9 = arith.cmpi eq, %arg2, %c0_i32_8 : i32
    %10 = arith.extui %9 : i1 to i32
    %c0_i32_9 = arith.constant 0 : i32
    %11 = arith.cmpi ne, %10, %c0_i32_9 : i32
    scf.if %11 {
      %c0_10 = arith.constant 0 : index
      %c0_11 = arith.constant 0 : index
      %12 = vector.load %arg7[%c0_10, %c0_11] : memref<256x128xf32, #tpu.memory_space<vmem>>, vector<256x128xf32>
      %c0_12 = arith.constant 0 : index
      %c0_13 = arith.constant 0 : index
      %13 = vector.load %arg5[%c0_12, %c0_13] : memref<1x128xf32, #tpu.memory_space<vmem>>, vector<1x128xf32>
      %14 = vector.broadcast %13 : vector<1x128xf32> to vector<256x128xf32>
      %15 = arith.addf %12, %14 : vector<256x128xf32>
      %c0_14 = arith.constant 0 : index
      %c0_15 = arith.constant 0 : index
      %16 = vector.load %arg6[%c0_14, %c0_15] : memref<256x128xf32, #tpu.memory_space<vmem>>, vector<256x128xf32>
      tpu.vector_store %arg6[%c0_14, %c0_15], %15 {strides = array<i32>} : memref<256x128xf32, #tpu.memory_space<vmem>>, vector<256x128xf32>,
    } else {
    }
    return
  }
  func.func @transform_0(%arg0: i32, %arg1: i32, %arg2: i32) -> (i32, i32) {
    %c0_i32 = arith.constant 0 : i32
    return %arg0, %arg2 : i32, i32
  }
  func.func @transform_1(%arg0: i32, %arg1: i32, %arg2: i32) -> (i32, i32) {
    %c0_i32 = arith.constant 0 : i32
    return %arg2, %arg1 : i32, i32
  }
  func.func @transform_2(%arg0: i32, %arg1: i32, %arg2: i32) -> (i32, i32) {
    %c0_i32 = arith.constant 0 : i32
    %c0_i32_0 = arith.constant 0 : i32
    return %c0_i32, %arg1 : i32, i32
  }
  func.func @transform_3(%arg0: i32, %arg1: i32, %arg2: i32) -> (i32, i32) {
    %c0_i32 = arith.constant 0 : i32
    return %arg0, %arg1 : i32, i32
  }
}

module attributes {stable_mosaic.version = 11 : i64} {
  func.func @_matmul_kernel(%arg0: i32, %arg1: i32, %arg2: i32, %arg3: memref<8x512xbf16, #tpu.memory_space<vmem>>, %arg4: memref<512x128xbf16, #tpu.memory_space<vmem>>, %arg5: memref<1x128xf32, #tpu.memory_space<vmem>>, %arg6: memref<8x128xf32, #tpu.memory_space<vmem>>, %arg7: memref<8x128xf32, #tpu.memory_space<vmem>>) attributes {dimension_semantics = [#tpu.dimension_semantics<parallel>, #tpu.dimension_semantics<parallel>, #tpu.dimension_semantics<arbitrary>], iteration_bounds = array<i64: 1, 1, 4>, scalar_prefetch = 0 : i64, scratch_operands = 1 : i64, tpu.core_type = #tpu.core_type<tc>, window_params = [{transform_indices = @transform_0, window_bounds = array<i64: 8, 512>}, {transform_indices = @transform_1, window_bounds = array<i64: 512, 128>}, {transform_indices = @transform_2, window_bounds = array<i64: 1, 128>}, {transform_indices = @transform_3, window_bounds = array<i64: 8, 128>}]} {
    %c0_i32 = arith.constant 0 : i32
    %0 = arith.cmpi eq, %arg2, %c0_i32 : i32
    %1 = arith.extui %0 : i1 to i32
    %c0_i32_0 = arith.constant 0 : i32
    %2 = arith.cmpi ne, %1, %c0_i32_0 : i32
    scf.if %2 {
      %cst_9 = arith.constant 0.000000e+00 : f32
      %12 = vector.broadcast %cst_9 : f32 to vector<8x128xf32>
      %c0_10 = arith.constant 0 : index
      %c0_11 = arith.constant 0 : index
      %13 = vector.load %arg7[%c0_10, %c0_11] : memref<8x128xf32, #tpu.memory_space<vmem>>, vector<8x128xf32>
      tpu.vector_store %arg7[%c0_10, %c0_11], %12 {strides = array<i32>} : memref<8x128xf32, #tpu.memory_space<vmem>>, vector<8x128xf32>,
    } else {
    }
    %c0 = arith.constant 0 : index
    %c0_1 = arith.constant 0 : index
    %3 = vector.load %arg7[%c0, %c0_1] : memref<8x128xf32, #tpu.memory_space<vmem>>, vector<8x128xf32>
    %c0_2 = arith.constant 0 : index
    %c0_3 = arith.constant 0 : index
    %4 = vector.load %arg3[%c0_2, %c0_3] : memref<8x512xbf16, #tpu.memory_space<vmem>>, vector<8x512xbf16>
    %c0_4 = arith.constant 0 : index
    %c0_5 = arith.constant 0 : index
    %5 = vector.load %arg4[%c0_4, %c0_5] : memref<512x128xbf16, #tpu.memory_space<vmem>>, vector<512x128xbf16>
    %cst = arith.constant dense<0.000000e+00> : vector<8x128xf32>
    %6 = tpu.matmul %4, %5, %cst {dimension_numbers = #tpu.dot_dimension_numbers<[1], [0], [0], [1], [0, 0, 1, 1], [], []>} : vector<8x512xbf16>, vector<512x128xbf16>, vector<8x128xf32> -> vector<8x128xf32>
    %7 = arith.addf %3, %6 : vector<8x128xf32>
    %c0_6 = arith.constant 0 : index
    %c0_7 = arith.constant 0 : index
    %8 = vector.load %arg7[%c0_6, %c0_7] : memref<8x128xf32, #tpu.memory_space<vmem>>, vector<8x128xf32>
    tpu.vector_store %arg7[%c0_6, %c0_7], %7 {strides = array<i32>} : memref<8x128xf32, #tpu.memory_space<vmem>>, vector<8x128xf32>,
    %c3_i32 = arith.constant 3 : i32
    %9 = arith.cmpi eq, %arg2, %c3_i32 : i32
    %10 = arith.extui %9 : i1 to i32
    %c0_i32_8 = arith.constant 0 : i32
    %11 = arith.cmpi ne, %10, %c0_i32_8 : i32
    scf.if %11 {
      %c0_9 = arith.constant 0 : index
      %c0_10 = arith.constant 0 : index
      %12 = vector.load %arg7[%c0_9, %c0_10] : memref<8x128xf32, #tpu.memory_space<vmem>>, vector<8x128xf32>
      %c0_11 = arith.constant 0 : index
      %c0_12 = arith.constant 0 : index
      %13 = vector.load %arg5[%c0_11, %c0_12] : memref<1x128xf32, #tpu.memory_space<vmem>>, vector<1x128xf32>
      %14 = vector.broadcast %13 : vector<1x128xf32> to vector<8x128xf32>
      %15 = arith.addf %12, %14 : vector<8x128xf32>
      %c0_13 = arith.constant 0 : index
      %c0_14 = arith.constant 0 : index
      %16 = vector.load %arg6[%c0_13, %c0_14] : memref<8x128xf32, #tpu.memory_space<vmem>>, vector<8x128xf32>
      tpu.vector_store %arg6[%c0_13, %c0_14], %15 {strides = array<i32>} : memref<8x128xf32, #tpu.memory_space<vmem>>, vector<8x128xf32>,
    } else {
    }
    return
  }
  func.func @transform_0(%arg0: i32, %arg1: i32, %arg2: i32) -> (i32, i32) {
    %c0_i32 = arith.constant 0 : i32
    return %arg0, %arg2 : i32, i32
  }
  func.func @transform_1(%arg0: i32, %arg1: i32, %arg2: i32) -> (i32, i32) {
    %c0_i32 = arith.constant 0 : i32
    return %arg2, %arg1 : i32, i32
  }
  func.func @transform_2(%arg0: i32, %arg1: i32, %arg2: i32) -> (i32, i32) {
    %c0_i32 = arith.constant 0 : i32
    %c0_i32_0 = arith.constant 0 : i32
    return %c0_i32, %arg1 : i32, i32
  }
  func.func @transform_3(%arg0: i32, %arg1: i32, %arg2: i32) -> (i32, i32) {
    %c0_i32 = arith.constant 0 : i32
    return %arg0, %arg1 : i32, i32
  }
}

module attributes {stable_mosaic.version = 11 : i64} {
  func.func @_matmul_kernel(%arg0: i32, %arg1: i32, %arg2: i32, %arg3: memref<8x128xbf16, #tpu.memory_space<vmem>>, %arg4: memref<128x128xbf16, #tpu.memory_space<vmem>>, %arg5: memref<1x128xf32, #tpu.memory_space<vmem>>, %arg6: memref<8x128xf32, #tpu.memory_space<vmem>>, %arg7: memref<8x128xf32, #tpu.memory_space<vmem>>) attributes {dimension_semantics = [#tpu.dimension_semantics<parallel>, #tpu.dimension_semantics<parallel>, #tpu.dimension_semantics<arbitrary>], iteration_bounds = array<i64: 1, 1, 1>, scalar_prefetch = 0 : i64, scratch_operands = 1 : i64, tpu.core_type = #tpu.core_type<tc>, window_params = [{transform_indices = @transform_0, window_bounds = array<i64: 8, 128>}, {transform_indices = @transform_1, window_bounds = array<i64: 128, 128>}, {transform_indices = @transform_2, window_bounds = array<i64: 1, 128>}, {transform_indices = @transform_3, window_bounds = array<i64: 8, 128>}]} {
    %c0_i32 = arith.constant 0 : i32
    %0 = arith.cmpi eq, %arg2, %c0_i32 : i32
    %1 = arith.extui %0 : i1 to i32
    %c0_i32_0 = arith.constant 0 : i32
    %2 = arith.cmpi ne, %1, %c0_i32_0 : i32
    scf.if %2 {
      %cst_10 = arith.constant 0.000000e+00 : f32
      %12 = vector.broadcast %cst_10 : f32 to vector<8x128xf32>
      %c0_11 = arith.constant 0 : index
      %c0_12 = arith.constant 0 : index
      %13 = vector.load %arg7[%c0_11, %c0_12] : memref<8x128xf32, #tpu.memory_space<vmem>>, vector<8x128xf32>
      tpu.vector_store %arg7[%c0_11, %c0_12], %12 {strides = array<i32>} : memref<8x128xf32, #tpu.memory_space<vmem>>, vector<8x128xf32>,
    } else {
    }
    %c0 = arith.constant 0 : index
    %c0_1 = arith.constant 0 : index
    %3 = vector.load %arg7[%c0, %c0_1] : memref<8x128xf32, #tpu.memory_space<vmem>>, vector<8x128xf32>
    %c0_2 = arith.constant 0 : index
    %c0_3 = arith.constant 0 : index
    %4 = vector.load %arg3[%c0_2, %c0_3] : memref<8x128xbf16, #tpu.memory_space<vmem>>, vector<8x128xbf16>
    %c0_4 = arith.constant 0 : index
    %c0_5 = arith.constant 0 : index
    %5 = vector.load %arg4[%c0_4, %c0_5] : memref<128x128xbf16, #tpu.memory_space<vmem>>, vector<128x128xbf16>
    %cst = arith.constant dense<0.000000e+00> : vector<8x128xf32>
    %6 = tpu.matmul %4, %5, %cst {dimension_numbers = #tpu.dot_dimension_numbers<[1], [0], [0], [1], [0, 0, 1, 1], [], []>} : vector<8x128xbf16>, vector<128x128xbf16>, vector<8x128xf32> -> vector<8x128xf32>
    %7 = arith.addf %3, %6 : vector<8x128xf32>
    %c0_6 = arith.constant 0 : index
    %c0_7 = arith.constant 0 : index
    %8 = vector.load %arg7[%c0_6, %c0_7] : memref<8x128xf32, #tpu.memory_space<vmem>>, vector<8x128xf32>
    tpu.vector_store %arg7[%c0_6, %c0_7], %7 {strides = array<i32>} : memref<8x128xf32, #tpu.memory_space<vmem>>, vector<8x128xf32>,
    %c0_i32_8 = arith.constant 0 : i32
    %9 = arith.cmpi eq, %arg2, %c0_i32_8 : i32
    %10 = arith.extui %9 : i1 to i32
    %c0_i32_9 = arith.constant 0 : i32
    %11 = arith.cmpi ne, %10, %c0_i32_9 : i32
    scf.if %11 {
      %c0_10 = arith.constant 0 : index
      %c0_11 = arith.constant 0 : index
      %12 = vector.load %arg7[%c0_10, %c0_11] : memref<8x128xf32, #tpu.memory_space<vmem>>, vector<8x128xf32>
      %c0_12 = arith.constant 0 : index
      %c0_13 = arith.constant 0 : index
      %13 = vector.load %arg5[%c0_12, %c0_13] : memref<1x128xf32, #tpu.memory_space<vmem>>, vector<1x128xf32>
      %14 = vector.broadcast %13 : vector<1x128xf32> to vector<8x128xf32>
      %15 = arith.addf %12, %14 : vector<8x128xf32>
      %c0_14 = arith.constant 0 : index
      %c0_15 = arith.constant 0 : index
      %16 = vector.load %arg6[%c0_14, %c0_15] : memref<8x128xf32, #tpu.memory_space<vmem>>, vector<8x128xf32>
      tpu.vector_store %arg6[%c0_14, %c0_15], %15 {strides = array<i32>} : memref<8x128xf32, #tpu.memory_space<vmem>>, vector<8x128xf32>,
    } else {
    }
    return
  }
  func.func @transform_0(%arg0: i32, %arg1: i32, %arg2: i32) -> (i32, i32) {
    %c0_i32 = arith.constant 0 : i32
    return %arg0, %arg2 : i32, i32
  }
  func.func @transform_1(%arg0: i32, %arg1: i32, %arg2: i32) -> (i32, i32) {
    %c0_i32 = arith.constant 0 : i32
    return %arg2, %arg1 : i32, i32
  }
  func.func @transform_2(%arg0: i32, %arg1: i32, %arg2: i32) -> (i32, i32) {
    %c0_i32 = arith.constant 0 : i32
    %c0_i32_0 = arith.constant 0 : i32
    return %c0_i32, %arg1 : i32, i32
  }
  func.func @transform_3(%arg0: i32, %arg1: i32, %arg2: i32) -> (i32, i32) {
    %c0_i32 = arith.constant 0 : i32
    return %arg0, %arg1 : i32, i32
  }
}

module attributes {stable_mosaic.version = 11 : i64} {
  func.func @_mha_kernel(%arg0: i32, %arg1: memref<1x4x4x8xbf16, #tpu.memory_space<vmem>>, %arg2: memref<1x4x4x8xbf16, #tpu.memory_space<vmem>>, %arg3: memref<1x4x4x8xbf16, #tpu.memory_space<vmem>>, %arg4: memref<1x4x4x8xf32, #tpu.memory_space<vmem>>) attributes {dimension_semantics = [#tpu.dimension_semantics<parallel>], iteration_bounds = array<i64: 2>, scalar_prefetch = 0 : i64, scratch_operands = 0 : i64, tpu.core_type = #tpu.core_type<tc>, window_params = [{transform_indices = @transform_0, window_bounds = array<i64: 1, 4, 4, 8>}, {transform_indices = @transform_1, window_bounds = array<i64: 1, 4, 4, 8>}, {transform_indices = @transform_2, window_bounds = array<i64: 1, 4, 4, 8>}, {transform_indices = @transform_3, window_bounds = array<i64: 1, 4, 4, 8>}]} {
    %c0 = arith.constant 0 : index
    %c0_0 = arith.constant 0 : index
    %c0_1 = arith.constant 0 : index
    %c0_2 = arith.constant 0 : index
    %0 = vector.load %arg1[%c0, %c0_0, %c0_1, %c0_2] : memref<1x4x4x8xbf16, #tpu.memory_space<vmem>>, vector<1x4x4x8xbf16>
    %1 = vector.shape_cast %0 : vector<1x4x4x8xbf16> to vector<4x4x8xbf16>
    %c0_3 = arith.constant 0 : index
    %c0_4 = arith.constant 0 : index
    %c0_5 = arith.constant 0 : index
    %c0_6 = arith.constant 0 : index
    %2 = vector.load %arg2[%c0_3, %c0_4, %c0_5, %c0_6] : memref<1x4x4x8xbf16, #tpu.memory_space<vmem>>, vector<1x4x4x8xbf16>
    %3 = vector.shape_cast %2 : vector<1x4x4x8xbf16> to vector<4x4x8xbf16>
    %c0_7 = arith.constant 0 : index
    %c0_8 = arith.constant 0 : index
    %c0_9 = arith.constant 0 : index
    %c0_10 = arith.constant 0 : index
    %4 = vector.load %arg3[%c0_7, %c0_8, %c0_9, %c0_10] : memref<1x4x4x8xbf16, #tpu.memory_space<vmem>>, vector<1x4x4x8xbf16>
    %5 = vector.shape_cast %4 : vector<1x4x4x8xbf16> to vector<4x4x8xbf16>
    "tpu.trace_start"() <{level = 10 : i32, message = "hqd,hkd->hqk"}> : () -> ()
    %cst = arith.constant dense<0.000000e+00> : vector<4x4x4xf32>
    %6 = tpu.matmul %1, %3, %cst {dimension_numbers = #tpu.dot_dimension_numbers<[2], [2], [1], [1], [0, 0, 0, 1, 1, 1], [0], [0]>} : vector<4x4x8xbf16>, vector<4x4x8xbf16>, vector<4x4x4xf32> -> vector<4x4x4xf32>
    "tpu.trace_stop"() : () -> ()
    %cst_11 = arith.constant 0.353553385 : f32
    %7 = vector.broadcast %cst_11 : f32 to vector<4x4x4xf32>
    %8 = arith.mulf %6, %7 : vector<4x4x4xf32>
    %cst_12 = arith.constant dense<0xFF800000> : vector<4x4xf32>
    %9 = vector.multi_reduction <maximumf>, %8, %cst_12 [2] : vector<4x4x4xf32> to vector<4x4xf32>
    %10 = vector.shape_cast %9 : vector<4x4xf32> to vector<4x4x1xf32>
    %11 = vector.broadcast %10 : vector<4x4x1xf32> to vector<4x4x4xf32>
    %12 = arith.subf %8, %11 : vector<4x4x4xf32>
    %13 = math.exp %12 : vector<4x4x4xf32>
    %cst_13 = arith.constant dense<0.000000e+00> : vector<4x4xf32>
    %14 = vector.multi_reduction <add>, %13, %cst_13 [2] : vector<4x4x4xf32> to vector<4x4xf32>
    %15 = vector.shape_cast %14 : vector<4x4xf32> to vector<4x4x1xf32>
    %16 = vector.broadcast %15 : vector<4x4x1xf32> to vector<4x4x4xf32>
    %17 = arith.divf %13, %16 : vector<4x4x4xf32>
    %18 = arith.truncf %17 : vector<4x4x4xf32> to vector<4x4x4xbf16>
    "tpu.trace_start"() <{level = 10 : i32, message = "hqk,hkd->hqd"}> : () -> ()
    %cst_14 = arith.constant dense<0.000000e+00> : vector<4x4x8xf32>
    %19 = tpu.matmul %18, %5, %cst_14 {dimension_numbers = #tpu.dot_dimension_numbers<[2], [1], [1], [2], [0, 0, 0, 1, 1, 2], [0], [0]>} : vector<4x4x4xbf16>, vector<4x4x8xbf16>, vector<4x4x8xf32> -> vector<4x4x8xf32>
    "tpu.trace_stop"() : () -> ()
    %c0_15 = arith.constant 0 : index
    %c0_16 = arith.constant 0 : index
    %c0_17 = arith.constant 0 : index
    %c0_18 = arith.constant 0 : index
    %20 = vector.load %arg4[%c0_15, %c0_16, %c0_17, %c0_18] : memref<1x4x4x8xf32, #tpu.memory_space<vmem>>, vector<1x4x4x8xf32>
    %21 = vector.shape_cast %20 : vector<1x4x4x8xf32> to vector<4x4x8xf32>
    %22 = vector.shape_cast %19 : vector<4x4x8xf32> to vector<1x4x4x8xf32>
    tpu.vector_store %arg4[%c0_15, %c0_16, %c0_17, %c0_18], %22 {strides = array<i32>} : memref<1x4x4x8xf32, #tpu.memory_space<vmem>>, vector<1x4x4x8xf32>,
    return
  }
  func.func @transform_0(%arg0: i32) -> (i32, i32, i32, i32) {
    %c0_i32 = arith.constant 0 : i32
    %c0_i32_0 = arith.constant 0 : i32
    %c0_i32_1 = arith.constant 0 : i32
    %c0_i32_2 = arith.constant 0 : i32
    return %arg0, %c0_i32, %c0_i32_0, %c0_i32_1 : i32, i32, i32, i32
  }
  func.func @transform_1(%arg0: i32) -> (i32, i32, i32, i32) {
    %c0_i32 = arith.constant 0 : i32
    %c0_i32_0 = arith.constant 0 : i32
    %c0_i32_1 = arith.constant 0 : i32
    %c0_i32_2 = arith.constant 0 : i32
    return %arg0, %c0_i32, %c0_i32_0, %c0_i32_1 : i32, i32, i32, i32
  }
  func.func @transform_2(%arg0: i32) -> (i32, i32, i32, i32) {
    %c0_i32 = arith.constant 0 : i32
    %c0_i32_0 = arith.constant 0 : i32
    %c0_i32_1 = arith.constant 0 : i32
    %c0_i32_2 = arith.constant 0 : i32
    return %arg0, %c0_i32, %c0_i32_0, %c0_i32_1 : i32, i32, i32, i32
  }
  func.func @transform_3(%arg0: i32) -> (i32, i32, i32, i32) {
    %c0_i32 = arith.constant 0 : i32
    %c0_i32_0 = arith.constant 0 : i32
    %c0_i32_1 = arith.constant 0 : i32
    %c0_i32_2 = arith.constant 0 : i32
    return %arg0, %c0_i32, %c0_i32_0, %c0_i32_1 : i32, i32, i32, i32
  }
}

module attributes {stable_mosaic.version = 11 : i64} {
  func.func @_add_ln_kernel(%arg0: i32, %arg1: memref<8x32xf32, #tpu.memory_space<vmem>>, %arg2: memref<8x32xf32, #tpu.memory_space<vmem>>, %arg3: memref<1x32xf32, #tpu.memory_space<vmem>>, %arg4: memref<1x32xf32, #tpu.memory_space<vmem>>, %arg5: memref<8x32xf32, #tpu.memory_space<vmem>>) attributes {dimension_semantics = [#tpu.dimension_semantics<parallel>], iteration_bounds = array<i64: 1>, scalar_prefetch = 0 : i64, scratch_operands = 0 : i64, tpu.core_type = #tpu.core_type<tc>, window_params = [{transform_indices = @transform_0, window_bounds = array<i64: 8, 32>}, {transform_indices = @transform_1, window_bounds = array<i64: 8, 32>}, {pipeline_mode = #tpu.pipeline_mode<synchronous>, transform_indices = @transform_2, window_bounds = array<i64: 1, 32>}, {pipeline_mode = #tpu.pipeline_mode<synchronous>, transform_indices = @transform_3, window_bounds = array<i64: 1, 32>}, {transform_indices = @transform_4, window_bounds = array<i64: 8, 32>}]} {
    %c0 = arith.constant 0 : index
    %c0_0 = arith.constant 0 : index
    %0 = vector.load %arg1[%c0, %c0_0] : memref<8x32xf32, #tpu.memory_space<vmem>>, vector<8x32xf32>
    %c0_1 = arith.constant 0 : index
    %c0_2 = arith.constant 0 : index
    %1 = vector.load %arg2[%c0_1, %c0_2] : memref<8x32xf32, #tpu.memory_space<vmem>>, vector<8x32xf32>
    %2 = arith.addf %0, %1 : vector<8x32xf32>
    %cst = arith.constant dense<0.000000e+00> : vector<8xf32>
    %3 = vector.multi_reduction <add>, %2, %cst [1] : vector<8x32xf32> to vector<8xf32>
    %4 = vector.shape_cast %3 : vector<8xf32> to vector<8x1xf32>
    %cst_3 = arith.constant 3.200000e+01 : f32
    %5 = vector.broadcast %cst_3 : f32 to vector<8x1xf32>
    %6 = arith.divf %4, %5 : vector<8x1xf32>
    %7 = vector.broadcast %6 : vector<8x1xf32> to vector<8x32xf32>
    %8 = arith.subf %2, %7 : vector<8x32xf32>
    %9 = arith.mulf %8, %8 : vector<8x32xf32>
    %cst_4 = arith.constant dense<0.000000e+00> : vector<8xf32>
    %10 = vector.multi_reduction <add>, %9, %cst_4 [1] : vector<8x32xf32> to vector<8xf32>
    %11 = vector.shape_cast %10 : vector<8xf32> to vector<8x1xf32>
    %cst_5 = arith.constant 3.200000e+01 : f32
    %12 = vector.broadcast %cst_5 : f32 to vector<8x1xf32>
    %13 = arith.divf %11, %12 : vector<8x1xf32>
    %14 = vector.broadcast %6 : vector<8x1xf32> to vector<8x32xf32>
    %15 = arith.subf %2, %14 : vector<8x32xf32>
    %cst_6 = arith.constant 9.99999974E-6 : f32
    %16 = vector.broadcast %cst_6 : f32 to vector<8x1xf32>
    %17 = arith.addf %13, %16 : vector<8x1xf32>
    %18 = math.rsqrt %17 : vector<8x1xf32>
    %19 = vector.broadcast %18 : vector<8x1xf32> to vector<8x32xf32>
    %20 = arith.mulf %15, %19 : vector<8x32xf32>
    %c0_7 = arith.constant 0 : index
    %c0_8 = arith.constant 0 : index
    %21 = vector.load %arg3[%c0_7, %c0_8] : memref<1x32xf32, #tpu.memory_space<vmem>>, vector<1x32xf32>
    %22 = vector.broadcast %21 : vector<1x32xf32> to vector<8x32xf32>
    %23 = arith.mulf %20, %22 : vector<8x32xf32>
    %c0_9 = arith.constant 0 : index
    %c0_10 = arith.constant 0 : index
    %24 = vector.load %arg4[%c0_9, %c0_10] : memref<1x32xf32, #tpu.memory_space<vmem>>, vector<1x32xf32>
    %25 = vector.broadcast %24 : vector<1x32xf32> to vector<8x32xf32>
    %26 = arith.addf %23, %25 : vector<8x32xf32>
    %c0_11 = arith.constant 0 : index
    %c0_12 = arith.constant 0 : index
    %27 = vector.load %arg5[%c0_11, %c0_12] : memref<8x32xf32, #tpu.memory_space<vmem>>, vector<8x32xf32>
    tpu.vector_store %arg5[%c0_11, %c0_12], %26 {strides = array<i32>} : memref<8x32xf32, #tpu.memory_space<vmem>>, vector<8x32xf32>,
    return
  }
  func.func @transform_0(%arg0: i32) -> (i32, i32) {
    %c0_i32 = arith.constant 0 : i32
    %c0_i32_0 = arith.constant 0 : i32
    return %arg0, %c0_i32 : i32, i32
  }
  func.func @transform_1(%arg0: i32) -> (i32, i32) {
    %c0_i32 = arith.constant 0 : i32
    %c0_i32_0 = arith.constant 0 : i32
    return %arg0, %c0_i32 : i32, i32
  }
  func.func @transform_2(%arg0: i32) -> (i32, i32) {
    %c0_i32 = arith.constant 0 : i32
    %c0_i32_0 = arith.constant 0 : i32
    %c0_i32_1 = arith.constant 0 : i32
    return %c0_i32, %c0_i32_0 : i32, i32
  }
  func.func @transform_3(%arg0: i32) -> (i32, i32) {
    %c0_i32 = arith.constant 0 : i32
    %c0_i32_0 = arith.constant 0 : i32
    %c0_i32_1 = arith.constant 0 : i32
    return %c0_i32, %c0_i32_0 : i32, i32
  }
  func.func @transform_4(%arg0: i32) -> (i32, i32) {
    %c0_i32 = arith.constant 0 : i32
    %c0_i32_0 = arith.constant 0 : i32
    return %arg0, %c0_i32 : i32, i32
  }
}

module attributes {stable_mosaic.version = 11 : i64} {
  func.func @_matmul_kernel(%arg0: i32, %arg1: i32, %arg2: i32, %arg3: memref<8x128xbf16, #tpu.memory_space<vmem>>, %arg4: memref<128x256xbf16, #tpu.memory_space<vmem>>, %arg5: memref<1x256xf32, #tpu.memory_space<vmem>>, %arg6: memref<8x256xf32, #tpu.memory_space<vmem>>, %arg7: memref<8x256xf32, #tpu.memory_space<vmem>>) attributes {dimension_semantics = [#tpu.dimension_semantics<parallel>, #tpu.dimension_semantics<parallel>, #tpu.dimension_semantics<arbitrary>], iteration_bounds = array<i64: 1, 4, 1>, scalar_prefetch = 0 : i64, scratch_operands = 1 : i64, tpu.core_type = #tpu.core_type<tc>, window_params = [{transform_indices = @transform_0, window_bounds = array<i64: 8, 128>}, {transform_indices = @transform_1, window_bounds = array<i64: 128, 256>}, {transform_indices = @transform_2, window_bounds = array<i64: 1, 256>}, {transform_indices = @transform_3, window_bounds = array<i64: 8, 256>}]} {
    %c0_i32 = arith.constant 0 : i32
    %0 = arith.cmpi eq, %arg2, %c0_i32 : i32
    %1 = arith.extui %0 : i1 to i32
    %c0_i32_0 = arith.constant 0 : i32
    %2 = arith.cmpi ne, %1, %c0_i32_0 : i32
    scf.if %2 {
      %cst_10 = arith.constant 0.000000e+00 : f32
      %12 = vector.broadcast %cst_10 : f32 to vector<8x256xf32>
      %c0_11 = arith.constant 0 : index
      %c0_12 = arith.constant 0 : index
      %13 = vector.load %arg7[%c0_11, %c0_12] : memref<8x256xf32, #tpu.memory_space<vmem>>, vector<8x256xf32>
      tpu.vector_store %arg7[%c0_11, %c0_12], %12 {strides = array<i32>} : memref<8x256xf32, #tpu.memory_space<vmem>>, vector<8x256xf32>,
    } else {
    }
    %c0 = arith.constant 0 : index
    %c0_1 = arith.constant 0 : index
    %3 = vector.load %arg7[%c0, %c0_1] : memref<8x256xf32, #tpu.memory_space<vmem>>, vector<8x256xf32>
    %c0_2 = arith.constant 0 : index
    %c0_3 = arith.constant 0 : index
    %4 = vector.load %arg3[%c0_2, %c0_3] : memref<8x128xbf16, #tpu.memory_space<vmem>>, vector<8x128xbf16>
    %c0_4 = arith.constant 0 : index
    %c0_5 = arith.constant 0 : index
    %5 = vector.load %arg4[%c0_4, %c0_5] : memref<128x256xbf16, #tpu.memory_space<vmem>>, vector<128x256xbf16>
    %cst = arith.constant dense<0.000000e+00> : vector<8x256xf32>
    %6 = tpu.matmul %4, %5, %cst {dimension_numbers = #tpu.dot_dimension_numbers<[1], [0], [0], [1], [0, 0, 1, 1], [], []>} : vector<8x128xbf16>, vector<128x256xbf16>, vector<8x256xf32> -> vector<8x256xf32>
    %7 = arith.addf %3, %6 : vector<8x256xf32>
    %c0_6 = arith.constant 0 : index
    %c0_7 = arith.constant 0 : index
    %8 = vector.load %arg7[%c0_6, %c0_7] : memref<8x256xf32, #tpu.memory_space<vmem>>, vector<8x256xf32>
    tpu.vector_store %arg7[%c0_6, %c0_7], %7 {strides = array<i32>} : memref<8x256xf32, #tpu.memory_space<vmem>>, vector<8x256xf32>,
    %c0_i32_8 = arith.constant 0 : i32
    %9 = arith.cmpi eq, %arg2, %c0_i32_8 : i32
    %10 = arith.extui %9 : i1 to i32
    %c0_i32_9 = arith.constant 0 : i32
    %11 = arith.cmpi ne, %10, %c0_i32_9 : i32
    scf.if %11 {
      %c0_10 = arith.constant 0 : index
      %c0_11 = arith.constant 0 : index
      %12 = vector.load %arg7[%c0_10, %c0_11] : memref<8x256xf32, #tpu.memory_space<vmem>>, vector<8x256xf32>
      %c0_12 = arith.constant 0 : index
      %c0_13 = arith.constant 0 : index
      %13 = vector.load %arg5[%c0_12, %c0_13] : memref<1x256xf32, #tpu.memory_space<vmem>>, vector<1x256xf32>
      %14 = vector.broadcast %13 : vector<1x256xf32> to vector<8x256xf32>
      %15 = arith.addf %12, %14 : vector<8x256xf32>
      %cst_14 = arith.constant 0.000000e+00 : f32
      %16 = vector.broadcast %cst_14 : f32 to vector<8x256xf32>
      %17 = arith.maximumf %15, %16 : vector<8x256xf32>
      %c0_15 = arith.constant 0 : index
      %c0_16 = arith.constant 0 : index
      %18 = vector.load %arg6[%c0_15, %c0_16] : memref<8x256xf32, #tpu.memory_space<vmem>>, vector<8x256xf32>
      tpu.vector_store %arg6[%c0_15, %c0_16], %17 {strides = array<i32>} : memref<8x256xf32, #tpu.memory_space<vmem>>, vector<8x256xf32>,
    } else {
    }
    return
  }
  func.func @transform_0(%arg0: i32, %arg1: i32, %arg2: i32) -> (i32, i32) {
    %c0_i32 = arith.constant 0 : i32
    return %arg0, %arg2 : i32, i32
  }
  func.func @transform_1(%arg0: i32, %arg1: i32, %arg2: i32) -> (i32, i32) {
    %c0_i32 = arith.constant 0 : i32
    return %arg2, %arg1 : i32, i32
  }
  func.func @transform_2(%arg0: i32, %arg1: i32, %arg2: i32) -> (i32, i32) {
    %c0_i32 = arith.constant 0 : i32
    %c0_i32_0 = arith.constant 0 : i32
    return %c0_i32, %arg1 : i32, i32
  }
  func.func @transform_3(%arg0: i32, %arg1: i32, %arg2: i32) -> (i32, i32) {
    %c0_i32 = arith.constant 0 : i32
    return %arg0, %arg1 : i32, i32
  }
}

module attributes {stable_mosaic.version = 11 : i64} {
  func.func @_matmul_kernel(%arg0: i32, %arg1: i32, %arg2: i32, %arg3: memref<8x512xbf16, #tpu.memory_space<vmem>>, %arg4: memref<512x128xbf16, #tpu.memory_space<vmem>>, %arg5: memref<1x128xf32, #tpu.memory_space<vmem>>, %arg6: memref<8x128xf32, #tpu.memory_space<vmem>>, %arg7: memref<8x128xf32, #tpu.memory_space<vmem>>) attributes {dimension_semantics = [#tpu.dimension_semantics<parallel>, #tpu.dimension_semantics<parallel>, #tpu.dimension_semantics<arbitrary>], iteration_bounds = array<i64: 1, 1, 2>, scalar_prefetch = 0 : i64, scratch_operands = 1 : i64, tpu.core_type = #tpu.core_type<tc>, window_params = [{transform_indices = @transform_0, window_bounds = array<i64: 8, 512>}, {transform_indices = @transform_1, window_bounds = array<i64: 512, 128>}, {transform_indices = @transform_2, window_bounds = array<i64: 1, 128>}, {transform_indices = @transform_3, window_bounds = array<i64: 8, 128>}]} {
    %c0_i32 = arith.constant 0 : i32
    %0 = arith.cmpi eq, %arg2, %c0_i32 : i32
    %1 = arith.extui %0 : i1 to i32
    %c0_i32_0 = arith.constant 0 : i32
    %2 = arith.cmpi ne, %1, %c0_i32_0 : i32
    scf.if %2 {
      %cst_9 = arith.constant 0.000000e+00 : f32
      %12 = vector.broadcast %cst_9 : f32 to vector<8x128xf32>
      %c0_10 = arith.constant 0 : index
      %c0_11 = arith.constant 0 : index
      %13 = vector.load %arg7[%c0_10, %c0_11] : memref<8x128xf32, #tpu.memory_space<vmem>>, vector<8x128xf32>
      tpu.vector_store %arg7[%c0_10, %c0_11], %12 {strides = array<i32>} : memref<8x128xf32, #tpu.memory_space<vmem>>, vector<8x128xf32>,
    } else {
    }
    %c0 = arith.constant 0 : index
    %c0_1 = arith.constant 0 : index
    %3 = vector.load %arg7[%c0, %c0_1] : memref<8x128xf32, #tpu.memory_space<vmem>>, vector<8x128xf32>
    %c0_2 = arith.constant 0 : index
    %c0_3 = arith.constant 0 : index
    %4 = vector.load %arg3[%c0_2, %c0_3] : memref<8x512xbf16, #tpu.memory_space<vmem>>, vector<8x512xbf16>
    %c0_4 = arith.constant 0 : index
    %c0_5 = arith.constant 0 : index
    %5 = vector.load %arg4[%c0_4, %c0_5] : memref<512x128xbf16, #tpu.memory_space<vmem>>, vector<512x128xbf16>
    %cst = arith.constant dense<0.000000e+00> : vector<8x128xf32>
    %6 = tpu.matmul %4, %5, %cst {dimension_numbers = #tpu.dot_dimension_numbers<[1], [0], [0], [1], [0, 0, 1, 1], [], []>} : vector<8x512xbf16>, vector<512x128xbf16>, vector<8x128xf32> -> vector<8x128xf32>
    %7 = arith.addf %3, %6 : vector<8x128xf32>
    %c0_6 = arith.constant 0 : index
    %c0_7 = arith.constant 0 : index
    %8 = vector.load %arg7[%c0_6, %c0_7] : memref<8x128xf32, #tpu.memory_space<vmem>>, vector<8x128xf32>
    tpu.vector_store %arg7[%c0_6, %c0_7], %7 {strides = array<i32>} : memref<8x128xf32, #tpu.memory_space<vmem>>, vector<8x128xf32>,
    %c1_i32 = arith.constant 1 : i32
    %9 = arith.cmpi eq, %arg2, %c1_i32 : i32
    %10 = arith.extui %9 : i1 to i32
    %c0_i32_8 = arith.constant 0 : i32
    %11 = arith.cmpi ne, %10, %c0_i32_8 : i32
    scf.if %11 {
      %c0_9 = arith.constant 0 : index
      %c0_10 = arith.constant 0 : index
      %12 = vector.load %arg7[%c0_9, %c0_10] : memref<8x128xf32, #tpu.memory_space<vmem>>, vector<8x128xf32>
      %c0_11 = arith.constant 0 : index
      %c0_12 = arith.constant 0 : index
      %13 = vector.load %arg5[%c0_11, %c0_12] : memref<1x128xf32, #tpu.memory_space<vmem>>, vector<1x128xf32>
      %14 = vector.broadcast %13 : vector<1x128xf32> to vector<8x128xf32>
      %15 = arith.addf %12, %14 : vector<8x128xf32>
      %c0_13 = arith.constant 0 : index
      %c0_14 = arith.constant 0 : index
      %16 = vector.load %arg6[%c0_13, %c0_14] : memref<8x128xf32, #tpu.memory_space<vmem>>, vector<8x128xf32>
      tpu.vector_store %arg6[%c0_13, %c0_14], %15 {strides = array<i32>} : memref<8x128xf32, #tpu.memory_space<vmem>>, vector<8x128xf32>,
    } else {
    }
    return
  }
  func.func @transform_0(%arg0: i32, %arg1: i32, %arg2: i32) -> (i32, i32) {
    %c0_i32 = arith.constant 0 : i32
    return %arg0, %arg2 : i32, i32
  }
  func.func @transform_1(%arg0: i32, %arg1: i32, %arg2: i32) -> (i32, i32) {
    %c0_i32 = arith.constant 0 : i32
    return %arg2, %arg1 : i32, i32
  }
  func.func @transform_2(%arg0: i32, %arg1: i32, %arg2: i32) -> (i32, i32) {
    %c0_i32 = arith.constant 0 : i32
    %c0_i32_0 = arith.constant 0 : i32
    return %c0_i32, %arg1 : i32, i32
  }
  func.func @transform_3(%arg0: i32, %arg1: i32, %arg2: i32) -> (i32, i32) {
    %c0_i32 = arith.constant 0 : i32
    return %arg0, %arg1 : i32, i32
  }
}

module attributes {stable_mosaic.version = 11 : i64} {
  func.func @_bmm_nt_kernel(%arg0: i32, %arg1: i32, %arg2: memref<1x4x32xbf16, #tpu.memory_space<vmem>>, %arg3: memref<1x256x32xbf16, #tpu.memory_space<vmem>>, %arg4: memref<1x4x256xf32, #tpu.memory_space<vmem>>) attributes {dimension_semantics = [#tpu.dimension_semantics<parallel>, #tpu.dimension_semantics<parallel>], iteration_bounds = array<i64: 2, 1>, scalar_prefetch = 0 : i64, scratch_operands = 0 : i64, tpu.core_type = #tpu.core_type<tc>, window_params = [{transform_indices = @transform_0, window_bounds = array<i64: 1, 4, 32>}, {transform_indices = @transform_1, window_bounds = array<i64: 1, 256, 32>}, {transform_indices = @transform_2, window_bounds = array<i64: 1, 4, 256>}]} {
    %c0 = arith.constant 0 : index
    %c0_0 = arith.constant 0 : index
    %c0_1 = arith.constant 0 : index
    %0 = vector.load %arg2[%c0, %c0_0, %c0_1] : memref<1x4x32xbf16, #tpu.memory_space<vmem>>, vector<1x4x32xbf16>
    %1 = vector.shape_cast %0 : vector<1x4x32xbf16> to vector<4x32xbf16>
    %c0_2 = arith.constant 0 : index
    %c0_3 = arith.constant 0 : index
    %c0_4 = arith.constant 0 : index
    %2 = vector.load %arg3[%c0_2, %c0_3, %c0_4] : memref<1x256x32xbf16, #tpu.memory_space<vmem>>, vector<1x256x32xbf16>
    %3 = vector.shape_cast %2 : vector<1x256x32xbf16> to vector<256x32xbf16>
    %cst = arith.constant dense<0.000000e+00> : vector<4x256xf32>
    %4 = tpu.matmul %1, %3, %cst {dimension_numbers = #tpu.dot_dimension_numbers<[1], [1], [0], [0], [0, 0, 1, 0], [], []>} : vector<4x32xbf16>, vector<256x32xbf16>, vector<4x256xf32> -> vector<4x256xf32>
    %c0_5 = arith.constant 0 : index
    %c0_6 = arith.constant 0 : index
    %c0_7 = arith.constant 0 : index
    %5 = vector.load %arg4[%c0_5, %c0_6, %c0_7] : memref<1x4x256xf32, #tpu.memory_space<vmem>>, vector<1x4x256xf32>
    %6 = vector.shape_cast %5 : vector<1x4x256xf32> to vector<4x256xf32>
    %7 = vector.shape_cast %4 : vector<4x256xf32> to vector<1x4x256xf32>
    tpu.vector_store %arg4[%c0_5, %c0_6, %c0_7], %7 {strides = array<i32>} : memref<1x4x256xf32, #tpu.memory_space<vmem>>, vector<1x4x256xf32>,
    return
  }
  func.func @transform_0(%arg0: i32, %arg1: i32) -> (i32, i32, i32) {
    %c0_i32 = arith.constant 0 : i32
    %c0_i32_0 = arith.constant 0 : i32
    %c0_i32_1 = arith.constant 0 : i32
    return %arg0, %c0_i32, %c0_i32_0 : i32, i32, i32
  }
  func.func @transform_1(%arg0: i32, %arg1: i32) -> (i32, i32, i32) {
    %c0_i32 = arith.constant 0 : i32
    %c0_i32_0 = arith.constant 0 : i32
    return %arg0, %arg1, %c0_i32 : i32, i32, i32
  }
  func.func @transform_2(%arg0: i32, %arg1: i32) -> (i32, i32, i32) {
    %c0_i32 = arith.constant 0 : i32
    %c0_i32_0 = arith.constant 0 : i32
    return %arg0, %c0_i32, %arg1 : i32, i32, i32
  }
}

module attributes {stable_mosaic.version = 11 : i64} {
  func.func @_softmax_rows_kernel(%arg0: i32, %arg1: memref<8x256xf32, #tpu.memory_space<vmem>>, %arg2: memref<8x256xf32, #tpu.memory_space<vmem>>) attributes {dimension_semantics = [#tpu.dimension_semantics<parallel>], iteration_bounds = array<i64: 1>, scalar_prefetch = 0 : i64, scratch_operands = 0 : i64, tpu.core_type = #tpu.core_type<tc>, window_params = [{transform_indices = @transform_0, window_bounds = array<i64: 8, 256>}, {transform_indices = @transform_1, window_bounds = array<i64: 8, 256>}]} {
    %c0 = arith.constant 0 : index
    %c0_0 = arith.constant 0 : index
    %0 = vector.load %arg1[%c0, %c0_0] : memref<8x256xf32, #tpu.memory_space<vmem>>, vector<8x256xf32>
    %cst = arith.constant dense<0xFF800000> : vector<8xf32>
    %1 = vector.multi_reduction <maximumf>, %0, %cst [1] : vector<8x256xf32> to vector<8xf32>
    %2 = vector.shape_cast %1 : vector<8xf32> to vector<8x1xf32>
    %3 = vector.broadcast %2 : vector<8x1xf32> to vector<8x256xf32>
    %4 = arith.subf %0, %3 : vector<8x256xf32>
    %5 = math.exp %4 : vector<8x256xf32>
    %cst_1 = arith.constant dense<0.000000e+00> : vector<8xf32>
    %6 = vector.multi_reduction <add>, %5, %cst_1 [1] : vector<8x256xf32> to vector<8xf32>
    %7 = vector.shape_cast %6 : vector<8xf32> to vector<8x1xf32>
    %8 = vector.broadcast %7 : vector<8x1xf32> to vector<8x256xf32>
    %9 = arith.divf %5, %8 : vector<8x256xf32>
    %c0_2 = arith.constant 0 : index
    %c0_3 = arith.constant 0 : index
    %10 = vector.load %arg2[%c0_2, %c0_3] : memref<8x256xf32, #tpu.memory_space<vmem>>, vector<8x256xf32>
    tpu.vector_store %arg2[%c0_2, %c0_3], %9 {strides = array<i32>} : memref<8x256xf32, #tpu.memory_space<vmem>>, vector<8x256xf32>,
    return
  }
  func.func @transform_0(%arg0: i32) -> (i32, i32) {
    %c0_i32 = arith.constant 0 : i32
    %c0_i32_0 = arith.constant 0 : i32
    return %arg0, %c0_i32 : i32, i32
  }
  func.func @transform_1(%arg0: i32) -> (i32, i32) {
    %c0_i32 = arith.constant 0 : i32
    %c0_i32_0 = arith.constant 0 : i32
    return %arg0, %c0_i32 : i32, i32
  }
}

module attributes {stable_mosaic.version = 11 : i64} {
  func.func @_bmm_kacc_kernel(%arg0: i32, %arg1: i32, %arg2: memref<1x4x256xbf16, #tpu.memory_space<vmem>>, %arg3: memref<1x256x32xbf16, #tpu.memory_space<vmem>>, %arg4: memref<1x4x32xf32, #tpu.memory_space<vmem>>, %arg5: memref<4x32xf32, #tpu.memory_space<vmem>>) attributes {dimension_semantics = [#tpu.dimension_semantics<parallel>, #tpu.dimension_semantics<arbitrary>], iteration_bounds = array<i64: 2, 1>, scalar_prefetch = 0 : i64, scratch_operands = 1 : i64, tpu.core_type = #tpu.core_type<tc>, window_params = [{transform_indices = @transform_0, window_bounds = array<i64: 1, 4, 256>}, {transform_indices = @transform_1, window_bounds = array<i64: 1, 256, 32>}, {transform_indices = @transform_2, window_bounds = array<i64: 1, 4, 32>}]} {
    %c0_i32 = arith.constant 0 : i32
    %0 = arith.cmpi eq, %arg1, %c0_i32 : i32
    %1 = arith.extui %0 : i1 to i32
    %c0_i32_0 = arith.constant 0 : i32
    %2 = arith.cmpi ne, %1, %c0_i32_0 : i32
    scf.if %2 {
      %cst_12 = arith.constant 0.000000e+00 : f32
      %14 = vector.broadcast %cst_12 : f32 to vector<4x32xf32>
      %c0_13 = arith.constant 0 : index
      %c0_14 = arith.constant 0 : index
      %15 = vector.load %arg5[%c0_13, %c0_14] : memref<4x32xf32, #tpu.memory_space<vmem>>, vector<4x32xf32>
      tpu.vector_store %arg5[%c0_13, %c0_14], %14 {strides = array<i32>} : memref<4x32xf32, #tpu.memory_space<vmem>>, vector<4x32xf32>,
    } else {
    }
    %c0 = arith.constant 0 : index
    %c0_1 = arith.constant 0 : index
    %3 = vector.load %arg5[%c0, %c0_1] : memref<4x32xf32, #tpu.memory_space<vmem>>, vector<4x32xf32>
    %c0_2 = arith.constant 0 : index
    %c0_3 = arith.constant 0 : index
    %c0_4 = arith.constant 0 : index
    %4 = vector.load %arg2[%c0_2, %c0_3, %c0_4] : memref<1x4x256xbf16, #tpu.memory_space<vmem>>, vector<1x4x256xbf16>
    %5 = vector.shape_cast %4 : vector<1x4x256xbf16> to vector<4x256xbf16>
    %c0_5 = arith.constant 0 : index
    %c0_6 = arith.constant 0 : index
    %c0_7 = arith.constant 0 : index
    %6 = vector.load %arg3[%c0_5, %c0_6, %c0_7] : memref<1x256x32xbf16, #tpu.memory_space<vmem>>, vector<1x256x32xbf16>
    %7 = vector.shape_cast %6 : vector<1x256x32xbf16> to vector<256x32xbf16>
    %cst = arith.constant dense<0.000000e+00> : vector<4x32xf32>
    %8 = tpu.matmul %5, %7, %cst {dimension_numbers = #tpu.dot_dimension_numbers<[1], [0], [0], [1], [0, 0, 1, 1], [], []>} : vector<4x256xbf16>, vector<256x32xbf16>, vector<4x32xf32> -> vector<4x32xf32>
    %9 = arith.addf %3, %8 : vector<4x32xf32>
    %c0_8 = arith.constant 0 : index
    %c0_9 = arith.constant 0 : index
    %10 = vector.load %arg5[%c0_8, %c0_9] : memref<4x32xf32, #tpu.memory_space<vmem>>, vector<4x32xf32>
    tpu.vector_store %arg5[%c0_8, %c0_9], %9 {strides = array<i32>} : memref<4x32xf32, #tpu.memory_space<vmem>>, vector<4x32xf32>,
    %c0_i32_10 = arith.constant 0 : i32
    %11 = arith.cmpi eq, %arg1, %c0_i32_10 : i32
    %12 = arith.extui %11 : i1 to i32
    %c0_i32_11 = arith.constant 0 : i32
    %13 = arith.cmpi ne, %12, %c0_i32_11 : i32
    scf.if %13 {
      %c0_12 = arith.constant 0 : index
      %c0_13 = arith.constant 0 : index
      %14 = vector.load %arg5[%c0_12, %c0_13] : memref<4x32xf32, #tpu.memory_space<vmem>>, vector<4x32xf32>
      %c0_14 = arith.constant 0 : index
      %c0_15 = arith.constant 0 : index
      %c0_16 = arith.constant 0 : index
      %15 = vector.load %arg4[%c0_14, %c0_15, %c0_16] : memref<1x4x32xf32, #tpu.memory_space<vmem>>, vector<1x4x32xf32>
      %16 = vector.shape_cast %15 : vector<1x4x32xf32> to vector<4x32xf32>
      %17 = vector.shape_cast %14 : vector<4x32xf32> to vector<1x4x32xf32>
      tpu.vector_store %arg4[%c0_14, %c0_15, %c0_16], %17 {strides = array<i32>} : memref<1x4x32xf32, #tpu.memory_space<vmem>>, vector<1x4x32xf32>,
    } else {
    }
    return
  }
  func.func @transform_0(%arg0: i32, %arg1: i32) -> (i32, i32, i32) {
    %c0_i32 = arith.constant 0 : i32
    %c0_i32_0 = arith.constant 0 : i32
    return %arg0, %c0_i32, %arg1 : i32, i32, i32
  }
  func.func @transform_1(%arg0: i32, %arg1: i32) -> (i32, i32, i32) {
    %c0_i32 = arith.constant 0 : i32
    %c0_i32_0 = arith.constant 0 : i32
    return %arg0, %arg1, %c0_i32 : i32, i32, i32
  }
  func.func @transform_2(%arg0: i32, %arg1: i32) -> (i32, i32, i32) {
    %c0_i32 = arith.constant 0 : i32
    %c0_i32_0 = arith.constant 0 : i32
    %c0_i32_1 = arith.constant 0 : i32
    return %arg0, %c0_i32, %c0_i32_0 : i32, i32, i32
  }
}

module attributes {stable_mosaic.version = 11 : i64} {
  func.func @_matmul_kernel(%arg0: i32, %arg1: i32, %arg2: i32, %arg3: memref<8x128xbf16, #tpu.memory_space<vmem>>, %arg4: memref<128x128xbf16, #tpu.memory_space<vmem>>, %arg5: memref<1x128xf32, #tpu.memory_space<vmem>>, %arg6: memref<8x128xf32, #tpu.memory_space<vmem>>, %arg7: memref<8x128xf32, #tpu.memory_space<vmem>>) attributes {dimension_semantics = [#tpu.dimension_semantics<parallel>, #tpu.dimension_semantics<parallel>, #tpu.dimension_semantics<arbitrary>], iteration_bounds = array<i64: 1, 1, 1>, scalar_prefetch = 0 : i64, scratch_operands = 1 : i64, tpu.core_type = #tpu.core_type<tc>, window_params = [{transform_indices = @transform_0, window_bounds = array<i64: 8, 128>}, {transform_indices = @transform_1, window_bounds = array<i64: 128, 128>}, {transform_indices = @transform_2, window_bounds = array<i64: 1, 128>}, {transform_indices = @transform_3, window_bounds = array<i64: 8, 128>}]} {
    %c0_i32 = arith.constant 0 : i32
    %0 = arith.cmpi eq, %arg2, %c0_i32 : i32
    %1 = arith.extui %0 : i1 to i32
    %c0_i32_0 = arith.constant 0 : i32
    %2 = arith.cmpi ne, %1, %c0_i32_0 : i32
    scf.if %2 {
      %cst_10 = arith.constant 0.000000e+00 : f32
      %12 = vector.broadcast %cst_10 : f32 to vector<8x128xf32>
      %c0_11 = arith.constant 0 : index
      %c0_12 = arith.constant 0 : index
      %13 = vector.load %arg7[%c0_11, %c0_12] : memref<8x128xf32, #tpu.memory_space<vmem>>, vector<8x128xf32>
      tpu.vector_store %arg7[%c0_11, %c0_12], %12 {strides = array<i32>} : memref<8x128xf32, #tpu.memory_space<vmem>>, vector<8x128xf32>,
    } else {
    }
    %c0 = arith.constant 0 : index
    %c0_1 = arith.constant 0 : index
    %3 = vector.load %arg7[%c0, %c0_1] : memref<8x128xf32, #tpu.memory_space<vmem>>, vector<8x128xf32>
    %c0_2 = arith.constant 0 : index
    %c0_3 = arith.constant 0 : index
    %4 = vector.load %arg3[%c0_2, %c0_3] : memref<8x128xbf16, #tpu.memory_space<vmem>>, vector<8x128xbf16>
    %c0_4 = arith.constant 0 : index
    %c0_5 = arith.constant 0 : index
    %5 = vector.load %arg4[%c0_4, %c0_5] : memref<128x128xbf16, #tpu.memory_space<vmem>>, vector<128x128xbf16>
    %cst = arith.constant dense<0.000000e+00> : vector<8x128xf32>
    %6 = tpu.matmul %4, %5, %cst {dimension_numbers = #tpu.dot_dimension_numbers<[1], [0], [0], [1], [0, 0, 1, 1], [], []>} : vector<8x128xbf16>, vector<128x128xbf16>, vector<8x128xf32> -> vector<8x128xf32>
    %7 = arith.addf %3, %6 : vector<8x128xf32>
    %c0_6 = arith.constant 0 : index
    %c0_7 = arith.constant 0 : index
    %8 = vector.load %arg7[%c0_6, %c0_7] : memref<8x128xf32, #tpu.memory_space<vmem>>, vector<8x128xf32>
    tpu.vector_store %arg7[%c0_6, %c0_7], %7 {strides = array<i32>} : memref<8x128xf32, #tpu.memory_space<vmem>>, vector<8x128xf32>,
    %c0_i32_8 = arith.constant 0 : i32
    %9 = arith.cmpi eq, %arg2, %c0_i32_8 : i32
    %10 = arith.extui %9 : i1 to i32
    %c0_i32_9 = arith.constant 0 : i32
    %11 = arith.cmpi ne, %10, %c0_i32_9 : i32
    scf.if %11 {
      %c0_10 = arith.constant 0 : index
      %c0_11 = arith.constant 0 : index
      %12 = vector.load %arg7[%c0_10, %c0_11] : memref<8x128xf32, #tpu.memory_space<vmem>>, vector<8x128xf32>
      %c0_12 = arith.constant 0 : index
      %c0_13 = arith.constant 0 : index
      %13 = vector.load %arg5[%c0_12, %c0_13] : memref<1x128xf32, #tpu.memory_space<vmem>>, vector<1x128xf32>
      %14 = vector.broadcast %13 : vector<1x128xf32> to vector<8x128xf32>
      %15 = arith.addf %12, %14 : vector<8x128xf32>
      %cst_14 = arith.constant 0.000000e+00 : f32
      %16 = vector.broadcast %cst_14 : f32 to vector<8x128xf32>
      %17 = arith.cmpf oge, %15, %16 : vector<8x128xf32>
      %cst_15 = arith.constant 0.00999999977 : f32
      %18 = vector.broadcast %cst_15 : f32 to vector<8x128xf32>
      %19 = arith.mulf %18, %15 : vector<8x128xf32>
      %20 = arith.select %17, %15, %19 : vector<8x128xi1>, vector<8x128xf32>
      %c0_16 = arith.constant 0 : index
      %c0_17 = arith.constant 0 : index
      %21 = vector.load %arg6[%c0_16, %c0_17] : memref<8x128xf32, #tpu.memory_space<vmem>>, vector<8x128xf32>
      tpu.vector_store %arg6[%c0_16, %c0_17], %20 {strides = array<i32>} : memref<8x128xf32, #tpu.memory_space<vmem>>, vector<8x128xf32>,
    } else {
    }
    return
  }
  func.func @transform_0(%arg0: i32, %arg1: i32, %arg2: i32) -> (i32, i32) {
    %c0_i32 = arith.constant 0 : i32
    return %arg0, %arg2 : i32, i32
  }
  func.func @transform_1(%arg0: i32, %arg1: i32, %arg2: i32) -> (i32, i32) {
    %c0_i32 = arith.constant 0 : i32
    return %arg2, %arg1 : i32, i32
  }
  func.func @transform_2(%arg0: i32, %arg1: i32, %arg2: i32) -> (i32, i32) {
    %c0_i32 = arith.constant 0 : i32
    %c0_i32_0 = arith.constant 0 : i32
    return %c0_i32, %arg1 : i32, i32
  }
  func.func @transform_3(%arg0: i32, %arg1: i32, %arg2: i32) -> (i32, i32) {
    %c0_i32 = arith.constant 0 : i32
    return %arg0, %arg1 : i32, i32
  }
}

module attributes {stable_mosaic.version = 11 : i64} {
  func.func @_matmul_kernel(%arg0: i32, %arg1: i32, %arg2: i32, %arg3: memref<8x128xbf16, #tpu.memory_space<vmem>>, %arg4: memref<128x256xbf16, #tpu.memory_space<vmem>>, %arg5: memref<1x256xf32, #tpu.memory_space<vmem>>, %arg6: memref<8x256xf32, #tpu.memory_space<vmem>>, %arg7: memref<8x256xf32, #tpu.memory_space<vmem>>) attributes {dimension_semantics = [#tpu.dimension_semantics<parallel>, #tpu.dimension_semantics<parallel>, #tpu.dimension_semantics<arbitrary>], iteration_bounds = array<i64: 1, 1, 1>, scalar_prefetch = 0 : i64, scratch_operands = 1 : i64, tpu.core_type = #tpu.core_type<tc>, window_params = [{transform_indices = @transform_0, window_bounds = array<i64: 8, 128>}, {transform_indices = @transform_1, window_bounds = array<i64: 128, 256>}, {transform_indices = @transform_2, window_bounds = array<i64: 1, 256>}, {transform_indices = @transform_3, window_bounds = array<i64: 8, 256>}]} {
    %c0_i32 = arith.constant 0 : i32
    %0 = arith.cmpi eq, %arg2, %c0_i32 : i32
    %1 = arith.extui %0 : i1 to i32
    %c0_i32_0 = arith.constant 0 : i32
    %2 = arith.cmpi ne, %1, %c0_i32_0 : i32
    scf.if %2 {
      %cst_10 = arith.constant 0.000000e+00 : f32
      %12 = vector.broadcast %cst_10 : f32 to vector<8x256xf32>
      %c0_11 = arith.constant 0 : index
      %c0_12 = arith.constant 0 : index
      %13 = vector.load %arg7[%c0_11, %c0_12] : memref<8x256xf32, #tpu.memory_space<vmem>>, vector<8x256xf32>
      tpu.vector_store %arg7[%c0_11, %c0_12], %12 {strides = array<i32>} : memref<8x256xf32, #tpu.memory_space<vmem>>, vector<8x256xf32>,
    } else {
    }
    %c0 = arith.constant 0 : index
    %c0_1 = arith.constant 0 : index
    %3 = vector.load %arg7[%c0, %c0_1] : memref<8x256xf32, #tpu.memory_space<vmem>>, vector<8x256xf32>
    %c0_2 = arith.constant 0 : index
    %c0_3 = arith.constant 0 : index
    %4 = vector.load %arg3[%c0_2, %c0_3] : memref<8x128xbf16, #tpu.memory_space<vmem>>, vector<8x128xbf16>
    %c0_4 = arith.constant 0 : index
    %c0_5 = arith.constant 0 : index
    %5 = vector.load %arg4[%c0_4, %c0_5] : memref<128x256xbf16, #tpu.memory_space<vmem>>, vector<128x256xbf16>
    %cst = arith.constant dense<0.000000e+00> : vector<8x256xf32>
    %6 = tpu.matmul %4, %5, %cst {dimension_numbers = #tpu.dot_dimension_numbers<[1], [0], [0], [1], [0, 0, 1, 1], [], []>} : vector<8x128xbf16>, vector<128x256xbf16>, vector<8x256xf32> -> vector<8x256xf32>
    %7 = arith.addf %3, %6 : vector<8x256xf32>
    %c0_6 = arith.constant 0 : index
    %c0_7 = arith.constant 0 : index
    %8 = vector.load %arg7[%c0_6, %c0_7] : memref<8x256xf32, #tpu.memory_space<vmem>>, vector<8x256xf32>
    tpu.vector_store %arg7[%c0_6, %c0_7], %7 {strides = array<i32>} : memref<8x256xf32, #tpu.memory_space<vmem>>, vector<8x256xf32>,
    %c0_i32_8 = arith.constant 0 : i32
    %9 = arith.cmpi eq, %arg2, %c0_i32_8 : i32
    %10 = arith.extui %9 : i1 to i32
    %c0_i32_9 = arith.constant 0 : i32
    %11 = arith.cmpi ne, %10, %c0_i32_9 : i32
    scf.if %11 {
      %c0_10 = arith.constant 0 : index
      %c0_11 = arith.constant 0 : index
      %12 = vector.load %arg7[%c0_10, %c0_11] : memref<8x256xf32, #tpu.memory_space<vmem>>, vector<8x256xf32>
      %c0_12 = arith.constant 0 : index
      %c0_13 = arith.constant 0 : index
      %13 = vector.load %arg5[%c0_12, %c0_13] : memref<1x256xf32, #tpu.memory_space<vmem>>, vector<1x256xf32>
      %14 = vector.broadcast %13 : vector<1x256xf32> to vector<8x256xf32>
      %15 = arith.addf %12, %14 : vector<8x256xf32>
      %cst_14 = arith.constant 0.000000e+00 : f32
      %16 = vector.broadcast %cst_14 : f32 to vector<8x256xf32>
      %17 = arith.cmpf oge, %15, %16 : vector<8x256xf32>
      %cst_15 = arith.constant 0.00999999977 : f32
      %18 = vector.broadcast %cst_15 : f32 to vector<8x256xf32>
      %19 = arith.mulf %18, %15 : vector<8x256xf32>
      %20 = arith.select %17, %15, %19 : vector<8x256xi1>, vector<8x256xf32>
      %c0_16 = arith.constant 0 : index
      %c0_17 = arith.constant 0 : index
      %21 = vector.load %arg6[%c0_16, %c0_17] : memref<8x256xf32, #tpu.memory_space<vmem>>, vector<8x256xf32>
      tpu.vector_store %arg6[%c0_16, %c0_17], %20 {strides = array<i32>} : memref<8x256xf32, #tpu.memory_space<vmem>>, vector<8x256xf32>,
    } else {
    }
    return
  }
  func.func @transform_0(%arg0: i32, %arg1: i32, %arg2: i32) -> (i32, i32) {
    %c0_i32 = arith.constant 0 : i32
    return %arg0, %arg2 : i32, i32
  }
  func.func @transform_1(%arg0: i32, %arg1: i32, %arg2: i32) -> (i32, i32) {
    %c0_i32 = arith.constant 0 : i32
    return %arg2, %arg1 : i32, i32
  }
  func.func @transform_2(%arg0: i32, %arg1: i32, %arg2: i32) -> (i32, i32) {
    %c0_i32 = arith.constant 0 : i32
    %c0_i32_0 = arith.constant 0 : i32
    return %c0_i32, %arg1 : i32, i32
  }
  func.func @transform_3(%arg0: i32, %arg1: i32, %arg2: i32) -> (i32, i32) {
    %c0_i32 = arith.constant 0 : i32
    return %arg0, %arg1 : i32, i32
  }
}

module attributes {stable_mosaic.version = 11 : i64} {
  func.func @_matmul_kernel(%arg0: i32, %arg1: i32, %arg2: i32, %arg3: memref<8x256xbf16, #tpu.memory_space<vmem>>, %arg4: memref<256x128xbf16, #tpu.memory_space<vmem>>, %arg5: memref<1x128xf32, #tpu.memory_space<vmem>>, %arg6: memref<8x128xf32, #tpu.memory_space<vmem>>, %arg7: memref<8x128xf32, #tpu.memory_space<vmem>>) attributes {dimension_semantics = [#tpu.dimension_semantics<parallel>, #tpu.dimension_semantics<parallel>, #tpu.dimension_semantics<arbitrary>], iteration_bounds = array<i64: 1, 1, 1>, scalar_prefetch = 0 : i64, scratch_operands = 1 : i64, tpu.core_type = #tpu.core_type<tc>, window_params = [{transform_indices = @transform_0, window_bounds = array<i64: 8, 256>}, {transform_indices = @transform_1, window_bounds = array<i64: 256, 128>}, {transform_indices = @transform_2, window_bounds = array<i64: 1, 128>}, {transform_indices = @transform_3, window_bounds = array<i64: 8, 128>}]} {
    %c0_i32 = arith.constant 0 : i32
    %0 = arith.cmpi eq, %arg2, %c0_i32 : i32
    %1 = arith.extui %0 : i1 to i32
    %c0_i32_0 = arith.constant 0 : i32
    %2 = arith.cmpi ne, %1, %c0_i32_0 : i32
    scf.if %2 {
      %cst_10 = arith.constant 0.000000e+00 : f32
      %12 = vector.broadcast %cst_10 : f32 to vector<8x128xf32>
      %c0_11 = arith.constant 0 : index
      %c0_12 = arith.constant 0 : index
      %13 = vector.load %arg7[%c0_11, %c0_12] : memref<8x128xf32, #tpu.memory_space<vmem>>, vector<8x128xf32>
      tpu.vector_store %arg7[%c0_11, %c0_12], %12 {strides = array<i32>} : memref<8x128xf32, #tpu.memory_space<vmem>>, vector<8x128xf32>,
    } else {
    }
    %c0 = arith.constant 0 : index
    %c0_1 = arith.constant 0 : index
    %3 = vector.load %arg7[%c0, %c0_1] : memref<8x128xf32, #tpu.memory_space<vmem>>, vector<8x128xf32>
    %c0_2 = arith.constant 0 : index
    %c0_3 = arith.constant 0 : index
    %4 = vector.load %arg3[%c0_2, %c0_3] : memref<8x256xbf16, #tpu.memory_space<vmem>>, vector<8x256xbf16>
    %c0_4 = arith.constant 0 : index
    %c0_5 = arith.constant 0 : index
    %5 = vector.load %arg4[%c0_4, %c0_5] : memref<256x128xbf16, #tpu.memory_space<vmem>>, vector<256x128xbf16>
    %cst = arith.constant dense<0.000000e+00> : vector<8x128xf32>
    %6 = tpu.matmul %4, %5, %cst {dimension_numbers = #tpu.dot_dimension_numbers<[1], [0], [0], [1], [0, 0, 1, 1], [], []>} : vector<8x256xbf16>, vector<256x128xbf16>, vector<8x128xf32> -> vector<8x128xf32>
    %7 = arith.addf %3, %6 : vector<8x128xf32>
    %c0_6 = arith.constant 0 : index
    %c0_7 = arith.constant 0 : index
    %8 = vector.load %arg7[%c0_6, %c0_7] : memref<8x128xf32, #tpu.memory_space<vmem>>, vector<8x128xf32>
    tpu.vector_store %arg7[%c0_6, %c0_7], %7 {strides = array<i32>} : memref<8x128xf32, #tpu.memory_space<vmem>>, vector<8x128xf32>,
    %c0_i32_8 = arith.constant 0 : i32
    %9 = arith.cmpi eq, %arg2, %c0_i32_8 : i32
    %10 = arith.extui %9 : i1 to i32
    %c0_i32_9 = arith.constant 0 : i32
    %11 = arith.cmpi ne, %10, %c0_i32_9 : i32
    scf.if %11 {
      %c0_10 = arith.constant 0 : index
      %c0_11 = arith.constant 0 : index
      %12 = vector.load %arg7[%c0_10, %c0_11] : memref<8x128xf32, #tpu.memory_space<vmem>>, vector<8x128xf32>
      %c0_12 = arith.constant 0 : index
      %c0_13 = arith.constant 0 : index
      %13 = vector.load %arg5[%c0_12, %c0_13] : memref<1x128xf32, #tpu.memory_space<vmem>>, vector<1x128xf32>
      %14 = vector.broadcast %13 : vector<1x128xf32> to vector<8x128xf32>
      %15 = arith.addf %12, %14 : vector<8x128xf32>
      %c0_14 = arith.constant 0 : index
      %c0_15 = arith.constant 0 : index
      %16 = vector.load %arg6[%c0_14, %c0_15] : memref<8x128xf32, #tpu.memory_space<vmem>>, vector<8x128xf32>
      tpu.vector_store %arg6[%c0_14, %c0_15], %15 {strides = array<i32>} : memref<8x128xf32, #tpu.memory_space<vmem>>, vector<8x128xf32>,
    } else {
    }
    return
  }
  func.func @transform_0(%arg0: i32, %arg1: i32, %arg2: i32) -> (i32, i32) {
    %c0_i32 = arith.constant 0 : i32
    return %arg0, %arg2 : i32, i32
  }
  func.func @transform_1(%arg0: i32, %arg1: i32, %arg2: i32) -> (i32, i32) {
    %c0_i32 = arith.constant 0 : i32
    return %arg2, %arg1 : i32, i32
  }
  func.func @transform_2(%arg0: i32, %arg1: i32, %arg2: i32) -> (i32, i32) {
    %c0_i32 = arith.constant 0 : i32
    %c0_i32_0 = arith.constant 0 : i32
    return %c0_i32, %arg1 : i32, i32
  }
  func.func @transform_3(%arg0: i32, %arg1: i32, %arg2: i32) -> (i32, i32) {
    %c0_i32 = arith.constant 0 : i32
    return %arg0, %arg1 : i32, i32
  }
}

module attributes {stable_mosaic.version = 11 : i64} {
  func.func @_prob_expect_kernel(%arg0: i32, %arg1: i32, %arg2: memref<1x4x256xbf16, #tpu.memory_space<vmem>>, %arg3: memref<16x4xbf16, #tpu.memory_space<vmem>>, %arg4: memref<16x1xf32, #tpu.memory_space<vmem>>, %arg5: memref<1x1x16xf32, #tpu.memory_space<vmem>>, %arg6: memref<1x1x256xf32, #tpu.memory_space<vmem>>) attributes {dimension_semantics = [#tpu.dimension_semantics<parallel>, #tpu.dimension_semantics<parallel>], iteration_bounds = array<i64: 2, 1>, scalar_prefetch = 0 : i64, scratch_operands = 0 : i64, tpu.core_type = #tpu.core_type<tc>, window_params = [{transform_indices = @transform_0, window_bounds = array<i64: 1, 4, 256>}, {pipeline_mode = #tpu.pipeline_mode<synchronous>, transform_indices = @transform_1, window_bounds = array<i64: 16, 4>}, {pipeline_mode = #tpu.pipeline_mode<synchronous>, transform_indices = @transform_2, window_bounds = array<i64: 16, 1>}, {transform_indices = @transform_3, window_bounds = array<i64: 1, 1, 16>}, {transform_indices = @transform_4, window_bounds = array<i64: 1, 1, 256>}]} {
    %c0 = arith.constant 0 : index
    %c0_0 = arith.constant 0 : index
    %c0_1 = arith.constant 0 : index
    %0 = vector.load %arg2[%c0, %c0_0, %c0_1] : memref<1x4x256xbf16, #tpu.memory_space<vmem>>, vector<1x4x256xbf16>
    %1 = vector.shape_cast %0 : vector<1x4x256xbf16> to vector<4x256xbf16>
    %c0_2 = arith.constant 0 : index
    %c0_3 = arith.constant 0 : index
    %2 = vector.load %arg3[%c0_2, %c0_3] : memref<16x4xbf16, #tpu.memory_space<vmem>>, vector<16x4xbf16>
    %cst = arith.constant dense<0.000000e+00> : vector<16x256xf32>
    %3 = tpu.matmul %2, %1, %cst {dimension_numbers = #tpu.dot_dimension_numbers<[1], [0], [0], [1], [0, 0, 1, 1], [], []>} : vector<16x4xbf16>, vector<4x256xbf16>, vector<16x256xf32> -> vector<16x256xf32>
    %c0_4 = arith.constant 0 : index
    %c0_5 = arith.constant 0 : index
    %4 = vector.load %arg4[%c0_4, %c0_5] : memref<16x1xf32, #tpu.memory_space<vmem>>, vector<16x1xf32>
    %5 = vector.broadcast %4 : vector<16x1xf32> to vector<16x256xf32>
    %6 = arith.addf %3, %5 : vector<16x256xf32>
    %cst_6 = arith.constant dense<0xFF800000> : vector<256xf32>
    %7 = vector.multi_reduction <maximumf>, %6, %cst_6 [0] : vector<16x256xf32> to vector<256xf32>
    %8 = vector.shape_cast %7 : vector<256xf32> to vector<1x256xf32>
    %9 = vector.broadcast %8 : vector<1x256xf32> to vector<16x256xf32>
    %10 = arith.subf %6, %9 : vector<16x256xf32>
    %11 = math.exp %10 : vector<16x256xf32>
    %cst_7 = arith.constant dense<0.000000e+00> : vector<256xf32>
    %12 = vector.multi_reduction <add>, %11, %cst_7 [0] : vector<16x256xf32> to vector<256xf32>
    %13 = vector.shape_cast %12 : vector<256xf32> to vector<1x256xf32>
    %14 = vector.broadcast %13 : vector<1x256xf32> to vector<16x256xf32>
    %15 = arith.divf %11, %14 : vector<16x256xf32>
    %c0_8 = arith.constant 0 : index
    %c0_9 = arith.constant 0 : index
    %c0_10 = arith.constant 0 : index
    %16 = vector.load %arg5[%c0_8, %c0_9, %c0_10] : memref<1x1x16xf32, #tpu.memory_space<vmem>>, vector<1x1x16xf32>
    %17 = vector.shape_cast %16 : vector<1x1x16xf32> to vector<1x16xf32>
    %cst_11 = arith.constant dense<0.000000e+00> : vector<1x256xf32>
    %18 = tpu.matmul %17, %15, %cst_11 {dimension_numbers = #tpu.dot_dimension_numbers<[1], [0], [0], [1], [0, 0, 1, 1], [], []>} : vector<1x16xf32>, vector<16x256xf32>, vector<1x256xf32> -> vector<1x256xf32>
    %c0_12 = arith.constant 0 : index
    %c0_13 = arith.constant 0 : index
    %c0_14 = arith.constant 0 : index
    %19 = vector.load %arg6[%c0_12, %c0_13, %c0_14] : memref<1x1x256xf32, #tpu.memory_space<vmem>>, vector<1x1x256xf32>
    %20 = vector.shape_cast %19 : vector<1x1x256xf32> to vector<1x256xf32>
    %21 = vector.shape_cast %18 : vector<1x256xf32> to vector<1x1x256xf32>
    tpu.vector_store %arg6[%c0_12, %c0_13, %c0_14], %21 {strides = array<i32>} : memref<1x1x256xf32, #tpu.memory_space<vmem>>, vector<1x1x256xf32>,
    return
  }
  func.func @transform_0(%arg0: i32, %arg1: i32) -> (i32, i32, i32) {
    %c0_i32 = arith.constant 0 : i32
    %c0_i32_0 = arith.constant 0 : i32
    return %arg0, %c0_i32, %arg1 : i32, i32, i32
  }
  func.func @transform_1(%arg0: i32, %arg1: i32) -> (i32, i32) {
    %c0_i32 = arith.constant 0 : i32
    %c0_i32_0 = arith.constant 0 : i32
    %c0_i32_1 = arith.constant 0 : i32
    return %c0_i32, %c0_i32_0 : i32, i32
  }
  func.func @transform_2(%arg0: i32, %arg1: i32) -> (i32, i32) {
    %c0_i32 = arith.constant 0 : i32
    %c0_i32_0 = arith.constant 0 : i32
    %c0_i32_1 = arith.constant 0 : i32
    return %c0_i32, %c0_i32_0 : i32, i32
  }
  func.func @transform_3(%arg0: i32, %arg1: i32) -> (i32, i32, i32) {
    %c0_i32 = arith.constant 0 : i32
    %c0_i32_0 = arith.constant 0 : i32
    %c0_i32_1 = arith.constant 0 : i32
    return %arg0, %c0_i32, %c0_i32_0 : i32, i32, i32
  }
  func.func @transform_4(%arg0: i32, %arg1: i32) -> (i32, i32, i32) {
    %c0_i32 = arith.constant 0 : i32
    %c0_i32_0 = arith.constant 0 : i32
    return %arg0, %c0_i32, %arg1 : i32, i32, i32
  }
}

</mosaic_0001>

<llo_original>
// kernel: sqldepth_forward.39
$region0: #{sqldepth_forward.39}
  #allocation0 [shape = 'u32[]', space=smem, size = 0x4, offset = 0x4, fixed_abs, tag = 'smem constant byte address 0x4 - core index']
  #allocation1 [shape = 'u32[144,128]{1,0:T(1,128)}', space=vmem, size = 0x12000, scoped, tag = 'internal scratch']
  #allocation2 [shape = 'f32[256,128]{1,0:T(8,128)}', space=vmem, size = 0x20000, scoped, tag = 'scratch operand']
  %s0 = inlined_call_operand.vmem [shape: bf16[512,128], index: 0, kind: input, shape index: {}]
  %s1 = inlined_call_operand.vmem [shape: bf16[128,128], index: 1, kind: input, shape index: {}]
  %s2 = inlined_call_operand.vmem [shape: f32[1,128], index: 2, kind: input, shape index: {}]
  %s3 = inlined_call_operand.vmem [shape: f32[512,128], index: 3, kind: output, shape index: {}]
  %s4 = sld [smem:[#allocation0]]
  $region53: #{sqldepth_forward.39} parent=0
    _
  %s6 = ssub.s32 1, %s4
  %s7 = scalar_select 0, %s6, %s4
  loop: start=0, step=1, limit=4
  $region2: #{sqldepth_forward.39} parent=0 // loop_pre_header
    _
  $region3: #{sqldepth_forward.39} parent=0 // loop_header
    %s9 = sphi 0, %s13
    %p10 = scmp.ge.s32.totalorder %s9, 4
    %s16 = sphi 0, %s35
    %s17 = sphi 0, %s31
    %s18 = sphi 0, %s27
    %s19 = sphi 0, %s16
    %s20 = sphi 0, %s17
    %s21 = sphi 0, %s18
    %s22 = sphi 0, %s19
    %s23 = sphi 0, %s20
    %s24 = sphi 0, %s21
    %s40 = sphi 0, %s42
    %s43 = sphi 0, %s40
    %s44 = sphi 0, %s43
    %s60 = sphi 0, %s44
    %s68 = sphi 0, %s70
    %s71 = sphi 0, %s68
    %s72 = sphi 0, %s71
    %s88 = sphi 0, %s72
    %s94 = sphi 0, %s96
    %s97 = sphi 0, %s94
    %s98 = sphi 0, %s97
    %s114 = sphi 0, %s98
    %s122 = sphi 0, %s124
    %s125 = sphi 0, %s122
    %s126 = sphi 0, %s125
    %s142 = sphi 0, %s126
  $region4: #{sqldepth_forward.39} parent=0 // loop_header_branch
    %12 = sbr.rel (%p10) target = $region8
  $region5: #{sqldepth_forward.39} parent=0 // loop_body
    %s14 = ssub.s32 %s9, 1
    %s15 = ssub.s32 %s9, 2
    %s25 = sadd.s32 1, %s18
    %p26 = scmp.ge.s32.totalorder %s25, 1
    %s27 = scalar_select %p26, 0, %s25
    %s28 = sadd.s32 1, %s17
    %s29 = scalar_select %p26, %s28, %s17
    %p30 = scmp.ge.s32.totalorder %s29, 1
    %s31 = scalar_select %p30, 0, %s29
    %s32 = sadd.s32 1, %s16
    %s33 = scalar_select %p30, %s32, %s16
    %p34 = scmp.ge.s32.totalorder %s33, 2
    %s35 = scalar_select %p34, 0, %s33
    %s36 = ssub.s32 %s16, %s35
    %s37 = ssub.s32 %s18, %s27
    %s38 = sor.u32 %s36, %s37
    %p39 = scmp.eq.s32.totalorder %s38, 0
    %s41 = sadd.s32 %s40, 1
    %s42 = scalar_select %p39, %s40, %s41
    %p45 = pneg %p39
    %p46 = scmp.eq.s32.totalorder %s9, 1
    %p47 = por %p45, %p46
    %p48 = scmp.ne.s32.totalorder %s40, %s43
    %p49 = scmp.eq.s32.totalorder %s9, 0
    %p50 = por %p48, %p49
    %p51 = scmp.ne.s32.totalorder %s40, %s43
    %p52 = scmp.eq.s32.totalorder %s14, 1
    %p53 = por %p51, %p52
    %p54 = scmp.ne.s32.totalorder %s43, %s44
    %p55 = scmp.eq.s32.totalorder %s14, 0
    %p56 = por %p54, %p55
    %p57 = scmp.ne.s32.totalorder %s43, %s44
    %p58 = scmp.eq.s32.totalorder %s15, 1
    %p59 = por %p57, %p58
    %p61 = scmp.ne.s32.totalorder %s44, %s60
    %p62 = scmp.eq.s32.totalorder %s15, 0
    %p63 = por %p61, %p62
    %s64 = ssub.s32 %s18, %s27
    %s65 = ssub.s32 %s17, %s31
    %s66 = sor.u32 %s64, %s65
    %p67 = scmp.eq.s32.totalorder %s66, 0
    %s69 = sadd.s32 %s68, 1
    %s70 = scalar_select %p67, %s68, %s69
    %p73 = pneg %p67
    %p74 = scmp.eq.s32.totalorder %s9, 1
    %p75 = por %p73, %p74
    %p76 = scmp.ne.s32.totalorder %s68, %s71
    %p77 = scmp.eq.s32.totalorder %s9, 0
    %p78 = por %p76, %p77
    %p79 = scmp.ne.s32.totalorder %s68, %s71
    %p80 = scmp.eq.s32.totalorder %s14, 1
    %p81 = por %p79, %p80
    %p82 = scmp.ne.s32.totalorder %s71, %s72
    %p83 = scmp.eq.s32.totalorder %s14, 0
    %p84 = por %p82, %p83
    %p85 = scmp.ne.s32.totalorder %s71, %s72
    %p86 = scmp.eq.s32.totalorder %s15, 1
    %p87 = por %p85, %p86
    %p89 = scmp.ne.s32.totalorder %s72, %s88
    %p90 = scmp.eq.s32.totalorder %s15, 0
    %p91 = por %p89, %p90
    %s92 = ssub.s32 %s17, %s31
    %p93 = scmp.eq.s32.totalorder %s92, 0
    %s95 = sadd.s32 %s94, 1
    %s96 = scalar_select %p93, %s94, %s95
    %p99 = pneg %p93
    %p100 = scmp.eq.s32.totalorder %s9, 1
    %p101 = por %p99, %p100
    %p102 = scmp.ne.s32.totalorder %s94, %s97
    %p103 = scmp.eq.s32.totalorder %s9, 0
    %p104 = por %p102, %p103
    %p105 = scmp.ne.s32.totalorder %s94, %s97
    %p106 = scmp.eq.s32.totalorder %s14, 1
    %p107 = por %p105, %p106
    %p108 = scmp.ne.s32.totalorder %s97, %s98
    %p109 = scmp.eq.s32.totalorder %s14, 0
    %p110 = por %p108, %p109
    %p111 = scmp.ne.s32.totalorder %s97, %s98
    %p112 = scmp.eq.s32.totalorder %s15, 1
    %p113 = por %p111, %p112
    %p115 = scmp.ne.s32.totalorder %s98, %s114
    %p116 = scmp.eq.s32.totalorder %s15, 0
    %p117 = por %p115, %p116
    %s118 = ssub.s32 %s16, %s35
    %s119 = ssub.s32 %s17, %s31
    %s120 = sor.u32 %s118, %s119
    %p121 = scmp.eq.s32.totalorder %s120, 0
    %s123 = sadd.s32 %s122, 1
    %s124 = scalar_select %p121, %s122, %s123
    %p127 = pneg %p121
    %p128 = scmp.eq.s32.totalorder %s9, 1
    %p129 = por %p127, %p128
    %p130 = scmp.ne.s32.totalorder %s122, %s125
    %p131 = scmp.eq.s32.totalorder %s9, 0
    %p132 = por %p130, %p131
    %p133 = scmp.ne.s32.totalorder %s122, %s125
    %p134 = scmp.eq.s32.totalorder %s14, 1
    %p135 = por %p133, %p134
    %p136 = scmp.ne.s32.totalorder %s125, %s126
    %p137 = scmp.eq.s32.totalorder %s14, 0
    %p138 = por %p136, %p137
    %p139 = scmp.ne.s32.totalorder %s125, %s126
    %p140 = scmp.eq.s32.totalorder %s15, 1
    %p141 = por %p139, %p140
    %p143 = scmp.ne.s32.totalorder %s126, %s142
    %p144 = scmp.eq.s32.totalorder %s15, 0
    %p145 = por %p143, %p144
    %p146 = scmp.le.s32.totalorder 1, %s9
    %p147 = scmp.lt.s32.totalorder %s9, 3
    %p148 = pnand %p146, %p147
    %p149 = pneg %p148
    // Predicated region
    $region9: #{sqldepth_forward.39} parent=5 // pred_check
      _
    $region10: #{sqldepth_forward.39} parent=5 // pred_check_branch
      %151 = sbr.rel (%p148) target = $region12
    $region11: #{sqldepth_forward.39} parent=5 // pred_region
      %s152 = ssub.s32 %s9, 1
      // Predicated region
      $region13: #{sqldepth_forward.39} parent=11 // pred_check
        %p153 = pneg %p84
      $region14: #{sqldepth_forward.39} parent=11 // pred_check_branch
        %155 = sbr.rel (%p153) target = $region16
      $region15: #{sqldepth_forward.39} parent=11 // pred_region
        %s156 = smul.u32 16, %s21
        %p157 = scmp.lt.s32.totalorder %s156, 15
        %s158 = scalar_select %p157, %s156, 15
        %p159 = scmp.lt.s32.totalorder %s20, 0
        %s160 = scalar_select %p159, %s20, 0
        %s161 = sadd.s32 %s160, %s158
        %s162 = smul.addr %s161, 4
        %s163 = scalar_lea.vmem %s1, %s162
        %s164 = smul.u32 16, %s21
      $region16: #{sqldepth_forward.39} parent=11 // pred_fallthru
        _
      // Predicated region
      $region17: #{sqldepth_forward.39} parent=11 // pred_check
        %p165 = pneg %p110
      $region18: #{sqldepth_forward.39} parent=11 // pred_check_branch
        %167 = sbr.rel (%p165) target = $region20
      $region19: #{sqldepth_forward.39} parent=11 // pred_region
        %p168 = scmp.lt.s32.totalorder %s20, 0
        %s169 = scalar_select %p168, %s20, 0
        %s170 = scalar_lea.vmem %s2, %s169
      $region20: #{sqldepth_forward.39} parent=11 // pred_fallthru
        _
    $region12: #{sqldepth_forward.39} parent=5 // pred_fallthru
      _
    %p171 = scmp.lt.s32.totalorder %s9, 2
    // Predicated region
    $region21: #{sqldepth_forward.39} parent=5 // pred_check
      %p172 = pneg %p171
    $region22: #{sqldepth_forward.39} parent=5 // pred_check_branch
      %174 = sbr.rel (%p172) target = $region24
    $region23: #{sqldepth_forward.39} parent=5 // pred_region
      // Predicated region
      $region25: #{sqldepth_forward.39} parent=23 // pred_check
        %p175 = pneg %p50
      $region26: #{sqldepth_forward.39} parent=23 // pred_check_branch
        %177 = sbr.rel (%p175) target = $region28
      $region27: #{sqldepth_forward.39} parent=23 // pred_region
        %s178 = smul.u32 32, %s16
        %p179 = scmp.lt.s32.totalorder %s178, 63
        %s180 = scalar_select %p179, %s178, 63
        %p181 = scmp.lt.s32.totalorder %s18, 0
        %s182 = scalar_select %p181, %s18, 0
        %s183 = sadd.s32 %s182, %s180
        %s184 = smul.addr %s183, 4
        %s185 = scalar_lea.vmem %s0, %s184
        %s186 = smul.u32 32, %s16
      $region28: #{sqldepth_forward.39} parent=23 // pred_fallthru
        _
    $region24: #{sqldepth_forward.39} parent=5 // pred_fallthru
      _
    %p187 = scmp.le.s32.totalorder 1, %s9
    %p188 = scmp.lt.s32.totalorder %s9, 3
    %p189 = pnand %p187, %p188
    %p190 = pneg %p189
    // Predicated region
    $region29: #{sqldepth_forward.39} parent=5 // pred_check
      _
    $region30: #{sqldepth_forward.39} parent=5 // pred_check_branch
      %192 = sbr.rel (%p189) target = $region32
    $region31: #{sqldepth_forward.39} parent=5 // pred_region
      %s193 = ssub.s32 %s9, 1
      %s194 = smul.u32 32, %s19
      %p195 = scmp.lt.s32.totalorder %s194, 63
      %s196 = scalar_select %p195, %s194, 63
      %p197 = scmp.lt.s32.totalorder %s21, 0
      %s198 = scalar_select %p197, %s21, 0
      %s199 = sadd.s32 %s198, %s196
      %s200 = smul.addr %s199, 4
      %s201 = scalar_lea.vmem %s0, %s200
      %p202 = pneg %p56
      %p203 = pneg %p53
      %s204 = smul.u32 16, %s21
      %p205 = scmp.lt.s32.totalorder %s204, 15
      %s206 = scalar_select %p205, %s204, 15
      %p207 = scmp.lt.s32.totalorder %s20, 0
      %s208 = scalar_select %p207, %s20, 0
      %s209 = sadd.s32 %s208, %s206
      %s210 = smul.addr %s209, 4
      %s211 = scalar_lea.vmem %s1, %s210
      %p212 = pneg %p84
      %p213 = pneg %p81
      %p214 = scmp.lt.s32.totalorder %s20, 0
      %s215 = scalar_select %p214, %s20, 0
      %s216 = scalar_lea.vmem %s2, %s215
      %p217 = pneg %p110
      %p218 = pneg %p107
      %p219 = pneg %p138
      %p220 = pneg %p135
      %s221 = smul.u32 32, %s19
      %p222 = scmp.lt.s32.totalorder %s221, 63
      %s223 = scalar_select %p222, %s221, 63
      %p224 = scmp.lt.s32.totalorder %s20, 0
      %s225 = scalar_select %p224, %s20, 0
      %s226 = sadd.s32 %s225, %s223
      %s227 = smul.addr %s226, 8
      %s228 = scalar_lea.vmem %s3, %s227
      %s229 = smul.u32 32, %s19
      %p230 = scmp.lt.s32.totalorder %s229, 63
      %s231 = scalar_select %p230, %s229, 63
      %p232 = scmp.lt.s32.totalorder %s21, 0
      %s233 = scalar_select %p232, %s21, 0
      %s234 = sadd.s32 %s233, %s231
      %s235 = smul.addr %s234, 4
      %s236 = scalar_lea.vmem %s0, %s235
      %s237 = smul.u32 32, %s19
      %s238 = smul.u32 16, %s21
      %p239 = scmp.lt.s32.totalorder %s238, 15
      %s240 = scalar_select %p239, %s238, 15
      %p241 = scmp.lt.s32.totalorder %s20, 0
      %s242 = scalar_select %p241, %s20, 0
      %s243 = sadd.s32 %s242, %s240
      %s244 = smul.addr %s243, 4
      %s245 = scalar_lea.vmem %s1, %s244
      %s246 = smul.u32 16, %s21
      %p247 = scmp.lt.s32.totalorder %s20, 0
      %s248 = scalar_select %p247, %s20, 0
      %s249 = scalar_lea.vmem %s2, %s248
      %s250 = smul.u32 32, %s19
      %p251 = scmp.lt.s32.totalorder %s250, 63
      %s252 = scalar_select %p251, %s250, 63
      %p253 = scmp.lt.s32.totalorder %s20, 0
      %s254 = scalar_select %p253, %s20, 0
      %s255 = sadd.s32 %s254, %s252
      %s256 = smul.addr %s255, 8
      %s257 = scalar_lea.vmem %s3, %s256
      %s258 = smul.u32 32, %s19
      %p260 = scmp.eq.s32.totalorder %s21, 0
      // Predicated region
      $region33: #{sqldepth_forward.39} parent=31 // pred_check
        %p261 = pneg %p260
      $region34: #{sqldepth_forward.39} parent=31 // pred_check_branch
        %263 = sbr.rel (%p261) target = $region36
      $region35: #{sqldepth_forward.39} parent=31 // pred_region
        %264 = vst [vmem:[#allocation2] sm:$0xff] 0.0
        %265 = vst [vmem:[#allocation2 + $0x8] sm:$0xff] 0.0
        %266 = vst [vmem:[#allocation2 + $0x10] sm:$0xff] 0.0
        %267 = vst [vmem:[#allocation2 + $0x18] sm:$0xff] 0.0
        %268 = vst [vmem:[#allocation2 + $0x20] sm:$0xff] 0.0
        %269 = vst [vmem:[#allocation2 + $0x28] sm:$0xff] 0.0
        %270 = vst [vmem:[#allocation2 + $0x30] sm:$0xff] 0.0
        %271 = vst [vmem:[#allocation2 + $0x38] sm:$0xff] 0.0
        %272 = vst [vmem:[#allocation2 + $0x40] sm:$0xff] 0.0
        %273 = vst [vmem:[#allocation2 + $0x48] sm:$0xff] 0.0
        %274 = vst [vmem:[#allocation2 + $0x50] sm:$0xff] 0.0
        %275 = vst [vmem:[#allocation2 + $0x58] sm:$0xff] 0.0
        %276 = vst [vmem:[#allocation2 + $0x60] sm:$0xff] 0.0
        %277 = vst [vmem:[#allocation2 + $0x68] sm:$0xff] 0.0
        %278 = vst [vmem:[#allocation2 + $0x70] sm:$0xff] 0.0
        %279 = vst [vmem:[#allocation2 + $0x78] sm:$0xff] 0.0
        %280 = vst [vmem:[#allocation2 + $0x80] sm:$0xff] 0.0
        %281 = vst [vmem:[#allocation2 + $0x88] sm:$0xff] 0.0
        %282 = vst [vmem:[#allocation2 + $0x90] sm:$0xff] 0.0
        %283 = vst [vmem:[#allocation2 + $0x98] sm:$0xff] 0.0
        %284 = vst [vmem:[#allocation2 + $0xa0] sm:$0xff] 0.0
        %285 = vst [vmem:[#allocation2 + $0xa8] sm:$0xff] 0.0
        %286 = vst [vmem:[#allocation2 + $0xb0] sm:$0xff] 0.0
        %287 = vst [vmem:[#allocation2 + $0xb8] sm:$0xff] 0.0
        %288 = vst [vmem:[#allocation2 + $0xc0] sm:$0xff] 0.0
        %289 = vst [vmem:[#allocation2 + $0xc8] sm:$0xff] 0.0
        %290 = vst [vmem:[#allocation2 + $0xd0] sm:$0xff] 0.0
        %291 = vst [vmem:[#allocation2 + $0xd8] sm:$0xff] 0.0
        %292 = vst [vmem:[#allocation2 + $0xe0] sm:$0xff] 0.0
        %293 = vst [vmem:[#allocation2 + $0xe8] sm:$0xff] 0.0
        %294 = vst [vmem:[#allocation2 + $0xf0] sm:$0xff] 0.0
        %295 = vst [vmem:[#allocation2 + $0xf8] sm:$0xff] 0.0
      $region36: #{sqldepth_forward.39} parent=31 // pred_fallthru
        _
      %v296 = vld [vmem:[#allocation2] sm:$0xff]
      %v297 = vld [vmem:[#allocation2 + $0x8] sm:$0xff]
      %v298 = vld [vmem:[#allocation2 + $0x10] sm:$0xff]
      %v299 = vld [vmem:[#allocation2 + $0x18] sm:$0xff]
      %v300 = vld [vmem:[#allocation2 + $0x20] sm:$0xff]
      %v301 = vld [vmem:[#allocation2 + $0x28] sm:$0xff]
      %v302 = vld [vmem:[#allocation2 + $0x30] sm:$0xff]
      %v303 = vld [vmem:[#allocation2 + $0x38] sm:$0xff]
      %v304 = vld [vmem:[#allocation2 + $0x40] sm:$0xff]
      %v305 = vld [vmem:[#allocation2 + $0x48] sm:$0xff]
      %v306 = vld [vmem:[#allocation2 + $0x50] sm:$0xff]
      %v307 = vld [vmem:[#allocation2 + $0x58] sm:$0xff]
      %v308 = vld [vmem:[#allocation2 + $0x60] sm:$0xff]
      %v309 = vld [vmem:[#allocation2 + $0x68] sm:$0xff]
      %v310 = vld [vmem:[#allocation2 + $0x70] sm:$0xff]
      %v311 = vld [vmem:[#allocation2 + $0x78] sm:$0xff]
      %v312 = vld [vmem:[#allocation2 + $0x80] sm:$0xff]
      %v313 = vld [vmem:[#allocation2 + $0x88] sm:$0xff]
      %v314 = vld [vmem:[#allocation2 + $0x90] sm:$0xff]
      %v315 = vld [vmem:[#allocation2 + $0x98] sm:$0xff]
      %v316 = vld [vmem:[#allocation2 + $0xa0] sm:$0xff]
      %v317 = vld [vmem:[#allocation2 + $0xa8] sm:$0xff]
      %v318 = vld [vmem:[#allocation2 + $0xb0] sm:$0xff]
      %v319 = vld [vmem:[#allocation2 + $0xb8] sm:$0xff]
      %v320 = vld [vmem:[#allocation2 + $0xc0] sm:$0xff]
      %v321 = vld [vmem:[#allocation2 + $0xc8] sm:$0xff]
      %v322 = vld [vmem:[#allocation2 + $0xd0] sm:$0xff]
      %v323 = vld [vmem:[#allocation2 + $0xd8] sm:$0xff]
      %v324 = vld [vmem:[#allocation2 + $0xe0] sm:$0xff]
      %v325 = vld [vmem:[#allocation2 + $0xe8] sm:$0xff]
      %v326 = vld [vmem:[#allocation2 + $0xf0] sm:$0xff]
      %v327 = vld [vmem:[#allocation2 + $0xf8] sm:$0xff]
      %v328 = vld [vmem:[%s236] sm:$0xf]
      %v329 = vld [vmem:[%s236 + $0x4] sm:$0xf]
      %v330 = vld [vmem:[%s236 + $0x8] sm:$0xf]
      %v331 = vld [vmem:[%s236 + $0xc] sm:$0xf]
      %v332 = vld [vmem:[%s236 + $0x10] sm:$0xf]
      %v333 = vld [vmem:[%s236 + $0x14] sm:$0xf]
      %v334 = vld [vmem:[%s236 + $0x18] sm:$0xf]
      %v335 = vld [vmem:[%s236 + $0x1c] sm:$0xf]
      %v336 = vld [vmem:[%s236 + $0x20] sm:$0xf]
      %v337 = vld [vmem:[%s236 + $0x24] sm:$0xf]
      %v338 = vld [vmem:[%s236 + $0x28] sm:$0xf]
      %v339 = vld [vmem:[%s236 + $0x2c] sm:$0xf]
      %v340 = vld [vmem:[%s236 + $0x30] sm:$0xf]
      %v341 = vld [vmem:[%s236 + $0x34] sm:$0xf]
      %v342 = vld [vmem:[%s236 + $0x38] sm:$0xf]
      %v343 = vld [vmem:[%s236 + $0x3c] sm:$0xf]
      %v344 = vld [vmem:[%s236 + $0x40] sm:$0xf]
      %v345 = vld [vmem:[%s236 + $0x44] sm:$0xf]
      %v346 = vld [vmem:[%s236 + $0x48] sm:$0xf]
      %v347 = vld [vmem:[%s236 + $0x4c] sm:$0xf]
      %v348 = vld [vmem:[%s236 + $0x50] sm:$0xf]
      %v349 = vld [vmem:[%s236 + $0x54] sm:$0xf]
      %v350 = vld [vmem:[%s236 + $0x58] sm:$0xf]
      %v351 = vld [vmem:[%s236 + $0x5c] sm:$0xf]
      %v352 = vld [vmem:[%s236 + $0x60] sm:$0xf]
      %v353 = vld [vmem:[%s236 + $0x64] sm:$0xf]
      %v354 = vld [vmem:[%s236 + $0x68] sm:$0xf]
      %v355 = vld [vmem:[%s236 + $0x6c] sm:$0xf]
      %v356 = vld [vmem:[%s236 + $0x70] sm:$0xf]
      %v357 = vld [vmem:[%s236 + $0x74] sm:$0xf]
      %v358 = vld [vmem:[%s236 + $0x78] sm:$0xf]
      %v359 = vld [vmem:[%s236 + $0x7c] sm:$0xf]
      %v360 = vld [vmem:[%s245] sm:$0xf]
      %v361 = vld [vmem:[%s245 + $0x4] sm:$0xf]
      %v362 = vld [vmem:[%s245 + $0x8] sm:$0xf]
      %v363 = vld [vmem:[%s245 + $0xc] sm:$0xf]
      %v364 = vld [vmem:[%s245 + $0x10] sm:$0xf]
      %v365 = vld [vmem:[%s245 + $0x14] sm:$0xf]
      %v366 = vld [vmem:[%s245 + $0x18] sm:$0xf]
      %v367 = vld [vmem:[%s245 + $0x1c] sm:$0xf]
      %v368 = vld [vmem:[%s245 + $0x20] sm:$0xf]
      %v369 = vld [vmem:[%s245 + $0x24] sm:$0xf]
      %v370 = vld [vmem:[%s245 + $0x28] sm:$0xf]
      %v371 = vld [vmem:[%s245 + $0x2c] sm:$0xf]
      %v372 = vld [vmem:[%s245 + $0x30] sm:$0xf]
      %v373 = vld [vmem:[%s245 + $0x34] sm:$0xf]
      %v374 = vld [vmem:[%s245 + $0x38] sm:$0xf]
      %v375 = vld [vmem:[%s245 + $0x3c] sm:$0xf]
      %v408 = vunpack.c.l.b16 %v328
      %v409 = vunpack.c.l.b16 %v329
      %v410 = vunpack.c.l.b16 %v330
      %v411 = vunpack.c.l.b16 %v331
      %v412 = vunpack.c.l.b16 %v332
      %v413 = vunpack.c.l.b16 %v333
      %v414 = vunpack.c.l.b16 %v334
      %v415 = vunpack.c.l.b16 %v335
      %v416 = vunpack.c.l.b16 %v336
      %v417 = vunpack.c.l.b16 %v337
      %v418 = vunpack.c.l.b16 %v338
      %v419 = vunpack.c.l.b16 %v339
      %v420 = vunpack.c.l.b16 %v340
      %v421 = vunpack.c.l.b16 %v341
      %v422 = vunpack.c.l.b16 %v342
      %v423 = vunpack.c.l.b16 %v343
      %v424 = vunpack.c.l.b16 %v344
      %v425 = vunpack.c.l.b16 %v345
      %v426 = vunpack.c.l.b16 %v346
      %v427 = vunpack.c.l.b16 %v347
      %v428 = vunpack.c.l.b16 %v348
      %v429 = vunpack.c.l.b16 %v349
      %v430 = vunpack.c.l.b16 %v350
      %v431 = vunpack.c.l.b16 %v351
      %v432 = vunpack.c.l.b16 %v352
      %v433 = vunpack.c.l.b16 %v353
      %v434 = vunpack.c.l.b16 %v354
      %v435 = vunpack.c.l.b16 %v355
      %v436 = vunpack.c.l.b16 %v356
      %v437 = vunpack.c.l.b16 %v357
      %v438 = vunpack.c.l.b16 %v358
      %v439 = vunpack.c.l.b16 %v359
      %v440 = vpack.c.b16 %v409, %v408
      %v441 = vpack.c.b16 %v411, %v410
      %v442 = vpack.c.b16 %v413, %v412
      %v443 = vpack.c.b16 %v415, %v414
      %v444 = vpack.c.b16 %v417, %v416
      %v445 = vpack.c.b16 %v419, %v418
      %v446 = vpack.c.b16 %v421, %v420
      %v447 = vpack.c.b16 %v423, %v422
      %v448 = vpack.c.b16 %v425, %v424
      %v449 = vpack.c.b16 %v427, %v426
      %v450 = vpack.c.b16 %v429, %v428
      %v451 = vpack.c.b16 %v431, %v430
      %v452 = vpack.c.b16 %v433, %v432
      %v453 = vpack.c.b16 %v435, %v434
      %v454 = vpack.c.b16 %v437, %v436
      %v455 = vpack.c.b16 %v439, %v438
      %v488 = vunpack.c.l.b16 %v360
      %v489 = vunpack.c.l.b16 %v361
      %v490 = vunpack.c.l.b16 %v362
      %v491 = vunpack.c.l.b16 %v363
      %v492 = vunpack.c.l.b16 %v364
      %v493 = vunpack.c.l.b16 %v365
      %v494 = vunpack.c.l.b16 %v366
      %v495 = vunpack.c.l.b16 %v367
      %v496 = vunpack.c.l.b16 %v368
      %v497 = vunpack.c.l.b16 %v369
      %v498 = vunpack.c.l.b16 %v370
      %v499 = vunpack.c.l.b16 %v371
      %v500 = vunpack.c.l.b16 %v372
      %v501 = vunpack.c.l.b16 %v373
      %v502 = vunpack.c.l.b16 %v374
      %v503 = vunpack.c.l.b16 %v375
      %v504 = vpack.c.b16 %v489, %v488
      %v505 = vpack.c.b16 %v491, %v490
      %v506 = vpack.c.b16 %v493, %v492
      %v507 = vpack.c.b16 %v495, %v494
      %v508 = vpack.c.b16 %v497, %v496
      %v509 = vpack.c.b16 %v499, %v498
      %v510 = vpack.c.b16 %v501, %v500
      %v511 = vpack.c.b16 %v503, %v502
      %520 = vmatprep.subr.bf16.mxu0 0
      %521 = vmatpush1.bf16.msra.mxu0 %v504
      %522 = vmatprep.subr.bf16.mxu0 0
      %523 = vmatpush1.bf16.msra.mxu0 %v505
      %524 = vmatprep.subr.bf16.mxu0 0
      %525 = vmatpush1.bf16.msra.mxu0 %v506
      %526 = vmatprep.subr.bf16.mxu0 0
      %527 = vmatpush1.bf16.msra.mxu0 %v507
      %528 = vmatprep.subr.bf16.mxu0 0
      %529 = vmatpush1.bf16.msra.mxu0 %v508
      %530 = vmatprep.subr.bf16.mxu0 0
      %531 = vmatpush1.bf16.msra.mxu0 %v509
      %532 = vmatprep.subr.bf16.mxu0 0
      %533 = vmatpush1.bf16.msra.mxu0 %v510
      %534 = vmatprep.subr.bf16.mxu0 0
      %535 = vmatpush1.bf16.msra.mxu0 %v511
      %536 = vmatprep.subr.bf16.mxu0 0
      %537 = vmatpush1.bf16.msra.mxu0 0
      %538 = vmatprep.subr.bf16.mxu0 0
      %539 = vmatpush1.bf16.msra.mxu0 0
      %540 = vmatprep.subr.bf16.mxu0 0
      %541 = vmatpush1.bf16.msra.mxu0 0
      %542 = vmatprep.subr.bf16.mxu0 0
      %543 = vmatpush1.bf16.msra.mxu0 0
      %544 = vmatprep.subr.bf16.mxu0 0
      %545 = vmatpush1.bf16.msra.mxu0 0
      %546 = vmatprep.subr.bf16.mxu0 0
      %547 = vmatpush1.bf16.msra.mxu0 0
      %548 = vmatprep.subr.bf16.mxu0 0
      %549 = vmatpush1.bf16.msra.mxu0 0
      %550 = vmatprep.subr.bf16.mxu0 0
      %551 = vmatpush1.bf16.msra.mxu0 0
      %552 = vmatprep.mubr.bf16.mxu0 0
      %553 = vmatmul.mubr.bf16.gmra.mrb[0].mxu0 %v440
      %v554 = vpop.f32.mrb[0].mxu0
      %v555 = vadd.f32 0.0, %v554
      %v556 = vpop.f32.mrb[0].mxu0
      %v557 = vpop.f32.mrb[0].mxu0
      %v558 = vadd.f32 0.0, %v557
      %v559 = vpop.f32.mrb[0].mxu0
      %560 = vmatprep.mubr.bf16.mxu0 0
      %561 = vmatmul.mubr.bf16.gmra.mrb[0].mxu0 %v441
      %v562 = vpop.f32.mrb[0].mxu0
      %v563 = vadd.f32 0.0, %v562
      %v564 = vpop.f32.mrb[0].mxu0
      %v565 = vpop.f32.mrb[0].mxu0
      %v566 = vadd.f32 0.0, %v565
      %v567 = vpop.f32.mrb[0].mxu0
      %568 = vmatprep.mubr.bf16.mxu0 0
      %569 = vmatmul.mubr.bf16.gmra.mrb[0].mxu0 %v442
      %v570 = vpop.f32.mrb[0].mxu0
      %v571 = vadd.f32 0.0, %v570
      %v572 = vpop.f32.mrb[0].mxu0
      %v573 = vpop.f32.mrb[0].mxu0
      %v574 = vadd.f32 0.0, %v573
      %v575 = vpop.f32.mrb[0].mxu0
      %576 = vmatprep.mubr.bf16.mxu0 0
      %577 = vmatmul.mubr.bf16.gmra.mrb[0].mxu0 %v443
      %v578 = vpop.f32.mrb[0].mxu0
      %v579 = vadd.f32 0.0, %v578
      %v580 = vpop.f32.mrb[0].mxu0
      %v581 = vpop.f32.mrb[0].mxu0
      %v582 = vadd.f32 0.0, %v581
      %v583 = vpop.f32.mrb[0].mxu0
      %584 = vmatprep.mubr.bf16.mxu0 0
      %585 = vmatmul.mubr.bf16.gmra.mrb[0].mxu0 %v444
      %v586 = vpop.f32.mrb[0].mxu0
      %v587 = vadd.f32 0.0, %v586
      %v588 = vpop.f32.mrb[0].mxu0
      %v589 = vpop.f32.mrb[0].mxu0
      %v590 = vadd.f32 0.0, %v589
      %v591 = vpop.f32.mrb[0].mxu0
      %592 = vmatprep.mubr.bf16.mxu0 0
      %593 = vmatmul.mubr.bf16.gmra.mrb[0].mxu0 %v445
      %v594 = vpop.f32.mrb[0].mxu0
      %v595 = vadd.f32 0.0, %v594
      %v596 = vpop.f32.mrb[0].mxu0
      %v597 = vpop.f32.mrb[0].mxu0
      %v598 = vadd.f32 0.0, %v597
      %v599 = vpop.f32.mrb[0].mxu0
      %600 = vmatprep.mubr.bf16.mxu0 0
      %601 = vmatmul.mubr.bf16.gmra.mrb[0].mxu0 %v446
      %v602 = vpop.f32.mrb[0].mxu0
      %v603 = vadd.f32 0.0, %v602
      %v604 = vpop.f32.mrb[0].mxu0
      %v605 = vpop.f32.mrb[0].mxu0
      %v606 = vadd.f32 0.0, %v605
      %v607 = vpop.f32.mrb[0].mxu0
      %608 = vmatprep.mubr.bf16.mxu0 0
      %609 = vmatmul.mubr.bf16.gmra.mrb[0].mxu0 %v447
      %v610 = vpop.f32.mrb[0].mxu0
      %v611 = vadd.f32 0.0, %v610
      %v612 = vpop.f32.mrb[0].mxu0
      %v613 = vpop.f32.mrb[0].mxu0
      %v614 = vadd.f32 0.0, %v613
      %v615 = vpop.f32.mrb[0].mxu0
      %616 = vmatprep.mubr.bf16.mxu0 0
      %617 = vmatmul.mubr.bf16.gmra.mrb[0].mxu0 %v448
      %v618 = vpop.f32.mrb[0].mxu0
      %v619 = vadd.f32 0.0, %v618
      %v620 = vpop.f32.mrb[0].mxu0
      %v621 = vpop.f32.mrb[0].mxu0
      %v622 = vadd.f32 0.0, %v621
      %v623 = vpop.f32.mrb[0].mxu0
      %624 = vmatprep.mubr.bf16.mxu0 0
      %625 = vmatmul.mubr.bf16.gmra.mrb[0].mxu0 %v449
      %v626 = vpop.f32.mrb[0].mxu0
      %v627 = vadd.f32 0.0, %v626
      %v628 = vpop.f32.mrb[0].mxu0
      %v629 = vpop.f32.mrb[0].mxu0
      %v630 = vadd.f32 0.0, %v629
      %v631 = vpop.f32.mrb[0].mxu0
      %632 = vmatprep.mubr.bf16.mxu0 0
      %633 = vmatmul.mubr.bf16.gmra.mrb[0].mxu0 %v450
      %v634 = vpop.f32.mrb[0].mxu0
      %v635 = vadd.f32 0.0, %v634
      %v636 = vpop.f32.mrb[0].mxu0
      %v637 = vpop.f32.mrb[0].mxu0
      %v638 = vadd.f32 0.0, %v637
      %v639 = vpop.f32.mrb[0].mxu0
      %640 = vmatprep.mubr.bf16.mxu0 0
      %641 = vmatmul.mubr.bf16.gmra.mrb[0].mxu0 %v451
      %v642 = vpop.f32.mrb[0].mxu0
      %v643 = vadd.f32 0.0, %v642
      %v644 = vpop.f32.mrb[0].mxu0
      %v645 = vpop.f32.mrb[0].mxu0
      %v646 = vadd.f32 0.0, %v645
      %v647 = vpop.f32.mrb[0].mxu0
      %648 = vmatprep.mubr.bf16.mxu0 0
      %649 = vmatmul.mubr.bf16.gmra.mrb[0].mxu0 %v452
      %v650 = vpop.f32.mrb[0].mxu0
      %v651 = vadd.f32 0.0, %v650
      %v652 = vpop.f32.mrb[0].mxu0
      %v653 = vpop.f32.mrb[0].mxu0
      %v654 = vadd.f32 0.0, %v653
      %v655 = vpop.f32.mrb[0].mxu0
      %656 = vmatprep.mubr.bf16.mxu0 0
      %657 = vmatmul.mubr.bf16.gmra.mrb[0].mxu0 %v453
      %v658 = vpop.f32.mrb[0].mxu0
      %v659 = vadd.f32 0.0, %v658
      %v660 = vpop.f32.mrb[0].mxu0
      %v661 = vpop.f32.mrb[0].mxu0
      %v662 = vadd.f32 0.0, %v661
      %v663 = vpop.f32.mrb[0].mxu0
      %664 = vmatprep.mubr.bf16.mxu0 0
      %665 = vmatmul.mubr.bf16.gmra.mrb[0].mxu0 %v454
      %v666 = vpop.f32.mrb[0].mxu0
      %v667 = vadd.f32 0.0, %v666
      %v668 = vpop.f32.mrb[0].mxu0
      %v669 = vpop.f32.mrb[0].mxu0
      %v670 = vadd.f32 0.0, %v669
      %v671 = vpop.f32.mrb[0].mxu0
      %672 = vmatprep.mubr.bf16.mxu0 0
      %673 = vmatmul.mubr.bf16.gmra.mrb[0].mxu0 %v455
      %v674 = vpop.f32.mrb[0].mxu0
      %v675 = vadd.f32 0.0, %v674
      %v676 = vpop.f32.mrb[0].mxu0
      %v677 = vpop.f32.mrb[0].mxu0
      %v678 = vadd.f32 0.0, %v677
      %v679 = vpop.f32.mrb[0].mxu0
      %680 = vdwg.mxu0
      %v681 = vadd.f32 %v296, %v555
      %v682 = vadd.f32 %v297, %v558
      %v683 = vadd.f32 %v298, %v563
      %v684 = vadd.f32 %v299, %v566
      %v685 = vadd.f32 %v300, %v571
      %v686 = vadd.f32 %v301, %v574
      %v687 = vadd.f32 %v302, %v579
      %v688 = vadd.f32 %v303, %v582
      %v689 = vadd.f32 %v304, %v587
      %v690 = vadd.f32 %v305, %v590
      %v691 = vadd.f32 %v306, %v595
      %v692 = vadd.f32 %v307, %v598
      %v693 = vadd.f32 %v308, %v603
      %v694 = vadd.f32 %v309, %v606
      %v695 = vadd.f32 %v310, %v611
      %v696 = vadd.f32 %v311, %v614
      %v697 = vadd.f32 %v312, %v619
      %v698 = vadd.f32 %v313, %v622
      %v699 = vadd.f32 %v314, %v627
      %v700 = vadd.f32 %v315, %v630
      %v701 = vadd.f32 %v316, %v635
      %v702 = vadd.f32 %v317, %v638
      %v703 = vadd.f32 %v318, %v643
      %v704 = vadd.f32 %v319, %v646
      %v705 = vadd.f32 %v320, %v651
      %v706 = vadd.f32 %v321, %v654
      %v707 = vadd.f32 %v322, %v659
      %v708 = vadd.f32 %v323, %v662
      %v709 = vadd.f32 %v324, %v667
      %v710 = vadd.f32 %v325, %v670
      %v711 = vadd.f32 %v326, %v675
      %v712 = vadd.f32 %v327, %v678
      %713 = vst [vmem:[#allocation2] sm:$0xff] %v681
      %714 = vst [vmem:[#allocation2 + $0x8] sm:$0xff] %v682
      %715 = vst [vmem:[#allocation2 + $0x10] sm:$0xff] %v683
      %716 = vst [vmem:[#allocation2 + $0x18] sm:$0xff] %v684
      %717 = vst [vmem:[#allocation2 + $0x20] sm:$0xff] %v685
      %718 = vst [vmem:[#allocation2 + $0x28] sm:$0xff] %v686
      %719 = vst [vmem:[#allocation2 + $0x30] sm:$0xff] %v687
      %720 = vst [vmem:[#allocation2 + $0x38] sm:$0xff] %v688
      %721 = vst [vmem:[#allocation2 + $0x40] sm:$0xff] %v689
      %722 = vst [vmem:[#allocation2 + $0x48] sm:$0xff] %v690
      %723 = vst [vmem:[#allocation2 + $0x50] sm:$0xff] %v691
      %724 = vst [vmem:[#allocation2 + $0x58] sm:$0xff] %v692
      %725 = vst [vmem:[#allocation2 + $0x60] sm:$0xff] %v693
      %726 = vst [vmem:[#allocation2 + $0x68] sm:$0xff] %v694
      %727 = vst [vmem:[#allocation2 + $0x70] sm:$0xff] %v695
      %728 = vst [vmem:[#allocation2 + $0x78] sm:$0xff] %v696
      %729 = vst [vmem:[#allocation2 + $0x80] sm:$0xff] %v697
      %730 = vst [vmem:[#allocation2 + $0x88] sm:$0xff] %v698
      %731 = vst [vmem:[#allocation2 + $0x90] sm:$0xff] %v699
      %732 = vst [vmem:[#allocation2 + $0x98] sm:$0xff] %v700
      %733 = vst [vmem:[#allocation2 + $0xa0] sm:$0xff] %v701
      %734 = vst [vmem:[#allocation2 + $0xa8] sm:$0xff] %v702
      %735 = vst [vmem:[#allocation2 + $0xb0] sm:$0xff] %v703
      %736 = vst [vmem:[#allocation2 + $0xb8] sm:$0xff] %v704
      %737 = vst [vmem:[#allocation2 + $0xc0] sm:$0xff] %v705
      %738 = vst [vmem:[#allocation2 + $0xc8] sm:$0xff] %v706
      %739 = vst [vmem:[#allocation2 + $0xd0] sm:$0xff] %v707
      %740 = vst [vmem:[#allocation2 + $0xd8] sm:$0xff] %v708
      %741 = vst [vmem:[#allocation2 + $0xe0] sm:$0xff] %v709
      %742 = vst [vmem:[#allocation2 + $0xe8] sm:$0xff] %v710
      %743 = vst [vmem:[#allocation2 + $0xf0] sm:$0xff] %v711
      %744 = vst [vmem:[#allocation2 + $0xf8] sm:$0xff] %v712
      // Predicated region
      $region37: #{sqldepth_forward.39} parent=31 // pred_check
        %p745 = pneg %p260
      $region38: #{sqldepth_forward.39} parent=31 // pred_check_branch
        %747 = sbr.rel (%p745) target = $region40
      $region39: #{sqldepth_forward.39} parent=31 // pred_region
        %v748 = vld [vmem:[#allocation2] sm:$0xff]
        %v749 = vld [vmem:[#allocation2 + $0x8] sm:$0xff]
        %v750 = vld [vmem:[#allocation2 + $0x10] sm:$0xff]
        %v751 = vld [vmem:[#allocation2 + $0x18] sm:$0xff]
        %v752 = vld [vmem:[#allocation2 + $0x20] sm:$0xff]
        %v753 = vld [vmem:[#allocation2 + $0x28] sm:$0xff]
        %v754 = vld [vmem:[#allocation2 + $0x30] sm:$0xff]
        %v755 = vld [vmem:[#allocation2 + $0x38] sm:$0xff]
        %v756 = vld [vmem:[#allocation2 + $0x40] sm:$0xff]
        %v757 = vld [vmem:[#allocation2 + $0x48] sm:$0xff]
        %v758 = vld [vmem:[#allocation2 + $0x50] sm:$0xff]
        %v759 = vld [vmem:[#allocation2 + $0x58] sm:$0xff]
        %v760 = vld [vmem:[#allocation2 + $0x60] sm:$0xff]
        %v761 = vld [vmem:[#allocation2 + $0x68] sm:$0xff]
        %v762 = vld [vmem:[#allocation2 + $0x70] sm:$0xff]
        %v763 = vld [vmem:[#allocation2 + $0x78] sm:$0xff]
        %v764 = vld [vmem:[#allocation2 + $0x80] sm:$0xff]
        %v765 = vld [vmem:[#allocation2 + $0x88] sm:$0xff]
        %v766 = vld [vmem:[#allocation2 + $0x90] sm:$0xff]
        %v767 = vld [vmem:[#allocation2 + $0x98] sm:$0xff]
        %v768 = vld [vmem:[#allocation2 + $0xa0] sm:$0xff]
        %v769 = vld [vmem:[#allocation2 + $0xa8] sm:$0xff]
        %v770 = vld [vmem:[#allocation2 + $0xb0] sm:$0xff]
        %v771 = vld [vmem:[#allocation2 + $0xb8] sm:$0xff]
        %v772 = vld [vmem:[#allocation2 + $0xc0] sm:$0xff]
        %v773 = vld [vmem:[#allocation2 + $0xc8] sm:$0xff]
        %v774 = vld [vmem:[#allocation2 + $0xd0] sm:$0xff]
        %v775 = vld [vmem:[#allocation2 + $0xd8] sm:$0xff]
        %v776 = vld [vmem:[#allocation2 + $0xe0] sm:$0xff]
        %v777 = vld [vmem:[#allocation2 + $0xe8] sm:$0xff]
        %v778 = vld [vmem:[#allocation2 + $0xf0] sm:$0xff]
        %v779 = vld [vmem:[#allocation2 + $0xf8] sm:$0xff]
        %v780 = vld [vmem:[%s249] sm:$0x1]
        %v782 = vlaneseq
        %v783 = vshrl.u32 %v782, 7
        %v784 = vsub.s32 0, %v783
        %v785 = vrot.slane %v780, %v784
        %v787 = vadd.f32 %v748, %v785
        %v788 = vadd.f32 %v749, %v785
        %v789 = vadd.f32 %v750, %v785
        %v790 = vadd.f32 %v751, %v785
        %v791 = vadd.f32 %v752, %v785
        %v792 = vadd.f32 %v753, %v785
        %v793 = vadd.f32 %v754, %v785
        %v794 = vadd.f32 %v755, %v785
        %v795 = vadd.f32 %v756, %v785
        %v796 = vadd.f32 %v757, %v785
        %v797 = vadd.f32 %v758, %v785
        %v798 = vadd.f32 %v759, %v785
        %v799 = vadd.f32 %v760, %v785
        %v800 = vadd.f32 %v761, %v785
        %v801 = vadd.f32 %v762, %v785
        %v802 = vadd.f32 %v763, %v785
        %v803 = vadd.f32 %v764, %v785
        %v804 = vadd.f32 %v765, %v785
        %v805 = vadd.f32 %v766, %v785
        %v806 = vadd.f32 %v767, %v785
        %v807 = vadd.f32 %v768, %v785
        %v808 = vadd.f32 %v769, %v785
        %v809 = vadd.f32 %v770, %v785
        %v810 = vadd.f32 %v771, %v785
        %v811 = vadd.f32 %v772, %v785
        %v812 = vadd.f32 %v773, %v785
        %v813 = vadd.f32 %v774, %v785
        %v814 = vadd.f32 %v775, %v785
        %v815 = vadd.f32 %v776, %v785
        %v816 = vadd.f32 %v777, %v785
        %v817 = vadd.f32 %v778, %v785
        %v818 = vadd.f32 %v779, %v785
        %v819 = vmax.f32 %v787, 0.0
        %v820 = vmax.f32 %v788, 0.0
        %v821 = vmax.f32 %v789, 0.0
        %v822 = vmax.f32 %v790, 0.0
        %v823 = vmax.f32 %v791, 0.0
        %v824 = vmax.f32 %v792, 0.0
        %v825 = vmax.f32 %v793, 0.0
        %v826 = vmax.f32 %v794, 0.0
        %v827 = vmax.f32 %v795, 0.0
        %v828 = vmax.f32 %v796, 0.0
        %v829 = vmax.f32 %v797, 0.0
        %v830 = vmax.f32 %v798, 0.0
        %v831 = vmax.f32 %v799, 0.0
        %v832 = vmax.f32 %v800, 0.0
        %v833 = vmax.f32 %v801, 0.0
        %v834 = vmax.f32 %v802, 0.0
        %v835 = vmax.f32 %v803, 0.0
        %v836 = vmax.f32 %v804, 0.0
        %v837 = vmax.f32 %v805, 0.0
        %v838 = vmax.f32 %v806, 0.0
        %v839 = vmax.f32 %v807, 0.0
        %v840 = vmax.f32 %v808, 0.0
        %v841 = vmax.f32 %v809, 0.0
        %v842 = vmax.f32 %v810, 0.0
        %v843 = vmax.f32 %v811, 0.0
        %v844 = vmax.f32 %v812, 0.0
        %v845 = vmax.f32 %v813, 0.0
        %v846 = vmax.f32 %v814, 0.0
        %v847 = vmax.f32 %v815, 0.0
        %v848 = vmax.f32 %v816, 0.0
        %v849 = vmax.f32 %v817, 0.0
        %v850 = vmax.f32 %v818, 0.0
        %851 = vst [vmem:[%s257] sm:$0xff] %v819
        %852 = vst [vmem:[%s257 + $0x8] sm:$0xff] %v820
        %853 = vst [vmem:[%s257 + $0x10] sm:$0xff] %v821
        %854 = vst [vmem:[%s257 + $0x18] sm:$0xff] %v822
        %855 = vst [vmem:[%s257 + $0x20] sm:$0xff] %v823
        %856 = vst [vmem:[%s257 + $0x28] sm:$0xff] %v824
        %857 = vst [vmem:[%s257 + $0x30] sm:$0xff] %v825
        %858 = vst [vmem:[%s257 + $0x38] sm:$0xff] %v826
        %859 = vst [vmem:[%s257 + $0x40] sm:$0xff] %v827
        %860 = vst [vmem:[%s257 + $0x48] sm:$0xff] %v828
        %861 = vst [vmem:[%s257 + $0x50] sm:$0xff] %v829
        %862 = vst [vmem:[%s257 + $0x58] sm:$0xff] %v830
        %863 = vst [vmem:[%s257 + $0x60] sm:$0xff] %v831
        %864 = vst [vmem:[%s257 + $0x68] sm:$0xff] %v832
        %865 = vst [vmem:[%s257 + $0x70] sm:$0xff] %v833
        %866 = vst [vmem:[%s257 + $0x78] sm:$0xff] %v834
        %867 = vst [vmem:[%s257 + $0x80] sm:$0xff] %v835
        %868 = vst [vmem:[%s257 + $0x88] sm:$0xff] %v836
        %869 = vst [vmem:[%s257 + $0x90] sm:$0xff] %v837
        %870 = vst [vmem:[%s257 + $0x98] sm:$0xff] %v838
        %871 = vst [vmem:[%s257 + $0xa0] sm:$0xff] %v839
        %872 = vst [vmem:[%s257 + $0xa8] sm:$0xff] %v840
        %873 = vst [vmem:[%s257 + $0xb0] sm:$0xff] %v841
        %874 = vst [vmem:[%s257 + $0xb8] sm:$0xff] %v842
        %875 = vst [vmem:[%s257 + $0xc0] sm:$0xff] %v843
        %876 = vst [vmem:[%s257 + $0xc8] sm:$0xff] %v844
        %877 = vst [vmem:[%s257 + $0xd0] sm:$0xff] %v845
        %878 = vst [vmem:[%s257 + $0xd8] sm:$0xff] %v846
        %879 = vst [vmem:[%s257 + $0xe0] sm:$0xff] %v847
        %880 = vst [vmem:[%s257 + $0xe8] sm:$0xff] %v848
        %881 = vst [vmem:[%s257 + $0xf0] sm:$0xff] %v849
        %882 = vst [vmem:[%s257 + $0xf8] sm:$0xff] %v850
      $region40: #{sqldepth_forward.39} parent=31 // pred_fallthru
        _
      %s883 = smul.u32 32, %s19
      %p884 = scmp.lt.s32.totalorder %s883, 63
      %s885 = scalar_select %p884, %s883, 63
      %p886 = scmp.lt.s32.totalorder %s20, 0
      %s887 = scalar_select %p886, %s20, 0
      %s888 = sadd.s32 %s887, %s885
      %s889 = smul.addr %s888, 8
      %s890 = scalar_lea.vmem %s3, %s889
      // Predicated region
      $region41: #{sqldepth_forward.39} parent=31 // pred_check
        %p891 = pneg %p135
      $region42: #{sqldepth_forward.39} parent=31 // pred_check_branch
        %893 = sbr.rel (%p891) target = $region44
      $region43: #{sqldepth_forward.39} parent=31 // pred_region
        %s894 = smul.u32 32, %s19
      $region44: #{sqldepth_forward.39} parent=31 // pred_fallthru
        _
    $region32: #{sqldepth_forward.39} parent=5 // pred_fallthru
      _
    %p895 = scmp.le.s32.totalorder 2, %s9
    // Predicated region
    $region45: #{sqldepth_forward.39} parent=5 // pred_check
      %p896 = pneg %p895
    $region46: #{sqldepth_forward.39} parent=5 // pred_check_branch
      %898 = sbr.rel (%p896) target = $region48
    $region47: #{sqldepth_forward.39} parent=5 // pred_region
      %s899 = ssub.s32 %s9, 2
      // Predicated region
      $region49: #{sqldepth_forward.39} parent=47 // pred_check
        %p900 = pneg %p141
      $region50: #{sqldepth_forward.39} parent=47 // pred_check_branch
        %902 = sbr.rel (%p900) target = $region52
      $region51: #{sqldepth_forward.39} parent=47 // pred_region
        %s903 = smul.u32 32, %s22
        %p904 = scmp.lt.s32.totalorder %s903, 63
        %s905 = scalar_select %p904, %s903, 63
        %p906 = scmp.lt.s32.totalorder %s23, 0
        %s907 = scalar_select %p906, %s23, 0
        %s908 = sadd.s32 %s907, %s905
        %s909 = smul.addr %s908, 8
        %s910 = scalar_lea.vmem %s3, %s909
      $region52: #{sqldepth_forward.39} parent=47 // pred_fallthru
        _
    $region48: #{sqldepth_forward.39} parent=5 // pred_fallthru
      _
  $region6: #{sqldepth_forward.39} parent=0 // loop_footer
    %s13 = sadd.s32 1, %s9
  $region7: #{sqldepth_forward.39} parent=0 // loop_footer_branch
    %8 = sbr.rel target = $region3
  $region8: #{sqldepth_forward.39} parent=0 // loop_exit
    _

// kernel: sqldepth_forward.40
$region0: #{sqldepth_forward.40}
  #allocation0 [shape = 'u32[]', space=smem, size = 0x4, offset = 0x4, fixed_abs, tag = 'smem constant byte address 0x4 - core index']
  #allocation1 [shape = 'u32[144,128]{1,0:T(1,128)}', space=vmem, size = 0x12000, scoped, tag = 'internal scratch']
  #allocation2 [shape = 'f32[256,128]{1,0:T(8,128)}', space=vmem, size = 0x20000, scoped, tag = 'scratch operand']
  %s0 = inlined_call_operand.vmem [shape: bf16[512,256], index: 0, kind: input, shape index: {}]
  %s1 = inlined_call_operand.vmem [shape: bf16[256,128], index: 1, kind: input, shape index: {}]
  %s2 = inlined_call_operand.vmem [shape: f32[1,128], index: 2, kind: input, shape index: {}]
  %s3 = inlined_call_operand.vmem [shape: f32[512,128], index: 3, kind: output, shape index: {}]
  %s4 = sld [smem:[#allocation0]]
  $region53: #{sqldepth_forward.40} parent=0
    _
  %s6 = ssub.s32 1, %s4
  %s7 = scalar_select 0, %s6, %s4
  loop: start=0, step=1, limit=4
  $region2: #{sqldepth_forward.40} parent=0 // loop_pre_header
    _
  $region3: #{sqldepth_forward.40} parent=0 // loop_header
    %s9 = sphi 0, %s13
    %p10 = scmp.ge.s32.totalorder %s9, 4
    %s16 = sphi 0, %s35
    %s17 = sphi 0, %s31
    %s18 = sphi 0, %s27
    %s19 = sphi 0, %s16
    %s20 = sphi 0, %s17
    %s21 = sphi 0, %s18
    %s22 = sphi 0, %s19
    %s23 = sphi 0, %s20
    %s24 = sphi 0, %s21
    %s40 = sphi 0, %s42
    %s43 = sphi 0, %s40
    %s44 = sphi 0, %s43
    %s60 = sphi 0, %s44
    %s68 = sphi 0, %s70
    %s71 = sphi 0, %s68
    %s72 = sphi 0, %s71
    %s88 = sphi 0, %s72
    %s94 = sphi 0, %s96
    %s97 = sphi 0, %s94
    %s98 = sphi 0, %s97
    %s114 = sphi 0, %s98
    %s122 = sphi 0, %s124
    %s125 = sphi 0, %s122
    %s126 = sphi 0, %s125
    %s142 = sphi 0, %s126
  $region4: #{sqldepth_forward.40} parent=0 // loop_header_branch
    %12 = sbr.rel (%p10) target = $region8
  $region5: #{sqldepth_forward.40} parent=0 // loop_body
    %s14 = ssub.s32 %s9, 1
    %s15 = ssub.s32 %s9, 2
    %s25 = sadd.s32 1, %s18
    %p26 = scmp.ge.s32.totalorder %s25, 1
    %s27 = scalar_select %p26, 0, %s25
    %s28 = sadd.s32 1, %s17
    %s29 = scalar_select %p26, %s28, %s17
    %p30 = scmp.ge.s32.totalorder %s29, 1
    %s31 = scalar_select %p30, 0, %s29
    %s32 = sadd.s32 1, %s16
    %s33 = scalar_select %p30, %s32, %s16
    %p34 = scmp.ge.s32.totalorder %s33, 2
    %s35 = scalar_select %p34, 0, %s33
    %s36 = ssub.s32 %s16, %s35
    %s37 = ssub.s32 %s18, %s27
    %s38 = sor.u32 %s36, %s37
    %p39 = scmp.eq.s32.totalorder %s38, 0
    %s41 = sadd.s32 %s40, 1
    %s42 = scalar_select %p39, %s40, %s41
    %p45 = pneg %p39
    %p46 = scmp.eq.s32.totalorder %s9, 1
    %p47 = por %p45, %p46
    %p48 = scmp.ne.s32.totalorder %s40, %s43
    %p49 = scmp.eq.s32.totalorder %s9, 0
    %p50 = por %p48, %p49
    %p51 = scmp.ne.s32.totalorder %s40, %s43
    %p52 = scmp.eq.s32.totalorder %s14, 1
    %p53 = por %p51, %p52
    %p54 = scmp.ne.s32.totalorder %s43, %s44
    %p55 = scmp.eq.s32.totalorder %s14, 0
    %p56 = por %p54, %p55
    %p57 = scmp.ne.s32.totalorder %s43, %s44
    %p58 = scmp.eq.s32.totalorder %s15, 1
    %p59 = por %p57, %p58
    %p61 = scmp.ne.s32.totalorder %s44, %s60
    %p62 = scmp.eq.s32.totalorder %s15, 0
    %p63 = por %p61, %p62
    %s64 = ssub.s32 %s18, %s27
    %s65 = ssub.s32 %s17, %s31
    %s66 = sor.u32 %s64, %s65
    %p67 = scmp.eq.s32.totalorder %s66, 0
    %s69 = sadd.s32 %s68, 1
    %s70 = scalar_select %p67, %s68, %s69
    %p73 = pneg %p67
    %p74 = scmp.eq.s32.totalorder %s9, 1
    %p75 = por %p73, %p74
    %p76 = scmp.ne.s32.totalorder %s68, %s71
    %p77 = scmp.eq.s32.totalorder %s9, 0
    %p78 = por %p76, %p77
    %p79 = scmp.ne.s32.totalorder %s68, %s71
    %p80 = scmp.eq.s32.totalorder %s14, 1
    %p81 = por %p79, %p80
    %p82 = scmp.ne.s32.totalorder %s71, %s72
    %p83 = scmp.eq.s32.totalorder %s14, 0
    %p84 = por %p82, %p83
    %p85 = scmp.ne.s32.totalorder %s71, %s72
    %p86 = scmp.eq.s32.totalorder %s15, 1
    %p87 = por %p85, %p86
    %p89 = scmp.ne.s32.totalorder %s72, %s88
    %p90 = scmp.eq.s32.totalorder %s15, 0
    %p91 = por %p89, %p90
    %s92 = ssub.s32 %s17, %s31
    %p93 = scmp.eq.s32.totalorder %s92, 0
    %s95 = sadd.s32 %s94, 1
    %s96 = scalar_select %p93, %s94, %s95
    %p99 = pneg %p93
    %p100 = scmp.eq.s32.totalorder %s9, 1
    %p101 = por %p99, %p100
    %p102 = scmp.ne.s32.totalorder %s94, %s97
    %p103 = scmp.eq.s32.totalorder %s9, 0
    %p104 = por %p102, %p103
    %p105 = scmp.ne.s32.totalorder %s94, %s97
    %p106 = scmp.eq.s32.totalorder %s14, 1
    %p107 = por %p105, %p106
    %p108 = scmp.ne.s32.totalorder %s97, %s98
    %p109 = scmp.eq.s32.totalorder %s14, 0
    %p110 = por %p108, %p109
    %p111 = scmp.ne.s32.totalorder %s97, %s98
    %p112 = scmp.eq.s32.totalorder %s15, 1
    %p113 = por %p111, %p112
    %p115 = scmp.ne.s32.totalorder %s98, %s114
    %p116 = scmp.eq.s32.totalorder %s15, 0
    %p117 = por %p115, %p116
    %s118 = ssub.s32 %s16, %s35
    %s119 = ssub.s32 %s17, %s31
    %s120 = sor.u32 %s118, %s119
    %p121 = scmp.eq.s32.totalorder %s120, 0
    %s123 = sadd.s32 %s122, 1
    %s124 = scalar_select %p121, %s122, %s123
    %p127 = pneg %p121
    %p128 = scmp.eq.s32.totalorder %s9, 1
    %p129 = por %p127, %p128
    %p130 = scmp.ne.s32.totalorder %s122, %s125
    %p131 = scmp.eq.s32.totalorder %s9, 0
    %p132 = por %p130, %p131
    %p133 = scmp.ne.s32.totalorder %s122, %s125
    %p134 = scmp.eq.s32.totalorder %s14, 1
    %p135 = por %p133, %p134
    %p136 = scmp.ne.s32.totalorder %s125, %s126
    %p137 = scmp.eq.s32.totalorder %s14, 0
    %p138 = por %p136, %p137
    %p139 = scmp.ne.s32.totalorder %s125, %s126
    %p140 = scmp.eq.s32.totalorder %s15, 1
    %p141 = por %p139, %p140
    %p143 = scmp.ne.s32.totalorder %s126, %s142
    %p144 = scmp.eq.s32.totalorder %s15, 0
    %p145 = por %p143, %p144
    %p146 = scmp.le.s32.totalorder 1, %s9
    %p147 = scmp.lt.s32.totalorder %s9, 3
    %p148 = pnand %p146, %p147
    %p149 = pneg %p148
    // Predicated region
    $region9: #{sqldepth_forward.40} parent=5 // pred_check
      _
    $region10: #{sqldepth_forward.40} parent=5 // pred_check_branch
      %151 = sbr.rel (%p148) target = $region12
    $region11: #{sqldepth_forward.40} parent=5 // pred_region
      %s152 = ssub.s32 %s9, 1
      // Predicated region
      $region13: #{sqldepth_forward.40} parent=11 // pred_check
        %p153 = pneg %p84
      $region14: #{sqldepth_forward.40} parent=11 // pred_check_branch
        %155 = sbr.rel (%p153) target = $region16
      $region15: #{sqldepth_forward.40} parent=11 // pred_region
        %s156 = smul.u32 32, %s21
        %p157 = scmp.lt.s32.totalorder %s156, 31
        %s158 = scalar_select %p157, %s156, 31
        %p159 = scmp.lt.s32.totalorder %s20, 0
        %s160 = scalar_select %p159, %s20, 0
        %s161 = sadd.s32 %s160, %s158
        %s162 = smul.addr %s161, 4
        %s163 = scalar_lea.vmem %s1, %s162
        %s164 = smul.u32 32, %s21
      $region16: #{sqldepth_forward.40} parent=11 // pred_fallthru
        _
      // Predicated region
      $region17: #{sqldepth_forward.40} parent=11 // pred_check
        %p165 = pneg %p110
      $region18: #{sqldepth_forward.40} parent=11 // pred_check_branch
        %167 = sbr.rel (%p165) target = $region20
      $region19: #{sqldepth_forward.40} parent=11 // pred_region
        %p168 = scmp.lt.s32.totalorder %s20, 0
        %s169 = scalar_select %p168, %s20, 0
        %s170 = scalar_lea.vmem %s2, %s169
      $region20: #{sqldepth_forward.40} parent=11 // pred_fallthru
        _
    $region12: #{sqldepth_forward.40} parent=5 // pred_fallthru
      _
    %p171 = scmp.lt.s32.totalorder %s9, 2
    // Predicated region
    $region21: #{sqldepth_forward.40} parent=5 // pred_check
      %p172 = pneg %p171
    $region22: #{sqldepth_forward.40} parent=5 // pred_check_branch
      %174 = sbr.rel (%p172) target = $region24
    $region23: #{sqldepth_forward.40} parent=5 // pred_region
      // Predicated region
      $region25: #{sqldepth_forward.40} parent=23 // pred_check
        %p175 = pneg %p50
      $region26: #{sqldepth_forward.40} parent=23 // pred_check_branch
        %177 = sbr.rel (%p175) target = $region28
      $region27: #{sqldepth_forward.40} parent=23 // pred_region
        %s178 = smul.u32 32, %s16
        %s179 = smul.u32 2, %s18
        %p180 = scmp.lt.s32.totalorder %s178, 63
        %s181 = scalar_select %p180, %s178, 63
        %p182 = scmp.lt.s32.totalorder %s179, 1
        %s183 = scalar_select %p182, %s179, 1
        %s184 = smul.addr %s181, 2
        %s185 = sadd.s32 %s183, %s184
        %s186 = smul.addr %s185, 4
        %s187 = scalar_lea.vmem %s0, %s186
        %s188 = smul.u32 32, %s16
        %s189 = smul.u32 2, %s18
      $region28: #{sqldepth_forward.40} parent=23 // pred_fallthru
        _
    $region24: #{sqldepth_forward.40} parent=5 // pred_fallthru
      _
    %p190 = scmp.le.s32.totalorder 1, %s9
    %p191 = scmp.lt.s32.totalorder %s9, 3
    %p192 = pnand %p190, %p191
    %p193 = pneg %p192
    // Predicated region
    $region29: #{sqldepth_forward.40} parent=5 // pred_check
      _
    $region30: #{sqldepth_forward.40} parent=5 // pred_check_branch
      %195 = sbr.rel (%p192) target = $region32
    $region31: #{sqldepth_forward.40} parent=5 // pred_region
      %s196 = ssub.s32 %s9, 1
      %s197 = smul.u32 32, %s19
      %s198 = smul.u32 2, %s21
      %p199 = scmp.lt.s32.totalorder %s197, 63
      %s200 = scalar_select %p199, %s197, 63
      %p201 = scmp.lt.s32.totalorder %s198, 1
      %s202 = scalar_select %p201, %s198, 1
      %s203 = smul.addr %s200, 2
      %s204 = sadd.s32 %s202, %s203
      %s205 = smul.addr %s204, 4
      %s206 = scalar_lea.vmem %s0, %s205
      %p207 = pneg %p56
      %p208 = pneg %p53
      %s209 = smul.u32 32, %s21
      %p210 = scmp.lt.s32.totalorder %s209, 31
      %s211 = scalar_select %p210, %s209, 31
      %p212 = scmp.lt.s32.totalorder %s20, 0
      %s213 = scalar_select %p212, %s20, 0
      %s214 = sadd.s32 %s213, %s211
      %s215 = smul.addr %s214, 4
      %s216 = scalar_lea.vmem %s1, %s215
      %p217 = pneg %p84
      %p218 = pneg %p81
      %p219 = scmp.lt.s32.totalorder %s20, 0
      %s220 = scalar_select %p219, %s20, 0
      %s221 = scalar_lea.vmem %s2, %s220
      %p222 = pneg %p110
      %p223 = pneg %p107
      %p224 = pneg %p138
      %p225 = pneg %p135
      %s226 = smul.u32 32, %s19
      %p227 = scmp.lt.s32.totalorder %s226, 63
      %s228 = scalar_select %p227, %s226, 63
      %p229 = scmp.lt.s32.totalorder %s20, 0
      %s230 = scalar_select %p229, %s20, 0
      %s231 = sadd.s32 %s230, %s228
      %s232 = smul.addr %s231, 8
      %s233 = scalar_lea.vmem %s3, %s232
      %s234 = smul.u32 32, %s19
      %s235 = smul.u32 2, %s21
      %p236 = scmp.lt.s32.totalorder %s234, 63
      %s237 = scalar_select %p236, %s234, 63
      %p238 = scmp.lt.s32.totalorder %s235, 1
      %s239 = scalar_select %p238, %s235, 1
      %s240 = smul.addr %s237, 2
      %s241 = sadd.s32 %s239, %s240
      %s242 = smul.addr %s241, 4
      %s243 = scalar_lea.vmem %s0, %s242
      %s244 = smul.u32 32, %s19
      %s245 = smul.u32 2, %s21
      %s246 = smul.u32 32, %s21
      %p247 = scmp.lt.s32.totalorder %s246, 31
      %s248 = scalar_select %p247, %s246, 31
      %p249 = scmp.lt.s32.totalorder %s20, 0
      %s250 = scalar_select %p249, %s20, 0
      %s251 = sadd.s32 %s250, %s248
      %s252 = smul.addr %s251, 4
      %s253 = scalar_lea.vmem %s1, %s252
      %s254 = smul.u32 32, %s21
      %p255 = scmp.lt.s32.totalorder %s20, 0
      %s256 = scalar_select %p255, %s20, 0
      %s257 = scalar_lea.vmem %s2, %s256
      %s258 = smul.u32 32, %s19
      %p259 = scmp.lt.s32.totalorder %s258, 63
      %s260 = scalar_select %p259, %s258, 63
      %p261 = scmp.lt.s32.totalorder %s20, 0
      %s262 = scalar_select %p261, %s20, 0
      %s263 = sadd.s32 %s262, %s260
      %s264 = smul.addr %s263, 8
      %s265 = scalar_lea.vmem %s3, %s264
      %s266 = smul.u32 32, %s19
      %p268 = scmp.eq.s32.totalorder %s21, 0
      // Predicated region
      $region33: #{sqldepth_forward.40} parent=31 // pred_check
        %p269 = pneg %p268
      $region34: #{sqldepth_forward.40} parent=31 // pred_check_branch
        %271 = sbr.rel (%p269) target = $region36
      $region35: #{sqldepth_forward.40} parent=31 // pred_region
        %272 = vst [vmem:[#allocation2] sm:$0xff] 0.0
        %273 = vst [vmem:[#allocation2 + $0x8] sm:$0xff] 0.0
        %274 = vst [vmem:[#allocation2 + $0x10] sm:$0xff] 0.0
        %275 = vst [vmem:[#allocation2 + $0x18] sm:$0xff] 0.0
        %276 = vst [vmem:[#allocation2 + $0x20] sm:$0xff] 0.0
        %277 = vst [vmem:[#allocation2 + $0x28] sm:$0xff] 0.0
        %278 = vst [vmem:[#allocation2 + $0x30] sm:$0xff] 0.0
        %279 = vst [vmem:[#allocation2 + $0x38] sm:$0xff] 0.0
        %280 = vst [vmem:[#allocation2 + $0x40] sm:$0xff] 0.0
        %281 = vst [vmem:[#allocation2 + $0x48] sm:$0xff] 0.0
        %282 = vst [vmem:[#allocation2 + $0x50] sm:$0xff] 0.0
        %283 = vst [vmem:[#allocation2 + $0x58] sm:$0xff] 0.0
        %284 = vst [vmem:[#allocation2 + $0x60] sm:$0xff] 0.0
        %285 = vst [vmem:[#allocation2 + $0x68] sm:$0xff] 0.0
        %286 = vst [vmem:[#allocation2 + $0x70] sm:$0xff] 0.0
        %287 = vst [vmem:[#allocation2 + $0x78] sm:$0xff] 0.0
        %288 = vst [vmem:[#allocation2 + $0x80] sm:$0xff] 0.0
        %289 = vst [vmem:[#allocation2 + $0x88] sm:$0xff] 0.0
        %290 = vst [vmem:[#allocation2 + $0x90] sm:$0xff] 0.0
        %291 = vst [vmem:[#allocation2 + $0x98] sm:$0xff] 0.0
        %292 = vst [vmem:[#allocation2 + $0xa0] sm:$0xff] 0.0
        %293 = vst [vmem:[#allocation2 + $0xa8] sm:$0xff] 0.0
        %294 = vst [vmem:[#allocation2 + $0xb0] sm:$0xff] 0.0
        %295 = vst [vmem:[#allocation2 + $0xb8] sm:$0xff] 0.0
        %296 = vst [vmem:[#allocation2 + $0xc0] sm:$0xff] 0.0
        %297 = vst [vmem:[#allocation2 + $0xc8] sm:$0xff] 0.0
        %298 = vst [vmem:[#allocation2 + $0xd0] sm:$0xff] 0.0
        %299 = vst [vmem:[#allocation2 + $0xd8] sm:$0xff] 0.0
        %300 = vst [vmem:[#allocation2 + $0xe0] sm:$0xff] 0.0
        %301 = vst [vmem:[#allocation2 + $0xe8] sm:$0xff] 0.0
        %302 = vst [vmem:[#allocation2 + $0xf0] sm:$0xff] 0.0
        %303 = vst [vmem:[#allocation2 + $0xf8] sm:$0xff] 0.0
      $region36: #{sqldepth_forward.40} parent=31 // pred_fallthru
        _
      %v304 = vld [vmem:[#allocation2] sm:$0xff]
      %v305 = vld [vmem:[#allocation2 + $0x8] sm:$0xff]
      %v306 = vld [vmem:[#allocation2 + $0x10] sm:$0xff]
      %v307 = vld [vmem:[#allocation2 + $0x18] sm:$0xff]
      %v308 = vld [vmem:[#allocation2 + $0x20] sm:$0xff]
      %v309 = vld [vmem:[#allocation2 + $0x28] sm:$0xff]
      %v310 = vld [vmem:[#allocation2 + $0x30] sm:$0xff]
      %v311 = vld [vmem:[#allocation2 + $0x38] sm:$0xff]
      %v312 = vld [vmem:[#allocation2 + $0x40] sm:$0xff]
      %v313 = vld [vmem:[#allocation2 + $0x48] sm:$0xff]
      %v314 = vld [vmem:[#allocation2 + $0x50] sm:$0xff]
      %v315 = vld [vmem:[#allocation2 + $0x58] sm:$0xff]
      %v316 = vld [vmem:[#allocation2 + $0x60] sm:$0xff]
      %v317 = vld [vmem:[#allocation2 + $0x68] sm:$0xff]
      %v318 = vld [vmem:[#allocation2 + $0x70] sm:$0xff]
      %v319 = vld [vmem:[#allocation2 + $0x78] sm:$0xff]
      %v320 = vld [vmem:[#allocation2 + $0x80] sm:$0xff]
      %v321 = vld [vmem:[#allocation2 + $0x88] sm:$0xff]
      %v322 = vld [vmem:[#allocation2 + $0x90] sm:$0xff]
      %v323 = vld [vmem:[#allocation2 + $0x98] sm:$0xff]
      %v324 = vld [vmem:[#allocation2 + $0xa0] sm:$0xff]
      %v325 = vld [vmem:[#allocation2 + $0xa8] sm:$0xff]
      %v326 = vld [vmem:[#allocation2 + $0xb0] sm:$0xff]
      %v327 = vld [vmem:[#allocation2 + $0xb8] sm:$0xff]
      %v328 = vld [vmem:[#allocation2 + $0xc0] sm:$0xff]
      %v329 = vld [vmem:[#allocation2 + $0xc8] sm:$0xff]
      %v330 = vld [vmem:[#allocation2 + $0xd0] sm:$0xff]
      %v331 = vld [vmem:[#allocation2 + $0xd8] sm:$0xff]
      %v332 = vld [vmem:[#allocation2 + $0xe0] sm:$0xff]
      %v333 = vld [vmem:[#allocation2 + $0xe8] sm:$0xff]
      %v334 = vld [vmem:[#allocation2 + $0xf0] sm:$0xff]
      %v335 = vld [vmem:[#allocation2 + $0xf8] sm:$0xff]
      %v336 = vld [vmem:[%s243] sm:$0xff]
      %v337 = vld [vmem:[%s243 + $0x8] sm:$0xff]
      %v338 = vld [vmem:[%s243 + $0x10] sm:$0xff]
      %v339 = vld [vmem:[%s243 + $0x18] sm:$0xff]
      %v340 = vld [vmem:[%s243 + $0x20] sm:$0xff]
      %v341 = vld [vmem:[%s243 + $0x28] sm:$0xff]
      %v342 = vld [vmem:[%s243 + $0x30] sm:$0xff]
      %v343 = vld [vmem:[%s243 + $0x38] sm:$0xff]
      %v344 = vld [vmem:[%s243 + $0x40] sm:$0xff]
      %v345 = vld [vmem:[%s243 + $0x48] sm:$0xff]
      %v346 = vld [vmem:[%s243 + $0x50] sm:$0xff]
      %v347 = vld [vmem:[%s243 + $0x58] sm:$0xff]
      %v348 = vld [vmem:[%s243 + $0x60] sm:$0xff]
      %v349 = vld [vmem:[%s243 + $0x68] sm:$0xff]
      %v350 = vld [vmem:[%s243 + $0x70] sm:$0xff]
      %v351 = vld [vmem:[%s243 + $0x78] sm:$0xff]
      %v352 = vld [vmem:[%s243 + $0x80] sm:$0xff]
      %v353 = vld [vmem:[%s243 + $0x88] sm:$0xff]
      %v354 = vld [vmem:[%s243 + $0x90] sm:$0xff]
      %v355 = vld [vmem:[%s243 + $0x98] sm:$0xff]
      %v356 = vld [vmem:[%s243 + $0xa0] sm:$0xff]
      %v357 = vld [vmem:[%s243 + $0xa8] sm:$0xff]
      %v358 = vld [vmem:[%s243 + $0xb0] sm:$0xff]
      %v359 = vld [vmem:[%s243 + $0xb8] sm:$0xff]
      %v360 = vld [vmem:[%s243 + $0xc0] sm:$0xff]
      %v361 = vld [vmem:[%s243 + $0xc8] sm:$0xff]
      %v362 = vld [vmem:[%s243 + $0xd0] sm:$0xff]
      %v363 = vld [vmem:[%s243 + $0xd8] sm:$0xff]
      %v364 = vld [vmem:[%s243 + $0xe0] sm:$0xff]
      %v365 = vld [vmem:[%s243 + $0xe8] sm:$0xff]
      %v366 = vld [vmem:[%s243 + $0xf0] sm:$0xff]
      %v367 = vld [vmem:[%s243 + $0xf8] sm:$0xff]
      %v368 = vld [vmem:[%s253] sm:$0xf]
      %v369 = vld [vmem:[%s253 + $0x4] sm:$0xf]
      %v370 = vld [vmem:[%s253 + $0x8] sm:$0xf]
      %v371 = vld [vmem:[%s253 + $0xc] sm:$0xf]
      %v372 = vld [vmem:[%s253 + $0x10] sm:$0xf]
      %v373 = vld [vmem:[%s253 + $0x14] sm:$0xf]
      %v374 = vld [vmem:[%s253 + $0x18] sm:$0xf]
      %v375 = vld [vmem:[%s253 + $0x1c] sm:$0xf]
      %v376 = vld [vmem:[%s253 + $0x20] sm:$0xf]
      %v377 = vld [vmem:[%s253 + $0x24] sm:$0xf]
      %v378 = vld [vmem:[%s253 + $0x28] sm:$0xf]
      %v379 = vld [vmem:[%s253 + $0x2c] sm:$0xf]
      %v380 = vld [vmem:[%s253 + $0x30] sm:$0xf]
      %v381 = vld [vmem:[%s253 + $0x34] sm:$0xf]
      %v382 = vld [vmem:[%s253 + $0x38] sm:$0xf]
      %v383 = vld [vmem:[%s253 + $0x3c] sm:$0xf]
      %v384 = vld [vmem:[%s253 + $0x40] sm:$0xf]
      %v385 = vld [vmem:[%s253 + $0x44] sm:$0xf]
      %v386 = vld [vmem:[%s253 + $0x48] sm:$0xf]
      %v387 = vld [vmem:[%s253 + $0x4c] sm:$0xf]
      %v388 = vld [vmem:[%s253 + $0x50] sm:$0xf]
      %v389 = vld [vmem:[%s253 + $0x54] sm:$0xf]
      %v390 = vld [vmem:[%s253 + $0x58] sm:$0xf]
      %v391 = vld [vmem:[%s253 + $0x5c] sm:$0xf]
      %v392 = vld [vmem:[%s253 + $0x60] sm:$0xf]
      %v393 = vld [vmem:[%s253 + $0x64] sm:$0xf]
      %v394 = vld [vmem:[%s253 + $0x68] sm:$0xf]
      %v395 = vld [vmem:[%s253 + $0x6c] sm:$0xf]
      %v396 = vld [vmem:[%s253 + $0x70] sm:$0xf]
      %v397 = vld [vmem:[%s253 + $0x74] sm:$0xf]
      %v398 = vld [vmem:[%s253 + $0x78] sm:$0xf]
      %v399 = vld [vmem:[%s253 + $0x7c] sm:$0xf]
      %v432 = vunpack.c.l.b16 %v336
      %v433 = vunpack.c.h.b16 %v336
      %v434 = vunpack.c.l.b16 %v337
      %v435 = vunpack.c.h.b16 %v337
      %v436 = vunpack.c.l.b16 %v338
      %v437 = vunpack.c.h.b16 %v338
      %v438 = vunpack.c.l.b16 %v339
      %v439 = vunpack.c.h.b16 %v339
      %v440 = vunpack.c.l.b16 %v340
      %v441 = vunpack.c.h.b16 %v340
      %v442 = vunpack.c.l.b16 %v341
      %v443 = vunpack.c.h.b16 %v341
      %v444 = vunpack.c.l.b16 %v342
      %v445 = vunpack.c.h.b16 %v342
      %v446 = vunpack.c.l.b16 %v343
      %v447 = vunpack.c.h.b16 %v343
      %v448 = vunpack.c.l.b16 %v344
      %v449 = vunpack.c.h.b16 %v344
      %v450 = vunpack.c.l.b16 %v345
      %v451 = vunpack.c.h.b16 %v345
      %v452 = vunpack.c.l.b16 %v346
      %v453 = vunpack.c.h.b16 %v346
      %v454 = vunpack.c.l.b16 %v347
      %v455 = vunpack.c.h.b16 %v347
      %v456 = vunpack.c.l.b16 %v348
      %v457 = vunpack.c.h.b16 %v348
      %v458 = vunpack.c.l.b16 %v349
      %v459 = vunpack.c.h.b16 %v349
      %v460 = vunpack.c.l.b16 %v350
      %v461 = vunpack.c.h.b16 %v350
      %v462 = vunpack.c.l.b16 %v351
      %v463 = vunpack.c.h.b16 %v351
      %v464 = vunpack.c.l.b16 %v352
      %v465 = vunpack.c.h.b16 %v352
      %v466 = vunpack.c.l.b16 %v353
      %v467 = vunpack.c.h.b16 %v353
      %v468 = vunpack.c.l.b16 %v354
      %v469 = vunpack.c.h.b16 %v354
      %v470 = vunpack.c.l.b16 %v355
      %v471 = vunpack.c.h.b16 %v355
      %v472 = vunpack.c.l.b16 %v356
      %v473 = vunpack.c.h.b16 %v356
      %v474 = vunpack.c.l.b16 %v357
      %v475 = vunpack.c.h.b16 %v357
      %v476 = vunpack.c.l.b16 %v358
      %v477 = vunpack.c.h.b16 %v358
      %v478 = vunpack.c.l.b16 %v359
      %v479 = vunpack.c.h.b16 %v359
      %v480 = vunpack.c.l.b16 %v360
      %v481 = vunpack.c.h.b16 %v360
      %v482 = vunpack.c.l.b16 %v361
      %v483 = vunpack.c.h.b16 %v361
      %v484 = vunpack.c.l.b16 %v362
      %v485 = vunpack.c.h.b16 %v362
      %v486 = vunpack.c.l.b16 %v363
      %v487 = vunpack.c.h.b16 %v363
      %v488 = vunpack.c.l.b16 %v364
      %v489 = vunpack.c.h.b16 %v364
      %v490 = vunpack.c.l.b16 %v365
      %v491 = vunpack.c.h.b16 %v365
      %v492 = vunpack.c.l.b16 %v366
      %v493 = vunpack.c.h.b16 %v366
      %v494 = vunpack.c.l.b16 %v367
      %v495 = vunpack.c.h.b16 %v367
      %v496 = vpack.c.b16 %v434, %v432
      %v497 = vpack.c.b16 %v435, %v433
      %v498 = vpack.c.b16 %v438, %v436
      %v499 = vpack.c.b16 %v439, %v437
      %v500 = vpack.c.b16 %v442, %v440
      %v501 = vpack.c.b16 %v443, %v441
      %v502 = vpack.c.b16 %v446, %v444
      %v503 = vpack.c.b16 %v447, %v445
      %v504 = vpack.c.b16 %v450, %v448
      %v505 = vpack.c.b16 %v451, %v449
      %v506 = vpack.c.b16 %v454, %v452
      %v507 = vpack.c.b16 %v455, %v453
      %v508 = vpack.c.b16 %v458, %v456
      %v509 = vpack.c.b16 %v459, %v457
      %v510 = vpack.c.b16 %v462, %v460
      %v511 = vpack.c.b16 %v463, %v461
      %v512 = vpack.c.b16 %v466, %v464
      %v513 = vpack.c.b16 %v467, %v465
      %v514 = vpack.c.b16 %v470, %v468
      %v515 = vpack.c.b16 %v471, %v469
      %v516 = vpack.c.b16 %v474, %v472
      %v517 = vpack.c.b16 %v475, %v473
      %v518 = vpack.c.b16 %v478, %v476
      %v519 = vpack.c.b16 %v479, %v477
      %v520 = vpack.c.b16 %v482, %v480
      %v521 = vpack.c.b16 %v483, %v481
      %v522 = vpack.c.b16 %v486, %v484
      %v523 = vpack.c.b16 %v487, %v485
      %v524 = vpack.c.b16 %v490, %v488
      %v525 = vpack.c.b16 %v491, %v489
      %v526 = vpack.c.b16 %v494, %v492
      %v527 = vpack.c.b16 %v495, %v493
      %v592 = vunpack.c.l.b16 %v368
      %v593 = vunpack.c.l.b16 %v369
      %v594 = vunpack.c.l.b16 %v370
      %v595 = vunpack.c.l.b16 %v371
      %v596 = vunpack.c.l.b16 %v372
      %v597 = vunpack.c.l.b16 %v373
      %v598 = vunpack.c.l.b16 %v374
      %v599 = vunpack.c.l.b16 %v375
      %v600 = vunpack.c.l.b16 %v376
      %v601 = vunpack.c.l.b16 %v377
      %v602 = vunpack.c.l.b16 %v378
      %v603 = vunpack.c.l.b16 %v379
      %v604 = vunpack.c.l.b16 %v380
      %v605 = vunpack.c.l.b16 %v381
      %v606 = vunpack.c.l.b16 %v382
      %v607 = vunpack.c.l.b16 %v383
      %v608 = vunpack.c.l.b16 %v384
      %v609 = vunpack.c.l.b16 %v385
      %v610 = vunpack.c.l.b16 %v386
      %v611 = vunpack.c.l.b16 %v387
      %v612 = vunpack.c.l.b16 %v388
      %v613 = vunpack.c.l.b16 %v389
      %v614 = vunpack.c.l.b16 %v390
      %v615 = vunpack.c.l.b16 %v391
      %v616 = vunpack.c.l.b16 %v392
      %v617 = vunpack.c.l.b16 %v393
      %v618 = vunpack.c.l.b16 %v394
      %v619 = vunpack.c.l.b16 %v395
      %v620 = vunpack.c.l.b16 %v396
      %v621 = vunpack.c.l.b16 %v397
      %v622 = vunpack.c.l.b16 %v398
      %v623 = vunpack.c.l.b16 %v399
      %v624 = vpack.c.b16 %v593, %v592
      %v625 = vpack.c.b16 %v595, %v594
      %v626 = vpack.c.b16 %v597, %v596
      %v627 = vpack.c.b16 %v599, %v598
      %v628 = vpack.c.b16 %v601, %v600
      %v629 = vpack.c.b16 %v603, %v602
      %v630 = vpack.c.b16 %v605, %v604
      %v631 = vpack.c.b16 %v607, %v606
      %v632 = vpack.c.b16 %v609, %v608
      %v633 = vpack.c.b16 %v611, %v610
      %v634 = vpack.c.b16 %v613, %v612
      %v635 = vpack.c.b16 %v615, %v614
      %v636 = vpack.c.b16 %v617, %v616
      %v637 = vpack.c.b16 %v619, %v618
      %v638 = vpack.c.b16 %v621, %v620
      %v639 = vpack.c.b16 %v623, %v622
      %656 = vmatprep.subr.bf16.mxu0 0
      %657 = vmatpush1.bf16.msra.mxu0 %v624
      %658 = vmatprep.subr.bf16.mxu0 0
      %659 = vmatpush1.bf16.msra.mxu0 %v625
      %660 = vmatprep.subr.bf16.mxu0 0
      %661 = vmatpush1.bf16.msra.mxu0 %v626
      %662 = vmatprep.subr.bf16.mxu0 0
      %663 = vmatpush1.bf16.msra.mxu0 %v627
      %664 = vmatprep.subr.bf16.mxu0 0
      %665 = vmatpush1.bf16.msra.mxu0 %v628
      %666 = vmatprep.subr.bf16.mxu0 0
      %667 = vmatpush1.bf16.msra.mxu0 %v629
      %668 = vmatprep.subr.bf16.mxu0 0
      %669 = vmatpush1.bf16.msra.mxu0 %v630
      %670 = vmatprep.subr.bf16.mxu0 0
      %671 = vmatpush1.bf16.msra.mxu0 %v631
      %672 = vmatprep.subr.bf16.mxu0 0
      %673 = vmatpush1.bf16.msra.mxu0 %v632
      %674 = vmatprep.subr.bf16.mxu0 0
      %675 = vmatpush1.bf16.msra.mxu0 %v633
      %676 = vmatprep.subr.bf16.mxu0 0
      %677 = vmatpush1.bf16.msra.mxu0 %v634
      %678 = vmatprep.subr.bf16.mxu0 0
      %679 = vmatpush1.bf16.msra.mxu0 %v635
      %680 = vmatprep.subr.bf16.mxu0 0
      %681 = vmatpush1.bf16.msra.mxu0 %v636
      %682 = vmatprep.subr.bf16.mxu0 0
      %683 = vmatpush1.bf16.msra.mxu0 %v637
      %684 = vmatprep.subr.bf16.mxu0 0
      %685 = vmatpush1.bf16.msra.mxu0 %v638
      %686 = vmatprep.subr.bf16.mxu0 0
      %687 = vmatpush1.bf16.msra.mxu0 %v639
      %688 = vmatprep.mubr.bf16.mxu0 %v497
      %689 = vmatmul.mubr.bf16.gmra.mrb[0].mxu0 %v496
      %v690 = vpop.f32.mrb[0].mxu0
      %v691 = vadd.f32 0.0, %v690
      %v692 = vpop.f32.mrb[0].mxu0
      %v693 = vpop.f32.mrb[0].mxu0
      %v694 = vadd.f32 0.0, %v693
      %v695 = vpop.f32.mrb[0].mxu0
      %696 = vmatprep.mubr.bf16.mxu0 %v499
      %697 = vmatmul.mubr.bf16.gmra.mrb[0].mxu0 %v498
      %v698 = vpop.f32.mrb[0].mxu0
      %v699 = vadd.f32 0.0, %v698
      %v700 = vpop.f32.mrb[0].mxu0
      %v701 = vpop.f32.mrb[0].mxu0
      %v702 = vadd.f32 0.0, %v701
      %v703 = vpop.f32.mrb[0].mxu0
      %704 = vmatprep.mubr.bf16.mxu0 %v501
      %705 = vmatmul.mubr.bf16.gmra.mrb[0].mxu0 %v500
      %v706 = vpop.f32.mrb[0].mxu0
      %v707 = vadd.f32 0.0, %v706
      %v708 = vpop.f32.mrb[0].mxu0
      %v709 = vpop.f32.mrb[0].mxu0
      %v710 = vadd.f32 0.0, %v709
      %v711 = vpop.f32.mrb[0].mxu0
      %712 = vmatprep.mubr.bf16.mxu0 %v503
      %713 = vmatmul.mubr.bf16.gmra.mrb[0].mxu0 %v502
      %v714 = vpop.f32.mrb[0].mxu0
      %v715 = vadd.f32 0.0, %v714
      %v716 = vpop.f32.mrb[0].mxu0
      %v717 = vpop.f32.mrb[0].mxu0
      %v718 = vadd.f32 0.0, %v717
      %v719 = vpop.f32.mrb[0].mxu0
      %720 = vmatprep.mubr.bf16.mxu0 %v505
      %721 = vmatmul.mubr.bf16.gmra.mrb[0].mxu0 %v504
      %v722 = vpop.f32.mrb[0].mxu0
      %v723 = vadd.f32 0.0, %v722
      %v724 = vpop.f32.mrb[0].mxu0
      %v725 = vpop.f32.mrb[0].mxu0
      %v726 = vadd.f32 0.0, %v725
      %v727 = vpop.f32.mrb[0].mxu0
      %728 = vmatprep.mubr.bf16.mxu0 %v507
      %729 = vmatmul.mubr.bf16.gmra.mrb[0].mxu0 %v506
      %v730 = vpop.f32.mrb[0].mxu0
      %v731 = vadd.f32 0.0, %v730
      %v732 = vpop.f32.mrb[0].mxu0
      %v733 = vpop.f32.mrb[0].mxu0
      %v734 = vadd.f32 0.0, %v733
      %v735 = vpop.f32.mrb[0].mxu0
      %736 = vmatprep.mubr.bf16.mxu0 %v509
      %737 = vmatmul.mubr.bf16.gmra.mrb[0].mxu0 %v508
      %v738 = vpop.f32.mrb[0].mxu0
      %v739 = vadd.f32 0.0, %v738
      %v740 = vpop.f32.mrb[0].mxu0
      %v741 = vpop.f32.mrb[0].mxu0
      %v742 = vadd.f32 0.0, %v741
      %v743 = vpop.f32.mrb[0].mxu0
      %744 = vmatprep.mubr.bf16.mxu0 %v511
      %745 = vmatmul.mubr.bf16.gmra.mrb[0].mxu0 %v510
      %v746 = vpop.f32.mrb[0].mxu0
      %v747 = vadd.f32 0.0, %v746
      %v748 = vpop.f32.mrb[0].mxu0
      %v749 = vpop.f32.mrb[0].mxu0
      %v750 = vadd.f32 0.0, %v749
      %v751 = vpop.f32.mrb[0].mxu0
      %752 = vmatprep.mubr.bf16.mxu0 %v513
      %753 = vmatmul.mubr.bf16.gmra.mrb[0].mxu0 %v512
      %v754 = vpop.f32.mrb[0].mxu0
      %v755 = vadd.f32 0.0, %v754
      %v756 = vpop.f32.mrb[0].mxu0
      %v757 = vpop.f32.mrb[0].mxu0
      %v758 = vadd.f32 0.0, %v757
      %v759 = vpop.f32.mrb[0].mxu0
      %760 = vmatprep.mubr.bf16.mxu0 %v515
      %761 = vmatmul.mubr.bf16.gmra.mrb[0].mxu0 %v514
      %v762 = vpop.f32.mrb[0].mxu0
      %v763 = vadd.f32 0.0, %v762
      %v764 = vpop.f32.mrb[0].mxu0
      %v765 = vpop.f32.mrb[0].mxu0
      %v766 = vadd.f32 0.0, %v765
      %v767 = vpop.f32.mrb[0].mxu0
      %768 = vmatprep.mubr.bf16.mxu0 %v517
      %769 = vmatmul.mubr.bf16.gmra.mrb[0].mxu0 %v516
      %v770 = vpop.f32.mrb[0].mxu0
      %v771 = vadd.f32 0.0, %v770
      %v772 = vpop.f32.mrb[0].mxu0
      %v773 = vpop.f32.mrb[0].mxu0
      %v774 = vadd.f32 0.0, %v773
      %v775 = vpop.f32.mrb[0].mxu0
      %776 = vmatprep.mubr.bf16.mxu0 %v519
      %777 = vmatmul.mubr.bf16.gmra.mrb[0].mxu0 %v518
      %v778 = vpop.f32.mrb[0].mxu0
      %v779 = vadd.f32 0.0, %v778
      %v780 = vpop.f32.mrb[0].mxu0
      %v781 = vpop.f32.mrb[0].mxu0
      %v782 = vadd.f32 0.0, %v781
      %v783 = vpop.f32.mrb[0].mxu0
      %784 = vmatprep.mubr.bf16.mxu0 %v521
      %785 = vmatmul.mubr.bf16.gmra.mrb[0].mxu0 %v520
      %v786 = vpop.f32.mrb[0].mxu0
      %v787 = vadd.f32 0.0, %v786
      %v788 = vpop.f32.mrb[0].mxu0
      %v789 = vpop.f32.mrb[0].mxu0
      %v790 = vadd.f32 0.0, %v789
      %v791 = vpop.f32.mrb[0].mxu0
      %792 = vmatprep.mubr.bf16.mxu0 %v523
      %793 = vmatmul.mubr.bf16.gmra.mrb[0].mxu0 %v522
      %v794 = vpop.f32.mrb[0].mxu0
      %v795 = vadd.f32 0.0, %v794
      %v796 = vpop.f32.mrb[0].mxu0
      %v797 = vpop.f32.mrb[0].mxu0
      %v798 = vadd.f32 0.0, %v797
      %v799 = vpop.f32.mrb[0].mxu0
      %800 = vmatprep.mubr.bf16.mxu0 %v525
      %801 = vmatmul.mubr.bf16.gmra.mrb[0].mxu0 %v524
      %v802 = vpop.f32.mrb[0].mxu0
      %v803 = vadd.f32 0.0, %v802
      %v804 = vpop.f32.mrb[0].mxu0
      %v805 = vpop.f32.mrb[0].mxu0
      %v806 = vadd.f32 0.0, %v805
      %v807 = vpop.f32.mrb[0].mxu0
      %808 = vmatprep.mubr.bf16.mxu0 %v527
      %809 = vmatmul.mubr.bf16.gmra.mrb[0].mxu0 %v526
      %v810 = vpop.f32.mrb[0].mxu0
      %v811 = vadd.f32 0.0, %v810
      %v812 = vpop.f32.mrb[0].mxu0
      %v813 = vpop.f32.mrb[0].mxu0
      %v814 = vadd.f32 0.0, %v813
      %v815 = vpop.f32.mrb[0].mxu0
      %816 = vdwg.mxu0
      %v817 = vadd.f32 %v304, %v691
      %v818 = vadd.f32 %v305, %v694
      %v819 = vadd.f32 %v306, %v699
      %v820 = vadd.f32 %v307, %v702
      %v821 = vadd.f32 %v308, %v707
      %v822 = vadd.f32 %v309, %v710
      %v823 = vadd.f32 %v310, %v715
      %v824 = vadd.f32 %v311, %v718
      %v825 = vadd.f32 %v312, %v723
      %v826 = vadd.f32 %v313, %v726
      %v827 = vadd.f32 %v314, %v731
      %v828 = vadd.f32 %v315, %v734
      %v829 = vadd.f32 %v316, %v739
      %v830 = vadd.f32 %v317, %v742
      %v831 = vadd.f32 %v318, %v747
      %v832 = vadd.f32 %v319, %v750
      %v833 = vadd.f32 %v320, %v755
      %v834 = vadd.f32 %v321, %v758
      %v835 = vadd.f32 %v322, %v763
      %v836 = vadd.f32 %v323, %v766
      %v837 = vadd.f32 %v324, %v771
      %v838 = vadd.f32 %v325, %v774
      %v839 = vadd.f32 %v326, %v779
      %v840 = vadd.f32 %v327, %v782
      %v841 = vadd.f32 %v328, %v787
      %v842 = vadd.f32 %v329, %v790
      %v843 = vadd.f32 %v330, %v795
      %v844 = vadd.f32 %v331, %v798
      %v845 = vadd.f32 %v332, %v803
      %v846 = vadd.f32 %v333, %v806
      %v847 = vadd.f32 %v334, %v811
      %v848 = vadd.f32 %v335, %v814
      %849 = vst [vmem:[#allocation2] sm:$0xff] %v817
      %850 = vst [vmem:[#allocation2 + $0x8] sm:$0xff] %v818
      %851 = vst [vmem:[#allocation2 + $0x10] sm:$0xff] %v819
      %852 = vst [vmem:[#allocation2 + $0x18] sm:$0xff] %v820
      %853 = vst [vmem:[#allocation2 + $0x20] sm:$0xff] %v821
      %854 = vst [vmem:[#allocation2 + $0x28] sm:$0xff] %v822
      %855 = vst [vmem:[#allocation2 + $0x30] sm:$0xff] %v823
      %856 = vst [vmem:[#allocation2 + $0x38] sm:$0xff] %v824
      %857 = vst [vmem:[#allocation2 + $0x40] sm:$0xff] %v825
      %858 = vst [vmem:[#allocation2 + $0x48] sm:$0xff] %v826
      %859 = vst [vmem:[#allocation2 + $0x50] sm:$0xff] %v827
      %860 = vst [vmem:[#allocation2 + $0x58] sm:$0xff] %v828
      %861 = vst [vmem:[#allocation2 + $0x60] sm:$0xff] %v829
      %862 = vst [vmem:[#allocation2 + $0x68] sm:$0xff] %v830
      %863 = vst [vmem:[#allocation2 + $0x70] sm:$0xff] %v831
      %864 = vst [vmem:[#allocation2 + $0x78] sm:$0xff] %v832
      %865 = vst [vmem:[#allocation2 + $0x80] sm:$0xff] %v833
      %866 = vst [vmem:[#allocation2 + $0x88] sm:$0xff] %v834
      %867 = vst [vmem:[#allocation2 + $0x90] sm:$0xff] %v835
      %868 = vst [vmem:[#allocation2 + $0x98] sm:$0xff] %v836
      %869 = vst [vmem:[#allocation2 + $0xa0] sm:$0xff] %v837
      %870 = vst [vmem:[#allocation2 + $0xa8] sm:$0xff] %v838
      %871 = vst [vmem:[#allocation2 + $0xb0] sm:$0xff] %v839
      %872 = vst [vmem:[#allocation2 + $0xb8] sm:$0xff] %v840
      %873 = vst [vmem:[#allocation2 + $0xc0] sm:$0xff] %v841
      %874 = vst [vmem:[#allocation2 + $0xc8] sm:$0xff] %v842
      %875 = vst [vmem:[#allocation2 + $0xd0] sm:$0xff] %v843
      %876 = vst [vmem:[#allocation2 + $0xd8] sm:$0xff] %v844
      %877 = vst [vmem:[#allocation2 + $0xe0] sm:$0xff] %v845
      %878 = vst [vmem:[#allocation2 + $0xe8] sm:$0xff] %v846
      %879 = vst [vmem:[#allocation2 + $0xf0] sm:$0xff] %v847
      %880 = vst [vmem:[#allocation2 + $0xf8] sm:$0xff] %v848
      // Predicated region
      $region37: #{sqldepth_forward.40} parent=31 // pred_check
        %p881 = pneg %p268
      $region38: #{sqldepth_forward.40} parent=31 // pred_check_branch
        %883 = sbr.rel (%p881) target = $region40
      $region39: #{sqldepth_forward.40} parent=31 // pred_region
        %v884 = vld [vmem:[#allocation2] sm:$0xff]
        %v885 = vld [vmem:[#allocation2 + $0x8] sm:$0xff]
        %v886 = vld [vmem:[#allocation2 + $0x10] sm:$0xff]
        %v887 = vld [vmem:[#allocation2 + $0x18] sm:$0xff]
        %v888 = vld [vmem:[#allocation2 + $0x20] sm:$0xff]
        %v889 = vld [vmem:[#allocation2 + $0x28] sm:$0xff]
        %v890 = vld [vmem:[#allocation2 + $0x30] sm:$0xff]
        %v891 = vld [vmem:[#allocation2 + $0x38] sm:$0xff]
        %v892 = vld [vmem:[#allocation2 + $0x40] sm:$0xff]
        %v893 = vld [vmem:[#allocation2 + $0x48] sm:$0xff]
        %v894 = vld [vmem:[#allocation2 + $0x50] sm:$0xff]
        %v895 = vld [vmem:[#allocation2 + $0x58] sm:$0xff]
        %v896 = vld [vmem:[#allocation2 + $0x60] sm:$0xff]
        %v897 = vld [vmem:[#allocation2 + $0x68] sm:$0xff]
        %v898 = vld [vmem:[#allocation2 + $0x70] sm:$0xff]
        %v899 = vld [vmem:[#allocation2 + $0x78] sm:$0xff]
        %v900 = vld [vmem:[#allocation2 + $0x80] sm:$0xff]
        %v901 = vld [vmem:[#allocation2 + $0x88] sm:$0xff]
        %v902 = vld [vmem:[#allocation2 + $0x90] sm:$0xff]
        %v903 = vld [vmem:[#allocation2 + $0x98] sm:$0xff]
        %v904 = vld [vmem:[#allocation2 + $0xa0] sm:$0xff]
        %v905 = vld [vmem:[#allocation2 + $0xa8] sm:$0xff]
        %v906 = vld [vmem:[#allocation2 + $0xb0] sm:$0xff]
        %v907 = vld [vmem:[#allocation2 + $0xb8] sm:$0xff]
        %v908 = vld [vmem:[#allocation2 + $0xc0] sm:$0xff]
        %v909 = vld [vmem:[#allocation2 + $0xc8] sm:$0xff]
        %v910 = vld [vmem:[#allocation2 + $0xd0] sm:$0xff]
        %v911 = vld [vmem:[#allocation2 + $0xd8] sm:$0xff]
        %v912 = vld [vmem:[#allocation2 + $0xe0] sm:$0xff]
        %v913 = vld [vmem:[#allocation2 + $0xe8] sm:$0xff]
        %v914 = vld [vmem:[#allocation2 + $0xf0] sm:$0xff]
        %v915 = vld [vmem:[#allocation2 + $0xf8] sm:$0xff]
        %v916 = vld [vmem:[%s257] sm:$0x1]
        %v918 = vlaneseq
        %v919 = vshrl.u32 %v918, 7
        %v920 = vsub.s32 0, %v919
        %v921 = vrot.slane %v916, %v920
        %v923 = vadd.f32 %v884, %v921
        %v924 = vadd.f32 %v885, %v921
        %v925 = vadd.f32 %v886, %v921
        %v926 = vadd.f32 %v887, %v921
        %v927 = vadd.f32 %v888, %v921
        %v928 = vadd.f32 %v889, %v921
        %v929 = vadd.f32 %v890, %v921
        %v930 = vadd.f32 %v891, %v921
        %v931 = vadd.f32 %v892, %v921
        %v932 = vadd.f32 %v893, %v921
        %v933 = vadd.f32 %v894, %v921
        %v934 = vadd.f32 %v895, %v921
        %v935 = vadd.f32 %v896, %v921
        %v936 = vadd.f32 %v897, %v921
        %v937 = vadd.f32 %v898, %v921
        %v938 = vadd.f32 %v899, %v921
        %v939 = vadd.f32 %v900, %v921
        %v940 = vadd.f32 %v901, %v921
        %v941 = vadd.f32 %v902, %v921
        %v942 = vadd.f32 %v903, %v921
        %v943 = vadd.f32 %v904, %v921
        %v944 = vadd.f32 %v905, %v921
        %v945 = vadd.f32 %v906, %v921
        %v946 = vadd.f32 %v907, %v921
        %v947 = vadd.f32 %v908, %v921
        %v948 = vadd.f32 %v909, %v921
        %v949 = vadd.f32 %v910, %v921
        %v950 = vadd.f32 %v911, %v921
        %v951 = vadd.f32 %v912, %v921
        %v952 = vadd.f32 %v913, %v921
        %v953 = vadd.f32 %v914, %v921
        %v954 = vadd.f32 %v915, %v921
        %v955 = vmax.f32 %v923, 0.0
        %v956 = vmax.f32 %v924, 0.0
        %v957 = vmax.f32 %v925, 0.0
        %v958 = vmax.f32 %v926, 0.0
        %v959 = vmax.f32 %v927, 0.0
        %v960 = vmax.f32 %v928, 0.0
        %v961 = vmax.f32 %v929, 0.0
        %v962 = vmax.f32 %v930, 0.0
        %v963 = vmax.f32 %v931, 0.0
        %v964 = vmax.f32 %v932, 0.0
        %v965 = vmax.f32 %v933, 0.0
        %v966 = vmax.f32 %v934, 0.0
        %v967 = vmax.f32 %v935, 0.0
        %v968 = vmax.f32 %v936, 0.0
        %v969 = vmax.f32 %v937, 0.0
        %v970 = vmax.f32 %v938, 0.0
        %v971 = vmax.f32 %v939, 0.0
        %v972 = vmax.f32 %v940, 0.0
        %v973 = vmax.f32 %v941, 0.0
        %v974 = vmax.f32 %v942, 0.0
        %v975 = vmax.f32 %v943, 0.0
        %v976 = vmax.f32 %v944, 0.0
        %v977 = vmax.f32 %v945, 0.0
        %v978 = vmax.f32 %v946, 0.0
        %v979 = vmax.f32 %v947, 0.0
        %v980 = vmax.f32 %v948, 0.0
        %v981 = vmax.f32 %v949, 0.0
        %v982 = vmax.f32 %v950, 0.0
        %v983 = vmax.f32 %v951, 0.0
        %v984 = vmax.f32 %v952, 0.0
        %v985 = vmax.f32 %v953, 0.0
        %v986 = vmax.f32 %v954, 0.0
        %987 = vst [vmem:[%s265] sm:$0xff] %v955
        %988 = vst [vmem:[%s265 + $0x8] sm:$0xff] %v956
        %989 = vst [vmem:[%s265 + $0x10] sm:$0xff] %v957
        %990 = vst [vmem:[%s265 + $0x18] sm:$0xff] %v958
        %991 = vst [vmem:[%s265 + $0x20] sm:$0xff] %v959
        %992 = vst [vmem:[%s265 + $0x28] sm:$0xff] %v960
        %993 = vst [vmem:[%s265 + $0x30] sm:$0xff] %v961
        %994 = vst [vmem:[%s265 + $0x38] sm:$0xff] %v962
        %995 = vst [vmem:[%s265 + $0x40] sm:$0xff] %v963
        %996 = vst [vmem:[%s265 + $0x48] sm:$0xff] %v964
        %997 = vst [vmem:[%s265 + $0x50] sm:$0xff] %v965
        %998 = vst [vmem:[%s265 + $0x58] sm:$0xff] %v966
        %999 = vst [vmem:[%s265 + $0x60] sm:$0xff] %v967
        %1000 = vst [vmem:[%s265 + $0x68] sm:$0xff] %v968
        %1001 = vst [vmem:[%s265 + $0x70] sm:$0xff] %v969
        %1002 = vst [vmem:[%s265 + $0x78] sm:$0xff] %v970
        %1003 = vst [vmem:[%s265 + $0x80] sm:$0xff] %v971
        %1004 = vst [vmem:[%s265 + $0x88] sm:$0xff] %v972
        %1005 = vst [vmem:[%s265 + $0x90] sm:$0xff] %v973
        %1006 = vst [vmem:[%s265 + $0x98] sm:$0xff] %v974
        %1007 = vst [vmem:[%s265 + $0xa0] sm:$0xff] %v975
        %1008 = vst [vmem:[%s265 + $0xa8] sm:$0xff] %v976
        %1009 = vst [vmem:[%s265 + $0xb0] sm:$0xff] %v977
        %1010 = vst [vmem:[%s265 + $0xb8] sm:$0xff] %v978
        %1011 = vst [vmem:[%s265 + $0xc0] sm:$0xff] %v979
        %1012 = vst [vmem:[%s265 + $0xc8] sm:$0xff] %v980
        %1013 = vst [vmem:[%s265 + $0xd0] sm:$0xff] %v981
        %1014 = vst [vmem:[%s265 + $0xd8] sm:$0xff] %v982
        %1015 = vst [vmem:[%s265 + $0xe0] sm:$0xff] %v983
        %1016 = vst [vmem:[%s265 + $0xe8] sm:$0xff] %v984
        %1017 = vst [vmem:[%s265 + $0xf0] sm:$0xff] %v985
        %1018 = vst [vmem:[%s265 + $0xf8] sm:$0xff] %v986
      $region40: #{sqldepth_forward.40} parent=31 // pred_fallthru
        _
      %s1019 = smul.u32 32, %s19
      %p1020 = scmp.lt.s32.totalorder %s1019, 63
      %s1021 = scalar_select %p1020, %s1019, 63
      %p1022 = scmp.lt.s32.totalorder %s20, 0
      %s1023 = scalar_select %p1022, %s20, 0
      %s1024 = sadd.s32 %s1023, %s1021
      %s1025 = smul.addr %s1024, 8
      %s1026 = scalar_lea.vmem %s3, %s1025
      // Predicated region
      $region41: #{sqldepth_forward.40} parent=31 // pred_check
        %p1027 = pneg %p135
      $region42: #{sqldepth_forward.40} parent=31 // pred_check_branch
        %1029 = sbr.rel (%p1027) target = $region44
      $region43: #{sqldepth_forward.40} parent=31 // pred_region
        %s1030 = smul.u32 32, %s19
      $region44: #{sqldepth_forward.40} parent=31 // pred_fallthru
        _
    $region32: #{sqldepth_forward.40} parent=5 // pred_fallthru
      _
    %p1031 = scmp.le.s32.totalorder 2, %s9
    // Predicated region
    $region45: #{sqldepth_forward.40} parent=5 // pred_check
      %p1032 = pneg %p1031
    $region46: #{sqldepth_forward.40} parent=5 // pred_check_branch
      %1034 = sbr.rel (%p1032) target = $region48
    $region47: #{sqldepth_forward.40} parent=5 // pred_region
      %s1035 = ssub.s32 %s9, 2
      // Predicated region
      $region49: #{sqldepth_forward.40} parent=47 // pred_check
        %p1036 = pneg %p141
      $region50: #{sqldepth_forward.40} parent=47 // pred_check_branch
        %1038 = sbr.rel (%p1036) target = $region52
      $region51: #{sqldepth_forward.40} parent=47 // pred_region
        %s1039 = smul.u32 32, %s22
        %p1040 = scmp.lt.s32.totalorder %s1039, 63
        %s1041 = scalar_select %p1040, %s1039, 63
        %p1042 = scmp.lt.s32.totalorder %s23, 0
        %s1043 = scalar_select %p1042, %s23, 0
        %s1044 = sadd.s32 %s1043, %s1041
        %s1045 = smul.addr %s1044, 8
        %s1046 = scalar_lea.vmem %s3, %s1045
      $region52: #{sqldepth_forward.40} parent=47 // pred_fallthru
        _
    $region48: #{sqldepth_forward.40} parent=5 // pred_fallthru
      _
  $region6: #{sqldepth_forward.40} parent=0 // loop_footer
    %s13 = sadd.s32 1, %s9
  $region7: #{sqldepth_forward.40} parent=0 // loop_footer_branch
    %8 = sbr.rel target = $region3
  $region8: #{sqldepth_forward.40} parent=0 // loop_exit
    _

// kernel: sqldepth_forward.70
$region0: #{sqldepth_forward.70}
  #allocation0 [shape = 'u32[]', space=smem, size = 0x4, offset = 0x4, fixed_abs, tag = 'smem constant byte address 0x4 - core index']
  #allocation1 [shape = 'u32[144,128]{1,0:T(1,128)}', space=vmem, size = 0x12000, scoped, tag = 'internal scratch']
  #allocation2 [shape = 'f32[256,128]{1,0:T(8,128)}', space=vmem, size = 0x20000, scoped, tag = 'scratch operand']
  %s0 = inlined_call_operand.vmem [shape: bf16[512,384], index: 0, kind: input, shape index: {}]
  %s1 = inlined_call_operand.vmem [shape: bf16[384,128], index: 1, kind: input, shape index: {}]
  %s2 = inlined_call_operand.vmem [shape: f32[1,128], index: 2, kind: input, shape index: {}]
  %s3 = inlined_call_operand.vmem [shape: f32[512,128], index: 3, kind: output, shape index: {}]
  %s4 = sld [smem:[#allocation0]]
  $region53: #{sqldepth_forward.70} parent=0
    _
  %s6 = ssub.s32 1, %s4
  %s7 = scalar_select 0, %s6, %s4
  loop: start=0, step=1, limit=4
  $region2: #{sqldepth_forward.70} parent=0 // loop_pre_header
    _
  $region3: #{sqldepth_forward.70} parent=0 // loop_header
    %s9 = sphi 0, %s13
    %p10 = scmp.ge.s32.totalorder %s9, 4
    %s16 = sphi 0, %s35
    %s17 = sphi 0, %s31
    %s18 = sphi 0, %s27
    %s19 = sphi 0, %s16
    %s20 = sphi 0, %s17
    %s21 = sphi 0, %s18
    %s22 = sphi 0, %s19
    %s23 = sphi 0, %s20
    %s24 = sphi 0, %s21
    %s40 = sphi 0, %s42
    %s43 = sphi 0, %s40
    %s44 = sphi 0, %s43
    %s60 = sphi 0, %s44
    %s68 = sphi 0, %s70
    %s71 = sphi 0, %s68
    %s72 = sphi 0, %s71
    %s88 = sphi 0, %s72
    %s94 = sphi 0, %s96
    %s97 = sphi 0, %s94
    %s98 = sphi 0, %s97
    %s114 = sphi 0, %s98
    %s122 = sphi 0, %s124
    %s125 = sphi 0, %s122
    %s126 = sphi 0, %s125
    %s142 = sphi 0, %s126
  $region4: #{sqldepth_forward.70} parent=0 // loop_header_branch
    %12 = sbr.rel (%p10) target = $region8
  $region5: #{sqldepth_forward.70} parent=0 // loop_body
    %s14 = ssub.s32 %s9, 1
    %s15 = ssub.s32 %s9, 2
    %s25 = sadd.s32 1, %s18
    %p26 = scmp.ge.s32.totalorder %s25, 1
    %s27 = scalar_select %p26, 0, %s25
    %s28 = sadd.s32 1, %s17
    %s29 = scalar_select %p26, %s28, %s17
    %p30 = scmp.ge.s32.totalorder %s29, 1
    %s31 = scalar_select %p30, 0, %s29
    %s32 = sadd.s32 1, %s16
    %s33 = scalar_select %p30, %s32, %s16
    %p34 = scmp.ge.s32.totalorder %s33, 2
    %s35 = scalar_select %p34, 0, %s33
    %s36 = ssub.s32 %s16, %s35
    %s37 = ssub.s32 %s18, %s27
    %s38 = sor.u32 %s36, %s37
    %p39 = scmp.eq.s32.totalorder %s38, 0
    %s41 = sadd.s32 %s40, 1
    %s42 = scalar_select %p39, %s40, %s41
    %p45 = pneg %p39
    %p46 = scmp.eq.s32.totalorder %s9, 1
    %p47 = por %p45, %p46
    %p48 = scmp.ne.s32.totalorder %s40, %s43
    %p49 = scmp.eq.s32.totalorder %s9, 0
    %p50 = por %p48, %p49
    %p51 = scmp.ne.s32.totalorder %s40, %s43
    %p52 = scmp.eq.s32.totalorder %s14, 1
    %p53 = por %p51, %p52
    %p54 = scmp.ne.s32.totalorder %s43, %s44
    %p55 = scmp.eq.s32.totalorder %s14, 0
    %p56 = por %p54, %p55
    %p57 = scmp.ne.s32.totalorder %s43, %s44
    %p58 = scmp.eq.s32.totalorder %s15, 1
    %p59 = por %p57, %p58
    %p61 = scmp.ne.s32.totalorder %s44, %s60
    %p62 = scmp.eq.s32.totalorder %s15, 0
    %p63 = por %p61, %p62
    %s64 = ssub.s32 %s18, %s27
    %s65 = ssub.s32 %s17, %s31
    %s66 = sor.u32 %s64, %s65
    %p67 = scmp.eq.s32.totalorder %s66, 0
    %s69 = sadd.s32 %s68, 1
    %s70 = scalar_select %p67, %s68, %s69
    %p73 = pneg %p67
    %p74 = scmp.eq.s32.totalorder %s9, 1
    %p75 = por %p73, %p74
    %p76 = scmp.ne.s32.totalorder %s68, %s71
    %p77 = scmp.eq.s32.totalorder %s9, 0
    %p78 = por %p76, %p77
    %p79 = scmp.ne.s32.totalorder %s68, %s71
    %p80 = scmp.eq.s32.totalorder %s14, 1
    %p81 = por %p79, %p80
    %p82 = scmp.ne.s32.totalorder %s71, %s72
    %p83 = scmp.eq.s32.totalorder %s14, 0
    %p84 = por %p82, %p83
    %p85 = scmp.ne.s32.totalorder %s71, %s72
    %p86 = scmp.eq.s32.totalorder %s15, 1
    %p87 = por %p85, %p86
    %p89 = scmp.ne.s32.totalorder %s72, %s88
    %p90 = scmp.eq.s32.totalorder %s15, 0
    %p91 = por %p89, %p90
    %s92 = ssub.s32 %s17, %s31
    %p93 = scmp.eq.s32.totalorder %s92, 0
    %s95 = sadd.s32 %s94, 1
    %s96 = scalar_select %p93, %s94, %s95
    %p99 = pneg %p93
    %p100 = scmp.eq.s32.totalorder %s9, 1
    %p101 = por %p99, %p100
    %p102 = scmp.ne.s32.totalorder %s94, %s97
    %p103 = scmp.eq.s32.totalorder %s9, 0
    %p104 = por %p102, %p103
    %p105 = scmp.ne.s32.totalorder %s94, %s97
    %p106 = scmp.eq.s32.totalorder %s14, 1
    %p107 = por %p105, %p106
    %p108 = scmp.ne.s32.totalorder %s97, %s98
    %p109 = scmp.eq.s32.totalorder %s14, 0
    %p110 = por %p108, %p109
    %p111 = scmp.ne.s32.totalorder %s97, %s98
    %p112 = scmp.eq.s32.totalorder %s15, 1
    %p113 = por %p111, %p112
    %p115 = scmp.ne.s32.totalorder %s98, %s114
    %p116 = scmp.eq.s32.totalorder %s15, 0
    %p117 = por %p115, %p116
    %s118 = ssub.s32 %s16, %s35
    %s119 = ssub.s32 %s17, %s31
    %s120 = sor.u32 %s118, %s119
    %p121 = scmp.eq.s32.totalorder %s120, 0
    %s123 = sadd.s32 %s122, 1
    %s124 = scalar_select %p121, %s122, %s123
    %p127 = pneg %p121
    %p128 = scmp.eq.s32.totalorder %s9, 1
    %p129 = por %p127, %p128
    %p130 = scmp.ne.s32.totalorder %s122, %s125
    %p131 = scmp.eq.s32.totalorder %s9, 0
    %p132 = por %p130, %p131
    %p133 = scmp.ne.s32.totalorder %s122, %s125
    %p134 = scmp.eq.s32.totalorder %s14, 1
    %p135 = por %p133, %p134
    %p136 = scmp.ne.s32.totalorder %s125, %s126
    %p137 = scmp.eq.s32.totalorder %s14, 0
    %p138 = por %p136, %p137
    %p139 = scmp.ne.s32.totalorder %s125, %s126
    %p140 = scmp.eq.s32.totalorder %s15, 1
    %p141 = por %p139, %p140
    %p143 = scmp.ne.s32.totalorder %s126, %s142
    %p144 = scmp.eq.s32.totalorder %s15, 0
    %p145 = por %p143, %p144
    %p146 = scmp.le.s32.totalorder 1, %s9
    %p147 = scmp.lt.s32.totalorder %s9, 3
    %p148 = pnand %p146, %p147
    %p149 = pneg %p148
    // Predicated region
    $region9: #{sqldepth_forward.70} parent=5 // pred_check
      _
    $region10: #{sqldepth_forward.70} parent=5 // pred_check_branch
      %151 = sbr.rel (%p148) target = $region12
    $region11: #{sqldepth_forward.70} parent=5 // pred_region
      %s152 = ssub.s32 %s9, 1
      // Predicated region
      $region13: #{sqldepth_forward.70} parent=11 // pred_check
        %p153 = pneg %p84
      $region14: #{sqldepth_forward.70} parent=11 // pred_check_branch
        %155 = sbr.rel (%p153) target = $region16
      $region15: #{sqldepth_forward.70} parent=11 // pred_region
        %s156 = smul.u32 48, %s21
        %p157 = scmp.lt.s32.totalorder %s156, 47
        %s158 = scalar_select %p157, %s156, 47
        %p159 = scmp.lt.s32.totalorder %s20, 0
        %s160 = scalar_select %p159, %s20, 0
        %s161 = sadd.s32 %s160, %s158
        %s162 = smul.addr %s161, 4
        %s163 = scalar_lea.vmem %s1, %s162
        %s164 = smul.u32 48, %s21
      $region16: #{sqldepth_forward.70} parent=11 // pred_fallthru
        _
      // Predicated region
      $region17: #{sqldepth_forward.70} parent=11 // pred_check
        %p165 = pneg %p110
      $region18: #{sqldepth_forward.70} parent=11 // pred_check_branch
        %167 = sbr.rel (%p165) target = $region20
      $region19: #{sqldepth_forward.70} parent=11 // pred_region
        %p168 = scmp.lt.s32.totalorder %s20, 0
        %s169 = scalar_select %p168, %s20, 0
        %s170 = scalar_lea.vmem %s2, %s169
      $region20: #{sqldepth_forward.70} parent=11 // pred_fallthru
        _
    $region12: #{sqldepth_forward.70} parent=5 // pred_fallthru
      _
    %p171 = scmp.lt.s32.totalorder %s9, 2
    // Predicated region
    $region21: #{sqldepth_forward.70} parent=5 // pred_check
      %p172 = pneg %p171
    $region22: #{sqldepth_forward.70} parent=5 // pred_check_branch
      %174 = sbr.rel (%p172) target = $region24
    $region23: #{sqldepth_forward.70} parent=5 // pred_region
      // Predicated region
      $region25: #{sqldepth_forward.70} parent=23 // pred_check
        %p175 = pneg %p50
      $region26: #{sqldepth_forward.70} parent=23 // pred_check_branch
        %177 = sbr.rel (%p175) target = $region28
      $region27: #{sqldepth_forward.70} parent=23 // pred_region
        %s178 = smul.u32 32, %s16
        %s179 = smul.u32 3, %s18
        %p180 = scmp.lt.s32.totalorder %s178, 63
        %s181 = scalar_select %p180, %s178, 63
        %p182 = scmp.lt.s32.totalorder %s179, 2
        %s183 = scalar_select %p182, %s179, 2
        %s184 = smul.addr %s181, 3
        %s185 = sadd.s32 %s183, %s184
        %s186 = smul.addr %s185, 4
        %s187 = scalar_lea.vmem %s0, %s186
        %s188 = smul.u32 32, %s16
        %s189 = smul.u32 3, %s18
      $region28: #{sqldepth_forward.70} parent=23 // pred_fallthru
        _
    $region24: #{sqldepth_forward.70} parent=5 // pred_fallthru
      _
    %p190 = scmp.le.s32.totalorder 1, %s9
    %p191 = scmp.lt.s32.totalorder %s9, 3
    %p192 = pnand %p190, %p191
    %p193 = pneg %p192
    // Predicated region
    $region29: #{sqldepth_forward.70} parent=5 // pred_check
      _
    $region30: #{sqldepth_forward.70} parent=5 // pred_check_branch
      %195 = sbr.rel (%p192) target = $region32
    $region31: #{sqldepth_forward.70} parent=5 // pred_region
      %s196 = ssub.s32 %s9, 1
      %s197 = smul.u32 32, %s19
      %s198 = smul.u32 3, %s21
      %p199 = scmp.lt.s32.totalorder %s197, 63
      %s200 = scalar_select %p199, %s197, 63
      %p201 = scmp.lt.s32.totalorder %s198, 2
      %s202 = scalar_select %p201, %s198, 2
      %s203 = smul.addr %s200, 3
      %s204 = sadd.s32 %s202, %s203
      %s205 = smul.addr %s204, 4
      %s206 = scalar_lea.vmem %s0, %s205
      %p207 = pneg %p56
      %p208 = pneg %p53
      %s209 = smul.u32 48, %s21
      %p210 = scmp.lt.s32.totalorder %s209, 47
      %s211 = scalar_select %p210, %s209, 47
      %p212 = scmp.lt.s32.totalorder %s20, 0
      %s213 = scalar_select %p212, %s20, 0
      %s214 = sadd.s32 %s213, %s211
      %s215 = smul.addr %s214, 4
      %s216 = scalar_lea.vmem %s1, %s215
      %p217 = pneg %p84
      %p218 = pneg %p81
      %p219 = scmp.lt.s32.totalorder %s20, 0
      %s220 = scalar_select %p219, %s20, 0
      %s221 = scalar_lea.vmem %s2, %s220
      %p222 = pneg %p110
      %p223 = pneg %p107
      %p224 = pneg %p138
      %p225 = pneg %p135
      %s226 = smul.u32 32, %s19
      %p227 = scmp.lt.s32.totalorder %s226, 63
      %s228 = scalar_select %p227, %s226, 63
      %p229 = scmp.lt.s32.totalorder %s20, 0
      %s230 = scalar_select %p229, %s20, 0
      %s231 = sadd.s32 %s230, %s228
      %s232 = smul.addr %s231, 8
      %s233 = scalar_lea.vmem %s3, %s232
      %s234 = smul.u32 32, %s19
      %s235 = smul.u32 3, %s21
      %p236 = scmp.lt.s32.totalorder %s234, 63
      %s237 = scalar_select %p236, %s234, 63
      %p238 = scmp.lt.s32.totalorder %s235, 2
      %s239 = scalar_select %p238, %s235, 2
      %s240 = smul.addr %s237, 3
      %s241 = sadd.s32 %s239, %s240
      %s242 = smul.addr %s241, 4
      %s243 = scalar_lea.vmem %s0, %s242
      %s244 = smul.u32 32, %s19
      %s245 = smul.u32 3, %s21
      %s246 = smul.u32 48, %s21
      %p247 = scmp.lt.s32.totalorder %s246, 47
      %s248 = scalar_select %p247, %s246, 47
      %p249 = scmp.lt.s32.totalorder %s20, 0
      %s250 = scalar_select %p249, %s20, 0
      %s251 = sadd.s32 %s250, %s248
      %s252 = smul.addr %s251, 4
      %s253 = scalar_lea.vmem %s1, %s252
      %s254 = smul.u32 48, %s21
      %p255 = scmp.lt.s32.totalorder %s20, 0
      %s256 = scalar_select %p255, %s20, 0
      %s257 = scalar_lea.vmem %s2, %s256
      %s258 = smul.u32 32, %s19
      %p259 = scmp.lt.s32.totalorder %s258, 63
      %s260 = scalar_select %p259, %s258, 63
      %p261 = scmp.lt.s32.totalorder %s20, 0
      %s262 = scalar_select %p261, %s20, 0
      %s263 = sadd.s32 %s262, %s260
      %s264 = smul.addr %s263, 8
      %s265 = scalar_lea.vmem %s3, %s264
      %s266 = smul.u32 32, %s19
      %p268 = scmp.eq.s32.totalorder %s21, 0
      // Predicated region
      $region33: #{sqldepth_forward.70} parent=31 // pred_check
        %p269 = pneg %p268
      $region34: #{sqldepth_forward.70} parent=31 // pred_check_branch
        %271 = sbr.rel (%p269) target = $region36
      $region35: #{sqldepth_forward.70} parent=31 // pred_region
        %272 = vst [vmem:[#allocation2] sm:$0xff] 0.0
        %273 = vst [vmem:[#allocation2 + $0x8] sm:$0xff] 0.0
        %274 = vst [vmem:[#allocation2 + $0x10] sm:$0xff] 0.0
        %275 = vst [vmem:[#allocation2 + $0x18] sm:$0xff] 0.0
        %276 = vst [vmem:[#allocation2 + $0x20] sm:$0xff] 0.0
        %277 = vst [vmem:[#allocation2 + $0x28] sm:$0xff] 0.0
        %278 = vst [vmem:[#allocation2 + $0x30] sm:$0xff] 0.0
        %279 = vst [vmem:[#allocation2 + $0x38] sm:$0xff] 0.0
        %280 = vst [vmem:[#allocation2 + $0x40] sm:$0xff] 0.0
        %281 = vst [vmem:[#allocation2 + $0x48] sm:$0xff] 0.0
        %282 = vst [vmem:[#allocation2 + $0x50] sm:$0xff] 0.0
        %283 = vst [vmem:[#allocation2 + $0x58] sm:$0xff] 0.0
        %284 = vst [vmem:[#allocation2 + $0x60] sm:$0xff] 0.0
        %285 = vst [vmem:[#allocation2 + $0x68] sm:$0xff] 0.0
        %286 = vst [vmem:[#allocation2 + $0x70] sm:$0xff] 0.0
        %287 = vst [vmem:[#allocation2 + $0x78] sm:$0xff] 0.0
        %288 = vst [vmem:[#allocation2 + $0x80] sm:$0xff] 0.0
        %289 = vst [vmem:[#allocation2 + $0x88] sm:$0xff] 0.0
        %290 = vst [vmem:[#allocation2 + $0x90] sm:$0xff] 0.0
        %291 = vst [vmem:[#allocation2 + $0x98] sm:$0xff] 0.0
        %292 = vst [vmem:[#allocation2 + $0xa0] sm:$0xff] 0.0
        %293 = vst [vmem:[#allocation2 + $0xa8] sm:$0xff] 0.0
        %294 = vst [vmem:[#allocation2 + $0xb0] sm:$0xff] 0.0
        %295 = vst [vmem:[#allocation2 + $0xb8] sm:$0xff] 0.0
        %296 = vst [vmem:[#allocation2 + $0xc0] sm:$0xff] 0.0
        %297 = vst [vmem:[#allocation2 + $0xc8] sm:$0xff] 0.0
        %298 = vst [vmem:[#allocation2 + $0xd0] sm:$0xff] 0.0
        %299 = vst [vmem:[#allocation2 + $0xd8] sm:$0xff] 0.0
        %300 = vst [vmem:[#allocation2 + $0xe0] sm:$0xff] 0.0
        %301 = vst [vmem:[#allocation2 + $0xe8] sm:$0xff] 0.0
        %302 = vst [vmem:[#allocation2 + $0xf0] sm:$0xff] 0.0
        %303 = vst [vmem:[#allocation2 + $0xf8] sm:$0xff] 0.0
      $region36: #{sqldepth_forward.70} parent=31 // pred_fallthru
        _
      %v304 = vld [vmem:[#allocation2] sm:$0xff]
      %v305 = vld [vmem:[#allocation2 + $0x8] sm:$0xff]
      %v306 = vld [vmem:[#allocation2 + $0x10] sm:$0xff]
      %v307 = vld [vmem:[#allocation2 + $0x18] sm:$0xff]
      %v308 = vld [vmem:[#allocation2 + $0x20] sm:$0xff]
      %v309 = vld [vmem:[#allocation2 + $0x28] sm:$0xff]
      %v310 = vld [vmem:[#allocation2 + $0x30] sm:$0xff]
      %v311 = vld [vmem:[#allocation2 + $0x38] sm:$0xff]
      %v312 = vld [vmem:[#allocation2 + $0x40] sm:$0xff]
      %v313 = vld [vmem:[#allocation2 + $0x48] sm:$0xff]
      %v314 = vld [vmem:[#allocation2 + $0x50] sm:$0xff]
      %v315 = vld [vmem:[#allocation2 + $0x58] sm:$0xff]
      %v316 = vld [vmem:[#allocation2 + $0x60] sm:$0xff]
      %v317 = vld [vmem:[#allocation2 + $0x68] sm:$0xff]
      %v318 = vld [vmem:[#allocation2 + $0x70] sm:$0xff]
      %v319 = vld [vmem:[#allocation2 + $0x78] sm:$0xff]
      %v320 = vld [vmem:[#allocation2 + $0x80] sm:$0xff]
      %v321 = vld [vmem:[#allocation2 + $0x88] sm:$0xff]
      %v322 = vld [vmem:[#allocation2 + $0x90] sm:$0xff]
      %v323 = vld [vmem:[#allocation2 + $0x98] sm:$0xff]
      %v324 = vld [vmem:[#allocation2 + $0xa0] sm:$0xff]
      %v325 = vld [vmem:[#allocation2 + $0xa8] sm:$0xff]
      %v326 = vld [vmem:[#allocation2 + $0xb0] sm:$0xff]
      %v327 = vld [vmem:[#allocation2 + $0xb8] sm:$0xff]
      %v328 = vld [vmem:[#allocation2 + $0xc0] sm:$0xff]
      %v329 = vld [vmem:[#allocation2 + $0xc8] sm:$0xff]
      %v330 = vld [vmem:[#allocation2 + $0xd0] sm:$0xff]
      %v331 = vld [vmem:[#allocation2 + $0xd8] sm:$0xff]
      %v332 = vld [vmem:[#allocation2 + $0xe0] sm:$0xff]
      %v333 = vld [vmem:[#allocation2 + $0xe8] sm:$0xff]
      %v334 = vld [vmem:[#allocation2 + $0xf0] sm:$0xff]
      %v335 = vld [vmem:[#allocation2 + $0xf8] sm:$0xff]
      %v336 = vld [vmem:[%s243] sm:$0xff]
      %v337 = vld [vmem:[%s243 + $0x8] sm:$0xf]
      %v338 = vld [vmem:[%s243 + $0xc] sm:$0xff]
      %v339 = vld [vmem:[%s243 + $0x14] sm:$0xf]
      %v340 = vld [vmem:[%s243 + $0x18] sm:$0xff]
      %v341 = vld [vmem:[%s243 + $0x20] sm:$0xf]
      %v342 = vld [vmem:[%s243 + $0x24] sm:$0xff]
      %v343 = vld [vmem:[%s243 + $0x2c] sm:$0xf]
      %v344 = vld [vmem:[%s243 + $0x30] sm:$0xff]
      %v345 = vld [vmem:[%s243 + $0x38] sm:$0xf]
      %v346 = vld [vmem:[%s243 + $0x3c] sm:$0xff]
      %v347 = vld [vmem:[%s243 + $0x44] sm:$0xf]
      %v348 = vld [vmem:[%s243 + $0x48] sm:$0xff]
      %v349 = vld [vmem:[%s243 + $0x50] sm:$0xf]
      %v350 = vld [vmem:[%s243 + $0x54] sm:$0xff]
      %v351 = vld [vmem:[%s243 + $0x5c] sm:$0xf]
      %v352 = vld [vmem:[%s243 + $0x60] sm:$0xff]
      %v353 = vld [vmem:[%s243 + $0x68] sm:$0xf]
      %v354 = vld [vmem:[%s243 + $0x6c] sm:$0xff]
      %v355 = vld [vmem:[%s243 + $0x74] sm:$0xf]
      %v356 = vld [vmem:[%s243 + $0x78] sm:$0xff]
      %v357 = vld [vmem:[%s243 + $0x80] sm:$0xf]
      %v358 = vld [vmem:[%s243 + $0x84] sm:$0xff]
      %v359 = vld [vmem:[%s243 + $0x8c] sm:$0xf]
      %v360 = vld [vmem:[%s243 + $0x90] sm:$0xff]
      %v361 = vld [vmem:[%s243 + $0x98] sm:$0xf]
      %v362 = vld [vmem:[%s243 + $0x9c] sm:$0xff]
      %v363 = vld [vmem:[%s243 + $0xa4] sm:$0xf]
      %v364 = vld [vmem:[%s243 + $0xa8] sm:$0xff]
      %v365 = vld [vmem:[%s243 + $0xb0] sm:$0xf]
      %v366 = vld [vmem:[%s243 + $0xb4] sm:$0xff]
      %v367 = vld [vmem:[%s243 + $0xbc] sm:$0xf]
      %v368 = vld [vmem:[%s243 + $0xc0] sm:$0xff]
      %v369 = vld [vmem:[%s243 + $0xc8] sm:$0xf]
      %v370 = vld [vmem:[%s243 + $0xcc] sm:$0xff]
      %v371 = vld [vmem:[%s243 + $0xd4] sm:$0xf]
      %v372 = vld [vmem:[%s243 + $0xd8] sm:$0xff]
      %v373 = vld [vmem:[%s243 + $0xe0] sm:$0xf]
      %v374 = vld [vmem:[%s243 + $0xe4] sm:$0xff]
      %v375 = vld [vmem:[%s243 + $0xec] sm:$0xf]
      %v376 = vld [vmem:[%s243 + $0xf0] sm:$0xff]
      %v377 = vld [vmem:[%s243 + $0xf8] sm:$0xf]
      %v378 = vld [vmem:[%s243 + $0xfc] sm:$0xff]
      %v379 = vld [vmem:[%s243 + $0x104] sm:$0xf]
      %v380 = vld [vmem:[%s243 + $0x108] sm:$0xff]
      %v381 = vld [vmem:[%s243 + $0x110] sm:$0xf]
      %v382 = vld [vmem:[%s243 + $0x114] sm:$0xff]
      %v383 = vld [vmem:[%s243 + $0x11c] sm:$0xf]
      %v384 = vld [vmem:[%s243 + $0x120] sm:$0xff]
      %v385 = vld [vmem:[%s243 + $0x128] sm:$0xf]
      %v386 = vld [vmem:[%s243 + $0x12c] sm:$0xff]
      %v387 = vld [vmem:[%s243 + $0x134] sm:$0xf]
      %v388 = vld [vmem:[%s243 + $0x138] sm:$0xff]
      %v389 = vld [vmem:[%s243 + $0x140] sm:$0xf]
      %v390 = vld [vmem:[%s243 + $0x144] sm:$0xff]
      %v391 = vld [vmem:[%s243 + $0x14c] sm:$0xf]
      %v392 = vld [vmem:[%s243 + $0x150] sm:$0xff]
      %v393 = vld [vmem:[%s243 + $0x158] sm:$0xf]
      %v394 = vld [vmem:[%s243 + $0x15c] sm:$0xff]
      %v395 = vld [vmem:[%s243 + $0x164] sm:$0xf]
      %v396 = vld [vmem:[%s243 + $0x168] sm:$0xff]
      %v397 = vld [vmem:[%s243 + $0x170] sm:$0xf]
      %v398 = vld [vmem:[%s243 + $0x174] sm:$0xff]
      %v399 = vld [vmem:[%s243 + $0x17c] sm:$0xf]
      %v400 = vld [vmem:[%s253] sm:$0xf]
      %v401 = vld [vmem:[%s253 + $0x4] sm:$0xf]
      %v402 = vld [vmem:[%s253 + $0x8] sm:$0xf]
      %v403 = vld [vmem:[%s253 + $0xc] sm:$0xf]
      %v404 = vld [vmem:[%s253 + $0x10] sm:$0xf]
      %v405 = vld [vmem:[%s253 + $0x14] sm:$0xf]
      %v406 = vld [vmem:[%s253 + $0x18] sm:$0xf]
      %v407 = vld [vmem:[%s253 + $0x1c] sm:$0xf]
      %v408 = vld [vmem:[%s253 + $0x20] sm:$0xf]
      %v409 = vld [vmem:[%s253 + $0x24] sm:$0xf]
      %v410 = vld [vmem:[%s253 + $0x28] sm:$0xf]
      %v411 = vld [vmem:[%s253 + $0x2c] sm:$0xf]
      %v412 = vld [vmem:[%s253 + $0x30] sm:$0xf]
      %v413 = vld [vmem:[%s253 + $0x34] sm:$0xf]
      %v414 = vld [vmem:[%s253 + $0x38] sm:$0xf]
      %v415 = vld [vmem:[%s253 + $0x3c] sm:$0xf]
      %v416 = vld [vmem:[%s253 + $0x40] sm:$0xf]
      %v417 = vld [vmem:[%s253 + $0x44] sm:$0xf]
      %v418 = vld [vmem:[%s253 + $0x48] sm:$0xf]
      %v419 = vld [vmem:[%s253 + $0x4c] sm:$0xf]
      %v420 = vld [vmem:[%s253 + $0x50] sm:$0xf]
      %v421 = vld [vmem:[%s253 + $0x54] sm:$0xf]
      %v422 = vld [vmem:[%s253 + $0x58] sm:$0xf]
      %v423 = vld [vmem:[%s253 + $0x5c] sm:$0xf]
      %v424 = vld [vmem:[%s253 + $0x60] sm:$0xf]
      %v425 = vld [vmem:[%s253 + $0x64] sm:$0xf]
      %v426 = vld [vmem:[%s253 + $0x68] sm:$0xf]
      %v427 = vld [vmem:[%s253 + $0x6c] sm:$0xf]
      %v428 = vld [vmem:[%s253 + $0x70] sm:$0xf]
      %v429 = vld [vmem:[%s253 + $0x74] sm:$0xf]
      %v430 = vld [vmem:[%s253 + $0x78] sm:$0xf]
      %v431 = vld [vmem:[%s253 + $0x7c] sm:$0xf]
      %v432 = vld [vmem:[%s253 + $0x80] sm:$0xf]
      %v433 = vld [vmem:[%s253 + $0x84] sm:$0xf]
      %v434 = vld [vmem:[%s253 + $0x88] sm:$0xf]
      %v435 = vld [vmem:[%s253 + $0x8c] sm:$0xf]
      %v436 = vld [vmem:[%s253 + $0x90] sm:$0xf]
      %v437 = vld [vmem:[%s253 + $0x94] sm:$0xf]
      %v438 = vld [vmem:[%s253 + $0x98] sm:$0xf]
      %v439 = vld [vmem:[%s253 + $0x9c] sm:$0xf]
      %v440 = vld [vmem:[%s253 + $0xa0] sm:$0xf]
      %v441 = vld [vmem:[%s253 + $0xa4] sm:$0xf]
      %v442 = vld [vmem:[%s253 + $0xa8] sm:$0xf]
      %v443 = vld [vmem:[%s253 + $0xac] sm:$0xf]
      %v444 = vld [vmem:[%s253 + $0xb0] sm:$0xf]
      %v445 = vld [vmem:[%s253 + $0xb4] sm:$0xf]
      %v446 = vld [vmem:[%s253 + $0xb8] sm:$0xf]
      %v447 = vld [vmem:[%s253 + $0xbc] sm:$0xf]
      %v512 = vunpack.c.l.b16 %v336
      %v513 = vunpack.c.h.b16 %v336
      %v514 = vunpack.c.l.b16 %v337
      %v515 = vunpack.c.l.b16 %v338
      %v516 = vunpack.c.h.b16 %v338
      %v517 = vunpack.c.l.b16 %v339
      %v518 = vunpack.c.l.b16 %v340
      %v519 = vunpack.c.h.b16 %v340
      %v520 = vunpack.c.l.b16 %v341
      %v521 = vunpack.c.l.b16 %v342
      %v522 = vunpack.c.h.b16 %v342
      %v523 = vunpack.c.l.b16 %v343
      %v524 = vunpack.c.l.b16 %v344
      %v525 = vunpack.c.h.b16 %v344
      %v526 = vunpack.c.l.b16 %v345
      %v527 = vunpack.c.l.b16 %v346
      %v528 = vunpack.c.h.b16 %v346
      %v529 = vunpack.c.l.b16 %v347
      %v530 = vunpack.c.l.b16 %v348
      %v531 = vunpack.c.h.b16 %v348
      %v532 = vunpack.c.l.b16 %v349
      %v533 = vunpack.c.l.b16 %v350
      %v534 = vunpack.c.h.b16 %v350
      %v535 = vunpack.c.l.b16 %v351
      %v536 = vunpack.c.l.b16 %v352
      %v537 = vunpack.c.h.b16 %v352
      %v538 = vunpack.c.l.b16 %v353
      %v539 = vunpack.c.l.b16 %v354
      %v540 = vunpack.c.h.b16 %v354
      %v541 = vunpack.c.l.b16 %v355
      %v542 = vunpack.c.l.b16 %v356
      %v543 = vunpack.c.h.b16 %v356
      %v544 = vunpack.c.l.b16 %v357
      %v545 = vunpack.c.l.b16 %v358
      %v546 = vunpack.c.h.b16 %v358
      %v547 = vunpack.c.l.b16 %v359
      %v548 = vunpack.c.l.b16 %v360
      %v549 = vunpack.c.h.b16 %v360
      %v550 = vunpack.c.l.b16 %v361
      %v551 = vunpack.c.l.b16 %v362
      %v552 = vunpack.c.h.b16 %v362
      %v553 = vunpack.c.l.b16 %v363
      %v554 = vunpack.c.l.b16 %v364
      %v555 = vunpack.c.h.b16 %v364
      %v556 = vunpack.c.l.b16 %v365
      %v557 = vunpack.c.l.b16 %v366
      %v558 = vunpack.c.h.b16 %v366
      %v559 = vunpack.c.l.b16 %v367
      %v560 = vunpack.c.l.b16 %v368
      %v561 = vunpack.c.h.b16 %v368
      %v562 = vunpack.c.l.b16 %v369
      %v563 = vunpack.c.l.b16 %v370
      %v564 = vunpack.c.h.b16 %v370
      %v565 = vunpack.c.l.b16 %v371
      %v566 = vunpack.c.l.b16 %v372
      %v567 = vunpack.c.h.b16 %v372
      %v568 = vunpack.c.l.b16 %v373
      %v569 = vunpack.c.l.b16 %v374
      %v570 = vunpack.c.h.b16 %v374
      %v571 = vunpack.c.l.b16 %v375
      %v572 = vunpack.c.l.b16 %v376
      %v573 = vunpack.c.h.b16 %v376
      %v574 = vunpack.c.l.b16 %v377
      %v575 = vunpack.c.l.b16 %v378
      %v576 = vunpack.c.h.b16 %v378
      %v577 = vunpack.c.l.b16 %v379
      %v578 = vunpack.c.l.b16 %v380
      %v579 = vunpack.c.h.b16 %v380
      %v580 = vunpack.c.l.b16 %v381
      %v581 = vunpack.c.l.b16 %v382
      %v582 = vunpack.c.h.b16 %v382
      %v583 = vunpack.c.l.b16 %v383
      %v584 = vunpack.c.l.b16 %v384
      %v585 = vunpack.c.h.b16 %v384
      %v586 = vunpack.c.l.b16 %v385
      %v587 = vunpack.c.l.b16 %v386
      %v588 = vunpack.c.h.b16 %v386
      %v589 = vunpack.c.l.b16 %v387
      %v590 = vunpack.c.l.b16 %v388
      %v591 = vunpack.c.h.b16 %v388
      %v592 = vunpack.c.l.b16 %v389
      %v593 = vunpack.c.l.b16 %v390
      %v594 = vunpack.c.h.b16 %v390
      %v595 = vunpack.c.l.b16 %v391
      %v596 = vunpack.c.l.b16 %v392
      %v597 = vunpack.c.h.b16 %v392
      %v598 = vunpack.c.l.b16 %v393
      %v599 = vunpack.c.l.b16 %v394
      %v600 = vunpack.c.h.b16 %v394
      %v601 = vunpack.c.l.b16 %v395
      %v602 = vunpack.c.l.b16 %v396
      %v603 = vunpack.c.h.b16 %v396
      %v604 = vunpack.c.l.b16 %v397
      %v605 = vunpack.c.l.b16 %v398
      %v606 = vunpack.c.h.b16 %v398
      %v607 = vunpack.c.l.b16 %v399
      %v608 = vpack.c.b16 %v515, %v512
      %v609 = vpack.c.b16 %v516, %v513
      %v610 = vpack.c.b16 %v517, %v514
      %v611 = vpack.c.b16 %v521, %v518
      %v612 = vpack.c.b16 %v522, %v519
      %v613 = vpack.c.b16 %v523, %v520
      %v614 = vpack.c.b16 %v527, %v524
      %v615 = vpack.c.b16 %v528, %v525
      %v616 = vpack.c.b16 %v529, %v526
      %v617 = vpack.c.b16 %v533, %v530
      %v618 = vpack.c.b16 %v534, %v531
      %v619 = vpack.c.b16 %v535, %v532
      %v620 = vpack.c.b16 %v539, %v536
      %v621 = vpack.c.b16 %v540, %v537
      %v622 = vpack.c.b16 %v541, %v538
      %v623 = vpack.c.b16 %v545, %v542
      %v624 = vpack.c.b16 %v546, %v543
      %v625 = vpack.c.b16 %v547, %v544
      %v626 = vpack.c.b16 %v551, %v548
      %v627 = vpack.c.b16 %v552, %v549
      %v628 = vpack.c.b16 %v553, %v550
      %v629 = vpack.c.b16 %v557, %v554
      %v630 = vpack.c.b16 %v558, %v555
      %v631 = vpack.c.b16 %v559, %v556
      %v632 = vpack.c.b16 %v563, %v560
      %v633 = vpack.c.b16 %v564, %v561
      %v634 = vpack.c.b16 %v565, %v562
      %v635 = vpack.c.b16 %v569, %v566
      %v636 = vpack.c.b16 %v570, %v567
      %v637 = vpack.c.b16 %v571, %v568
      %v638 = vpack.c.b16 %v575, %v572
      %v639 = vpack.c.b16 %v576, %v573
      %v640 = vpack.c.b16 %v577, %v574
      %v641 = vpack.c.b16 %v581, %v578
      %v642 = vpack.c.b16 %v582, %v579
      %v643 = vpack.c.b16 %v583, %v580
      %v644 = vpack.c.b16 %v587, %v584
      %v645 = vpack.c.b16 %v588, %v585
      %v646 = vpack.c.b16 %v589, %v586
      %v647 = vpack.c.b16 %v593, %v590
      %v648 = vpack.c.b16 %v594, %v591
      %v649 = vpack.c.b16 %v595, %v592
      %v650 = vpack.c.b16 %v599, %v596
      %v651 = vpack.c.b16 %v600, %v597
      %v652 = vpack.c.b16 %v601, %v598
      %v653 = vpack.c.b16 %v605, %v602
      %v654 = vpack.c.b16 %v606, %v603
      %v655 = vpack.c.b16 %v607, %v604
      %v752 = vunpack.c.l.b16 %v400
      %v753 = vunpack.c.l.b16 %v401
      %v754 = vunpack.c.l.b16 %v402
      %v755 = vunpack.c.l.b16 %v403
      %v756 = vunpack.c.l.b16 %v404
      %v757 = vunpack.c.l.b16 %v405
      %v758 = vunpack.c.l.b16 %v406
      %v759 = vunpack.c.l.b16 %v407
      %v760 = vunpack.c.l.b16 %v408
      %v761 = vunpack.c.l.b16 %v409
      %v762 = vunpack.c.l.b16 %v410
      %v763 = vunpack.c.l.b16 %v411
      %v764 = vunpack.c.l.b16 %v412
      %v765 = vunpack.c.l.b16 %v413
      %v766 = vunpack.c.l.b16 %v414
      %v767 = vunpack.c.l.b16 %v415
      %v768 = vunpack.c.l.b16 %v416
      %v769 = vunpack.c.l.b16 %v417
      %v770 = vunpack.c.l.b16 %v418
      %v771 = vunpack.c.l.b16 %v419
      %v772 = vunpack.c.l.b16 %v420
      %v773 = vunpack.c.l.b16 %v421
      %v774 = vunpack.c.l.b16 %v422
      %v775 = vunpack.c.l.b16 %v423
      %v776 = vunpack.c.l.b16 %v424
      %v777 = vunpack.c.l.b16 %v425
      %v778 = vunpack.c.l.b16 %v426
      %v779 = vunpack.c.l.b16 %v427
      %v780 = vunpack.c.l.b16 %v428
      %v781 = vunpack.c.l.b16 %v429
      %v782 = vunpack.c.l.b16 %v430
      %v783 = vunpack.c.l.b16 %v431
      %v784 = vunpack.c.l.b16 %v432
      %v785 = vunpack.c.l.b16 %v433
      %v786 = vunpack.c.l.b16 %v434
      %v787 = vunpack.c.l.b16 %v435
      %v788 = vunpack.c.l.b16 %v436
      %v789 = vunpack.c.l.b16 %v437
      %v790 = vunpack.c.l.b16 %v438
      %v791 = vunpack.c.l.b16 %v439
      %v792 = vunpack.c.l.b16 %v440
      %v793 = vunpack.c.l.b16 %v441
      %v794 = vunpack.c.l.b16 %v442
      %v795 = vunpack.c.l.b16 %v443
      %v796 = vunpack.c.l.b16 %v444
      %v797 = vunpack.c.l.b16 %v445
      %v798 = vunpack.c.l.b16 %v446
      %v799 = vunpack.c.l.b16 %v447
      %v800 = vpack.c.b16 %v753, %v752
      %v801 = vpack.c.b16 %v755, %v754
      %v802 = vpack.c.b16 %v757, %v756
      %v803 = vpack.c.b16 %v759, %v758
      %v804 = vpack.c.b16 %v761, %v760
      %v805 = vpack.c.b16 %v763, %v762
      %v806 = vpack.c.b16 %v765, %v764
      %v807 = vpack.c.b16 %v767, %v766
      %v808 = vpack.c.b16 %v769, %v768
      %v809 = vpack.c.b16 %v771, %v770
      %v810 = vpack.c.b16 %v773, %v772
      %v811 = vpack.c.b16 %v775, %v774
      %v812 = vpack.c.b16 %v777, %v776
      %v813 = vpack.c.b16 %v779, %v778
      %v814 = vpack.c.b16 %v781, %v780
      %v815 = vpack.c.b16 %v783, %v782
      %v816 = vpack.c.b16 %v785, %v784
      %v817 = vpack.c.b16 %v787, %v786
      %v818 = vpack.c.b16 %v789, %v788
      %v819 = vpack.c.b16 %v791, %v790
      %v820 = vpack.c.b16 %v793, %v792
      %v821 = vpack.c.b16 %v795, %v794
      %v822 = vpack.c.b16 %v797, %v796
      %v823 = vpack.c.b16 %v799, %v798
      %848 = vmatprep.subr.bf16.mxu0 0
      %849 = vmatpush1.bf16.msra.mxu0 %v800
      %850 = vmatprep.subr.bf16.mxu0 0
      %851 = vmatpush1.bf16.msra.mxu0 %v801
      %852 = vmatprep.subr.bf16.mxu0 0
      %853 = vmatpush1.bf16.msra.mxu0 %v802
      %854 = vmatprep.subr.bf16.mxu0 0
      %855 = vmatpush1.bf16.msra.mxu0 %v803
      %856 = vmatprep.subr.bf16.mxu0 0
      %857 = vmatpush1.bf16.msra.mxu0 %v804
      %858 = vmatprep.subr.bf16.mxu0 0
      %859 = vmatpush1.bf16.msra.mxu0 %v805
      %860 = vmatprep.subr.bf16.mxu0 0
      %861 = vmatpush1.bf16.msra.mxu0 %v806
      %862 = vmatprep.subr.bf16.mxu0 0
      %863 = vmatpush1.bf16.msra.mxu0 %v807
      %864 = vmatprep.subr.bf16.mxu0 0
      %865 = vmatpush1.bf16.msra.mxu0 %v808
      %866 = vmatprep.subr.bf16.mxu0 0
      %867 = vmatpush1.bf16.msra.mxu0 %v809
      %868 = vmatprep.subr.bf16.mxu0 0
      %869 = vmatpush1.bf16.msra.mxu0 %v810
      %870 = vmatprep.subr.bf16.mxu0 0
      %871 = vmatpush1.bf16.msra.mxu0 %v811
      %872 = vmatprep.subr.bf16.mxu0 0
      %873 = vmatpush1.bf16.msra.mxu0 %v812
      %874 = vmatprep.subr.bf16.mxu0 0
      %875 = vmatpush1.bf16.msra.mxu0 %v813
      %876 = vmatprep.subr.bf16.mxu0 0
      %877 = vmatpush1.bf16.msra.mxu0 %v814
      %878 = vmatprep.subr.bf16.mxu0 0
      %879 = vmatpush1.bf16.msra.mxu0 %v815
      %880 = vmatprep.mubr.bf16.mxu0 %v609
      %881 = vmatmul.mubr.bf16.gmra.mrb[0].mxu0 %v608
      %v882 = vpop.f32.mrb[0].mxu0
      %v883 = vadd.f32 0.0, %v882
      %v884 = vpop.f32.mrb[0].mxu0
      %v885 = vpop.f32.mrb[0].mxu0
      %v886 = vadd.f32 0.0, %v885
      %v887 = vpop.f32.mrb[0].mxu0
      %888 = vmatprep.mubr.bf16.mxu0 %v612
      %889 = vmatmul.mubr.bf16.gmra.mrb[0].mxu0 %v611
      %v890 = vpop.f32.mrb[0].mxu0
      %v891 = vadd.f32 0.0, %v890
      %v892 = vpop.f32.mrb[0].mxu0
      %v893 = vpop.f32.mrb[0].mxu0
      %v894 = vadd.f32 0.0, %v893
      %v895 = vpop.f32.mrb[0].mxu0
      %896 = vmatprep.mubr.bf16.mxu0 %v615
      %897 = vmatmul.mubr.bf16.gmra.mrb[0].mxu0 %v614
      %v898 = vpop.f32.mrb[0].mxu0
      %v899 = vadd.f32 0.0, %v898
      %v900 = vpop.f32.mrb[0].mxu0
      %v901 = vpop.f32.mrb[0].mxu0
      %v902 = vadd.f32 0.0, %v901
      %v903 = vpop.f32.mrb[0].mxu0
      %904 = vmatprep.mubr.bf16.mxu0 %v618
      %905 = vmatmul.mubr.bf16.gmra.mrb[0].mxu0 %v617
      %v906 = vpop.f32.mrb[0].mxu0
      %v907 = vadd.f32 0.0, %v906
      %v908 = vpop.f32.mrb[0].mxu0
      %v909 = vpop.f32.mrb[0].mxu0
      %v910 = vadd.f32 0.0, %v909
      %v911 = vpop.f32.mrb[0].mxu0
      %912 = vmatprep.mubr.bf16.mxu0 %v621
      %913 = vmatmul.mubr.bf16.gmra.mrb[0].mxu0 %v620
      %v914 = vpop.f32.mrb[0].mxu0
      %v915 = vadd.f32 0.0, %v914
      %v916 = vpop.f32.mrb[0].mxu0
      %v917 = vpop.f32.mrb[0].mxu0
      %v918 = vadd.f32 0.0, %v917
      %v919 = vpop.f32.mrb[0].mxu0
      %920 = vmatprep.mubr.bf16.mxu0 %v624
      %921 = vmatmul.mubr.bf16.gmra.mrb[0].mxu0 %v623
      %v922 = vpop.f32.mrb[0].mxu0
      %v923 = vadd.f32 0.0, %v922
      %v924 = vpop.f32.mrb[0].mxu0
      %v925 = vpop.f32.mrb[0].mxu0
      %v926 = vadd.f32 0.0, %v925
      %v927 = vpop.f32.mrb[0].mxu0
      %928 = vmatprep.mubr.bf16.mxu0 %v627
      %929 = vmatmul.mubr.bf16.gmra.mrb[0].mxu0 %v626
      %v930 = vpop.f32.mrb[0].mxu0
      %v931 = vadd.f32 0.0, %v930
      %v932 = vpop.f32.mrb[0].mxu0
      %v933 = vpop.f32.mrb[0].mxu0
      %v934 = vadd.f32 0.0, %v933
      %v935 = vpop.f32.mrb[0].mxu0
      %936 = vmatprep.mubr.bf16.mxu0 %v630
      %937 = vmatmul.mubr.bf16.gmra.mrb[0].mxu0 %v629
      %v938 = vpop.f32.mrb[0].mxu0
      %v939 = vadd.f32 0.0, %v938
      %v940 = vpop.f32.mrb[0].mxu0
      %v941 = vpop.f32.mrb[0].mxu0
      %v942 = vadd.f32 0.0, %v941
      %v943 = vpop.f32.mrb[0].mxu0
      %944 = vmatprep.mubr.bf16.mxu0 %v633
      %945 = vmatmul.mubr.bf16.gmra.mrb[0].mxu0 %v632
      %v946 = vpop.f32.mrb[0].mxu0
      %v947 = vadd.f32 0.0, %v946
      %v948 = vpop.f32.mrb[0].mxu0
      %v949 = vpop.f32.mrb[0].mxu0
      %v950 = vadd.f32 0.0, %v949
      %v951 = vpop.f32.mrb[0].mxu0
      %952 = vmatprep.mubr.bf16.mxu0 %v636
      %953 = vmatmul.mubr.bf16.gmra.mrb[0].mxu0 %v635
      %v954 = vpop.f32.mrb[0].mxu0
      %v955 = vadd.f32 0.0, %v954
      %v956 = vpop.f32.mrb[0].mxu0
      %v957 = vpop.f32.mrb[0].mxu0
      %v958 = vadd.f32 0.0, %v957
      %v959 = vpop.f32.mrb[0].mxu0
      %960 = vmatprep.mubr.bf16.mxu0 %v639
      %961 = vmatmul.mubr.bf16.gmra.mrb[0].mxu0 %v638
      %v962 = vpop.f32.mrb[0].mxu0
      %v963 = vadd.f32 0.0, %v962
      %v964 = vpop.f32.mrb[0].mxu0
      %v965 = vpop.f32.mrb[0].mxu0
      %v966 = vadd.f32 0.0, %v965
      %v967 = vpop.f32.mrb[0].mxu0
      %968 = vmatprep.mubr.bf16.mxu0 %v642
      %969 = vmatmul.mubr.bf16.gmra.mrb[0].mxu0 %v641
      %v970 = vpop.f32.mrb[0].mxu0
      %v971 = vadd.f32 0.0, %v970
      %v972 = vpop.f32.mrb[0].mxu0
      %v973 = vpop.f32.mrb[0].mxu0
      %v974 = vadd.f32 0.0, %v973
      %v975 = vpop.f32.mrb[0].mxu0
      %976 = vmatprep.mubr.bf16.mxu0 %v645
      %977 = vmatmul.mubr.bf16.gmra.mrb[0].mxu0 %v644
      %v978 = vpop.f32.mrb[0].mxu0
      %v979 = vadd.f32 0.0, %v978
      %v980 = vpop.f32.mrb[0].mxu0
      %v981 = vpop.f32.mrb[0].mxu0
      %v982 = vadd.f32 0.0, %v981
      %v983 = vpop.f32.mrb[0].mxu0
      %984 = vmatprep.mubr.bf16.mxu0 %v648
      %985 = vmatmul.mubr.bf16.gmra.mrb[0].mxu0 %v647
      %v986 = vpop.f32.mrb[0].mxu0
      %v987 = vadd.f32 0.0, %v986
      %v988 = vpop.f32.mrb[0].mxu0
      %v989 = vpop.f32.mrb[0].mxu0
      %v990 = vadd.f32 0.0, %v989
      %v991 = vpop.f32.mrb[0].mxu0
      %992 = vmatprep.mubr.bf16.mxu0 %v651
      %993 = vmatmul.mubr.bf16.gmra.mrb[0].mxu0 %v650
      %v994 = vpop.f32.mrb[0].mxu0
      %v995 = vadd.f32 0.0, %v994
      %v996 = vpop.f32.mrb[0].mxu0
      %v997 = vpop.f32.mrb[0].mxu0
      %v998 = vadd.f32 0.0, %v997
      %v999 = vpop.f32.mrb[0].mxu0
      %1000 = vmatprep.mubr.bf16.mxu0 %v654
      %1001 = vmatmul.mubr.bf16.gmra.mrb[0].mxu0 %v653
      %v1002 = vpop.f32.mrb[0].mxu0
      %v1003 = vadd.f32 0.0, %v1002
      %v1004 = vpop.f32.mrb[0].mxu0
      %v1005 = vpop.f32.mrb[0].mxu0
      %v1006 = vadd.f32 0.0, %v1005
      %v1007 = vpop.f32.mrb[0].mxu0
      %1008 = vdwg.mxu0
      %1009 = vmatprep.subr.bf16.mxu0 0
      %1010 = vmatpush1.bf16.msra.mxu0 %v816
      %1011 = vmatprep.subr.bf16.mxu0 0
      %1012 = vmatpush1.bf16.msra.mxu0 %v817
      %1013 = vmatprep.subr.bf16.mxu0 0
      %1014 = vmatpush1.bf16.msra.mxu0 %v818
      %1015 = vmatprep.subr.bf16.mxu0 0
      %1016 = vmatpush1.bf16.msra.mxu0 %v819
      %1017 = vmatprep.subr.bf16.mxu0 0
      %1018 = vmatpush1.bf16.msra.mxu0 %v820
      %1019 = vmatprep.subr.bf16.mxu0 0
      %1020 = vmatpush1.bf16.msra.mxu0 %v821
      %1021 = vmatprep.subr.bf16.mxu0 0
      %1022 = vmatpush1.bf16.msra.mxu0 %v822
      %1023 = vmatprep.subr.bf16.mxu0 0
      %1024 = vmatpush1.bf16.msra.mxu0 %v823
      %1025 = vmatprep.subr.bf16.mxu0 0
      %1026 = vmatpush1.bf16.msra.mxu0 0
      %1027 = vmatprep.subr.bf16.mxu0 0
      %1028 = vmatpush1.bf16.msra.mxu0 0
      %1029 = vmatprep.subr.bf16.mxu0 0
      %1030 = vmatpush1.bf16.msra.mxu0 0
      %1031 = vmatprep.subr.bf16.mxu0 0
      %1032 = vmatpush1.bf16.msra.mxu0 0
      %1033 = vmatprep.subr.bf16.mxu0 0
      %1034 = vmatpush1.bf16.msra.mxu0 0
      %1035 = vmatprep.subr.bf16.mxu0 0
      %1036 = vmatpush1.bf16.msra.mxu0 0
      %1037 = vmatprep.subr.bf16.mxu0 0
      %1038 = vmatpush1.bf16.msra.mxu0 0
      %1039 = vmatprep.subr.bf16.mxu0 0
      %1040 = vmatpush1.bf16.msra.mxu0 0
      %1041 = vmatprep.mubr.bf16.mxu0 0
      %1042 = vmatmul.mubr.bf16.gmra.mrb[0].mxu0 %v610
      %v1043 = vpop.f32.mrb[0].mxu0
      %v1044 = vadd.f32 %v883, %v1043
      %v1045 = vpop.f32.mrb[0].mxu0
      %v1046 = vpop.f32.mrb[0].mxu0
      %v1047 = vadd.f32 %v886, %v1046
      %v1048 = vpop.f32.mrb[0].mxu0
      %1049 = vmatprep.mubr.bf16.mxu0 0
      %1050 = vmatmul.mubr.bf16.gmra.mrb[0].mxu0 %v613
      %v1051 = vpop.f32.mrb[0].mxu0
      %v1052 = vadd.f32 %v891, %v1051
      %v1053 = vpop.f32.mrb[0].mxu0
      %v1054 = vpop.f32.mrb[0].mxu0
      %v1055 = vadd.f32 %v894, %v1054
      %v1056 = vpop.f32.mrb[0].mxu0
      %1057 = vmatprep.mubr.bf16.mxu0 0
      %1058 = vmatmul.mubr.bf16.gmra.mrb[0].mxu0 %v616
      %v1059 = vpop.f32.mrb[0].mxu0
      %v1060 = vadd.f32 %v899, %v1059
      %v1061 = vpop.f32.mrb[0].mxu0
      %v1062 = vpop.f32.mrb[0].mxu0
      %v1063 = vadd.f32 %v902, %v1062
      %v1064 = vpop.f32.mrb[0].mxu0
      %1065 = vmatprep.mubr.bf16.mxu0 0
      %1066 = vmatmul.mubr.bf16.gmra.mrb[0].mxu0 %v619
      %v1067 = vpop.f32.mrb[0].mxu0
      %v1068 = vadd.f32 %v907, %v1067
      %v1069 = vpop.f32.mrb[0].mxu0
      %v1070 = vpop.f32.mrb[0].mxu0
      %v1071 = vadd.f32 %v910, %v1070
      %v1072 = vpop.f32.mrb[0].mxu0
      %1073 = vmatprep.mubr.bf16.mxu0 0
      %1074 = vmatmul.mubr.bf16.gmra.mrb[0].mxu0 %v622
      %v1075 = vpop.f32.mrb[0].mxu0
      %v1076 = vadd.f32 %v915, %v1075
      %v1077 = vpop.f32.mrb[0].mxu0
      %v1078 = vpop.f32.mrb[0].mxu0
      %v1079 = vadd.f32 %v918, %v1078
      %v1080 = vpop.f32.mrb[0].mxu0
      %1081 = vmatprep.mubr.bf16.mxu0 0
      %1082 = vmatmul.mubr.bf16.gmra.mrb[0].mxu0 %v625
      %v1083 = vpop.f32.mrb[0].mxu0
      %v1084 = vadd.f32 %v923, %v1083
      %v1085 = vpop.f32.mrb[0].mxu0
      %v1086 = vpop.f32.mrb[0].mxu0
      %v1087 = vadd.f32 %v926, %v1086
      %v1088 = vpop.f32.mrb[0].mxu0
      %1089 = vmatprep.mubr.bf16.mxu0 0
      %1090 = vmatmul.mubr.bf16.gmra.mrb[0].mxu0 %v628
      %v1091 = vpop.f32.mrb[0].mxu0
      %v1092 = vadd.f32 %v931, %v1091
      %v1093 = vpop.f32.mrb[0].mxu0
      %v1094 = vpop.f32.mrb[0].mxu0
      %v1095 = vadd.f32 %v934, %v1094
      %v1096 = vpop.f32.mrb[0].mxu0
      %1097 = vmatprep.mubr.bf16.mxu0 0
      %1098 = vmatmul.mubr.bf16.gmra.mrb[0].mxu0 %v631
      %v1099 = vpop.f32.mrb[0].mxu0
      %v1100 = vadd.f32 %v939, %v1099
      %v1101 = vpop.f32.mrb[0].mxu0
      %v1102 = vpop.f32.mrb[0].mxu0
      %v1103 = vadd.f32 %v942, %v1102
      %v1104 = vpop.f32.mrb[0].mxu0
      %1105 = vmatprep.mubr.bf16.mxu0 0
      %1106 = vmatmul.mubr.bf16.gmra.mrb[0].mxu0 %v634
      %v1107 = vpop.f32.mrb[0].mxu0
      %v1108 = vadd.f32 %v947, %v1107
      %v1109 = vpop.f32.mrb[0].mxu0
      %v1110 = vpop.f32.mrb[0].mxu0
      %v1111 = vadd.f32 %v950, %v1110
      %v1112 = vpop.f32.mrb[0].mxu0
      %1113 = vmatprep.mubr.bf16.mxu0 0
      %1114 = vmatmul.mubr.bf16.gmra.mrb[0].mxu0 %v637
      %v1115 = vpop.f32.mrb[0].mxu0
      %v1116 = vadd.f32 %v955, %v1115
      %v1117 = vpop.f32.mrb[0].mxu0
      %v1118 = vpop.f32.mrb[0].mxu0
      %v1119 = vadd.f32 %v958, %v1118
      %v1120 = vpop.f32.mrb[0].mxu0
      %1121 = vmatprep.mubr.bf16.mxu0 0
      %1122 = vmatmul.mubr.bf16.gmra.mrb[0].mxu0 %v640
      %v1123 = vpop.f32.mrb[0].mxu0
      %v1124 = vadd.f32 %v963, %v1123
      %v1125 = vpop.f32.mrb[0].mxu0
      %v1126 = vpop.f32.mrb[0].mxu0
      %v1127 = vadd.f32 %v966, %v1126
      %v1128 = vpop.f32.mrb[0].mxu0
      %1129 = vmatprep.mubr.bf16.mxu0 0
      %1130 = vmatmul.mubr.bf16.gmra.mrb[0].mxu0 %v643
      %v1131 = vpop.f32.mrb[0].mxu0
      %v1132 = vadd.f32 %v971, %v1131
      %v1133 = vpop.f32.mrb[0].mxu0
      %v1134 = vpop.f32.mrb[0].mxu0
      %v1135 = vadd.f32 %v974, %v1134
      %v1136 = vpop.f32.mrb[0].mxu0
      %1137 = vmatprep.mubr.bf16.mxu0 0
      %1138 = vmatmul.mubr.bf16.gmra.mrb[0].mxu0 %v646
      %v1139 = vpop.f32.mrb[0].mxu0
      %v1140 = vadd.f32 %v979, %v1139
      %v1141 = vpop.f32.mrb[0].mxu0
      %v1142 = vpop.f32.mrb[0].mxu0
      %v1143 = vadd.f32 %v982, %v1142
      %v1144 = vpop.f32.mrb[0].mxu0
      %1145 = vmatprep.mubr.bf16.mxu0 0
      %1146 = vmatmul.mubr.bf16.gmra.mrb[0].mxu0 %v649
      %v1147 = vpop.f32.mrb[0].mxu0
      %v1148 = vadd.f32 %v987, %v1147
      %v1149 = vpop.f32.mrb[0].mxu0
      %v1150 = vpop.f32.mrb[0].mxu0
      %v1151 = vadd.f32 %v990, %v1150
      %v1152 = vpop.f32.mrb[0].mxu0
      %1153 = vmatprep.mubr.bf16.mxu0 0
      %1154 = vmatmul.mubr.bf16.gmra.mrb[0].mxu0 %v652
      %v1155 = vpop.f32.mrb[0].mxu0
      %v1156 = vadd.f32 %v995, %v1155
      %v1157 = vpop.f32.mrb[0].mxu0
      %v1158 = vpop.f32.mrb[0].mxu0
      %v1159 = vadd.f32 %v998, %v1158
      %v1160 = vpop.f32.mrb[0].mxu0
      %1161 = vmatprep.mubr.bf16.mxu0 0
      %1162 = vmatmul.mubr.bf16.gmra.mrb[0].mxu0 %v655
      %v1163 = vpop.f32.mrb[0].mxu0
      %v1164 = vadd.f32 %v1003, %v1163
      %v1165 = vpop.f32.mrb[0].mxu0
      %v1166 = vpop.f32.mrb[0].mxu0
      %v1167 = vadd.f32 %v1006, %v1166
      %v1168 = vpop.f32.mrb[0].mxu0
      %1169 = vdwg.mxu0
      %v1170 = vadd.f32 %v304, %v1044
      %v1171 = vadd.f32 %v305, %v1047
      %v1172 = vadd.f32 %v306, %v1052
      %v1173 = vadd.f32 %v307, %v1055
      %v1174 = vadd.f32 %v308, %v1060
      %v1175 = vadd.f32 %v309, %v1063
      %v1176 = vadd.f32 %v310, %v1068
      %v1177 = vadd.f32 %v311, %v1071
      %v1178 = vadd.f32 %v312, %v1076
      %v1179 = vadd.f32 %v313, %v1079
      %v1180 = vadd.f32 %v314, %v1084
      %v1181 = vadd.f32 %v315, %v1087
      %v1182 = vadd.f32 %v316, %v1092
      %v1183 = vadd.f32 %v317, %v1095
      %v1184 = vadd.f32 %v318, %v1100
      %v1185 = vadd.f32 %v319, %v1103
      %v1186 = vadd.f32 %v320, %v1108
      %v1187 = vadd.f32 %v321, %v1111
      %v1188 = vadd.f32 %v322, %v1116
      %v1189 = vadd.f32 %v323, %v1119
      %v1190 = vadd.f32 %v324, %v1124
      %v1191 = vadd.f32 %v325, %v1127
      %v1192 = vadd.f32 %v326, %v1132
      %v1193 = vadd.f32 %v327, %v1135
      %v1194 = vadd.f32 %v328, %v1140
      %v1195 = vadd.f32 %v329, %v1143
      %v1196 = vadd.f32 %v330, %v1148
      %v1197 = vadd.f32 %v331, %v1151
      %v1198 = vadd.f32 %v332, %v1156
      %v1199 = vadd.f32 %v333, %v1159
      %v1200 = vadd.f32 %v334, %v1164
      %v1201 = vadd.f32 %v335, %v1167
      %1202 = vst [vmem:[#allocation2] sm:$0xff] %v1170
      %1203 = vst [vmem:[#allocation2 + $0x8] sm:$0xff] %v1171
      %1204 = vst [vmem:[#allocation2 + $0x10] sm:$0xff] %v1172
      %1205 = vst [vmem:[#allocation2 + $0x18] sm:$0xff] %v1173
      %1206 = vst [vmem:[#allocation2 + $0x20] sm:$0xff] %v1174
      %1207 = vst [vmem:[#allocation2 + $0x28] sm:$0xff] %v1175
      %1208 = vst [vmem:[#allocation2 + $0x30] sm:$0xff] %v1176
      %1209 = vst [vmem:[#allocation2 + $0x38] sm:$0xff] %v1177
      %1210 = vst [vmem:[#allocation2 + $0x40] sm:$0xff] %v1178
      %1211 = vst [vmem:[#allocation2 + $0x48] sm:$0xff] %v1179
      %1212 = vst [vmem:[#allocation2 + $0x50] sm:$0xff] %v1180
      %1213 = vst [vmem:[#allocation2 + $0x58] sm:$0xff] %v1181
      %1214 = vst [vmem:[#allocation2 + $0x60] sm:$0xff] %v1182
      %1215 = vst [vmem:[#allocation2 + $0x68] sm:$0xff] %v1183
      %1216 = vst [vmem:[#allocation2 + $0x70] sm:$0xff] %v1184
      %1217 = vst [vmem:[#allocation2 + $0x78] sm:$0xff] %v1185
      %1218 = vst [vmem:[#allocation2 + $0x80] sm:$0xff] %v1186
      %1219 = vst [vmem:[#allocation2 + $0x88] sm:$0xff] %v1187
      %1220 = vst [vmem:[#allocation2 + $0x90] sm:$0xff] %v1188
      %1221 = vst [vmem:[#allocation2 + $0x98] sm:$0xff] %v1189
      %1222 = vst [vmem:[#allocation2 + $0xa0] sm:$0xff] %v1190
      %1223 = vst [vmem:[#allocation2 + $0xa8] sm:$0xff] %v1191
      %1224 = vst [vmem:[#allocation2 + $0xb0] sm:$0xff] %v1192
      %1225 = vst [vmem:[#allocation2 + $0xb8] sm:$0xff] %v1193
      %1226 = vst [vmem:[#allocation2 + $0xc0] sm:$0xff] %v1194
      %1227 = vst [vmem:[#allocation2 + $0xc8] sm:$0xff] %v1195
      %1228 = vst [vmem:[#allocation2 + $0xd0] sm:$0xff] %v1196
      %1229 = vst [vmem:[#allocation2 + $0xd8] sm:$0xff] %v1197
      %1230 = vst [vmem:[#allocation2 + $0xe0] sm:$0xff] %v1198
      %1231 = vst [vmem:[#allocation2 + $0xe8] sm:$0xff] %v1199
      %1232 = vst [vmem:[#allocation2 + $0xf0] sm:$0xff] %v1200
      %1233 = vst [vmem:[#allocation2 + $0xf8] sm:$0xff] %v1201
      // Predicated region
      $region37: #{sqldepth_forward.70} parent=31 // pred_check
        %p1234 = pneg %p268
      $region38: #{sqldepth_forward.70} parent=31 // pred_check_branch
        %1236 = sbr.rel (%p1234) target = $region40
      $region39: #{sqldepth_forward.70} parent=31 // pred_region
        %v1237 = vld [vmem:[#allocation2] sm:$0xff]
        %v1238 = vld [vmem:[#allocation2 + $0x8] sm:$0xff]
        %v1239 = vld [vmem:[#allocation2 + $0x10] sm:$0xff]
        %v1240 = vld [vmem:[#allocation2 + $0x18] sm:$0xff]
        %v1241 = vld [vmem:[#allocation2 + $0x20] sm:$0xff]
        %v1242 = vld [vmem:[#allocation2 + $0x28] sm:$0xff]
        %v1243 = vld [vmem:[#allocation2 + $0x30] sm:$0xff]
        %v1244 = vld [vmem:[#allocation2 + $0x38] sm:$0xff]
        %v1245 = vld [vmem:[#allocation2 + $0x40] sm:$0xff]
        %v1246 = vld [vmem:[#allocation2 + $0x48] sm:$0xff]
        %v1247 = vld [vmem:[#allocation2 + $0x50] sm:$0xff]
        %v1248 = vld [vmem:[#allocation2 + $0x58] sm:$0xff]
        %v1249 = vld [vmem:[#allocation2 + $0x60] sm:$0xff]
        %v1250 = vld [vmem:[#allocation2 + $0x68] sm:$0xff]
        %v1251 = vld [vmem:[#allocation2 + $0x70] sm:$0xff]
        %v1252 = vld [vmem:[#allocation2 + $0x78] sm:$0xff]
        %v1253 = vld [vmem:[#allocation2 + $0x80] sm:$0xff]
        %v1254 = vld [vmem:[#allocation2 + $0x88] sm:$0xff]
        %v1255 = vld [vmem:[#allocation2 + $0x90] sm:$0xff]
        %v1256 = vld [vmem:[#allocation2 + $0x98] sm:$0xff]
        %v1257 = vld [vmem:[#allocation2 + $0xa0] sm:$0xff]
        %v1258 = vld [vmem:[#allocation2 + $0xa8] sm:$0xff]
        %v1259 = vld [vmem:[#allocation2 + $0xb0] sm:$0xff]
        %v1260 = vld [vmem:[#allocation2 + $0xb8] sm:$0xff]
        %v1261 = vld [vmem:[#allocation2 + $0xc0] sm:$0xff]
        %v1262 = vld [vmem:[#allocation2 + $0xc8] sm:$0xff]
        %v1263 = vld [vmem:[#allocation2 + $0xd0] sm:$0xff]
        %v1264 = vld [vmem:[#allocation2 + $0xd8] sm:$0xff]
        %v1265 = vld [vmem:[#allocation2 + $0xe0] sm:$0xff]
        %v1266 = vld [vmem:[#allocation2 + $0xe8] sm:$0xff]
        %v1267 = vld [vmem:[#allocation2 + $0xf0] sm:$0xff]
        %v1268 = vld [vmem:[#allocation2 + $0xf8] sm:$0xff]
        %v1269 = vld [vmem:[%s257] sm:$0x1]
        %v1271 = vlaneseq
        %v1272 = vshrl.u32 %v1271, 7
        %v1273 = vsub.s32 0, %v1272
        %v1274 = vrot.slane %v1269, %v1273
        %v1276 = vadd.f32 %v1237, %v1274
        %v1277 = vadd.f32 %v1238, %v1274
        %v1278 = vadd.f32 %v1239, %v1274
        %v1279 = vadd.f32 %v1240, %v1274
        %v1280 = vadd.f32 %v1241, %v1274
        %v1281 = vadd.f32 %v1242, %v1274
        %v1282 = vadd.f32 %v1243, %v1274
        %v1283 = vadd.f32 %v1244, %v1274
        %v1284 = vadd.f32 %v1245, %v1274
        %v1285 = vadd.f32 %v1246, %v1274
        %v1286 = vadd.f32 %v1247, %v1274
        %v1287 = vadd.f32 %v1248, %v1274
        %v1288 = vadd.f32 %v1249, %v1274
        %v1289 = vadd.f32 %v1250, %v1274
        %v1290 = vadd.f32 %v1251, %v1274
        %v1291 = vadd.f32 %v1252, %v1274
        %v1292 = vadd.f32 %v1253, %v1274
        %v1293 = vadd.f32 %v1254, %v1274
        %v1294 = vadd.f32 %v1255, %v1274
        %v1295 = vadd.f32 %v1256, %v1274
        %v1296 = vadd.f32 %v1257, %v1274
        %v1297 = vadd.f32 %v1258, %v1274
        %v1298 = vadd.f32 %v1259, %v1274
        %v1299 = vadd.f32 %v1260, %v1274
        %v1300 = vadd.f32 %v1261, %v1274
        %v1301 = vadd.f32 %v1262, %v1274
        %v1302 = vadd.f32 %v1263, %v1274
        %v1303 = vadd.f32 %v1264, %v1274
        %v1304 = vadd.f32 %v1265, %v1274
        %v1305 = vadd.f32 %v1266, %v1274
        %v1306 = vadd.f32 %v1267, %v1274
        %v1307 = vadd.f32 %v1268, %v1274
        %1308 = vst [vmem:[%s265] sm:$0xff] %v1276
        %1309 = vst [vmem:[%s265 + $0x8] sm:$0xff] %v1277
        %1310 = vst [vmem:[%s265 + $0x10] sm:$0xff] %v1278
        %1311 = vst [vmem:[%s265 + $0x18] sm:$0xff] %v1279
        %1312 = vst [vmem:[%s265 + $0x20] sm:$0xff] %v1280
        %1313 = vst [vmem:[%s265 + $0x28] sm:$0xff] %v1281
        %1314 = vst [vmem:[%s265 + $0x30] sm:$0xff] %v1282
        %1315 = vst [vmem:[%s265 + $0x38] sm:$0xff] %v1283
        %1316 = vst [vmem:[%s265 + $0x40] sm:$0xff] %v1284
        %1317 = vst [vmem:[%s265 + $0x48] sm:$0xff] %v1285
        %1318 = vst [vmem:[%s265 + $0x50] sm:$0xff] %v1286
        %1319 = vst [vmem:[%s265 + $0x58] sm:$0xff] %v1287
        %1320 = vst [vmem:[%s265 + $0x60] sm:$0xff] %v1288
        %1321 = vst [vmem:[%s265 + $0x68] sm:$0xff] %v1289
        %1322 = vst [vmem:[%s265 + $0x70] sm:$0xff] %v1290
        %1323 = vst [vmem:[%s265 + $0x78] sm:$0xff] %v1291
        %1324 = vst [vmem:[%s265 + $0x80] sm:$0xff] %v1292
        %1325 = vst [vmem:[%s265 + $0x88] sm:$0xff] %v1293
        %1326 = vst [vmem:[%s265 + $0x90] sm:$0xff] %v1294
        %1327 = vst [vmem:[%s265 + $0x98] sm:$0xff] %v1295
        %1328 = vst [vmem:[%s265 + $0xa0] sm:$0xff] %v1296
        %1329 = vst [vmem:[%s265 + $0xa8] sm:$0xff] %v1297
        %1330 = vst [vmem:[%s265 + $0xb0] sm:$0xff] %v1298
        %1331 = vst [vmem:[%s265 + $0xb8] sm:$0xff] %v1299
        %1332 = vst [vmem:[%s265 + $0xc0] sm:$0xff] %v1300
        %1333 = vst [vmem:[%s265 + $0xc8] sm:$0xff] %v1301
        %1334 = vst [vmem:[%s265 + $0xd0] sm:$0xff] %v1302
        %1335 = vst [vmem:[%s265 + $0xd8] sm:$0xff] %v1303
        %1336 = vst [vmem:[%s265 + $0xe0] sm:$0xff] %v1304
        %1337 = vst [vmem:[%s265 + $0xe8] sm:$0xff] %v1305
        %1338 = vst [vmem:[%s265 + $0xf0] sm:$0xff] %v1306
        %1339 = vst [vmem:[%s265 + $0xf8] sm:$0xff] %v1307
      $region40: #{sqldepth_forward.70} parent=31 // pred_fallthru
        _
      %s1340 = smul.u32 32, %s19
      %p1341 = scmp.lt.s32.totalorder %s1340, 63
      %s1342 = scalar_select %p1341, %s1340, 63
      %p1343 = scmp.lt.s32.totalorder %s20, 0
      %s1344 = scalar_select %p1343, %s20, 0
      %s1345 = sadd.s32 %s1344, %s1342
      %s1346 = smul.addr %s1345, 8
      %s1347 = scalar_lea.vmem %s3, %s1346
      // Predicated region
      $region41: #{sqldepth_forward.70} parent=31 // pred_check
        %p1348 = pneg %p135
      $region42: #{sqldepth_forward.70} parent=31 // pred_check_branch
        %1350 = sbr.rel (%p1348) target = $region44
      $region43: #{sqldepth_forward.70} parent=31 // pred_region
        %s1351 = smul.u32 32, %s19
      $region44: #{sqldepth_forward.70} parent=31 // pred_fallthru
        _
    $region32: #{sqldepth_forward.70} parent=5 // pred_fallthru
      _
    %p1352 = scmp.le.s32.totalorder 2, %s9
    // Predicated region
    $region45: #{sqldepth_forward.70} parent=5 // pred_check
      %p1353 = pneg %p1352
    $region46: #{sqldepth_forward.70} parent=5 // pred_check_branch
      %1355 = sbr.rel (%p1353) target = $region48
    $region47: #{sqldepth_forward.70} parent=5 // pred_region
      %s1356 = ssub.s32 %s9, 2
      // Predicated region
      $region49: #{sqldepth_forward.70} parent=47 // pred_check
        %p1357 = pneg %p141
      $region50: #{sqldepth_forward.70} parent=47 // pred_check_branch
        %1359 = sbr.rel (%p1357) target = $region52
      $region51: #{sqldepth_forward.70} parent=47 // pred_region
        %s1360 = smul.u32 32, %s22
        %p1361 = scmp.lt.s32.totalorder %s1360, 63
        %s1362 = scalar_select %p1361, %s1360, 63
        %p1363 = scmp.lt.s32.totalorder %s23, 0
        %s1364 = scalar_select %p1363, %s23, 0
        %s1365 = sadd.s32 %s1364, %s1362
        %s1366 = smul.addr %s1365, 8
        %s1367 = scalar_lea.vmem %s3, %s1366
      $region52: #{sqldepth_forward.70} parent=47 // pred_fallthru
        _
    $region48: #{sqldepth_forward.70} parent=5 // pred_fallthru
      _
  $region6: #{sqldepth_forward.70} parent=0 // loop_footer
    %s13 = sadd.s32 1, %s9
  $region7: #{sqldepth_forward.70} parent=0 // loop_footer_branch
    %8 = sbr.rel target = $region3
  $region8: #{sqldepth_forward.70} parent=0 // loop_exit
    _

// kernel: sqldepth_forward.41
$region0: #{sqldepth_forward.41}
  #allocation0 [shape = 'u32[]', space=smem, size = 0x4, offset = 0x4, fixed_abs, tag = 'smem constant byte address 0x4 - core index']
  #allocation1 [shape = 'u32[144,128]{1,0:T(1,128)}', space=vmem, size = 0x12000, scoped, tag = 'internal scratch']
  #allocation2 [shape = 'f32[8,128]{1,0:T(8,128)}', space=vmem, size = 0x1000, scoped, tag = 'scratch operand']
  %s0 = inlined_call_operand.vmem [shape: bf16[8,2048], index: 0, kind: input, shape index: {}]
  %s1 = inlined_call_operand.vmem [shape: bf16[2048,128], index: 1, kind: input, shape index: {}]
  %s2 = inlined_call_operand.vmem [shape: f32[1,128], index: 2, kind: input, shape index: {}]
  %s3 = inlined_call_operand.vmem [shape: f32[8,128], index: 3, kind: output, shape index: {}]
  %s4 = sld [smem:[#allocation0]]
  $region53: #{sqldepth_forward.41} parent=0
    _
  %s6 = ssub.s32 1, %s4
  %s7 = scalar_select 0, %s6, %s4
  loop: start=0, step=1, limit=6
  $region2: #{sqldepth_forward.41} parent=0 // loop_pre_header
    _
  $region3: #{sqldepth_forward.41} parent=0 // loop_header
    %s9 = sphi 0, %s13
    %p10 = scmp.ge.s32.totalorder %s9, 6
    %s16 = sphi 0, %s35
    %s17 = sphi 0, %s31
    %s18 = sphi 0, %s27
    %s19 = sphi 0, %s16
    %s20 = sphi 0, %s17
    %s21 = sphi 0, %s18
    %s22 = sphi 0, %s19
    %s23 = sphi 0, %s20
    %s24 = sphi 0, %s21
    %s40 = sphi 0, %s42
    %s43 = sphi 0, %s40
    %s44 = sphi 0, %s43
    %s60 = sphi 0, %s44
    %s68 = sphi 0, %s70
    %s71 = sphi 0, %s68
    %s72 = sphi 0, %s71
    %s88 = sphi 0, %s72
    %s94 = sphi 0, %s96
    %s97 = sphi 0, %s94
    %s98 = sphi 0, %s97
    %s114 = sphi 0, %s98
    %s122 = sphi 0, %s124
    %s125 = sphi 0, %s122
    %s126 = sphi 0, %s125
    %s142 = sphi 0, %s126
  $region4: #{sqldepth_forward.41} parent=0 // loop_header_branch
    %12 = sbr.rel (%p10) target = $region8
  $region5: #{sqldepth_forward.41} parent=0 // loop_body
    %s14 = ssub.s32 %s9, 1
    %s15 = ssub.s32 %s9, 2
    %s25 = sadd.s32 1, %s18
    %p26 = scmp.ge.s32.totalorder %s25, 4
    %s27 = scalar_select %p26, 0, %s25
    %s28 = sadd.s32 1, %s17
    %s29 = scalar_select %p26, %s28, %s17
    %p30 = scmp.ge.s32.totalorder %s29, 1
    %s31 = scalar_select %p30, 0, %s29
    %s32 = sadd.s32 1, %s16
    %s33 = scalar_select %p30, %s32, %s16
    %p34 = scmp.ge.s32.totalorder %s33, 1
    %s35 = scalar_select %p34, 0, %s33
    %s36 = ssub.s32 %s16, %s35
    %s37 = ssub.s32 %s18, %s27
    %s38 = sor.u32 %s36, %s37
    %p39 = scmp.eq.s32.totalorder %s38, 0
    %s41 = sadd.s32 %s40, 1
    %s42 = scalar_select %p39, %s40, %s41
    %p45 = pneg %p39
    %p46 = scmp.eq.s32.totalorder %s9, 3
    %p47 = por %p45, %p46
    %p48 = scmp.ne.s32.totalorder %s40, %s43
    %p49 = scmp.eq.s32.totalorder %s9, 0
    %p50 = por %p48, %p49
    %p51 = scmp.ne.s32.totalorder %s40, %s43
    %p52 = scmp.eq.s32.totalorder %s14, 3
    %p53 = por %p51, %p52
    %p54 = scmp.ne.s32.totalorder %s43, %s44
    %p55 = scmp.eq.s32.totalorder %s14, 0
    %p56 = por %p54, %p55
    %p57 = scmp.ne.s32.totalorder %s43, %s44
    %p58 = scmp.eq.s32.totalorder %s15, 3
    %p59 = por %p57, %p58
    %p61 = scmp.ne.s32.totalorder %s44, %s60
    %p62 = scmp.eq.s32.totalorder %s15, 0
    %p63 = por %p61, %p62
    %s64 = ssub.s32 %s18, %s27
    %s65 = ssub.s32 %s17, %s31
    %s66 = sor.u32 %s64, %s65
    %p67 = scmp.eq.s32.totalorder %s66, 0
    %s69 = sadd.s32 %s68, 1
    %s70 = scalar_select %p67, %s68, %s69
    %p73 = pneg %p67
    %p74 = scmp.eq.s32.totalorder %s9, 3
    %p75 = por %p73, %p74
    %p76 = scmp.ne.s32.totalorder %s68, %s71
    %p77 = scmp.eq.s32.totalorder %s9, 0
    %p78 = por %p76, %p77
    %p79 = scmp.ne.s32.totalorder %s68, %s71
    %p80 = scmp.eq.s32.totalorder %s14, 3
    %p81 = por %p79, %p80
    %p82 = scmp.ne.s32.totalorder %s71, %s72
    %p83 = scmp.eq.s32.totalorder %s14, 0
    %p84 = por %p82, %p83
    %p85 = scmp.ne.s32.totalorder %s71, %s72
    %p86 = scmp.eq.s32.totalorder %s15, 3
    %p87 = por %p85, %p86
    %p89 = scmp.ne.s32.totalorder %s72, %s88
    %p90 = scmp.eq.s32.totalorder %s15, 0
    %p91 = por %p89, %p90
    %s92 = ssub.s32 %s17, %s31
    %p93 = scmp.eq.s32.totalorder %s92, 0
    %s95 = sadd.s32 %s94, 1
    %s96 = scalar_select %p93, %s94, %s95
    %p99 = pneg %p93
    %p100 = scmp.eq.s32.totalorder %s9, 3
    %p101 = por %p99, %p100
    %p102 = scmp.ne.s32.totalorder %s94, %s97
    %p103 = scmp.eq.s32.totalorder %s9, 0
    %p104 = por %p102, %p103
    %p105 = scmp.ne.s32.totalorder %s94, %s97
    %p106 = scmp.eq.s32.totalorder %s14, 3
    %p107 = por %p105, %p106
    %p108 = scmp.ne.s32.totalorder %s97, %s98
    %p109 = scmp.eq.s32.totalorder %s14, 0
    %p110 = por %p108, %p109
    %p111 = scmp.ne.s32.totalorder %s97, %s98
    %p112 = scmp.eq.s32.totalorder %s15, 3
    %p113 = por %p111, %p112
    %p115 = scmp.ne.s32.totalorder %s98, %s114
    %p116 = scmp.eq.s32.totalorder %s15, 0
    %p117 = por %p115, %p116
    %s118 = ssub.s32 %s16, %s35
    %s119 = ssub.s32 %s17, %s31
    %s120 = sor.u32 %s118, %s119
    %p121 = scmp.eq.s32.totalorder %s120, 0
    %s123 = sadd.s32 %s122, 1
    %s124 = scalar_select %p121, %s122, %s123
    %p127 = pneg %p121
    %p128 = scmp.eq.s32.totalorder %s9, 3
    %p129 = por %p127, %p128
    %p130 = scmp.ne.s32.totalorder %s122, %s125
    %p131 = scmp.eq.s32.totalorder %s9, 0
    %p132 = por %p130, %p131
    %p133 = scmp.ne.s32.totalorder %s122, %s125
    %p134 = scmp.eq.s32.totalorder %s14, 3
    %p135 = por %p133, %p134
    %p136 = scmp.ne.s32.totalorder %s125, %s126
    %p137 = scmp.eq.s32.totalorder %s14, 0
    %p138 = por %p136, %p137
    %p139 = scmp.ne.s32.totalorder %s125, %s126
    %p140 = scmp.eq.s32.totalorder %s15, 3
    %p141 = por %p139, %p140
    %p143 = scmp.ne.s32.totalorder %s126, %s142
    %p144 = scmp.eq.s32.totalorder %s15, 0
    %p145 = por %p143, %p144
    %p146 = scmp.le.s32.totalorder 1, %s9
    %p147 = scmp.lt.s32.totalorder %s9, 5
    %p148 = pnand %p146, %p147
    %p149 = pneg %p148
    // Predicated region
    $region9: #{sqldepth_forward.41} parent=5 // pred_check
      _
    $region10: #{sqldepth_forward.41} parent=5 // pred_check_branch
      %151 = sbr.rel (%p148) target = $region12
    $region11: #{sqldepth_forward.41} parent=5 // pred_region
      %s152 = ssub.s32 %s9, 1
      // Predicated region
      $region13: #{sqldepth_forward.41} parent=11 // pred_check
        %p153 = pneg %p110
      $region14: #{sqldepth_forward.41} parent=11 // pred_check_branch
        %155 = sbr.rel (%p153) target = $region16
      $region15: #{sqldepth_forward.41} parent=11 // pred_region
        %p156 = scmp.lt.s32.totalorder %s20, 0
        %s157 = scalar_select %p156, %s20, 0
        %s158 = scalar_lea.vmem %s2, %s157
      $region16: #{sqldepth_forward.41} parent=11 // pred_fallthru
        _
    $region12: #{sqldepth_forward.41} parent=5 // pred_fallthru
      _
    %p159 = scmp.lt.s32.totalorder %s9, 4
    // Predicated region
    $region17: #{sqldepth_forward.41} parent=5 // pred_check
      %p160 = pneg %p159
    $region18: #{sqldepth_forward.41} parent=5 // pred_check_branch
      %162 = sbr.rel (%p160) target = $region20
    $region19: #{sqldepth_forward.41} parent=5 // pred_region
      // Predicated region
      $region21: #{sqldepth_forward.41} parent=19 // pred_check
        %p163 = pneg %p50
      $region22: #{sqldepth_forward.41} parent=19 // pred_check_branch
        %165 = sbr.rel (%p163) target = $region24
      $region23: #{sqldepth_forward.41} parent=19 // pred_region
        %s166 = smul.u32 4, %s18
        %p167 = scmp.lt.s32.totalorder %s16, 0
        %s168 = scalar_select %p167, %s16, 0
        %p169 = scmp.lt.s32.totalorder %s166, 15
        %s170 = scalar_select %p169, %s166, 15
        %s171 = smul.addr %s168, 16
        %s172 = sadd.s32 %s170, %s171
        %s173 = smul.addr %s172, 4
        %s174 = scalar_lea.vmem %s0, %s173
        %s175 = smul.u32 4, %s18
      $region24: #{sqldepth_forward.41} parent=19 // pred_fallthru
        _
      // Predicated region
      $region25: #{sqldepth_forward.41} parent=19 // pred_check
        %p176 = pneg %p78
      $region26: #{sqldepth_forward.41} parent=19 // pred_check_branch
        %178 = sbr.rel (%p176) target = $region28
      $region27: #{sqldepth_forward.41} parent=19 // pred_region
        %s179 = smul.u32 64, %s18
        %p180 = scmp.lt.s32.totalorder %s179, 255
        %s181 = scalar_select %p180, %s179, 255
        %p182 = scmp.lt.s32.totalorder %s17, 0
        %s183 = scalar_select %p182, %s17, 0
        %s184 = sadd.s32 %s183, %s181
        %s185 = smul.addr %s184, 4
        %s186 = scalar_lea.vmem %s1, %s185
        %s187 = smul.u32 64, %s18
      $region28: #{sqldepth_forward.41} parent=19 // pred_fallthru
        _
    $region20: #{sqldepth_forward.41} parent=5 // pred_fallthru
      _
    %p188 = scmp.le.s32.totalorder 1, %s9
    %p189 = scmp.lt.s32.totalorder %s9, 5
    %p190 = pnand %p188, %p189
    %p191 = pneg %p190
    // Predicated region
    $region29: #{sqldepth_forward.41} parent=5 // pred_check
      _
    $region30: #{sqldepth_forward.41} parent=5 // pred_check_branch
      %193 = sbr.rel (%p190) target = $region32
    $region31: #{sqldepth_forward.41} parent=5 // pred_region
      %s194 = ssub.s32 %s9, 1
      %s195 = smul.u32 4, %s21
      %p196 = scmp.lt.s32.totalorder %s19, 0
      %s197 = scalar_select %p196, %s19, 0
      %p198 = scmp.lt.s32.totalorder %s195, 15
      %s199 = scalar_select %p198, %s195, 15
      %s200 = smul.addr %s197, 16
      %s201 = sadd.s32 %s199, %s200
      %s202 = smul.addr %s201, 4
      %s203 = scalar_lea.vmem %s0, %s202
      %p204 = pneg %p56
      %p205 = pneg %p53
      %s206 = smul.u32 64, %s21
      %p207 = scmp.lt.s32.totalorder %s206, 255
      %s208 = scalar_select %p207, %s206, 255
      %p209 = scmp.lt.s32.totalorder %s20, 0
      %s210 = scalar_select %p209, %s20, 0
      %s211 = sadd.s32 %s210, %s208
      %s212 = smul.addr %s211, 4
      %s213 = scalar_lea.vmem %s1, %s212
      %p214 = pneg %p84
      %p215 = pneg %p81
      %p216 = scmp.lt.s32.totalorder %s20, 0
      %s217 = scalar_select %p216, %s20, 0
      %s218 = scalar_lea.vmem %s2, %s217
      %p219 = pneg %p110
      %p220 = pneg %p107
      %p221 = pneg %p138
      %p222 = pneg %p135
      %p223 = scmp.lt.s32.totalorder %s19, 0
      %s224 = scalar_select %p223, %s19, 0
      %p225 = scmp.lt.s32.totalorder %s20, 0
      %s226 = scalar_select %p225, %s20, 0
      %s227 = sadd.s32 %s226, %s224
      %s228 = smul.addr %s227, 8
      %s229 = scalar_lea.vmem %s3, %s228
      %s230 = smul.u32 4, %s21
      %p231 = scmp.lt.s32.totalorder %s19, 0
      %s232 = scalar_select %p231, %s19, 0
      %p233 = scmp.lt.s32.totalorder %s230, 15
      %s234 = scalar_select %p233, %s230, 15
      %s235 = smul.addr %s232, 16
      %s236 = sadd.s32 %s234, %s235
      %s237 = smul.addr %s236, 4
      %s238 = scalar_lea.vmem %s0, %s237
      %s239 = smul.u32 4, %s21
      %s240 = smul.u32 64, %s21
      %p241 = scmp.lt.s32.totalorder %s240, 255
      %s242 = scalar_select %p241, %s240, 255
      %p243 = scmp.lt.s32.totalorder %s20, 0
      %s244 = scalar_select %p243, %s20, 0
      %s245 = sadd.s32 %s244, %s242
      %s246 = smul.addr %s245, 4
      %s247 = scalar_lea.vmem %s1, %s246
      %s248 = smul.u32 64, %s21
      %p249 = scmp.lt.s32.totalorder %s20, 0
      %s250 = scalar_select %p249, %s20, 0
      %s251 = scalar_lea.vmem %s2, %s250
      %p252 = scmp.lt.s32.totalorder %s19, 0
      %s253 = scalar_select %p252, %s19, 0
      %p254 = scmp.lt.s32.totalorder %s20, 0
      %s255 = scalar_select %p254, %s20, 0
      %s256 = sadd.s32 %s255, %s253
      %s257 = smul.addr %s256, 8
      %s258 = scalar_lea.vmem %s3, %s257
      %p260 = scmp.eq.s32.totalorder %s21, 0
      // Predicated region
      $region33: #{sqldepth_forward.41} parent=31 // pred_check
        %p261 = pneg %p260
      $region34: #{sqldepth_forward.41} parent=31 // pred_check_branch
        %263 = sbr.rel (%p261) target = $region36
      $region35: #{sqldepth_forward.41} parent=31 // pred_region
        %264 = vst [vmem:[#allocation2] sm:$0xff] 0.0
      $region36: #{sqldepth_forward.41} parent=31 // pred_fallthru
        _
      %v265 = vld [vmem:[#allocation2] sm:$0xff]
      %v266 = vld [vmem:[%s238] sm:$0xff]
      %v267 = vld [vmem:[%s238 + $0x8] sm:$0xff]
      %v268 = vld [vmem:[%s247] sm:$0xf]
      %v269 = vld [vmem:[%s247 + $0x4] sm:$0xf]
      %v270 = vld [vmem:[%s247 + $0x8] sm:$0xf]
      %v271 = vld [vmem:[%s247 + $0xc] sm:$0xf]
      %v272 = vld [vmem:[%s247 + $0x10] sm:$0xf]
      %v273 = vld [vmem:[%s247 + $0x14] sm:$0xf]
      %v274 = vld [vmem:[%s247 + $0x18] sm:$0xf]
      %v275 = vld [vmem:[%s247 + $0x1c] sm:$0xf]
      %v276 = vld [vmem:[%s247 + $0x20] sm:$0xf]
      %v277 = vld [vmem:[%s247 + $0x24] sm:$0xf]
      %v278 = vld [vmem:[%s247 + $0x28] sm:$0xf]
      %v279 = vld [vmem:[%s247 + $0x2c] sm:$0xf]
      %v280 = vld [vmem:[%s247 + $0x30] sm:$0xf]
      %v281 = vld [vmem:[%s247 + $0x34] sm:$0xf]
      %v282 = vld [vmem:[%s247 + $0x38] sm:$0xf]
      %v283 = vld [vmem:[%s247 + $0x3c] sm:$0xf]
      %v284 = vld [vmem:[%s247 + $0x40] sm:$0xf]
      %v285 = vld [vmem:[%s247 + $0x44] sm:$0xf]
      %v286 = vld [vmem:[%s247 + $0x48] sm:$0xf]
      %v287 = vld [vmem:[%s247 + $0x4c] sm:$0xf]
      %v288 = vld [vmem:[%s247 + $0x50] sm:$0xf]
      %v289 = vld [vmem:[%s247 + $0x54] sm:$0xf]
      %v290 = vld [vmem:[%s247 + $0x58] sm:$0xf]
      %v291 = vld [vmem:[%s247 + $0x5c] sm:$0xf]
      %v292 = vld [vmem:[%s247 + $0x60] sm:$0xf]
      %v293 = vld [vmem:[%s247 + $0x64] sm:$0xf]
      %v294 = vld [vmem:[%s247 + $0x68] sm:$0xf]
      %v295 = vld [vmem:[%s247 + $0x6c] sm:$0xf]
      %v296 = vld [vmem:[%s247 + $0x70] sm:$0xf]
      %v297 = vld [vmem:[%s247 + $0x74] sm:$0xf]
      %v298 = vld [vmem:[%s247 + $0x78] sm:$0xf]
      %v299 = vld [vmem:[%s247 + $0x7c] sm:$0xf]
      %v300 = vld [vmem:[%s247 + $0x80] sm:$0xf]
      %v301 = vld [vmem:[%s247 + $0x84] sm:$0xf]
      %v302 = vld [vmem:[%s247 + $0x88] sm:$0xf]
      %v303 = vld [vmem:[%s247 + $0x8c] sm:$0xf]
      %v304 = vld [vmem:[%s247 + $0x90] sm:$0xf]
      %v305 = vld [vmem:[%s247 + $0x94] sm:$0xf]
      %v306 = vld [vmem:[%s247 + $0x98] sm:$0xf]
      %v307 = vld [vmem:[%s247 + $0x9c] sm:$0xf]
      %v308 = vld [vmem:[%s247 + $0xa0] sm:$0xf]
      %v309 = vld [vmem:[%s247 + $0xa4] sm:$0xf]
      %v310 = vld [vmem:[%s247 + $0xa8] sm:$0xf]
      %v311 = vld [vmem:[%s247 + $0xac] sm:$0xf]
      %v312 = vld [vmem:[%s247 + $0xb0] sm:$0xf]
      %v313 = vld [vmem:[%s247 + $0xb4] sm:$0xf]
      %v314 = vld [vmem:[%s247 + $0xb8] sm:$0xf]
      %v315 = vld [vmem:[%s247 + $0xbc] sm:$0xf]
      %v316 = vld [vmem:[%s247 + $0xc0] sm:$0xf]
      %v317 = vld [vmem:[%s247 + $0xc4] sm:$0xf]
      %v318 = vld [vmem:[%s247 + $0xc8] sm:$0xf]
      %v319 = vld [vmem:[%s247 + $0xcc] sm:$0xf]
      %v320 = vld [vmem:[%s247 + $0xd0] sm:$0xf]
      %v321 = vld [vmem:[%s247 + $0xd4] sm:$0xf]
      %v322 = vld [vmem:[%s247 + $0xd8] sm:$0xf]
      %v323 = vld [vmem:[%s247 + $0xdc] sm:$0xf]
      %v324 = vld [vmem:[%s247 + $0xe0] sm:$0xf]
      %v325 = vld [vmem:[%s247 + $0xe4] sm:$0xf]
      %v326 = vld [vmem:[%s247 + $0xe8] sm:$0xf]
      %v327 = vld [vmem:[%s247 + $0xec] sm:$0xf]
      %v328 = vld [vmem:[%s247 + $0xf0] sm:$0xf]
      %v329 = vld [vmem:[%s247 + $0xf4] sm:$0xf]
      %v330 = vld [vmem:[%s247 + $0xf8] sm:$0xf]
      %v331 = vld [vmem:[%s247 + $0xfc] sm:$0xf]
      %v334 = vunpack.c.l.b16 %v266
      %v335 = vunpack.c.h.b16 %v266
      %v336 = vunpack.c.l.b16 %v267
      %v337 = vunpack.c.h.b16 %v267
      %v338 = vpack.c.b16 %v334, %v334
      %v339 = vpack.c.b16 %v335, %v335
      %v340 = vpack.c.b16 %v336, %v336
      %v341 = vpack.c.b16 %v337, %v337
      %v410 = vunpack.c.l.b16 %v268
      %v411 = vunpack.c.l.b16 %v269
      %v412 = vunpack.c.l.b16 %v270
      %v413 = vunpack.c.l.b16 %v271
      %v414 = vunpack.c.l.b16 %v272
      %v415 = vunpack.c.l.b16 %v273
      %v416 = vunpack.c.l.b16 %v274
      %v417 = vunpack.c.l.b16 %v275
      %v418 = vunpack.c.l.b16 %v276
      %v419 = vunpack.c.l.b16 %v277
      %v420 = vunpack.c.l.b16 %v278
      %v421 = vunpack.c.l.b16 %v279
      %v422 = vunpack.c.l.b16 %v280
      %v423 = vunpack.c.l.b16 %v281
      %v424 = vunpack.c.l.b16 %v282
      %v425 = vunpack.c.l.b16 %v283
      %v426 = vunpack.c.l.b16 %v284
      %v427 = vunpack.c.l.b16 %v285
      %v428 = vunpack.c.l.b16 %v286
      %v429 = vunpack.c.l.b16 %v287
      %v430 = vunpack.c.l.b16 %v288
      %v431 = vunpack.c.l.b16 %v289
      %v432 = vunpack.c.l.b16 %v290
      %v433 = vunpack.c.l.b16 %v291
      %v434 = vunpack.c.l.b16 %v292
      %v435 = vunpack.c.l.b16 %v293
      %v436 = vunpack.c.l.b16 %v294
      %v437 = vunpack.c.l.b16 %v295
      %v438 = vunpack.c.l.b16 %v296
      %v439 = vunpack.c.l.b16 %v297
      %v440 = vunpack.c.l.b16 %v298
      %v441 = vunpack.c.l.b16 %v299
      %v442 = vunpack.c.l.b16 %v300
      %v443 = vunpack.c.l.b16 %v301
      %v444 = vunpack.c.l.b16 %v302
      %v445 = vunpack.c.l.b16 %v303
      %v446 = vunpack.c.l.b16 %v304
      %v447 = vunpack.c.l.b16 %v305
      %v448 = vunpack.c.l.b16 %v306
      %v449 = vunpack.c.l.b16 %v307
      %v450 = vunpack.c.l.b16 %v308
      %v451 = vunpack.c.l.b16 %v309
      %v452 = vunpack.c.l.b16 %v310
      %v453 = vunpack.c.l.b16 %v311
      %v454 = vunpack.c.l.b16 %v312
      %v455 = vunpack.c.l.b16 %v313
      %v456 = vunpack.c.l.b16 %v314
      %v457 = vunpack.c.l.b16 %v315
      %v458 = vunpack.c.l.b16 %v316
      %v459 = vunpack.c.l.b16 %v317
      %v460 = vunpack.c.l.b16 %v318
      %v461 = vunpack.c.l.b16 %v319
      %v462 = vunpack.c.l.b16 %v320
      %v463 = vunpack.c.l.b16 %v321
      %v464 = vunpack.c.l.b16 %v322
      %v465 = vunpack.c.l.b16 %v323
      %v466 = vunpack.c.l.b16 %v324
      %v467 = vunpack.c.l.b16 %v325
      %v468 = vunpack.c.l.b16 %v326
      %v469 = vunpack.c.l.b16 %v327
      %v470 = vunpack.c.l.b16 %v328
      %v471 = vunpack.c.l.b16 %v329
      %v472 = vunpack.c.l.b16 %v330
      %v473 = vunpack.c.l.b16 %v331
      %v474 = vpack.c.b16 %v411, %v410
      %v475 = vpack.c.b16 %v413, %v412
      %v476 = vpack.c.b16 %v415, %v414
      %v477 = vpack.c.b16 %v417, %v416
      %v478 = vpack.c.b16 %v419, %v418
      %v479 = vpack.c.b16 %v421, %v420
      %v480 = vpack.c.b16 %v423, %v422
      %v481 = vpack.c.b16 %v425, %v424
      %v482 = vpack.c.b16 %v427, %v426
      %v483 = vpack.c.b16 %v429, %v428
      %v484 = vpack.c.b16 %v431, %v430
      %v485 = vpack.c.b16 %v433, %v432
      %v486 = vpack.c.b16 %v435, %v434
      %v487 = vpack.c.b16 %v437, %v436
      %v488 = vpack.c.b16 %v439, %v438
      %v489 = vpack.c.b16 %v441, %v440
      %v490 = vpack.c.b16 %v443, %v442
      %v491 = vpack.c.b16 %v445, %v444
      %v492 = vpack.c.b16 %v447, %v446
      %v493 = vpack.c.b16 %v449, %v448
      %v494 = vpack.c.b16 %v451, %v450
      %v495 = vpack.c.b16 %v453, %v452
      %v496 = vpack.c.b16 %v455, %v454
      %v497 = vpack.c.b16 %v457, %v456
      %v498 = vpack.c.b16 %v459, %v458
      %v499 = vpack.c.b16 %v461, %v460
      %v500 = vpack.c.b16 %v463, %v462
      %v501 = vpack.c.b16 %v465, %v464
      %v502 = vpack.c.b16 %v467, %v466
      %v503 = vpack.c.b16 %v469, %v468
      %v504 = vpack.c.b16 %v471, %v470
      %v505 = vpack.c.b16 %v473, %v472
      %538 = vmatprep.subr.bf16.mxu0 0
      %539 = vmatpush1.bf16.msra.mxu0 %v474
      %540 = vmatprep.subr.bf16.mxu0 0
      %541 = vmatpush1.bf16.msra.mxu0 %v475
      %542 = vmatprep.subr.bf16.mxu0 0
      %543 = vmatpush1.bf16.msra.mxu0 %v476
      %544 = vmatprep.subr.bf16.mxu0 0
      %545 = vmatpush1.bf16.msra.mxu0 %v477
      %546 = vmatprep.subr.bf16.mxu0 0
      %547 = vmatpush1.bf16.msra.mxu0 %v478
      %548 = vmatprep.subr.bf16.mxu0 0
      %549 = vmatpush1.bf16.msra.mxu0 %v479
      %550 = vmatprep.subr.bf16.mxu0 0
      %551 = vmatpush1.bf16.msra.mxu0 %v480
      %552 = vmatprep.subr.bf16.mxu0 0
      %553 = vmatpush1.bf16.msra.mxu0 %v481
      %554 = vmatprep.subr.bf16.mxu0 0
      %555 = vmatpush1.bf16.msra.mxu0 %v482
      %556 = vmatprep.subr.bf16.mxu0 0
      %557 = vmatpush1.bf16.msra.mxu0 %v483
      %558 = vmatprep.subr.bf16.mxu0 0
      %559 = vmatpush1.bf16.msra.mxu0 %v484
      %560 = vmatprep.subr.bf16.mxu0 0
      %561 = vmatpush1.bf16.msra.mxu0 %v485
      %562 = vmatprep.subr.bf16.mxu0 0
      %563 = vmatpush1.bf16.msra.mxu0 %v486
      %564 = vmatprep.subr.bf16.mxu0 0
      %565 = vmatpush1.bf16.msra.mxu0 %v487
      %566 = vmatprep.subr.bf16.mxu0 0
      %567 = vmatpush1.bf16.msra.mxu0 %v488
      %568 = vmatprep.subr.bf16.mxu0 0
      %569 = vmatpush1.bf16.msra.mxu0 %v489
      %570 = vmatprep.mubr.bf16.mxu0 %v339
      %571 = vmatmul.mubr.bf16.gmra.mrb[0].mxu0 %v338
      %v572 = vpop.f32.mrb[0].mxu0
      %v573 = vadd.f32 0.0, %v572
      %v574 = vpop.f32.mrb[0].mxu0
      %v575 = vpop.f32.mrb[0].mxu0
      %v576 = vpop.f32.mrb[0].mxu0
      %577 = vdwg.mxu0
      %578 = vmatprep.subr.bf16.mxu0 0
      %579 = vmatpush1.bf16.msra.mxu0 %v490
      %580 = vmatprep.subr.bf16.mxu0 0
      %581 = vmatpush1.bf16.msra.mxu0 %v491
      %582 = vmatprep.subr.bf16.mxu0 0
      %583 = vmatpush1.bf16.msra.mxu0 %v492
      %584 = vmatprep.subr.bf16.mxu0 0
      %585 = vmatpush1.bf16.msra.mxu0 %v493
      %586 = vmatprep.subr.bf16.mxu0 0
      %587 = vmatpush1.bf16.msra.mxu0 %v494
      %588 = vmatprep.subr.bf16.mxu0 0
      %589 = vmatpush1.bf16.msra.mxu0 %v495
      %590 = vmatprep.subr.bf16.mxu0 0
      %591 = vmatpush1.bf16.msra.mxu0 %v496
      %592 = vmatprep.subr.bf16.mxu0 0
      %593 = vmatpush1.bf16.msra.mxu0 %v497
      %594 = vmatprep.subr.bf16.mxu0 0
      %595 = vmatpush1.bf16.msra.mxu0 %v498
      %596 = vmatprep.subr.bf16.mxu0 0
      %597 = vmatpush1.bf16.msra.mxu0 %v499
      %598 = vmatprep.subr.bf16.mxu0 0
      %599 = vmatpush1.bf16.msra.mxu0 %v500
      %600 = vmatprep.subr.bf16.mxu0 0
      %601 = vmatpush1.bf16.msra.mxu0 %v501
      %602 = vmatprep.subr.bf16.mxu0 0
      %603 = vmatpush1.bf16.msra.mxu0 %v502
      %604 = vmatprep.subr.bf16.mxu0 0
      %605 = vmatpush1.bf16.msra.mxu0 %v503
      %606 = vmatprep.subr.bf16.mxu0 0
      %607 = vmatpush1.bf16.msra.mxu0 %v504
      %608 = vmatprep.subr.bf16.mxu0 0
      %609 = vmatpush1.bf16.msra.mxu0 %v505
      %610 = vmatprep.mubr.bf16.mxu0 %v341
      %611 = vmatmul.mubr.bf16.gmra.mrb[0].mxu0 %v340
      %v612 = vpop.f32.mrb[0].mxu0
      %v613 = vadd.f32 %v573, %v612
      %v614 = vpop.f32.mrb[0].mxu0
      %v615 = vpop.f32.mrb[0].mxu0
      %v616 = vpop.f32.mrb[0].mxu0
      %617 = vdwg.mxu0
      %v618 = vadd.f32 %v265, %v613
      %619 = vst [vmem:[#allocation2] sm:$0xff] %v618
      %p620 = scmp.eq.s32.totalorder %s21, 3
      // Predicated region
      $region37: #{sqldepth_forward.41} parent=31 // pred_check
        %p621 = pneg %p620
      $region38: #{sqldepth_forward.41} parent=31 // pred_check_branch
        %623 = sbr.rel (%p621) target = $region40
      $region39: #{sqldepth_forward.41} parent=31 // pred_region
        %v624 = vld [vmem:[#allocation2] sm:$0xff]
        %v625 = vld [vmem:[%s251] sm:$0x1]
        %v627 = vlaneseq
        %v628 = vshrl.u32 %v627, 7
        %v629 = vsub.s32 0, %v628
        %v630 = vrot.slane %v625, %v629
        %v632 = vadd.f32 %v624, %v630
        %633 = vst [vmem:[%s258] sm:$0xff] %v632
      $region40: #{sqldepth_forward.41} parent=31 // pred_fallthru
        _
      %p634 = scmp.lt.s32.totalorder %s19, 0
      %s635 = scalar_select %p634, %s19, 0
      %p636 = scmp.lt.s32.totalorder %s20, 0
      %s637 = scalar_select %p636, %s20, 0
      %s638 = sadd.s32 %s637, %s635
      %s639 = smul.addr %s638, 8
      %s640 = scalar_lea.vmem %s3, %s639
      // Predicated region
      $region41: #{sqldepth_forward.41} parent=31 // pred_check
        %p641 = pneg %p135
      $region42: #{sqldepth_forward.41} parent=31 // pred_check_branch
        %643 = sbr.rel (%p641) target = $region44
      $region43: #{sqldepth_forward.41} parent=31 // pred_region
        _
      $region44: #{sqldepth_forward.41} parent=31 // pred_fallthru
        _
      // Predicated region
      $region45: #{sqldepth_forward.41} parent=31 // pred_check
        %p644 = pneg %p135
      $region46: #{sqldepth_forward.41} parent=31 // pred_check_branch
        %646 = sbr.rel (%p644) target = $region48
      $region47: #{sqldepth_forward.41} parent=31 // pred_region
        %p647 = scmp.lt.s32.totalorder %s19, 0
        %s648 = scalar_select %p647, %s19, 0
        %p649 = scmp.lt.s32.totalorder %s20, 0
        %s650 = scalar_select %p649, %s20, 0
        %s651 = sadd.s32 %s650, %s648
        %s652 = smul.addr %s651, 8
        %s653 = scalar_lea.vmem %s3, %s652
      $region48: #{sqldepth_forward.41} parent=31 // pred_fallthru
        _
    $region32: #{sqldepth_forward.41} parent=5 // pred_fallthru
      _
    %p654 = scmp.le.s32.totalorder 2, %s9
    // Predicated region
    $region49: #{sqldepth_forward.41} parent=5 // pred_check
      %p655 = pneg %p654
    $region50: #{sqldepth_forward.41} parent=5 // pred_check_branch
      %657 = sbr.rel (%p655) target = $region52
    $region51: #{sqldepth_forward.41} parent=5 // pred_region
      %s658 = ssub.s32 %s9, 2
    $region52: #{sqldepth_forward.41} parent=5 // pred_fallthru
      _
  $region6: #{sqldepth_forward.41} parent=0 // loop_footer
    %s13 = sadd.s32 1, %s9
  $region7: #{sqldepth_forward.41} parent=0 // loop_footer_branch
    %8 = sbr.rel target = $region3
  $region8: #{sqldepth_forward.41} parent=0 // loop_exit
    _

// kernel: sqldepth_forward.42
$region0: #{sqldepth_forward.42}
  #allocation0 [shape = 'u32[]', space=smem, size = 0x4, offset = 0x4, fixed_abs, tag = 'smem constant byte address 0x4 - core index']
  #allocation1 [shape = 'u32[144,128]{1,0:T(1,128)}', space=vmem, size = 0x12000, scoped, tag = 'internal scratch']
  #allocation2 [shape = 'f32[8,128]{1,0:T(8,128)}', space=vmem, size = 0x1000, scoped, tag = 'scratch operand']
  %s0 = inlined_call_operand.vmem [shape: bf16[8,128], index: 0, kind: input, shape index: {}]
  %s1 = inlined_call_operand.vmem [shape: bf16[128,128], index: 1, kind: input, shape index: {}]
  %s2 = inlined_call_operand.vmem [shape: f32[1,128], index: 2, kind: input, shape index: {}]
  %s3 = inlined_call_operand.vmem [shape: f32[8,128], index: 3, kind: output, shape index: {}]
  %s4 = sld [smem:[#allocation0]]
  $region30: #{sqldepth_forward.42} parent=0
    _
  %s6 = ssub.s32 1, %s4
  %s7 = scalar_select 0, %s6, %s4
  // Predicated region
  $region2: #{sqldepth_forward.42} parent=0 // pred_check
    _
  $region3: #{sqldepth_forward.42} parent=0 // pred_check_branch
    %9 = sbr.rel (0) target = $region5
  $region4: #{sqldepth_forward.42} parent=0 // pred_region
    _
  $region5: #{sqldepth_forward.42} parent=0 // pred_fallthru
    _
  // Predicated region
  $region6: #{sqldepth_forward.42} parent=0 // pred_check
    _
  $region7: #{sqldepth_forward.42} parent=0 // pred_check_branch
    %11 = sbr.rel (0) target = $region9
  $region8: #{sqldepth_forward.42} parent=0 // pred_region
    _
  $region9: #{sqldepth_forward.42} parent=0 // pred_fallthru
    _
  // Predicated region
  $region10: #{sqldepth_forward.42} parent=0 // pred_check
    _
  $region11: #{sqldepth_forward.42} parent=0 // pred_check_branch
    %13 = sbr.rel (0) target = $region13
  $region12: #{sqldepth_forward.42} parent=0 // pred_region
    _
  $region13: #{sqldepth_forward.42} parent=0 // pred_fallthru
    _
  %p15 = scmp.eq.s32.totalorder 0, 0
  // Predicated region
  $region14: #{sqldepth_forward.42} parent=0 // pred_check
    %p16 = pneg %p15
  $region15: #{sqldepth_forward.42} parent=0 // pred_check_branch
    %18 = sbr.rel (%p16) target = $region17
  $region16: #{sqldepth_forward.42} parent=0 // pred_region
    %19 = vst [vmem:[#allocation2] sm:$0xff] 0.0
  $region17: #{sqldepth_forward.42} parent=0 // pred_fallthru
    _
  %v20 = vld [vmem:[#allocation2] sm:$0xff]
  %v21 = vld [vmem:[%s0] sm:$0xf]
  %v22 = vld [vmem:[%s1] sm:$0xf]
  %v23 = vld [vmem:[%s1 + $0x4] sm:$0xf]
  %v24 = vld [vmem:[%s1 + $0x8] sm:$0xf]
  %v25 = vld [vmem:[%s1 + $0xc] sm:$0xf]
  %v26 = vld [vmem:[%s1 + $0x10] sm:$0xf]
  %v27 = vld [vmem:[%s1 + $0x14] sm:$0xf]
  %v28 = vld [vmem:[%s1 + $0x18] sm:$0xf]
  %v29 = vld [vmem:[%s1 + $0x1c] sm:$0xf]
  %v30 = vld [vmem:[%s1 + $0x20] sm:$0xf]
  %v31 = vld [vmem:[%s1 + $0x24] sm:$0xf]
  %v32 = vld [vmem:[%s1 + $0x28] sm:$0xf]
  %v33 = vld [vmem:[%s1 + $0x2c] sm:$0xf]
  %v34 = vld [vmem:[%s1 + $0x30] sm:$0xf]
  %v35 = vld [vmem:[%s1 + $0x34] sm:$0xf]
  %v36 = vld [vmem:[%s1 + $0x38] sm:$0xf]
  %v37 = vld [vmem:[%s1 + $0x3c] sm:$0xf]
  %v54 = vunpack.c.l.b16 %v22
  %v55 = vunpack.c.l.b16 %v23
  %v56 = vunpack.c.l.b16 %v24
  %v57 = vunpack.c.l.b16 %v25
  %v58 = vunpack.c.l.b16 %v26
  %v59 = vunpack.c.l.b16 %v27
  %v60 = vunpack.c.l.b16 %v28
  %v61 = vunpack.c.l.b16 %v29
  %v62 = vunpack.c.l.b16 %v30
  %v63 = vunpack.c.l.b16 %v31
  %v64 = vunpack.c.l.b16 %v32
  %v65 = vunpack.c.l.b16 %v33
  %v66 = vunpack.c.l.b16 %v34
  %v67 = vunpack.c.l.b16 %v35
  %v68 = vunpack.c.l.b16 %v36
  %v69 = vunpack.c.l.b16 %v37
  %v70 = vpack.c.b16 %v55, %v54
  %v71 = vpack.c.b16 %v57, %v56
  %v72 = vpack.c.b16 %v59, %v58
  %v73 = vpack.c.b16 %v61, %v60
  %v74 = vpack.c.b16 %v63, %v62
  %v75 = vpack.c.b16 %v65, %v64
  %v76 = vpack.c.b16 %v67, %v66
  %v77 = vpack.c.b16 %v69, %v68
  %86 = vmatprep.subr.bf16.mxu0 0
  %87 = vmatpush1.bf16.msra.mxu0 %v70
  %88 = vmatprep.subr.bf16.mxu0 0
  %89 = vmatpush1.bf16.msra.mxu0 %v71
  %90 = vmatprep.subr.bf16.mxu0 0
  %91 = vmatpush1.bf16.msra.mxu0 %v72
  %92 = vmatprep.subr.bf16.mxu0 0
  %93 = vmatpush1.bf16.msra.mxu0 %v73
  %94 = vmatprep.subr.bf16.mxu0 0
  %95 = vmatpush1.bf16.msra.mxu0 %v74
  %96 = vmatprep.subr.bf16.mxu0 0
  %97 = vmatpush1.bf16.msra.mxu0 %v75
  %98 = vmatprep.subr.bf16.mxu0 0
  %99 = vmatpush1.bf16.msra.mxu0 %v76
  %100 = vmatprep.subr.bf16.mxu0 0
  %101 = vmatpush1.bf16.msra.mxu0 %v77
  %102 = vmatprep.subr.bf16.mxu0 0
  %103 = vmatpush1.bf16.msra.mxu0 0
  %104 = vmatprep.subr.bf16.mxu0 0
  %105 = vmatpush1.bf16.msra.mxu0 0
  %106 = vmatprep.subr.bf16.mxu0 0
  %107 = vmatpush1.bf16.msra.mxu0 0
  %108 = vmatprep.subr.bf16.mxu0 0
  %109 = vmatpush1.bf16.msra.mxu0 0
  %110 = vmatprep.subr.bf16.mxu0 0
  %111 = vmatpush1.bf16.msra.mxu0 0
  %112 = vmatprep.subr.bf16.mxu0 0
  %113 = vmatpush1.bf16.msra.mxu0 0
  %114 = vmatprep.subr.bf16.mxu0 0
  %115 = vmatpush1.bf16.msra.mxu0 0
  %116 = vmatprep.subr.bf16.mxu0 0
  %117 = vmatpush1.bf16.msra.mxu0 0
  %118 = vmatprep.mubr.bf16.mxu0 0
  %119 = vmatmul.mubr.bf16.gmra.mrb[0].mxu0 %v21
  %v120 = vpop.f32.mrb[0].mxu0
  %v121 = vadd.f32 0.0, %v120
  %v122 = vpop.f32.mrb[0].mxu0
  %v123 = vpop.f32.mrb[0].mxu0
  %v124 = vpop.f32.mrb[0].mxu0
  %125 = vdwg.mxu0
  %v126 = vadd.f32 %v20, %v121
  %127 = vst [vmem:[#allocation2] sm:$0xff] %v126
  // Predicated region
  $region18: #{sqldepth_forward.42} parent=0 // pred_check
    %p128 = pneg %p15
  $region19: #{sqldepth_forward.42} parent=0 // pred_check_branch
    %130 = sbr.rel (%p128) target = $region21
  $region20: #{sqldepth_forward.42} parent=0 // pred_region
    %v131 = vld [vmem:[#allocation2] sm:$0xff]
    %v132 = vld [vmem:[%s2] sm:$0x1]
    %v134 = vlaneseq
    %v135 = vshrl.u32 %v134, 7
    %v136 = vsub.s32 0, %v135
    %v137 = vrot.slane %v132, %v136
    %v139 = vadd.f32 %v131, %v137
    %140 = vst [vmem:[%s3] sm:$0xff] %v139
  $region21: #{sqldepth_forward.42} parent=0 // pred_fallthru
    _
  // Predicated region
  $region22: #{sqldepth_forward.42} parent=0 // pred_check
    _
  $region23: #{sqldepth_forward.42} parent=0 // pred_check_branch
    %142 = sbr.rel (0) target = $region25
  $region24: #{sqldepth_forward.42} parent=0 // pred_region
    _
  $region25: #{sqldepth_forward.42} parent=0 // pred_fallthru
    _
  // Predicated region
  $region26: #{sqldepth_forward.42} parent=0 // pred_check
    _
  $region27: #{sqldepth_forward.42} parent=0 // pred_check_branch
    %144 = sbr.rel (0) target = $region29
  $region28: #{sqldepth_forward.42} parent=0 // pred_region
    _
  $region29: #{sqldepth_forward.42} parent=0 // pred_fallthru
    _

// kernel: sqldepth_forward.45
$region0: #{sqldepth_forward.45}
  #allocation0 [shape = 'u32[]', space=smem, size = 0x4, offset = 0x4, fixed_abs, tag = 'smem constant byte address 0x4 - core index']
  #allocation1 [shape = 'u32[144,128]{1,0:T(1,128)}', space=vmem, size = 0x12000, scoped, tag = 'internal scratch']
  %s0 = inlined_call_operand.vmem [shape: f32[8,32], index: 0, kind: input, shape index: {}]
  %s1 = inlined_call_operand.vmem [shape: f32[8,32], index: 1, kind: input, shape index: {}]
  %s2 = inlined_call_operand.vmem [shape: f32[1,32], index: 2, kind: input, shape index: {}]
  %s3 = inlined_call_operand.vmem [shape: f32[1,32], index: 3, kind: input, shape index: {}]
  %s4 = inlined_call_operand.vmem [shape: f32[8,32], index: 4, kind: output, shape index: {}]
  %s5 = sld [smem:[#allocation0]]
  $region26: #{sqldepth_forward.45} parent=0
    _
  %s7 = ssub.s32 1, %s5
  %s8 = scalar_select 0, %s7, %s5
  // Predicated region
  $region2: #{sqldepth_forward.45} parent=0 // pred_check
    _
  $region3: #{sqldepth_forward.45} parent=0 // pred_check_branch
    %10 = sbr.rel (0) target = $region5
  $region4: #{sqldepth_forward.45} parent=0 // pred_region
    _
  $region5: #{sqldepth_forward.45} parent=0 // pred_fallthru
    _
  // Predicated region
  $region6: #{sqldepth_forward.45} parent=0 // pred_check
    _
  $region7: #{sqldepth_forward.45} parent=0 // pred_check_branch
    %12 = sbr.rel (0) target = $region9
  $region8: #{sqldepth_forward.45} parent=0 // pred_region
    _
  $region9: #{sqldepth_forward.45} parent=0 // pred_fallthru
    _
  // Predicated region
  $region10: #{sqldepth_forward.45} parent=0 // pred_check
    _
  $region11: #{sqldepth_forward.45} parent=0 // pred_check_branch
    %14 = sbr.rel (0) target = $region13
  $region12: #{sqldepth_forward.45} parent=0 // pred_region
    _
  $region13: #{sqldepth_forward.45} parent=0 // pred_fallthru
    _
  // Predicated region
  $region14: #{sqldepth_forward.45} parent=0 // pred_check
    _
  $region15: #{sqldepth_forward.45} parent=0 // pred_check_branch
    %16 = sbr.rel (0) target = $region17
  $region16: #{sqldepth_forward.45} parent=0 // pred_region
    _
  $region17: #{sqldepth_forward.45} parent=0 // pred_fallthru
    _
  %v17 = vld [vmem:[%s0] sm:$0xff]
  %v18 = vld [vmem:[%s1] sm:$0xff]
  %v19 = vadd.f32 %v17, %v18
  %vm20 = vcmask 261120
  %v21 = vsel %vm20, %v19, 0.0
  %22 = vadd.xlane.f32.xlu0 %v21
  %v23 = vpop.xlane.xlu0 %22
  %v24 = vrcp.pop 32.0
  %v25 = vmul.f32 %v23, %v24
  %v26 = vsub.f32 %v19, %v25
  %v27 = vmul.f32 %v26, %v26
  %v28 = vsel %vm20, %v27, 0.0
  %29 = vadd.xlane.f32.xlu0 %v28
  %v30 = vpop.xlane.xlu0 %29
  %v31 = vmul.f32 %v30, %v24
  %v32 = vadd.f32 %v31, 1e-05
  %v33 = vrsqrt.pop %v32
  %v34 = vmul.f32 %v26, %v33
  %v35 = vld [vmem:[%s2] sm:$0x1]
  %v37 = vlaneseq
  %v38 = vshrl.u32 %v37, 7
  %v39 = vsub.s32 0, %v38
  %v40 = vrot.slane %v35, %v39
  %v42 = vmul.f32 %v34, %v40
  %v43 = vld [vmem:[%s3] sm:$0x1]
  %v45 = vlaneseq
  %v46 = vshrl.u32 %v45, 7
  %v47 = vsub.s32 0, %v46
  %v48 = vrot.slane %v43, %v47
  %v50 = vadd.f32 %v42, %v48
  %51 = vst.msk [vmem:[%s4] sm:$0xff] %vm20, %v50
  // Predicated region
  $region18: #{sqldepth_forward.45} parent=0 // pred_check
    _
  $region19: #{sqldepth_forward.45} parent=0 // pred_check_branch
    %53 = sbr.rel (0) target = $region21
  $region20: #{sqldepth_forward.45} parent=0 // pred_region
    _
  $region21: #{sqldepth_forward.45} parent=0 // pred_fallthru
    _
  // Predicated region
  $region22: #{sqldepth_forward.45} parent=0 // pred_check
    _
  $region23: #{sqldepth_forward.45} parent=0 // pred_check_branch
    %55 = sbr.rel (0) target = $region25
  $region24: #{sqldepth_forward.45} parent=0 // pred_region
    _
  $region25: #{sqldepth_forward.45} parent=0 // pred_fallthru
    _

// kernel: sqldepth_forward.43
$region0: #{sqldepth_forward.43}
  #allocation0 [shape = 'u32[]', space=smem, size = 0x4, offset = 0x4, fixed_abs, tag = 'smem constant byte address 0x4 - core index']
  #allocation1 [shape = 'u32[144,128]{1,0:T(1,128)}', space=vmem, size = 0x12000, scoped, tag = 'internal scratch']
  %s0 = inlined_call_operand.vmem [shape: bf16[2,4,4,8], index: 0, kind: input, shape index: {}]
  %s1 = inlined_call_operand.vmem [shape: bf16[2,4,4,8], index: 1, kind: input, shape index: {}]
  %s2 = inlined_call_operand.vmem [shape: bf16[2,4,4,8], index: 2, kind: input, shape index: {}]
  %s3 = inlined_call_operand.vmem [shape: f32[2,4,4,8], index: 3, kind: output, shape index: {}]
  %s4 = sld [smem:[#allocation0]]
  $region45: #{sqldepth_forward.43} parent=0
    _
  %s6 = ssub.s32 1, %s4
  %s7 = scalar_select 0, %s6, %s4
  loop: start=0, step=1, limit=4
  $region2: #{sqldepth_forward.43} parent=0 // loop_pre_header
    _
  $region3: #{sqldepth_forward.43} parent=0 // loop_header
    %s9 = sphi 0, %s13
    %p10 = scmp.ge.s32.totalorder %s9, 4
    %s19 = sphi 0, %s21
    %s22 = sphi 0, %s19
    %s23 = sphi 0, %s22
    %s39 = sphi 0, %s23
    %s45 = sphi 0, %s47
    %s48 = sphi 0, %s45
    %s49 = sphi 0, %s48
    %s65 = sphi 0, %s49
    %s71 = sphi 0, %s73
    %s74 = sphi 0, %s71
    %s75 = sphi 0, %s74
    %s91 = sphi 0, %s75
    %s97 = sphi 0, %s99
    %s100 = sphi 0, %s97
    %s101 = sphi 0, %s100
    %s117 = sphi 0, %s101
  $region4: #{sqldepth_forward.43} parent=0 // loop_header_branch
    %12 = sbr.rel (%p10) target = $region8
  $region5: #{sqldepth_forward.43} parent=0 // loop_body
    %s14 = ssub.s32 %s9, 1
    %s15 = ssub.s32 %s9, 2
    %s16 = sadd.s32 %s9, 1
    %s17 = ssub.s32 %s9, %s16
    %p18 = scmp.eq.s32.totalorder %s17, 0
    %s20 = sadd.s32 %s19, 1
    %s21 = scalar_select %p18, %s19, %s20
    %p24 = pneg %p18
    %p25 = scmp.eq.s32.totalorder %s9, 1
    %p26 = por %p24, %p25
    %p27 = scmp.ne.s32.totalorder %s19, %s22
    %p28 = scmp.eq.s32.totalorder %s9, 0
    %p29 = por %p27, %p28
    %p30 = scmp.ne.s32.totalorder %s19, %s22
    %p31 = scmp.eq.s32.totalorder %s14, 1
    %p32 = por %p30, %p31
    %p33 = scmp.ne.s32.totalorder %s22, %s23
    %p34 = scmp.eq.s32.totalorder %s14, 0
    %p35 = por %p33, %p34
    %p36 = scmp.ne.s32.totalorder %s22, %s23
    %p37 = scmp.eq.s32.totalorder %s15, 1
    %p38 = por %p36, %p37
    %p40 = scmp.ne.s32.totalorder %s23, %s39
    %p41 = scmp.eq.s32.totalorder %s15, 0
    %p42 = por %p40, %p41
    %s43 = ssub.s32 %s9, %s16
    %p44 = scmp.eq.s32.totalorder %s43, 0
    %s46 = sadd.s32 %s45, 1
    %s47 = scalar_select %p44, %s45, %s46
    %p50 = pneg %p44
    %p51 = scmp.eq.s32.totalorder %s9, 1
    %p52 = por %p50, %p51
    %p53 = scmp.ne.s32.totalorder %s45, %s48
    %p54 = scmp.eq.s32.totalorder %s9, 0
    %p55 = por %p53, %p54
    %p56 = scmp.ne.s32.totalorder %s45, %s48
    %p57 = scmp.eq.s32.totalorder %s14, 1
    %p58 = por %p56, %p57
    %p59 = scmp.ne.s32.totalorder %s48, %s49
    %p60 = scmp.eq.s32.totalorder %s14, 0
    %p61 = por %p59, %p60
    %p62 = scmp.ne.s32.totalorder %s48, %s49
    %p63 = scmp.eq.s32.totalorder %s15, 1
    %p64 = por %p62, %p63
    %p66 = scmp.ne.s32.totalorder %s49, %s65
    %p67 = scmp.eq.s32.totalorder %s15, 0
    %p68 = por %p66, %p67
    %s69 = ssub.s32 %s9, %s16
    %p70 = scmp.eq.s32.totalorder %s69, 0
    %s72 = sadd.s32 %s71, 1
    %s73 = scalar_select %p70, %s71, %s72
    %p76 = pneg %p70
    %p77 = scmp.eq.s32.totalorder %s9, 1
    %p78 = por %p76, %p77
    %p79 = scmp.ne.s32.totalorder %s71, %s74
    %p80 = scmp.eq.s32.totalorder %s9, 0
    %p81 = por %p79, %p80
    %p82 = scmp.ne.s32.totalorder %s71, %s74
    %p83 = scmp.eq.s32.totalorder %s14, 1
    %p84 = por %p82, %p83
    %p85 = scmp.ne.s32.totalorder %s74, %s75
    %p86 = scmp.eq.s32.totalorder %s14, 0
    %p87 = por %p85, %p86
    %p88 = scmp.ne.s32.totalorder %s74, %s75
    %p89 = scmp.eq.s32.totalorder %s15, 1
    %p90 = por %p88, %p89
    %p92 = scmp.ne.s32.totalorder %s75, %s91
    %p93 = scmp.eq.s32.totalorder %s15, 0
    %p94 = por %p92, %p93
    %s95 = ssub.s32 %s9, %s16
    %p96 = scmp.eq.s32.totalorder %s95, 0
    %s98 = sadd.s32 %s97, 1
    %s99 = scalar_select %p96, %s97, %s98
    %p102 = pneg %p96
    %p103 = scmp.eq.s32.totalorder %s9, 1
    %p104 = por %p102, %p103
    %p105 = scmp.ne.s32.totalorder %s97, %s100
    %p106 = scmp.eq.s32.totalorder %s9, 0
    %p107 = por %p105, %p106
    %p108 = scmp.ne.s32.totalorder %s97, %s100
    %p109 = scmp.eq.s32.totalorder %s14, 1
    %p110 = por %p108, %p109
    %p111 = scmp.ne.s32.totalorder %s100, %s101
    %p112 = scmp.eq.s32.totalorder %s14, 0
    %p113 = por %p111, %p112
    %p114 = scmp.ne.s32.totalorder %s100, %s101
    %p115 = scmp.eq.s32.totalorder %s15, 1
    %p116 = por %p114, %p115
    %p118 = scmp.ne.s32.totalorder %s101, %s117
    %p119 = scmp.eq.s32.totalorder %s15, 0
    %p120 = por %p118, %p119
    %p121 = scmp.le.s32.totalorder 1, %s9
    %p122 = scmp.lt.s32.totalorder %s9, 3
    %p123 = pnand %p121, %p122
    %p124 = pneg %p123
    // Predicated region
    $region9: #{sqldepth_forward.43} parent=5 // pred_check
      _
    $region10: #{sqldepth_forward.43} parent=5 // pred_check_branch
      %126 = sbr.rel (%p123) target = $region12
    $region11: #{sqldepth_forward.43} parent=5 // pred_region
      %s127 = ssub.s32 %s9, 1
    $region12: #{sqldepth_forward.43} parent=5 // pred_fallthru
      _
    %p128 = scmp.lt.s32.totalorder %s9, 2
    // Predicated region
    $region13: #{sqldepth_forward.43} parent=5 // pred_check
      %p129 = pneg %p128
    $region14: #{sqldepth_forward.43} parent=5 // pred_check_branch
      %131 = sbr.rel (%p129) target = $region16
    $region15: #{sqldepth_forward.43} parent=5 // pred_region
      // Predicated region
      $region17: #{sqldepth_forward.43} parent=15 // pred_check
        %p132 = pneg %p29
      $region18: #{sqldepth_forward.43} parent=15 // pred_check_branch
        %134 = sbr.rel (%p132) target = $region20
      $region19: #{sqldepth_forward.43} parent=15 // pred_region
        %p135 = scmp.lt.s32.totalorder %s9, 1
        %s136 = scalar_select %p135, %s9, 1
        %s137 = smul.addr %s136, 4
        %s138 = smul.addr %s137, 2
        %s139 = scalar_lea.vmem %s0, %s138
      $region20: #{sqldepth_forward.43} parent=15 // pred_fallthru
        _
      // Predicated region
      $region21: #{sqldepth_forward.43} parent=15 // pred_check
        %p140 = pneg %p55
      $region22: #{sqldepth_forward.43} parent=15 // pred_check_branch
        %142 = sbr.rel (%p140) target = $region24
      $region23: #{sqldepth_forward.43} parent=15 // pred_region
        %p143 = scmp.lt.s32.totalorder %s9, 1
        %s144 = scalar_select %p143, %s9, 1
        %s145 = smul.addr %s144, 4
        %s146 = smul.addr %s145, 2
        %s147 = scalar_lea.vmem %s1, %s146
      $region24: #{sqldepth_forward.43} parent=15 // pred_fallthru
        _
      // Predicated region
      $region25: #{sqldepth_forward.43} parent=15 // pred_check
        %p148 = pneg %p81
      $region26: #{sqldepth_forward.43} parent=15 // pred_check_branch
        %150 = sbr.rel (%p148) target = $region28
      $region27: #{sqldepth_forward.43} parent=15 // pred_region
        %p151 = scmp.lt.s32.totalorder %s9, 1
        %s152 = scalar_select %p151, %s9, 1
        %s153 = smul.addr %s152, 4
        %s154 = smul.addr %s153, 2
        %s155 = scalar_lea.vmem %s2, %s154
      $region28: #{sqldepth_forward.43} parent=15 // pred_fallthru
        _
    $region16: #{sqldepth_forward.43} parent=5 // pred_fallthru
      _
    %p156 = scmp.le.s32.totalorder 1, %s9
    %p157 = scmp.lt.s32.totalorder %s9, 3
    %p158 = pnand %p156, %p157
    %p159 = pneg %p158
    // Predicated region
    $region29: #{sqldepth_forward.43} parent=5 // pred_check
      _
    $region30: #{sqldepth_forward.43} parent=5 // pred_check_branch
      %161 = sbr.rel (%p158) target = $region32
    $region31: #{sqldepth_forward.43} parent=5 // pred_region
      %s162 = ssub.s32 %s9, 1
      %p163 = scmp.lt.s32.totalorder %s14, 1
      %s164 = scalar_select %p163, %s14, 1
      %s165 = smul.addr %s164, 4
      %s166 = smul.addr %s165, 2
      %s167 = scalar_lea.vmem %s0, %s166
      %p168 = pneg %p35
      %p169 = pneg %p32
      %p170 = scmp.lt.s32.totalorder %s14, 1
      %s171 = scalar_select %p170, %s14, 1
      %s172 = smul.addr %s171, 4
      %s173 = smul.addr %s172, 2
      %s174 = scalar_lea.vmem %s1, %s173
      %p175 = pneg %p61
      %p176 = pneg %p58
      %p177 = scmp.lt.s32.totalorder %s14, 1
      %s178 = scalar_select %p177, %s14, 1
      %s179 = smul.addr %s178, 4
      %s180 = smul.addr %s179, 2
      %s181 = scalar_lea.vmem %s2, %s180
      %p182 = pneg %p87
      %p183 = pneg %p84
      %p184 = pneg %p113
      %p185 = pneg %p110
      %p186 = scmp.lt.s32.totalorder %s14, 1
      %s187 = scalar_select %p186, %s14, 1
      %s188 = smul.addr %s187, 4
      %s189 = smul.addr %s188, 4
      %s190 = scalar_lea.vmem %s3, %s189
      %p191 = scmp.lt.s32.totalorder %s14, 1
      %s192 = scalar_select %p191, %s14, 1
      %s193 = smul.addr %s192, 4
      %s194 = smul.addr %s193, 2
      %s195 = scalar_lea.vmem %s0, %s194
      %p196 = scmp.lt.s32.totalorder %s14, 1
      %s197 = scalar_select %p196, %s14, 1
      %s198 = smul.addr %s197, 4
      %s199 = smul.addr %s198, 2
      %s200 = scalar_lea.vmem %s1, %s199
      %p201 = scmp.lt.s32.totalorder %s14, 1
      %s202 = scalar_select %p201, %s14, 1
      %s203 = smul.addr %s202, 4
      %s204 = smul.addr %s203, 2
      %s205 = scalar_lea.vmem %s2, %s204
      %p206 = scmp.lt.s32.totalorder %s14, 1
      %s207 = scalar_select %p206, %s14, 1
      %s208 = smul.addr %s207, 4
      %s209 = smul.addr %s208, 4
      %s210 = scalar_lea.vmem %s3, %s209
      %v212 = vld [vmem:[%s195] sm:$0x3]
      %v213 = vld [vmem:[%s195 + $0x2] sm:$0x3]
      %v214 = vld [vmem:[%s195 + $0x4] sm:$0x3]
      %v215 = vld [vmem:[%s195 + $0x6] sm:$0x3]
      %v216 = vld [vmem:[%s200] sm:$0x3]
      %v217 = vld [vmem:[%s200 + $0x2] sm:$0x3]
      %v218 = vld [vmem:[%s200 + $0x4] sm:$0x3]
      %v219 = vld [vmem:[%s200 + $0x6] sm:$0x3]
      %v220 = vld [vmem:[%s205] sm:$0x3]
      %v221 = vld [vmem:[%s205 + $0x2] sm:$0x3]
      %v222 = vld [vmem:[%s205 + $0x4] sm:$0x3]
      %v223 = vld [vmem:[%s205 + $0x6] sm:$0x3]
      %vm224 = vcmask 64512
      %v226 = vsel %vm224, %v212, 0
      %v229 = vsel %vm224, %v216, 0
      %231 = vmatprep.subr.bf16.mxu0 0
      %232 = vmatpush1.bf16.xpose.msra.mxu0 %v229
      %233 = vmatprep.subr.bf16.mxu0 0
      %234 = vmatpush1.bf16.xpose.msra.mxu0 0
      %235 = vmatprep.subr.bf16.mxu0 0
      %236 = vmatpush1.bf16.xpose.msra.mxu0 0
      %237 = vmatprep.subr.bf16.mxu0 0
      %238 = vmatpush1.bf16.xpose.msra.mxu0 0
      %239 = vmatprep.subr.bf16.mxu0 0
      %240 = vmatpush1.bf16.xpose.msra.mxu0 0
      %241 = vmatprep.subr.bf16.mxu0 0
      %242 = vmatpush1.bf16.xpose.msra.mxu0 0
      %243 = vmatprep.subr.bf16.mxu0 0
      %244 = vmatpush1.bf16.xpose.msra.mxu0 0
      %245 = vmatprep.subr.bf16.mxu0 0
      %246 = vmatpush1.bf16.xpose.msra.mxu0 0
      %247 = vmatprep.subr.bf16.mxu0 0
      %248 = vmatpush1.bf16.xpose.msra.mxu0 0
      %249 = vmatprep.subr.bf16.mxu0 0
      %250 = vmatpush1.bf16.xpose.msra.mxu0 0
      %251 = vmatprep.subr.bf16.mxu0 0
      %252 = vmatpush1.bf16.xpose.msra.mxu0 0
      %253 = vmatprep.subr.bf16.mxu0 0
      %254 = vmatpush1.bf16.xpose.msra.mxu0 0
      %255 = vmatprep.subr.bf16.mxu0 0
      %256 = vmatpush1.bf16.xpose.msra.mxu0 0
      %257 = vmatprep.subr.bf16.mxu0 0
      %258 = vmatpush1.bf16.xpose.msra.mxu0 0
      %259 = vmatprep.subr.bf16.mxu0 0
      %260 = vmatpush1.bf16.xpose.msra.mxu0 0
      %261 = vmatprep.subr.bf16.mxu0 0
      %262 = vmatpush1.bf16.xpose.msra.mxu0 0
      %263 = vmatprep.mubr.bf16.mxu0 0
      %264 = vmatmul.mubr.bf16.gmra.mrb[0].mxu0 %v226
      %v265 = vpop.f32.mrb[0].mxu0
      %v266 = vadd.f32 0.0, %v265
      %v267 = vpop.f32.mrb[0].mxu0
      %v268 = vpop.f32.mrb[0].mxu0
      %v269 = vpop.f32.mrb[0].mxu0
      %270 = vdwg.mxu0
      %v272 = vsel %vm224, %v213, 0
      %v275 = vsel %vm224, %v217, 0
      %277 = vmatprep.subr.bf16.mxu0 0
      %278 = vmatpush1.bf16.xpose.msra.mxu0 %v275
      %279 = vmatprep.subr.bf16.mxu0 0
      %280 = vmatpush1.bf16.xpose.msra.mxu0 0
      %281 = vmatprep.subr.bf16.mxu0 0
      %282 = vmatpush1.bf16.xpose.msra.mxu0 0
      %283 = vmatprep.subr.bf16.mxu0 0
      %284 = vmatpush1.bf16.xpose.msra.mxu0 0
      %285 = vmatprep.subr.bf16.mxu0 0
      %286 = vmatpush1.bf16.xpose.msra.mxu0 0
      %287 = vmatprep.subr.bf16.mxu0 0
      %288 = vmatpush1.bf16.xpose.msra.mxu0 0
      %289 = vmatprep.subr.bf16.mxu0 0
      %290 = vmatpush1.bf16.xpose.msra.mxu0 0
      %291 = vmatprep.subr.bf16.mxu0 0
      %292 = vmatpush1.bf16.xpose.msra.mxu0 0
      %293 = vmatprep.subr.bf16.mxu0 0
      %294 = vmatpush1.bf16.xpose.msra.mxu0 0
      %295 = vmatprep.subr.bf16.mxu0 0
      %296 = vmatpush1.bf16.xpose.msra.mxu0 0
      %297 = vmatprep.subr.bf16.mxu0 0
      %298 = vmatpush1.bf16.xpose.msra.mxu0 0
      %299 = vmatprep.subr.bf16.mxu0 0
      %300 = vmatpush1.bf16.xpose.msra.mxu0 0
      %301 = vmatprep.subr.bf16.mxu0 0
      %302 = vmatpush1.bf16.xpose.msra.mxu0 0
      %303 = vmatprep.subr.bf16.mxu0 0
      %304 = vmatpush1.bf16.xpose.msra.mxu0 0
      %305 = vmatprep.subr.bf16.mxu0 0
      %306 = vmatpush1.bf16.xpose.msra.mxu0 0
      %307 = vmatprep.subr.bf16.mxu0 0
      %308 = vmatpush1.bf16.xpose.msra.mxu0 0
      %309 = vmatprep.mubr.bf16.mxu0 0
      %310 = vmatmul.mubr.bf16.gmra.mrb[0].mxu0 %v272
      %v311 = vpop.f32.mrb[0].mxu0
      %v312 = vadd.f32 0.0, %v311
      %v313 = vpop.f32.mrb[0].mxu0
      %v314 = vpop.f32.mrb[0].mxu0
      %v315 = vpop.f32.mrb[0].mxu0
      %316 = vdwg.mxu0
      %v318 = vsel %vm224, %v214, 0
      %v321 = vsel %vm224, %v218, 0
      %323 = vmatprep.subr.bf16.mxu0 0
      %324 = vmatpush1.bf16.xpose.msra.mxu0 %v321
      %325 = vmatprep.subr.bf16.mxu0 0
      %326 = vmatpush1.bf16.xpose.msra.mxu0 0
      %327 = vmatprep.subr.bf16.mxu0 0
      %328 = vmatpush1.bf16.xpose.msra.mxu0 0
      %329 = vmatprep.subr.bf16.mxu0 0
      %330 = vmatpush1.bf16.xpose.msra.mxu0 0
      %331 = vmatprep.subr.bf16.mxu0 0
      %332 = vmatpush1.bf16.xpose.msra.mxu0 0
      %333 = vmatprep.subr.bf16.mxu0 0
      %334 = vmatpush1.bf16.xpose.msra.mxu0 0
      %335 = vmatprep.subr.bf16.mxu0 0
      %336 = vmatpush1.bf16.xpose.msra.mxu0 0
      %337 = vmatprep.subr.bf16.mxu0 0
      %338 = vmatpush1.bf16.xpose.msra.mxu0 0
      %339 = vmatprep.subr.bf16.mxu0 0
      %340 = vmatpush1.bf16.xpose.msra.mxu0 0
      %341 = vmatprep.subr.bf16.mxu0 0
      %342 = vmatpush1.bf16.xpose.msra.mxu0 0
      %343 = vmatprep.subr.bf16.mxu0 0
      %344 = vmatpush1.bf16.xpose.msra.mxu0 0
      %345 = vmatprep.subr.bf16.mxu0 0
      %346 = vmatpush1.bf16.xpose.msra.mxu0 0
      %347 = vmatprep.subr.bf16.mxu0 0
      %348 = vmatpush1.bf16.xpose.msra.mxu0 0
      %349 = vmatprep.subr.bf16.mxu0 0
      %350 = vmatpush1.bf16.xpose.msra.mxu0 0
      %351 = vmatprep.subr.bf16.mxu0 0
      %352 = vmatpush1.bf16.xpose.msra.mxu0 0
      %353 = vmatprep.subr.bf16.mxu0 0
      %354 = vmatpush1.bf16.xpose.msra.mxu0 0
      %355 = vmatprep.mubr.bf16.mxu0 0
      %356 = vmatmul.mubr.bf16.gmra.mrb[0].mxu0 %v318
      %v357 = vpop.f32.mrb[0].mxu0
      %v358 = vadd.f32 0.0, %v357
      %v359 = vpop.f32.mrb[0].mxu0
      %v360 = vpop.f32.mrb[0].mxu0
      %v361 = vpop.f32.mrb[0].mxu0
      %362 = vdwg.mxu0
      %v364 = vsel %vm224, %v215, 0
      %v367 = vsel %vm224, %v219, 0
      %369 = vmatprep.subr.bf16.mxu0 0
      %370 = vmatpush1.bf16.xpose.msra.mxu0 %v367
      %371 = vmatprep.subr.bf16.mxu0 0
      %372 = vmatpush1.bf16.xpose.msra.mxu0 0
      %373 = vmatprep.subr.bf16.mxu0 0
      %374 = vmatpush1.bf16.xpose.msra.mxu0 0
      %375 = vmatprep.subr.bf16.mxu0 0
      %376 = vmatpush1.bf16.xpose.msra.mxu0 0
      %377 = vmatprep.subr.bf16.mxu0 0
      %378 = vmatpush1.bf16.xpose.msra.mxu0 0
      %379 = vmatprep.subr.bf16.mxu0 0
      %380 = vmatpush1.bf16.xpose.msra.mxu0 0
      %381 = vmatprep.subr.bf16.mxu0 0
      %382 = vmatpush1.bf16.xpose.msra.mxu0 0
      %383 = vmatprep.subr.bf16.mxu0 0
      %384 = vmatpush1.bf16.xpose.msra.mxu0 0
      %385 = vmatprep.subr.bf16.mxu0 0
      %386 = vmatpush1.bf16.xpose.msra.mxu0 0
      %387 = vmatprep.subr.bf16.mxu0 0
      %388 = vmatpush1.bf16.xpose.msra.mxu0 0
      %389 = vmatprep.subr.bf16.mxu0 0
      %390 = vmatpush1.bf16.xpose.msra.mxu0 0
      %391 = vmatprep.subr.bf16.mxu0 0
      %392 = vmatpush1.bf16.xpose.msra.mxu0 0
      %393 = vmatprep.subr.bf16.mxu0 0
      %394 = vmatpush1.bf16.xpose.msra.mxu0 0
      %395 = vmatprep.subr.bf16.mxu0 0
      %396 = vmatpush1.bf16.xpose.msra.mxu0 0
      %397 = vmatprep.subr.bf16.mxu0 0
      %398 = vmatpush1.bf16.xpose.msra.mxu0 0
      %399 = vmatprep.subr.bf16.mxu0 0
      %400 = vmatpush1.bf16.xpose.msra.mxu0 0
      %401 = vmatprep.mubr.bf16.mxu0 0
      %402 = vmatmul.mubr.bf16.gmra.mrb[0].mxu0 %v364
      %v403 = vpop.f32.mrb[0].mxu0
      %v404 = vadd.f32 0.0, %v403
      %v405 = vpop.f32.mrb[0].mxu0
      %v406 = vpop.f32.mrb[0].mxu0
      %v407 = vpop.f32.mrb[0].mxu0
      %408 = vdwg.mxu0
      %v409 = vmul.f32 %v266, 0.35355338
      %v410 = vmul.f32 %v312, 0.35355338
      %v411 = vmul.f32 %v358, 0.35355338
      %v412 = vmul.f32 %v404, 0.35355338
      %vm413 = vcmask 27648
      %v414 = vsel %vm413, %v409, -inf
      %415 = vmax.xlane.f32.xlu0 %v414
      %v416 = vpop.xlane.xlu0 %415
      %v417 = vsel %vm413, %v410, -inf
      %418 = vmax.xlane.f32.xlu0 %v417
      %v419 = vpop.xlane.xlu0 %418
      %v420 = vsel %vm413, %v411, -inf
      %421 = vmax.xlane.f32.xlu0 %v420
      %v422 = vpop.xlane.xlu0 %421
      %v423 = vsel %vm413, %v412, -inf
      %424 = vmax.xlane.f32.xlu0 %v423
      %v425 = vpop.xlane.xlu0 %424
      %v426 = vsub.f32 %v409, %v416
      %v427 = vsub.f32 %v410, %v419
      %v428 = vsub.f32 %v411, %v422
      %v429 = vsub.f32 %v412, %v425
      %v430 = vmul.f32 %v426, 1.442695
      %v431 = vpow.pop %v430
      %v432 = vmul.f32 %v427, 1.442695
      %v433 = vpow.pop %v432
      %v434 = vmul.f32 %v428, 1.442695
      %v435 = vpow.pop %v434
      %v436 = vmul.f32 %v429, 1.442695
      %v437 = vpow.pop %v436
      %v438 = vsel %vm413, %v431, 0.0
      %439 = vadd.xlane.f32.xlu0 %v438
      %v440 = vpop.xlane.xlu0 %439
      %v441 = vsel %vm413, %v433, 0.0
      %442 = vadd.xlane.f32.xlu0 %v441
      %v443 = vpop.xlane.xlu0 %442
      %v444 = vsel %vm413, %v435, 0.0
      %445 = vadd.xlane.f32.xlu0 %v444
      %v446 = vpop.xlane.xlu0 %445
      %v447 = vsel %vm413, %v437, 0.0
      %448 = vadd.xlane.f32.xlu0 %v447
      %v449 = vpop.xlane.xlu0 %448
      %v450 = vrcp.pop %v440
      %v451 = vmul.f32 %v431, %v450
      %v452 = vrcp.pop %v443
      %v453 = vmul.f32 %v433, %v452
      %v454 = vrcp.pop %v446
      %v455 = vmul.f32 %v435, %v454
      %v456 = vrcp.pop %v449
      %v457 = vmul.f32 %v437, %v456
      %v458 = vpack.c.bf16 %v451, %v451
      %v459 = vpack.c.bf16 %v453, %v453
      %v460 = vpack.c.bf16 %v455, %v455
      %v461 = vpack.c.bf16 %v457, %v457
      %vm462 = vcmask 31744
      %v464 = vsel %vm462, %v458, 0
      %vm466 = vcmask 1041408
      %v468 = vsel %vm466, %v220, 0
      %470 = vmatprep.subr.bf16.mxu0 0
      %471 = vmatpush1.bf16.msra.mxu0 %v468
      %472 = vmatprep.subr.bf16.mxu0 0
      %473 = vmatpush1.bf16.msra.mxu0 0
      %474 = vmatprep.subr.bf16.mxu0 0
      %475 = vmatpush1.bf16.msra.mxu0 0
      %476 = vmatprep.subr.bf16.mxu0 0
      %477 = vmatpush1.bf16.msra.mxu0 0
      %478 = vmatprep.subr.bf16.mxu0 0
      %479 = vmatpush1.bf16.msra.mxu0 0
      %480 = vmatprep.subr.bf16.mxu0 0
      %481 = vmatpush1.bf16.msra.mxu0 0
      %482 = vmatprep.subr.bf16.mxu0 0
      %483 = vmatpush1.bf16.msra.mxu0 0
      %484 = vmatprep.subr.bf16.mxu0 0
      %485 = vmatpush1.bf16.msra.mxu0 0
      %486 = vmatprep.subr.bf16.mxu0 0
      %487 = vmatpush1.bf16.msra.mxu0 0
      %488 = vmatprep.subr.bf16.mxu0 0
      %489 = vmatpush1.bf16.msra.mxu0 0
      %490 = vmatprep.subr.bf16.mxu0 0
      %491 = vmatpush1.bf16.msra.mxu0 0
      %492 = vmatprep.subr.bf16.mxu0 0
      %493 = vmatpush1.bf16.msra.mxu0 0
      %494 = vmatprep.subr.bf16.mxu0 0
      %495 = vmatpush1.bf16.msra.mxu0 0
      %496 = vmatprep.subr.bf16.mxu0 0
      %497 = vmatpush1.bf16.msra.mxu0 0
      %498 = vmatprep.subr.bf16.mxu0 0
      %499 = vmatpush1.bf16.msra.mxu0 0
      %500 = vmatprep.subr.bf16.mxu0 0
      %501 = vmatpush1.bf16.msra.mxu0 0
      %502 = vmatprep.mubr.bf16.mxu0 0
      %503 = vmatmul.mubr.bf16.gmra.mrb[0].mxu0 %v464
      %v504 = vpop.f32.mrb[0].mxu0
      %v505 = vadd.f32 0.0, %v504
      %v506 = vpop.f32.mrb[0].mxu0
      %v507 = vpop.f32.mrb[0].mxu0
      %v508 = vpop.f32.mrb[0].mxu0
      %509 = vdwg.mxu0
      %v511 = vsel %vm462, %v459, 0
      %v514 = vsel %vm466, %v221, 0
      %516 = vmatprep.subr.bf16.mxu0 0
      %517 = vmatpush1.bf16.msra.mxu0 %v514
      %518 = vmatprep.subr.bf16.mxu0 0
      %519 = vmatpush1.bf16.msra.mxu0 0
      %520 = vmatprep.subr.bf16.mxu0 0
      %521 = vmatpush1.bf16.msra.mxu0 0
      %522 = vmatprep.subr.bf16.mxu0 0
      %523 = vmatpush1.bf16.msra.mxu0 0
      %524 = vmatprep.subr.bf16.mxu0 0
      %525 = vmatpush1.bf16.msra.mxu0 0
      %526 = vmatprep.subr.bf16.mxu0 0
      %527 = vmatpush1.bf16.msra.mxu0 0
      %528 = vmatprep.subr.bf16.mxu0 0
      %529 = vmatpush1.bf16.msra.mxu0 0
      %530 = vmatprep.subr.bf16.mxu0 0
      %531 = vmatpush1.bf16.msra.mxu0 0
      %532 = vmatprep.subr.bf16.mxu0 0
      %533 = vmatpush1.bf16.msra.mxu0 0
      %534 = vmatprep.subr.bf16.mxu0 0
      %535 = vmatpush1.bf16.msra.mxu0 0
      %536 = vmatprep.subr.bf16.mxu0 0
      %537 = vmatpush1.bf16.msra.mxu0 0
      %538 = vmatprep.subr.bf16.mxu0 0
      %539 = vmatpush1.bf16.msra.mxu0 0
      %540 = vmatprep.subr.bf16.mxu0 0
      %541 = vmatpush1.bf16.msra.mxu0 0
      %542 = vmatprep.subr.bf16.mxu0 0
      %543 = vmatpush1.bf16.msra.mxu0 0
      %544 = vmatprep.subr.bf16.mxu0 0
      %545 = vmatpush1.bf16.msra.mxu0 0
      %546 = vmatprep.subr.bf16.mxu0 0
      %547 = vmatpush1.bf16.msra.mxu0 0
      %548 = vmatprep.mubr.bf16.mxu0 0
      %549 = vmatmul.mubr.bf16.gmra.mrb[0].mxu0 %v511
      %v550 = vpop.f32.mrb[0].mxu0
      %v551 = vadd.f32 0.0, %v550
      %v552 = vpop.f32.mrb[0].mxu0
      %v553 = vpop.f32.mrb[0].mxu0
      %v554 = vpop.f32.mrb[0].mxu0
      %555 = vdwg.mxu0
      %v557 = vsel %vm462, %v460, 0
      %v560 = vsel %vm466, %v222, 0
      %562 = vmatprep.subr.bf16.mxu0 0
      %563 = vmatpush1.bf16.msra.mxu0 %v560
      %564 = vmatprep.subr.bf16.mxu0 0
      %565 = vmatpush1.bf16.msra.mxu0 0
      %566 = vmatprep.subr.bf16.mxu0 0
      %567 = vmatpush1.bf16.msra.mxu0 0
      %568 = vmatprep.subr.bf16.mxu0 0
      %569 = vmatpush1.bf16.msra.mxu0 0
      %570 = vmatprep.subr.bf16.mxu0 0
      %571 = vmatpush1.bf16.msra.mxu0 0
      %572 = vmatprep.subr.bf16.mxu0 0
      %573 = vmatpush1.bf16.msra.mxu0 0
      %574 = vmatprep.subr.bf16.mxu0 0
      %575 = vmatpush1.bf16.msra.mxu0 0
      %576 = vmatprep.subr.bf16.mxu0 0
      %577 = vmatpush1.bf16.msra.mxu0 0
      %578 = vmatprep.subr.bf16.mxu0 0
      %579 = vmatpush1.bf16.msra.mxu0 0
      %580 = vmatprep.subr.bf16.mxu0 0
      %581 = vmatpush1.bf16.msra.mxu0 0
      %582 = vmatprep.subr.bf16.mxu0 0
      %583 = vmatpush1.bf16.msra.mxu0 0
      %584 = vmatprep.subr.bf16.mxu0 0
      %585 = vmatpush1.bf16.msra.mxu0 0
      %586 = vmatprep.subr.bf16.mxu0 0
      %587 = vmatpush1.bf16.msra.mxu0 0
      %588 = vmatprep.subr.bf16.mxu0 0
      %589 = vmatpush1.bf16.msra.mxu0 0
      %590 = vmatprep.subr.bf16.mxu0 0
      %591 = vmatpush1.bf16.msra.mxu0 0
      %592 = vmatprep.subr.bf16.mxu0 0
      %593 = vmatpush1.bf16.msra.mxu0 0
      %594 = vmatprep.mubr.bf16.mxu0 0
      %595 = vmatmul.mubr.bf16.gmra.mrb[0].mxu0 %v557
      %v596 = vpop.f32.mrb[0].mxu0
      %v597 = vadd.f32 0.0, %v596
      %v598 = vpop.f32.mrb[0].mxu0
      %v599 = vpop.f32.mrb[0].mxu0
      %v600 = vpop.f32.mrb[0].mxu0
      %601 = vdwg.mxu0
      %v603 = vsel %vm462, %v461, 0
      %v606 = vsel %vm466, %v223, 0
      %608 = vmatprep.subr.bf16.mxu0 0
      %609 = vmatpush1.bf16.msra.mxu0 %v606
      %610 = vmatprep.subr.bf16.mxu0 0
      %611 = vmatpush1.bf16.msra.mxu0 0
      %612 = vmatprep.subr.bf16.mxu0 0
      %613 = vmatpush1.bf16.msra.mxu0 0
      %614 = vmatprep.subr.bf16.mxu0 0
      %615 = vmatpush1.bf16.msra.mxu0 0
      %616 = vmatprep.subr.bf16.mxu0 0
      %617 = vmatpush1.bf16.msra.mxu0 0
      %618 = vmatprep.subr.bf16.mxu0 0
      %619 = vmatpush1.bf16.msra.mxu0 0
      %620 = vmatprep.subr.bf16.mxu0 0
      %621 = vmatpush1.bf16.msra.mxu0 0
      %622 = vmatprep.subr.bf16.mxu0 0
      %623 = vmatpush1.bf16.msra.mxu0 0
      %624 = vmatprep.subr.bf16.mxu0 0
      %625 = vmatpush1.bf16.msra.mxu0 0
      %626 = vmatprep.subr.bf16.mxu0 0
      %627 = vmatpush1.bf16.msra.mxu0 0
      %628 = vmatprep.subr.bf16.mxu0 0
      %629 = vmatpush1.bf16.msra.mxu0 0
      %630 = vmatprep.subr.bf16.mxu0 0
      %631 = vmatpush1.bf16.msra.mxu0 0
      %632 = vmatprep.subr.bf16.mxu0 0
      %633 = vmatpush1.bf16.msra.mxu0 0
      %634 = vmatprep.subr.bf16.mxu0 0
      %635 = vmatpush1.bf16.msra.mxu0 0
      %636 = vmatprep.subr.bf16.mxu0 0
      %637 = vmatpush1.bf16.msra.mxu0 0
      %638 = vmatprep.subr.bf16.mxu0 0
      %639 = vmatpush1.bf16.msra.mxu0 0
      %640 = vmatprep.mubr.bf16.mxu0 0
      %641 = vmatmul.mubr.bf16.gmra.mrb[0].mxu0 %v603
      %v642 = vpop.f32.mrb[0].mxu0
      %v643 = vadd.f32 0.0, %v642
      %v644 = vpop.f32.mrb[0].mxu0
      %v645 = vpop.f32.mrb[0].mxu0
      %v646 = vpop.f32.mrb[0].mxu0
      %647 = vdwg.mxu0
      %vm648 = vcmask 60416
      %649 = vst.msk [vmem:[%s210] sm:$0xf] %vm648, %v505
      %650 = vst.msk [vmem:[%s210 + $0x4] sm:$0xf] %vm648, %v551
      %651 = vst.msk [vmem:[%s210 + $0x8] sm:$0xf] %vm648, %v597
      %652 = vst.msk [vmem:[%s210 + $0xc] sm:$0xf] %vm648, %v643
      %p653 = scmp.lt.s32.totalorder %s14, 1
      %s654 = scalar_select %p653, %s14, 1
      %s655 = smul.addr %s654, 4
      %s656 = smul.addr %s655, 4
      %s657 = scalar_lea.vmem %s3, %s656
      // Predicated region
      $region33: #{sqldepth_forward.43} parent=31 // pred_check
        %p658 = pneg %p110
      $region34: #{sqldepth_forward.43} parent=31 // pred_check_branch
        %660 = sbr.rel (%p658) target = $region36
      $region35: #{sqldepth_forward.43} parent=31 // pred_region
        _
      $region36: #{sqldepth_forward.43} parent=31 // pred_fallthru
        _
    $region32: #{sqldepth_forward.43} parent=5 // pred_fallthru
      _
    %p661 = scmp.le.s32.totalorder 2, %s9
    // Predicated region
    $region37: #{sqldepth_forward.43} parent=5 // pred_check
      %p662 = pneg %p661
    $region38: #{sqldepth_forward.43} parent=5 // pred_check_branch
      %664 = sbr.rel (%p662) target = $region40
    $region39: #{sqldepth_forward.43} parent=5 // pred_region
      %s665 = ssub.s32 %s9, 2
      // Predicated region
      $region41: #{sqldepth_forward.43} parent=39 // pred_check
        %p666 = pneg %p116
      $region42: #{sqldepth_forward.43} parent=39 // pred_check_branch
        %668 = sbr.rel (%p666) target = $region44
      $region43: #{sqldepth_forward.43} parent=39 // pred_region
        %p669 = scmp.lt.s32.totalorder %s15, 1
        %s670 = scalar_select %p669, %s15, 1
        %s671 = smul.addr %s670, 4
        %s672 = smul.addr %s671, 4
        %s673 = scalar_lea.vmem %s3, %s672
      $region44: #{sqldepth_forward.43} parent=39 // pred_fallthru
        _
    $region40: #{sqldepth_forward.43} parent=5 // pred_fallthru
      _
  $region6: #{sqldepth_forward.43} parent=0 // loop_footer
    %s13 = sadd.s32 1, %s9
  $region7: #{sqldepth_forward.43} parent=0 // loop_footer_branch
    %8 = sbr.rel target = $region3
  $region8: #{sqldepth_forward.43} parent=0 // loop_exit
    _

// kernel: sqldepth_forward.46
$region0: #{sqldepth_forward.46}
  #allocation0 [shape = 'u32[]', space=smem, size = 0x4, offset = 0x4, fixed_abs, tag = 'smem constant byte address 0x4 - core index']
  #allocation1 [shape = 'u32[144,128]{1,0:T(1,128)}', space=vmem, size = 0x12000, scoped, tag = 'internal scratch']
  #allocation2 [shape = 'f32[8,256]{1,0:T(8,128)}', space=vmem, size = 0x2000, scoped, tag = 'scratch operand']
  %s0 = inlined_call_operand.vmem [shape: bf16[8,128], index: 0, kind: input, shape index: {}]
  %s1 = inlined_call_operand.vmem [shape: bf16[128,1024], index: 1, kind: input, shape index: {}]
  %s2 = inlined_call_operand.vmem [shape: f32[1,1024], index: 2, kind: input, shape index: {}]
  %s3 = inlined_call_operand.vmem [shape: f32[8,1024], index: 3, kind: output, shape index: {}]
  %s4 = sld [smem:[#allocation0]]
  $region91: #{sqldepth_forward.46} parent=0
    _
  %s6 = ssub.s32 1, %s4
  %s7 = scalar_select 0, %s6, %s4
  $region1: #{sqldepth_forward.46} parent=0
    #allocation3 [shape = 'u8[131072]{0}', space=vmem, size = 0x20000, scoped, tag = 'input window, operand 1']
    loop: start=0, step=1, limit=6
    $region2: #{sqldepth_forward.46} parent=1 // loop_pre_header
      _
    $region3: #{sqldepth_forward.46} parent=1 // loop_header
      %s9 = sphi 0, %s13
      %p10 = scmp.ge.s32.totalorder %s9, 6
      %s16 = sphi 0, %s35
      %s17 = sphi 0, %s31
      %s18 = sphi 0, %s27
      %s19 = sphi 0, %s16
      %s20 = sphi 0, %s17
      %s21 = sphi 0, %s18
      %s22 = sphi 0, %s19
      %s23 = sphi 0, %s20
      %s24 = sphi 0, %s21
      %s40 = sphi 0, %s42
      %s43 = sphi 0, %s40
      %s44 = sphi 0, %s43
      %s60 = sphi 0, %s44
      %s68 = sphi 0, %s70
      %s71 = sphi 0, %s68
      %s72 = sphi 0, %s71
      %s88 = sphi 0, %s72
      %s94 = sphi 0, %s96
      %s97 = sphi 0, %s94
      %s98 = sphi 0, %s97
      %s114 = sphi 0, %s98
      %s122 = sphi 0, %s124
      %s125 = sphi 0, %s122
      %s126 = sphi 0, %s125
      %s142 = sphi 0, %s126
    $region4: #{sqldepth_forward.46} parent=1 // loop_header_branch
      %12 = sbr.rel (%p10) target = $region8
    $region5: #{sqldepth_forward.46} parent=1 // loop_body
      %s14 = ssub.s32 %s9, 1
      %s15 = ssub.s32 %s9, 2
      %s25 = sadd.s32 1, %s18
      %p26 = scmp.ge.s32.totalorder %s25, 1
      %s27 = scalar_select %p26, 0, %s25
      %s28 = sadd.s32 1, %s17
      %s29 = scalar_select %p26, %s28, %s17
      %p30 = scmp.ge.s32.totalorder %s29, 4
      %s31 = scalar_select %p30, 0, %s29
      %s32 = sadd.s32 1, %s16
      %s33 = scalar_select %p30, %s32, %s16
      %p34 = scmp.ge.s32.totalorder %s33, 1
      %s35 = scalar_select %p34, 0, %s33
      %s36 = ssub.s32 %s16, %s35
      %s37 = ssub.s32 %s18, %s27
      %s38 = sor.u32 %s36, %s37
      %p39 = scmp.eq.s32.totalorder %s38, 0
      %s41 = sadd.s32 %s40, 1
      %s42 = scalar_select %p39, %s40, %s41
      %p45 = pneg %p39
      %p46 = scmp.eq.s32.totalorder %s9, 3
      %p47 = por %p45, %p46
      %p48 = scmp.ne.s32.totalorder %s40, %s43
      %p49 = scmp.eq.s32.totalorder %s9, 0
      %p50 = por %p48, %p49
      %p51 = scmp.ne.s32.totalorder %s40, %s43
      %p52 = scmp.eq.s32.totalorder %s14, 3
      %p53 = por %p51, %p52
      %p54 = scmp.ne.s32.totalorder %s43, %s44
      %p55 = scmp.eq.s32.totalorder %s14, 0
      %p56 = por %p54, %p55
      %p57 = scmp.ne.s32.totalorder %s43, %s44
      %p58 = scmp.eq.s32.totalorder %s15, 3
      %p59 = por %p57, %p58
      %p61 = scmp.ne.s32.totalorder %s44, %s60
      %p62 = scmp.eq.s32.totalorder %s15, 0
      %p63 = por %p61, %p62
      %s64 = ssub.s32 %s18, %s27
      %s65 = ssub.s32 %s17, %s31
      %s66 = sor.u32 %s64, %s65
      %p67 = scmp.eq.s32.totalorder %s66, 0
      %s69 = sadd.s32 %s68, 1
      %s70 = scalar_select %p67, %s68, %s69
      %p73 = pneg %p67
      %p74 = scmp.eq.s32.totalorder %s9, 3
      %p75 = por %p73, %p74
      %p76 = scmp.ne.s32.totalorder %s68, %s71
      %p77 = scmp.eq.s32.totalorder %s9, 0
      %p78 = por %p76, %p77
      %p79 = scmp.ne.s32.totalorder %s68, %s71
      %p80 = scmp.eq.s32.totalorder %s14, 3
      %p81 = por %p79, %p80
      %p82 = scmp.ne.s32.totalorder %s71, %s72
      %p83 = scmp.eq.s32.totalorder %s14, 0
      %p84 = por %p82, %p83
      %p85 = scmp.ne.s32.totalorder %s71, %s72
      %p86 = scmp.eq.s32.totalorder %s15, 3
      %p87 = por %p85, %p86
      %p89 = scmp.ne.s32.totalorder %s72, %s88
      %p90 = scmp.eq.s32.totalorder %s15, 0
      %p91 = por %p89, %p90
      %s92 = ssub.s32 %s17, %s31
      %p93 = scmp.eq.s32.totalorder %s92, 0
      %s95 = sadd.s32 %s94, 1
      %s96 = scalar_select %p93, %s94, %s95
      %p99 = pneg %p93
      %p100 = scmp.eq.s32.totalorder %s9, 3
      %p101 = por %p99, %p100
      %p102 = scmp.ne.s32.totalorder %s94, %s97
      %p103 = scmp.eq.s32.totalorder %s9, 0
      %p104 = por %p102, %p103
      %p105 = scmp.ne.s32.totalorder %s94, %s97
      %p106 = scmp.eq.s32.totalorder %s14, 3
      %p107 = por %p105, %p106
      %p108 = scmp.ne.s32.totalorder %s97, %s98
      %p109 = scmp.eq.s32.totalorder %s14, 0
      %p110 = por %p108, %p109
      %p111 = scmp.ne.s32.totalorder %s97, %s98
      %p112 = scmp.eq.s32.totalorder %s15, 3
      %p113 = por %p111, %p112
      %p115 = scmp.ne.s32.totalorder %s98, %s114
      %p116 = scmp.eq.s32.totalorder %s15, 0
      %p117 = por %p115, %p116
      %s118 = ssub.s32 %s16, %s35
      %s119 = ssub.s32 %s17, %s31
      %s120 = sor.u32 %s118, %s119
      %p121 = scmp.eq.s32.totalorder %s120, 0
      %s123 = sadd.s32 %s122, 1
      %s124 = scalar_select %p121, %s122, %s123
      %p127 = pneg %p121
      %p128 = scmp.eq.s32.totalorder %s9, 3
      %p129 = por %p127, %p128
      %p130 = scmp.ne.s32.totalorder %s122, %s125
      %p131 = scmp.eq.s32.totalorder %s9, 0
      %p132 = por %p130, %p131
      %p133 = scmp.ne.s32.totalorder %s122, %s125
      %p134 = scmp.eq.s32.totalorder %s14, 3
      %p135 = por %p133, %p134
      %p136 = scmp.ne.s32.totalorder %s125, %s126
      %p137 = scmp.eq.s32.totalorder %s14, 0
      %p138 = por %p136, %p137
      %p139 = scmp.ne.s32.totalorder %s125, %s126
      %p140 = scmp.eq.s32.totalorder %s15, 3
      %p141 = por %p139, %p140
      %p143 = scmp.ne.s32.totalorder %s126, %s142
      %p144 = scmp.eq.s32.totalorder %s15, 0
      %p145 = por %p143, %p144
      %p146 = scmp.le.s32.totalorder 1, %s9
      %p147 = scmp.lt.s32.totalorder %s9, 5
      %p148 = pnand %p146, %p147
      %p149 = pneg %p148
      // Predicated region
      $region9: #{sqldepth_forward.46} parent=5 // pred_check
        _
      $region10: #{sqldepth_forward.46} parent=5 // pred_check_branch
        %151 = sbr.rel (%p148) target = $region12
      $region11: #{sqldepth_forward.46} parent=5 // pred_region
        %s152 = ssub.s32 %s9, 1
        // Predicated region
        $region13: #{sqldepth_forward.46} parent=11 // pred_check
          %p153 = pneg %p56
        $region14: #{sqldepth_forward.46} parent=11 // pred_check_branch
          %155 = sbr.rel (%p153) target = $region16
        $region15: #{sqldepth_forward.46} parent=11 // pred_region
          %p156 = scmp.lt.s32.totalorder %s19, 0
          %s157 = scalar_select %p156, %s19, 0
          %p158 = scmp.lt.s32.totalorder %s21, 0
          %s159 = scalar_select %p158, %s21, 0
          %s160 = sadd.s32 %s159, %s157
          %s161 = smul.addr %s160, 4
          %s162 = scalar_lea.vmem %s0, %s161
        $region16: #{sqldepth_forward.46} parent=11 // pred_fallthru
          _
      $region12: #{sqldepth_forward.46} parent=5 // pred_fallthru
        _
      %p163 = scmp.lt.s32.totalorder %s9, 4
      // Predicated region
      $region17: #{sqldepth_forward.46} parent=5 // pred_check
        %p164 = pneg %p163
      $region18: #{sqldepth_forward.46} parent=5 // pred_check_branch
        %166 = sbr.rel (%p164) target = $region20
      $region19: #{sqldepth_forward.46} parent=5 // pred_region
        // Predicated region
        $region21: #{sqldepth_forward.46} parent=19 // pred_check
          %p167 = pneg %p78
        $region22: #{sqldepth_forward.46} parent=19 // pred_check_branch
          %169 = sbr.rel (%p167) target = $region24
        $region23: #{sqldepth_forward.46} parent=19 // pred_region
          %s170 = sand.u32 %s68, 1
          %s171 = sand.u32 %s68, 1
          %s172 = smul.addr %s171, 128
          %s173 = scalar_lea.vmem [#allocation3], %s172
          %s174 = smul.u32 16, %s18
          %s175 = smul.u32 2, %s17
          %s176 = smul.addr %s174, 8
          %s177 = sadd.s32 %s175, %s176
          %s178 = smul.addr %s177, 4
          %s179 = scalar_lea.vmem %s1, %s178
          // Predicated region
          $region25: #{sqldepth_forward.46} parent=23 // pred_check
            _
          $region26: #{sqldepth_forward.46} parent=23 // pred_check_branch
            %181 = sbr.rel (0) target = $region28
          $region27: #{sqldepth_forward.46} parent=23 // pred_region
            // Predicated region
            $region29: #{sqldepth_forward.46} parent=27 // pred_check
              _
            $region30: #{sqldepth_forward.46} parent=27 // pred_check_branch
              %183 = sbr.rel (0) target = $region32
            $region31: #{sqldepth_forward.46} parent=27 // pred_region
              // Predicated region
              $region44: #{sqldepth_forward.46} parent=31 // pred_check
                _
              $region45: #{sqldepth_forward.46} parent=31 // pred_check_branch
                %228 = sbr.rel (0) target = $region47
              $region46: #{sqldepth_forward.46} parent=31 // pred_region
                loop: start=0, step=1, limit=1
                $region48: #{sqldepth_forward.46} parent=46 // loop_pre_header
                  _
                $region49: #{sqldepth_forward.46} parent=46 // loop_header
                  %s230 = sphi 0, %s234
                  %p231 = scmp.ge.s32.totalorder %s230, 1
                  %s235 = sphi %s179, %s179
                  %s236 = sphi %s173, %s173
                $region50: #{sqldepth_forward.46} parent=46 // loop_header_branch
                  %233 = sbr.rel (%p231) target = $region54
                $region51: #{sqldepth_forward.46} parent=46 // loop_body
                  %v237 = vld [vmem:[%s235] sm:$0xff]
                  %238 = vst [vmem:[%s236] sm:$0xff] %v237
                  %v239 = vld [vmem:[%s235 + $0x20] sm:$0xff]
                  %240 = vst [vmem:[%s236 + $0x8] sm:$0xff] %v239
                  %v241 = vld [vmem:[%s235 + $0x40] sm:$0xff]
                  %242 = vst [vmem:[%s236 + $0x10] sm:$0xff] %v241
                  %v243 = vld [vmem:[%s235 + $0x60] sm:$0xff]
                  %244 = vst [vmem:[%s236 + $0x18] sm:$0xff] %v243
                  %v245 = vld [vmem:[%s235 + $0x80] sm:$0xff]
                  %246 = vst [vmem:[%s236 + $0x20] sm:$0xff] %v245
                  %v247 = vld [vmem:[%s235 + $0xa0] sm:$0xff]
                  %248 = vst [vmem:[%s236 + $0x28] sm:$0xff] %v247
                  %v249 = vld [vmem:[%s235 + $0xc0] sm:$0xff]
                  %250 = vst [vmem:[%s236 + $0x30] sm:$0xff] %v249
                  %v251 = vld [vmem:[%s235 + $0xe0] sm:$0xff]
                  %252 = vst [vmem:[%s236 + $0x38] sm:$0xff] %v251
                  %v253 = vld [vmem:[%s235 + $0x100] sm:$0xff]
                  %254 = vst [vmem:[%s236 + $0x40] sm:$0xff] %v253
                  %v255 = vld [vmem:[%s235 + $0x120] sm:$0xff]
                  %256 = vst [vmem:[%s236 + $0x48] sm:$0xff] %v255
                  %v257 = vld [vmem:[%s235 + $0x140] sm:$0xff]
                  %258 = vst [vmem:[%s236 + $0x50] sm:$0xff] %v257
                  %v259 = vld [vmem:[%s235 + $0x160] sm:$0xff]
                  %260 = vst [vmem:[%s236 + $0x58] sm:$0xff] %v259
                  %v261 = vld [vmem:[%s235 + $0x180] sm:$0xff]
                  %262 = vst [vmem:[%s236 + $0x60] sm:$0xff] %v261
                  %v263 = vld [vmem:[%s235 + $0x1a0] sm:$0xff]
                  %264 = vst [vmem:[%s236 + $0x68] sm:$0xff] %v263
                  %v265 = vld [vmem:[%s235 + $0x1c0] sm:$0xff]
                  %266 = vst [vmem:[%s236 + $0x70] sm:$0xff] %v265
                  %v267 = vld [vmem:[%s235 + $0x1e0] sm:$0xff]
                  %268 = vst [vmem:[%s236 + $0x78] sm:$0xff] %v267
                $region52: #{sqldepth_forward.46} parent=46 // loop_footer
                  %s234 = sadd.s32 1, %s230
                $region53: #{sqldepth_forward.46} parent=46 // loop_footer_branch
                  %229 = sbr.rel target = $region49
                $region54: #{sqldepth_forward.46} parent=46 // loop_exit
                  _
              $region47: #{sqldepth_forward.46} parent=31 // pred_fallthru
                _
              // Predicated region
              $region55: #{sqldepth_forward.46} parent=31 // pred_check
                _
              $region56: #{sqldepth_forward.46} parent=31 // pred_check_branch
                %270 = sbr.rel target = $region58
              $region57: #{sqldepth_forward.46} parent=31 // pred_region
                _
              $region58: #{sqldepth_forward.46} parent=31 // pred_fallthru
                _
            $region32: #{sqldepth_forward.46} parent=27 // pred_fallthru
              _
            // Predicated region
            $region33: #{sqldepth_forward.46} parent=27 // pred_check
              _
            $region34: #{sqldepth_forward.46} parent=27 // pred_check_branch
              %185 = sbr.rel target = $region36
            $region35: #{sqldepth_forward.46} parent=27 // pred_region
              loop: start=0, step=1, limit=1
              $region37: #{sqldepth_forward.46} parent=35 // loop_pre_header
                _
              $region38: #{sqldepth_forward.46} parent=35 // loop_header
                %s188 = sphi 0, %s192
                %p189 = scmp.ge.s32.totalorder %s188, 1
                %s193 = sphi %s179, %s179
                %s194 = sphi %s173, %s173
              $region39: #{sqldepth_forward.46} parent=35 // loop_header_branch
                %191 = sbr.rel (%p189) target = $region43
              $region40: #{sqldepth_forward.46} parent=35 // loop_body
                %v195 = vld [vmem:[%s193] sm:$0xff]
                %196 = vst [vmem:[%s194] sm:$0xff] %v195
                %v197 = vld [vmem:[%s193 + $0x20] sm:$0xff]
                %198 = vst [vmem:[%s194 + $0x8] sm:$0xff] %v197
                %v199 = vld [vmem:[%s193 + $0x40] sm:$0xff]
                %200 = vst [vmem:[%s194 + $0x10] sm:$0xff] %v199
                %v201 = vld [vmem:[%s193 + $0x60] sm:$0xff]
                %202 = vst [vmem:[%s194 + $0x18] sm:$0xff] %v201
                %v203 = vld [vmem:[%s193 + $0x80] sm:$0xff]
                %204 = vst [vmem:[%s194 + $0x20] sm:$0xff] %v203
                %v205 = vld [vmem:[%s193 + $0xa0] sm:$0xff]
                %206 = vst [vmem:[%s194 + $0x28] sm:$0xff] %v205
                %v207 = vld [vmem:[%s193 + $0xc0] sm:$0xff]
                %208 = vst [vmem:[%s194 + $0x30] sm:$0xff] %v207
                %v209 = vld [vmem:[%s193 + $0xe0] sm:$0xff]
                %210 = vst [vmem:[%s194 + $0x38] sm:$0xff] %v209
                %v211 = vld [vmem:[%s193 + $0x100] sm:$0xff]
                %212 = vst [vmem:[%s194 + $0x40] sm:$0xff] %v211
                %v213 = vld [vmem:[%s193 + $0x120] sm:$0xff]
                %214 = vst [vmem:[%s194 + $0x48] sm:$0xff] %v213
                %v215 = vld [vmem:[%s193 + $0x140] sm:$0xff]
                %216 = vst [vmem:[%s194 + $0x50] sm:$0xff] %v215
                %v217 = vld [vmem:[%s193 + $0x160] sm:$0xff]
                %218 = vst [vmem:[%s194 + $0x58] sm:$0xff] %v217
                %v219 = vld [vmem:[%s193 + $0x180] sm:$0xff]
                %220 = vst [vmem:[%s194 + $0x60] sm:$0xff] %v219
                %v221 = vld [vmem:[%s193 + $0x1a0] sm:$0xff]
                %222 = vst [vmem:[%s194 + $0x68] sm:$0xff] %v221
                %v223 = vld [vmem:[%s193 + $0x1c0] sm:$0xff]
                %224 = vst [vmem:[%s194 + $0x70] sm:$0xff] %v223
                %v225 = vld [vmem:[%s193 + $0x1e0] sm:$0xff]
                %226 = vst [vmem:[%s194 + $0x78] sm:$0xff] %v225
              $region41: #{sqldepth_forward.46} parent=35 // loop_footer
                %s192 = sadd.s32 1, %s188
              $region42: #{sqldepth_forward.46} parent=35 // loop_footer_branch
                %187 = sbr.rel target = $region38
              $region43: #{sqldepth_forward.46} parent=35 // loop_exit
                _
            $region36: #{sqldepth_forward.46} parent=27 // pred_fallthru
              _
          $region28: #{sqldepth_forward.46} parent=23 // pred_fallthru
            _
          %271 = vnop
        $region24: #{sqldepth_forward.46} parent=19 // pred_fallthru
          _
        // Predicated region
        $region59: #{sqldepth_forward.46} parent=19 // pred_check
          %p272 = pneg %p104
        $region60: #{sqldepth_forward.46} parent=19 // pred_check_branch
          %274 = sbr.rel (%p272) target = $region62
        $region61: #{sqldepth_forward.46} parent=19 // pred_region
          %s275 = smul.u32 2, %s17
          %p276 = scmp.lt.s32.totalorder %s275, 7
          %s277 = scalar_select %p276, %s275, 7
          %s278 = scalar_lea.vmem %s2, %s277
          %s279 = smul.u32 2, %s17
        $region62: #{sqldepth_forward.46} parent=19 // pred_fallthru
          _
      $region20: #{sqldepth_forward.46} parent=5 // pred_fallthru
        _
      %p280 = scmp.le.s32.totalorder 1, %s9
      %p281 = scmp.lt.s32.totalorder %s9, 5
      %p282 = pnand %p280, %p281
      %p283 = pneg %p282
      // Predicated region
      $region63: #{sqldepth_forward.46} parent=5 // pred_check
        _
      $region64: #{sqldepth_forward.46} parent=5 // pred_check_branch
        %285 = sbr.rel (%p282) target = $region66
      $region65: #{sqldepth_forward.46} parent=5 // pred_region
        %s286 = ssub.s32 %s9, 1
        %s287 = sand.u32 %s71, 1
        %s288 = sand.u32 %s71, 1
        %s289 = smul.addr %s288, 128
        %s290 = scalar_lea.vmem [#allocation3], %s289
        // Predicated region
        $region67: #{sqldepth_forward.46} parent=65 // pred_check
          %p291 = pneg %p84
        $region68: #{sqldepth_forward.46} parent=65 // pred_check_branch
          %293 = sbr.rel (%p291) target = $region70
        $region69: #{sqldepth_forward.46} parent=65 // pred_region
          _
        $region70: #{sqldepth_forward.46} parent=65 // pred_fallthru
          _
        %p294 = scmp.lt.s32.totalorder %s19, 0
        %s295 = scalar_select %p294, %s19, 0
        %p296 = scmp.lt.s32.totalorder %s21, 0
        %s297 = scalar_select %p296, %s21, 0
        %s298 = sadd.s32 %s297, %s295
        %s299 = smul.addr %s298, 4
        %s300 = scalar_lea.vmem %s0, %s299
        %p301 = pneg %p56
        %p302 = pneg %p53
        %s303 = sand.u32 %s71, 1
        %s304 = sand.u32 %s71, 1
        %s305 = smul.addr %s304, 128
        %s306 = scalar_lea.vmem [#allocation3], %s305
        %p307 = pneg %p84
        %p308 = pneg %p81
        %s309 = smul.u32 2, %s20
        %p310 = scmp.lt.s32.totalorder %s309, 7
        %s311 = scalar_select %p310, %s309, 7
        %s312 = scalar_lea.vmem %s2, %s311
        %p313 = pneg %p110
        %p314 = pneg %p107
        %p315 = pneg %p138
        %p316 = pneg %p135
        %s317 = smul.u32 2, %s20
        %p318 = scmp.lt.s32.totalorder %s19, 0
        %s319 = scalar_select %p318, %s19, 0
        %p320 = scmp.lt.s32.totalorder %s317, 7
        %s321 = scalar_select %p320, %s317, 7
        %s322 = smul.addr %s319, 8
        %s323 = sadd.s32 %s321, %s322
        %s324 = smul.addr %s323, 8
        %s325 = scalar_lea.vmem %s3, %s324
        %p326 = scmp.lt.s32.totalorder %s19, 0
        %s327 = scalar_select %p326, %s19, 0
        %p328 = scmp.lt.s32.totalorder %s21, 0
        %s329 = scalar_select %p328, %s21, 0
        %s330 = sadd.s32 %s329, %s327
        %s331 = smul.addr %s330, 4
        %s332 = scalar_lea.vmem %s0, %s331
        %s333 = smul.u32 16, %s21
        %s334 = smul.u32 2, %s20
        %s335 = smul.u32 2, %s20
        %p336 = scmp.lt.s32.totalorder %s335, 7
        %s337 = scalar_select %p336, %s335, 7
        %s338 = scalar_lea.vmem %s2, %s337
        %s339 = smul.u32 2, %s20
        %s340 = smul.u32 2, %s20
        %p341 = scmp.lt.s32.totalorder %s19, 0
        %s342 = scalar_select %p341, %s19, 0
        %p343 = scmp.lt.s32.totalorder %s340, 7
        %s344 = scalar_select %p343, %s340, 7
        %s345 = smul.addr %s342, 8
        %s346 = sadd.s32 %s344, %s345
        %s347 = smul.addr %s346, 8
        %s348 = scalar_lea.vmem %s3, %s347
        %s349 = smul.u32 2, %s20
        %p351 = scmp.eq.s32.totalorder %s21, 0
        // Predicated region
        $region71: #{sqldepth_forward.46} parent=65 // pred_check
          %p352 = pneg %p351
        $region72: #{sqldepth_forward.46} parent=65 // pred_check_branch
          %354 = sbr.rel (%p352) target = $region74
        $region73: #{sqldepth_forward.46} parent=65 // pred_region
          %355 = vst [vmem:[#allocation2] sm:$0xff] 0.0
          %356 = vst [vmem:[#allocation2 + $0x8] sm:$0xff] 0.0
        $region74: #{sqldepth_forward.46} parent=65 // pred_fallthru
          _
        %v357 = vld [vmem:[#allocation2] sm:$0xff]
        %v358 = vld [vmem:[#allocation2 + $0x8] sm:$0xff]
        %v359 = vld [vmem:[%s332] sm:$0xf]
        %v360 = vld [vmem:[%s290] sm:$0xff]
        %v361 = vld [vmem:[%s290 + $0x8] sm:$0xff]
        %v362 = vld [vmem:[%s290 + $0x10] sm:$0xff]
        %v363 = vld [vmem:[%s290 + $0x18] sm:$0xff]
        %v364 = vld [vmem:[%s290 + $0x20] sm:$0xff]
        %v365 = vld [vmem:[%s290 + $0x28] sm:$0xff]
        %v366 = vld [vmem:[%s290 + $0x30] sm:$0xff]
        %v367 = vld [vmem:[%s290 + $0x38] sm:$0xff]
        %v368 = vld [vmem:[%s290 + $0x40] sm:$0xff]
        %v369 = vld [vmem:[%s290 + $0x48] sm:$0xff]
        %v370 = vld [vmem:[%s290 + $0x50] sm:$0xff]
        %v371 = vld [vmem:[%s290 + $0x58] sm:$0xff]
        %v372 = vld [vmem:[%s290 + $0x60] sm:$0xff]
        %v373 = vld [vmem:[%s290 + $0x68] sm:$0xff]
        %v374 = vld [vmem:[%s290 + $0x70] sm:$0xff]
        %v375 = vld [vmem:[%s290 + $0x78] sm:$0xff]
        %v392 = vunpack.c.l.b16 %v360
        %v393 = vunpack.c.h.b16 %v360
        %v394 = vunpack.c.l.b16 %v361
        %v395 = vunpack.c.h.b16 %v361
        %v396 = vunpack.c.l.b16 %v362
        %v397 = vunpack.c.h.b16 %v362
        %v398 = vunpack.c.l.b16 %v363
        %v399 = vunpack.c.h.b16 %v363
        %v400 = vunpack.c.l.b16 %v364
        %v401 = vunpack.c.h.b16 %v364
        %v402 = vunpack.c.l.b16 %v365
        %v403 = vunpack.c.h.b16 %v365
        %v404 = vunpack.c.l.b16 %v366
        %v405 = vunpack.c.h.b16 %v366
        %v406 = vunpack.c.l.b16 %v367
        %v407 = vunpack.c.h.b16 %v367
        %v408 = vunpack.c.l.b16 %v368
        %v409 = vunpack.c.h.b16 %v368
        %v410 = vunpack.c.l.b16 %v369
        %v411 = vunpack.c.h.b16 %v369
        %v412 = vunpack.c.l.b16 %v370
        %v413 = vunpack.c.h.b16 %v370
        %v414 = vunpack.c.l.b16 %v371
        %v415 = vunpack.c.h.b16 %v371
        %v416 = vunpack.c.l.b16 %v372
        %v417 = vunpack.c.h.b16 %v372
        %v418 = vunpack.c.l.b16 %v373
        %v419 = vunpack.c.h.b16 %v373
        %v420 = vunpack.c.l.b16 %v374
        %v421 = vunpack.c.h.b16 %v374
        %v422 = vunpack.c.l.b16 %v375
        %v423 = vunpack.c.h.b16 %v375
        %v424 = vpack.c.b16 %v394, %v392
        %v425 = vpack.c.b16 %v395, %v393
        %v426 = vpack.c.b16 %v398, %v396
        %v427 = vpack.c.b16 %v399, %v397
        %v428 = vpack.c.b16 %v402, %v400
        %v429 = vpack.c.b16 %v403, %v401
        %v430 = vpack.c.b16 %v406, %v404
        %v431 = vpack.c.b16 %v407, %v405
        %v432 = vpack.c.b16 %v410, %v408
        %v433 = vpack.c.b16 %v411, %v409
        %v434 = vpack.c.b16 %v414, %v412
        %v435 = vpack.c.b16 %v415, %v413
        %v436 = vpack.c.b16 %v418, %v416
        %v437 = vpack.c.b16 %v419, %v417
        %v438 = vpack.c.b16 %v422, %v420
        %v439 = vpack.c.b16 %v423, %v421
        %456 = vmatprep.subr.bf16.mxu0 %v425
        %457 = vmatpush1.bf16.msra.mxu0 %v424
        %458 = vmatprep.subr.bf16.mxu0 %v427
        %459 = vmatpush1.bf16.msra.mxu0 %v426
        %460 = vmatprep.subr.bf16.mxu0 %v429
        %461 = vmatpush1.bf16.msra.mxu0 %v428
        %462 = vmatprep.subr.bf16.mxu0 %v431
        %463 = vmatpush1.bf16.msra.mxu0 %v430
        %464 = vmatprep.subr.bf16.mxu0 %v433
        %465 = vmatpush1.bf16.msra.mxu0 %v432
        %466 = vmatprep.subr.bf16.mxu0 %v435
        %467 = vmatpush1.bf16.msra.mxu0 %v434
        %468 = vmatprep.subr.bf16.mxu0 %v437
        %469 = vmatpush1.bf16.msra.mxu0 %v436
        %470 = vmatprep.subr.bf16.mxu0 %v439
        %471 = vmatpush1.bf16.msra.mxu0 %v438
        %472 = vmatprep.subr.bf16.mxu0 0
        %473 = vmatpush1.bf16.msra.mxu0 0
        %474 = vmatprep.subr.bf16.mxu0 0
        %475 = vmatpush1.bf16.msra.mxu0 0
        %476 = vmatprep.subr.bf16.mxu0 0
        %477 = vmatpush1.bf16.msra.mxu0 0
        %478 = vmatprep.subr.bf16.mxu0 0
        %479 = vmatpush1.bf16.msra.mxu0 0
        %480 = vmatprep.subr.bf16.mxu0 0
        %481 = vmatpush1.bf16.msra.mxu0 0
        %482 = vmatprep.subr.bf16.mxu0 0
        %483 = vmatpush1.bf16.msra.mxu0 0
        %484 = vmatprep.subr.bf16.mxu0 0
        %485 = vmatpush1.bf16.msra.mxu0 0
        %486 = vmatprep.subr.bf16.mxu0 0
        %487 = vmatpush1.bf16.msra.mxu0 0
        %488 = vmatprep.mubr.bf16.mxu0 0
        %489 = vmatmul.mubr.bf16.gmra.mrb[0].mxu0 %v359
        %v490 = vpop.f32.mrb[0].mxu0
        %v491 = vadd.f32 0.0, %v490
        %v492 = vpop.f32.mrb[0].mxu0
        %v493 = vadd.f32 0.0, %v492
        %v494 = vpop.f32.mrb[0].mxu0
        %v495 = vpop.f32.mrb[0].mxu0
        %496 = vdwg.mxu0
        %v497 = vadd.f32 %v357, %v491
        %v498 = vadd.f32 %v358, %v493
        %499 = vst [vmem:[#allocation2] sm:$0xff] %v497
        %500 = vst [vmem:[#allocation2 + $0x8] sm:$0xff] %v498
        // Predicated region
        $region75: #{sqldepth_forward.46} parent=65 // pred_check
          %p501 = pneg %p351
        $region76: #{sqldepth_forward.46} parent=65 // pred_check_branch
          %503 = sbr.rel (%p501) target = $region78
        $region77: #{sqldepth_forward.46} parent=65 // pred_region
          %v504 = vld [vmem:[#allocation2] sm:$0xff]
          %v505 = vld [vmem:[#allocation2 + $0x8] sm:$0xff]
          %v506 = vld [vmem:[%s338] sm:$0x3]
          %v508 = vlaneseq
          %v509 = vshrl.u32 %v508, 7
          %v510 = vsub.s32 0, %v509
          %v511 = vrot.slane %v506, %v510
          %v512 = vlaneseq
          %v513 = vshrl.u32 %v512, 7
          %v514 = vsub.s32 1, %v513
          %v515 = vrot.slane %v506, %v514
          %v518 = vadd.f32 %v504, %v511
          %v519 = vadd.f32 %v505, %v515
          %v520 = vmax.f32 %v518, 0.0
          %v521 = vmax.f32 %v519, 0.0
          %522 = vst [vmem:[%s348] sm:$0xff] %v520
          %523 = vst [vmem:[%s348 + $0x8] sm:$0xff] %v521
        $region78: #{sqldepth_forward.46} parent=65 // pred_fallthru
          _
        %s524 = smul.u32 2, %s20
        %p525 = scmp.lt.s32.totalorder %s19, 0
        %s526 = scalar_select %p525, %s19, 0
        %p527 = scmp.lt.s32.totalorder %s524, 7
        %s528 = scalar_select %p527, %s524, 7
        %s529 = smul.addr %s526, 8
        %s530 = sadd.s32 %s528, %s529
        %s531 = smul.addr %s530, 8
        %s532 = scalar_lea.vmem %s3, %s531
        // Predicated region
        $region79: #{sqldepth_forward.46} parent=65 // pred_check
          %p533 = pneg %p135
        $region80: #{sqldepth_forward.46} parent=65 // pred_check_branch
          %535 = sbr.rel (%p533) target = $region82
        $region81: #{sqldepth_forward.46} parent=65 // pred_region
          %s536 = smul.u32 2, %s20
        $region82: #{sqldepth_forward.46} parent=65 // pred_fallthru
          _
      $region66: #{sqldepth_forward.46} parent=5 // pred_fallthru
        _
      %p537 = scmp.le.s32.totalorder 2, %s9
      // Predicated region
      $region83: #{sqldepth_forward.46} parent=5 // pred_check
        %p538 = pneg %p537
      $region84: #{sqldepth_forward.46} parent=5 // pred_check_branch
        %540 = sbr.rel (%p538) target = $region86
      $region85: #{sqldepth_forward.46} parent=5 // pred_region
        %s541 = ssub.s32 %s9, 2
        // Predicated region
        $region87: #{sqldepth_forward.46} parent=85 // pred_check
          %p542 = pneg %p141
        $region88: #{sqldepth_forward.46} parent=85 // pred_check_branch
          %544 = sbr.rel (%p542) target = $region90
        $region89: #{sqldepth_forward.46} parent=85 // pred_region
          %s545 = smul.u32 2, %s23
          %p546 = scmp.lt.s32.totalorder %s22, 0
          %s547 = scalar_select %p546, %s22, 0
          %p548 = scmp.lt.s32.totalorder %s545, 7
          %s549 = scalar_select %p548, %s545, 7
          %s550 = smul.addr %s547, 8
          %s551 = sadd.s32 %s549, %s550
          %s552 = smul.addr %s551, 8
          %s553 = scalar_lea.vmem %s3, %s552
        $region90: #{sqldepth_forward.46} parent=85 // pred_fallthru
          _
      $region86: #{sqldepth_forward.46} parent=5 // pred_fallthru
        _
    $region6: #{sqldepth_forward.46} parent=1 // loop_footer
      %s13 = sadd.s32 1, %s9
    $region7: #{sqldepth_forward.46} parent=1 // loop_footer_branch
      %8 = sbr.rel target = $region3
    $region8: #{sqldepth_forward.46} parent=1 // loop_exit
      _

// kernel: sqldepth_forward.72
$region0: #{sqldepth_forward.72}
  #allocation0 [shape = 'u32[]', space=smem, size = 0x4, offset = 0x4, fixed_abs, tag = 'smem constant byte address 0x4 - core index']
  #allocation1 [shape = 'u32[144,128]{1,0:T(1,128)}', space=vmem, size = 0x12000, scoped, tag = 'internal scratch']
  %s0 = inlined_call_operand.vmem [shape: f32[8,256], index: 0, kind: input, shape index: {}]
  %s1 = inlined_call_operand.vmem [shape: f32[8,256], index: 1, kind: output, shape index: {}]
  %s2 = sld [smem:[#allocation0]]
  $region14: #{sqldepth_forward.72} parent=0
    _
  %s4 = ssub.s32 1, %s2
  %s5 = scalar_select 0, %s4, %s2
  // Predicated region
  $region2: #{sqldepth_forward.72} parent=0 // pred_check
    _
  $region3: #{sqldepth_forward.72} parent=0 // pred_check_branch
    %7 = sbr.rel (0) target = $region5
  $region4: #{sqldepth_forward.72} parent=0 // pred_region
    _
  $region5: #{sqldepth_forward.72} parent=0 // pred_fallthru
    _
  %v8 = vld [vmem:[%s0] sm:$0xff]
  %v9 = vld [vmem:[%s0 + $0x8] sm:$0xff]
  %v10 = vmax.f32 %v8, %v9
  %11 = vmax.xlane.f32.xlu0 %v10
  %v12 = vpop.xlane.xlu0 %11
  %v13 = vsub.f32 %v8, %v12
  %v14 = vsub.f32 %v9, %v12
  %v15 = vmul.f32 %v13, 1.442695
  %v16 = vpow.pop %v15
  %v17 = vmul.f32 %v14, 1.442695
  %v18 = vpow.pop %v17
  %v19 = vadd.f32 %v16, %v18
  %20 = vadd.xlane.f32.xlu0 %v19
  %v21 = vpop.xlane.xlu0 %20
  %v22 = vrcp.pop %v21
  %v23 = vmul.f32 %v16, %v22
  %v24 = vmul.f32 %v18, %v22
  %25 = vst [vmem:[%s1] sm:$0xff] %v23
  %26 = vst [vmem:[%s1 + $0x8] sm:$0xff] %v24
  // Predicated region
  $region6: #{sqldepth_forward.72} parent=0 // pred_check
    _
  $region7: #{sqldepth_forward.72} parent=0 // pred_check_branch
    %28 = sbr.rel (0) target = $region9
  $region8: #{sqldepth_forward.72} parent=0 // pred_region
    _
  $region9: #{sqldepth_forward.72} parent=0 // pred_fallthru
    _
  // Predicated region
  $region10: #{sqldepth_forward.72} parent=0 // pred_check
    _
  $region11: #{sqldepth_forward.72} parent=0 // pred_check_branch
    %30 = sbr.rel (0) target = $region13
  $region12: #{sqldepth_forward.72} parent=0 // pred_region
    _
  $region13: #{sqldepth_forward.72} parent=0 // pred_fallthru
    _

// kernel: sqldepth_forward.71
$region0: #{sqldepth_forward.71}
  #allocation0 [shape = 'u32[]', space=smem, size = 0x4, offset = 0x4, fixed_abs, tag = 'smem constant byte address 0x4 - core index']
  #allocation1 [shape = 'u32[144,128]{1,0:T(1,128)}', space=vmem, size = 0x12000, scoped, tag = 'internal scratch']
  %s0 = inlined_call_operand.vmem [shape: bf16[2,4,32], index: 0, kind: input, shape index: {}]
  %s1 = inlined_call_operand.vmem [shape: bf16[2,256,32], index: 1, kind: input, shape index: {}]
  %s2 = inlined_call_operand.vmem [shape: f32[2,4,256], index: 2, kind: output, shape index: {}]
  %s3 = sld [smem:[#allocation0]]
  $region41: #{sqldepth_forward.71} parent=0
    _
  %s5 = ssub.s32 1, %s3
  %s6 = scalar_select 0, %s5, %s3
  loop: start=0, step=1, limit=4
  $region2: #{sqldepth_forward.71} parent=0 // loop_pre_header
    _
  $region3: #{sqldepth_forward.71} parent=0 // loop_header
    %s8 = sphi 0, %s12
    %p9 = scmp.ge.s32.totalorder %s8, 4
    %s15 = sphi 0, %s27
    %s16 = sphi 0, %s23
    %s17 = sphi 0, %s15
    %s18 = sphi 0, %s16
    %s19 = sphi 0, %s17
    %s20 = sphi 0, %s18
    %s30 = sphi 0, %s32
    %s33 = sphi 0, %s30
    %s34 = sphi 0, %s33
    %s50 = sphi 0, %s34
    %s58 = sphi 0, %s60
    %s61 = sphi 0, %s58
    %s62 = sphi 0, %s61
    %s78 = sphi 0, %s62
    %s86 = sphi 0, %s88
    %s89 = sphi 0, %s86
    %s90 = sphi 0, %s89
    %s106 = sphi 0, %s90
  $region4: #{sqldepth_forward.71} parent=0 // loop_header_branch
    %11 = sbr.rel (%p9) target = $region8
  $region5: #{sqldepth_forward.71} parent=0 // loop_body
    %s13 = ssub.s32 %s8, 1
    %s14 = ssub.s32 %s8, 2
    %s21 = sadd.s32 1, %s16
    %p22 = scmp.ge.s32.totalorder %s21, 1
    %s23 = scalar_select %p22, 0, %s21
    %s24 = sadd.s32 1, %s15
    %s25 = scalar_select %p22, %s24, %s15
    %p26 = scmp.ge.s32.totalorder %s25, 2
    %s27 = scalar_select %p26, 0, %s25
    %s28 = ssub.s32 %s15, %s27
    %p29 = scmp.eq.s32.totalorder %s28, 0
    %s31 = sadd.s32 %s30, 1
    %s32 = scalar_select %p29, %s30, %s31
    %p35 = pneg %p29
    %p36 = scmp.eq.s32.totalorder %s8, 1
    %p37 = por %p35, %p36
    %p38 = scmp.ne.s32.totalorder %s30, %s33
    %p39 = scmp.eq.s32.totalorder %s8, 0
    %p40 = por %p38, %p39
    %p41 = scmp.ne.s32.totalorder %s30, %s33
    %p42 = scmp.eq.s32.totalorder %s13, 1
    %p43 = por %p41, %p42
    %p44 = scmp.ne.s32.totalorder %s33, %s34
    %p45 = scmp.eq.s32.totalorder %s13, 0
    %p46 = por %p44, %p45
    %p47 = scmp.ne.s32.totalorder %s33, %s34
    %p48 = scmp.eq.s32.totalorder %s14, 1
    %p49 = por %p47, %p48
    %p51 = scmp.ne.s32.totalorder %s34, %s50
    %p52 = scmp.eq.s32.totalorder %s14, 0
    %p53 = por %p51, %p52
    %s54 = ssub.s32 %s15, %s27
    %s55 = ssub.s32 %s16, %s23
    %s56 = sor.u32 %s54, %s55
    %p57 = scmp.eq.s32.totalorder %s56, 0
    %s59 = sadd.s32 %s58, 1
    %s60 = scalar_select %p57, %s58, %s59
    %p63 = pneg %p57
    %p64 = scmp.eq.s32.totalorder %s8, 1
    %p65 = por %p63, %p64
    %p66 = scmp.ne.s32.totalorder %s58, %s61
    %p67 = scmp.eq.s32.totalorder %s8, 0
    %p68 = por %p66, %p67
    %p69 = scmp.ne.s32.totalorder %s58, %s61
    %p70 = scmp.eq.s32.totalorder %s13, 1
    %p71 = por %p69, %p70
    %p72 = scmp.ne.s32.totalorder %s61, %s62
    %p73 = scmp.eq.s32.totalorder %s13, 0
    %p74 = por %p72, %p73
    %p75 = scmp.ne.s32.totalorder %s61, %s62
    %p76 = scmp.eq.s32.totalorder %s14, 1
    %p77 = por %p75, %p76
    %p79 = scmp.ne.s32.totalorder %s62, %s78
    %p80 = scmp.eq.s32.totalorder %s14, 0
    %p81 = por %p79, %p80
    %s82 = ssub.s32 %s15, %s27
    %s83 = ssub.s32 %s16, %s23
    %s84 = sor.u32 %s82, %s83
    %p85 = scmp.eq.s32.totalorder %s84, 0
    %s87 = sadd.s32 %s86, 1
    %s88 = scalar_select %p85, %s86, %s87
    %p91 = pneg %p85
    %p92 = scmp.eq.s32.totalorder %s8, 1
    %p93 = por %p91, %p92
    %p94 = scmp.ne.s32.totalorder %s86, %s89
    %p95 = scmp.eq.s32.totalorder %s8, 0
    %p96 = por %p94, %p95
    %p97 = scmp.ne.s32.totalorder %s86, %s89
    %p98 = scmp.eq.s32.totalorder %s13, 1
    %p99 = por %p97, %p98
    %p100 = scmp.ne.s32.totalorder %s89, %s90
    %p101 = scmp.eq.s32.totalorder %s13, 0
    %p102 = por %p100, %p101
    %p103 = scmp.ne.s32.totalorder %s89, %s90
    %p104 = scmp.eq.s32.totalorder %s14, 1
    %p105 = por %p103, %p104
    %p107 = scmp.ne.s32.totalorder %s90, %s106
    %p108 = scmp.eq.s32.totalorder %s14, 0
    %p109 = por %p107, %p108
    %p110 = scmp.le.s32.totalorder 1, %s8
    %p111 = scmp.lt.s32.totalorder %s8, 3
    %p112 = pnand %p110, %p111
    %p113 = pneg %p112
    // Predicated region
    $region9: #{sqldepth_forward.71} parent=5 // pred_check
      _
    $region10: #{sqldepth_forward.71} parent=5 // pred_check_branch
      %115 = sbr.rel (%p112) target = $region12
    $region11: #{sqldepth_forward.71} parent=5 // pred_region
      %s116 = ssub.s32 %s8, 1
    $region12: #{sqldepth_forward.71} parent=5 // pred_fallthru
      _
    %p117 = scmp.lt.s32.totalorder %s8, 2
    // Predicated region
    $region13: #{sqldepth_forward.71} parent=5 // pred_check
      %p118 = pneg %p117
    $region14: #{sqldepth_forward.71} parent=5 // pred_check_branch
      %120 = sbr.rel (%p118) target = $region16
    $region15: #{sqldepth_forward.71} parent=5 // pred_region
      // Predicated region
      $region17: #{sqldepth_forward.71} parent=15 // pred_check
        %p121 = pneg %p40
      $region18: #{sqldepth_forward.71} parent=15 // pred_check_branch
        %123 = sbr.rel (%p121) target = $region20
      $region19: #{sqldepth_forward.71} parent=15 // pred_region
        %p124 = scmp.lt.s32.totalorder %s15, 1
        %s125 = scalar_select %p124, %s15, 1
        %s126 = smul.addr %s125, 2
        %s127 = scalar_lea.vmem %s0, %s126
      $region20: #{sqldepth_forward.71} parent=15 // pred_fallthru
        _
      // Predicated region
      $region21: #{sqldepth_forward.71} parent=15 // pred_check
        %p128 = pneg %p68
      $region22: #{sqldepth_forward.71} parent=15 // pred_check_branch
        %130 = sbr.rel (%p128) target = $region24
      $region23: #{sqldepth_forward.71} parent=15 // pred_region
        %s131 = smul.u32 32, %s16
        %p132 = scmp.lt.s32.totalorder %s15, 1
        %s133 = scalar_select %p132, %s15, 1
        %p134 = scmp.lt.s32.totalorder %s131, 31
        %s135 = scalar_select %p134, %s131, 31
        %s136 = smul.addr %s133, 32
        %s137 = sadd.s32 %s135, %s136
        %s138 = smul.addr %s137, 4
        %s139 = scalar_lea.vmem %s1, %s138
        %s140 = smul.u32 32, %s16
      $region24: #{sqldepth_forward.71} parent=15 // pred_fallthru
        _
    $region16: #{sqldepth_forward.71} parent=5 // pred_fallthru
      _
    %p141 = scmp.le.s32.totalorder 1, %s8
    %p142 = scmp.lt.s32.totalorder %s8, 3
    %p143 = pnand %p141, %p142
    %p144 = pneg %p143
    // Predicated region
    $region25: #{sqldepth_forward.71} parent=5 // pred_check
      _
    $region26: #{sqldepth_forward.71} parent=5 // pred_check_branch
      %146 = sbr.rel (%p143) target = $region28
    $region27: #{sqldepth_forward.71} parent=5 // pred_region
      %s147 = ssub.s32 %s8, 1
      %p148 = scmp.lt.s32.totalorder %s17, 1
      %s149 = scalar_select %p148, %s17, 1
      %s150 = smul.addr %s149, 2
      %s151 = scalar_lea.vmem %s0, %s150
      %p152 = pneg %p46
      %p153 = pneg %p43
      %s154 = smul.u32 32, %s18
      %p155 = scmp.lt.s32.totalorder %s17, 1
      %s156 = scalar_select %p155, %s17, 1
      %p157 = scmp.lt.s32.totalorder %s154, 31
      %s158 = scalar_select %p157, %s154, 31
      %s159 = smul.addr %s156, 32
      %s160 = sadd.s32 %s158, %s159
      %s161 = smul.addr %s160, 4
      %s162 = scalar_lea.vmem %s1, %s161
      %p163 = pneg %p74
      %p164 = pneg %p71
      %p165 = pneg %p102
      %p166 = pneg %p99
      %s167 = smul.u32 2, %s18
      %p168 = scmp.lt.s32.totalorder %s17, 1
      %s169 = scalar_select %p168, %s17, 1
      %p170 = scmp.lt.s32.totalorder %s167, 1
      %s171 = scalar_select %p170, %s167, 1
      %s172 = smul.addr %s169, 2
      %s173 = sadd.s32 %s171, %s172
      %s174 = smul.addr %s173, 4
      %s175 = scalar_lea.vmem %s2, %s174
      %p176 = scmp.lt.s32.totalorder %s17, 1
      %s177 = scalar_select %p176, %s17, 1
      %s178 = smul.addr %s177, 2
      %s179 = scalar_lea.vmem %s0, %s178
      %s180 = smul.u32 32, %s18
      %p181 = scmp.lt.s32.totalorder %s17, 1
      %s182 = scalar_select %p181, %s17, 1
      %p183 = scmp.lt.s32.totalorder %s180, 31
      %s184 = scalar_select %p183, %s180, 31
      %s185 = smul.addr %s182, 32
      %s186 = sadd.s32 %s184, %s185
      %s187 = smul.addr %s186, 4
      %s188 = scalar_lea.vmem %s1, %s187
      %s189 = smul.u32 32, %s18
      %s190 = smul.u32 2, %s18
      %p191 = scmp.lt.s32.totalorder %s17, 1
      %s192 = scalar_select %p191, %s17, 1
      %p193 = scmp.lt.s32.totalorder %s190, 1
      %s194 = scalar_select %p193, %s190, 1
      %s195 = smul.addr %s192, 2
      %s196 = sadd.s32 %s194, %s195
      %s197 = smul.addr %s196, 4
      %s198 = scalar_lea.vmem %s2, %s197
      %s199 = smul.u32 2, %s18
      %v201 = vld [vmem:[%s179] sm:$0x3]
      %v202 = vld [vmem:[%s188] sm:$0xf]
      %v203 = vld [vmem:[%s188 + $0x4] sm:$0xf]
      %v204 = vld [vmem:[%s188 + $0x8] sm:$0xf]
      %v205 = vld [vmem:[%s188 + $0xc] sm:$0xf]
      %v206 = vld [vmem:[%s188 + $0x10] sm:$0xf]
      %v207 = vld [vmem:[%s188 + $0x14] sm:$0xf]
      %v208 = vld [vmem:[%s188 + $0x18] sm:$0xf]
      %v209 = vld [vmem:[%s188 + $0x1c] sm:$0xf]
      %v210 = vld [vmem:[%s188 + $0x20] sm:$0xf]
      %v211 = vld [vmem:[%s188 + $0x24] sm:$0xf]
      %v212 = vld [vmem:[%s188 + $0x28] sm:$0xf]
      %v213 = vld [vmem:[%s188 + $0x2c] sm:$0xf]
      %v214 = vld [vmem:[%s188 + $0x30] sm:$0xf]
      %v215 = vld [vmem:[%s188 + $0x34] sm:$0xf]
      %v216 = vld [vmem:[%s188 + $0x38] sm:$0xf]
      %v217 = vld [vmem:[%s188 + $0x3c] sm:$0xf]
      %v218 = vld [vmem:[%s188 + $0x40] sm:$0xf]
      %v219 = vld [vmem:[%s188 + $0x44] sm:$0xf]
      %v220 = vld [vmem:[%s188 + $0x48] sm:$0xf]
      %v221 = vld [vmem:[%s188 + $0x4c] sm:$0xf]
      %v222 = vld [vmem:[%s188 + $0x50] sm:$0xf]
      %v223 = vld [vmem:[%s188 + $0x54] sm:$0xf]
      %v224 = vld [vmem:[%s188 + $0x58] sm:$0xf]
      %v225 = vld [vmem:[%s188 + $0x5c] sm:$0xf]
      %v226 = vld [vmem:[%s188 + $0x60] sm:$0xf]
      %v227 = vld [vmem:[%s188 + $0x64] sm:$0xf]
      %v228 = vld [vmem:[%s188 + $0x68] sm:$0xf]
      %v229 = vld [vmem:[%s188 + $0x6c] sm:$0xf]
      %v230 = vld [vmem:[%s188 + $0x70] sm:$0xf]
      %v231 = vld [vmem:[%s188 + $0x74] sm:$0xf]
      %v232 = vld [vmem:[%s188 + $0x78] sm:$0xf]
      %v233 = vld [vmem:[%s188 + $0x7c] sm:$0xf]
      %v266 = vunpack.c.l.b16 %v202
      %v267 = vunpack.c.l.b16 %v203
      %v268 = vunpack.c.l.b16 %v204
      %v269 = vunpack.c.l.b16 %v205
      %v270 = vunpack.c.l.b16 %v206
      %v271 = vunpack.c.l.b16 %v207
      %v272 = vunpack.c.l.b16 %v208
      %v273 = vunpack.c.l.b16 %v209
      %v274 = vunpack.c.l.b16 %v210
      %v275 = vunpack.c.l.b16 %v211
      %v276 = vunpack.c.l.b16 %v212
      %v277 = vunpack.c.l.b16 %v213
      %v278 = vunpack.c.l.b16 %v214
      %v279 = vunpack.c.l.b16 %v215
      %v280 = vunpack.c.l.b16 %v216
      %v281 = vunpack.c.l.b16 %v217
      %v282 = vunpack.c.l.b16 %v218
      %v283 = vunpack.c.l.b16 %v219
      %v284 = vunpack.c.l.b16 %v220
      %v285 = vunpack.c.l.b16 %v221
      %v286 = vunpack.c.l.b16 %v222
      %v287 = vunpack.c.l.b16 %v223
      %v288 = vunpack.c.l.b16 %v224
      %v289 = vunpack.c.l.b16 %v225
      %v290 = vunpack.c.l.b16 %v226
      %v291 = vunpack.c.l.b16 %v227
      %v292 = vunpack.c.l.b16 %v228
      %v293 = vunpack.c.l.b16 %v229
      %v294 = vunpack.c.l.b16 %v230
      %v295 = vunpack.c.l.b16 %v231
      %v296 = vunpack.c.l.b16 %v232
      %v297 = vunpack.c.l.b16 %v233
      %v298 = vpack.c.b16 %v267, %v266
      %v299 = vpack.c.b16 %v269, %v268
      %v300 = vpack.c.b16 %v271, %v270
      %v301 = vpack.c.b16 %v273, %v272
      %v302 = vpack.c.b16 %v275, %v274
      %v303 = vpack.c.b16 %v277, %v276
      %v304 = vpack.c.b16 %v279, %v278
      %v305 = vpack.c.b16 %v281, %v280
      %v306 = vpack.c.b16 %v283, %v282
      %v307 = vpack.c.b16 %v285, %v284
      %v308 = vpack.c.b16 %v287, %v286
      %v309 = vpack.c.b16 %v289, %v288
      %v310 = vpack.c.b16 %v291, %v290
      %v311 = vpack.c.b16 %v293, %v292
      %v312 = vpack.c.b16 %v295, %v294
      %v313 = vpack.c.b16 %v297, %v296
      %vm314 = vcmask 261120
      %v316 = vsel %vm314, %v201, 0
      %v319 = vsel %vm314, %v298, 0
      %v322 = vsel %vm314, %v299, 0
      %v325 = vsel %vm314, %v300, 0
      %v328 = vsel %vm314, %v301, 0
      %v331 = vsel %vm314, %v302, 0
      %v334 = vsel %vm314, %v303, 0
      %v337 = vsel %vm314, %v304, 0
      %v340 = vsel %vm314, %v305, 0
      %v343 = vsel %vm314, %v306, 0
      %v346 = vsel %vm314, %v307, 0
      %v349 = vsel %vm314, %v308, 0
      %v352 = vsel %vm314, %v309, 0
      %v355 = vsel %vm314, %v310, 0
      %v358 = vsel %vm314, %v311, 0
      %v361 = vsel %vm314, %v312, 0
      %v364 = vsel %vm314, %v313, 0
      %366 = vmatprep.subr.bf16.mxu0 0
      %367 = vmatpush1.bf16.xpose.msra.mxu0 %v319
      %368 = vmatprep.subr.bf16.mxu0 0
      %369 = vmatpush1.bf16.xpose.msra.mxu0 %v322
      %370 = vmatprep.subr.bf16.mxu0 0
      %371 = vmatpush1.bf16.xpose.msra.mxu0 %v325
      %372 = vmatprep.subr.bf16.mxu0 0
      %373 = vmatpush1.bf16.xpose.msra.mxu0 %v328
      %374 = vmatprep.subr.bf16.mxu0 0
      %375 = vmatpush1.bf16.xpose.msra.mxu0 %v331
      %376 = vmatprep.subr.bf16.mxu0 0
      %377 = vmatpush1.bf16.xpose.msra.mxu0 %v334
      %378 = vmatprep.subr.bf16.mxu0 0
      %379 = vmatpush1.bf16.xpose.msra.mxu0 %v337
      %380 = vmatprep.subr.bf16.mxu0 0
      %381 = vmatpush1.bf16.xpose.msra.mxu0 %v340
      %382 = vmatprep.subr.bf16.mxu0 0
      %383 = vmatpush1.bf16.xpose.msra.mxu0 %v343
      %384 = vmatprep.subr.bf16.mxu0 0
      %385 = vmatpush1.bf16.xpose.msra.mxu0 %v346
      %386 = vmatprep.subr.bf16.mxu0 0
      %387 = vmatpush1.bf16.xpose.msra.mxu0 %v349
      %388 = vmatprep.subr.bf16.mxu0 0
      %389 = vmatpush1.bf16.xpose.msra.mxu0 %v352
      %390 = vmatprep.subr.bf16.mxu0 0
      %391 = vmatpush1.bf16.xpose.msra.mxu0 %v355
      %392 = vmatprep.subr.bf16.mxu0 0
      %393 = vmatpush1.bf16.xpose.msra.mxu0 %v358
      %394 = vmatprep.subr.bf16.mxu0 0
      %395 = vmatpush1.bf16.xpose.msra.mxu0 %v361
      %396 = vmatprep.subr.bf16.mxu0 0
      %397 = vmatpush1.bf16.xpose.msra.mxu0 %v364
      %398 = vmatprep.mubr.bf16.mxu0 0
      %399 = vmatmul.mubr.bf16.gmra.mrb[0].mxu0 %v316
      %v400 = vpop.f32.mrb[0].mxu0
      %v401 = vadd.f32 0.0, %v400
      %v402 = vpop.f32.mrb[0].mxu0
      %v403 = vadd.f32 0.0, %v402
      %v404 = vpop.f32.mrb[0].mxu0
      %v405 = vpop.f32.mrb[0].mxu0
      %406 = vdwg.mxu0
      %v409 = vcombine.low %v401, %v403
      %411 = vst [vmem:[%s198] sm:$0xff] %v409
      %s412 = smul.u32 2, %s18
      %p413 = scmp.lt.s32.totalorder %s17, 1
      %s414 = scalar_select %p413, %s17, 1
      %p415 = scmp.lt.s32.totalorder %s412, 1
      %s416 = scalar_select %p415, %s412, 1
      %s417 = smul.addr %s414, 2
      %s418 = sadd.s32 %s416, %s417
      %s419 = smul.addr %s418, 4
      %s420 = scalar_lea.vmem %s2, %s419
      // Predicated region
      $region29: #{sqldepth_forward.71} parent=27 // pred_check
        %p421 = pneg %p99
      $region30: #{sqldepth_forward.71} parent=27 // pred_check_branch
        %423 = sbr.rel (%p421) target = $region32
      $region31: #{sqldepth_forward.71} parent=27 // pred_region
        %s424 = smul.u32 2, %s18
      $region32: #{sqldepth_forward.71} parent=27 // pred_fallthru
        _
    $region28: #{sqldepth_forward.71} parent=5 // pred_fallthru
      _
    %p425 = scmp.le.s32.totalorder 2, %s8
    // Predicated region
    $region33: #{sqldepth_forward.71} parent=5 // pred_check
      %p426 = pneg %p425
    $region34: #{sqldepth_forward.71} parent=5 // pred_check_branch
      %428 = sbr.rel (%p426) target = $region36
    $region35: #{sqldepth_forward.71} parent=5 // pred_region
      %s429 = ssub.s32 %s8, 2
      // Predicated region
      $region37: #{sqldepth_forward.71} parent=35 // pred_check
        %p430 = pneg %p105
      $region38: #{sqldepth_forward.71} parent=35 // pred_check_branch
        %432 = sbr.rel (%p430) target = $region40
      $region39: #{sqldepth_forward.71} parent=35 // pred_region
        %s433 = smul.u32 2, %s20
        %p434 = scmp.lt.s32.totalorder %s19, 1
        %s435 = scalar_select %p434, %s19, 1
        %p436 = scmp.lt.s32.totalorder %s433, 1
        %s437 = scalar_select %p436, %s433, 1
        %s438 = smul.addr %s435, 2
        %s439 = sadd.s32 %s437, %s438
        %s440 = smul.addr %s439, 4
        %s441 = scalar_lea.vmem %s2, %s440
      $region40: #{sqldepth_forward.71} parent=35 // pred_fallthru
        _
    $region36: #{sqldepth_forward.71} parent=5 // pred_fallthru
      _
  $region6: #{sqldepth_forward.71} parent=0 // loop_footer
    %s12 = sadd.s32 1, %s8
  $region7: #{sqldepth_forward.71} parent=0 // loop_footer_branch
    %7 = sbr.rel target = $region3
  $region8: #{sqldepth_forward.71} parent=0 // loop_exit
    _

// kernel: sqldepth_forward.47
$region0: #{sqldepth_forward.47}
  #allocation0 [shape = 'u32[]', space=smem, size = 0x4, offset = 0x4, fixed_abs, tag = 'smem constant byte address 0x4 - core index']
  #allocation1 [shape = 'u32[144,128]{1,0:T(1,128)}', space=vmem, size = 0x12000, scoped, tag = 'internal scratch']
  #allocation2 [shape = 'f32[8,128]{1,0:T(8,128)}', space=vmem, size = 0x1000, scoped, tag = 'scratch operand']
  %s0 = inlined_call_operand.vmem [shape: bf16[8,1024], index: 0, kind: input, shape index: {}]
  %s1 = inlined_call_operand.vmem [shape: bf16[1024,128], index: 1, kind: input, shape index: {}]
  %s2 = inlined_call_operand.vmem [shape: f32[1,128], index: 2, kind: input, shape index: {}]
  %s3 = inlined_call_operand.vmem [shape: f32[8,128], index: 3, kind: output, shape index: {}]
  %s4 = sld [smem:[#allocation0]]
  $region53: #{sqldepth_forward.47} parent=0
    _
  %s6 = ssub.s32 1, %s4
  %s7 = scalar_select 0, %s6, %s4
  loop: start=0, step=1, limit=4
  $region2: #{sqldepth_forward.47} parent=0 // loop_pre_header
    _
  $region3: #{sqldepth_forward.47} parent=0 // loop_header
    %s9 = sphi 0, %s13
    %p10 = scmp.ge.s32.totalorder %s9, 4
    %s16 = sphi 0, %s35
    %s17 = sphi 0, %s31
    %s18 = sphi 0, %s27
    %s19 = sphi 0, %s16
    %s20 = sphi 0, %s17
    %s21 = sphi 0, %s18
    %s22 = sphi 0, %s19
    %s23 = sphi 0, %s20
    %s24 = sphi 0, %s21
    %s40 = sphi 0, %s42
    %s43 = sphi 0, %s40
    %s44 = sphi 0, %s43
    %s60 = sphi 0, %s44
    %s68 = sphi 0, %s70
    %s71 = sphi 0, %s68
    %s72 = sphi 0, %s71
    %s88 = sphi 0, %s72
    %s94 = sphi 0, %s96
    %s97 = sphi 0, %s94
    %s98 = sphi 0, %s97
    %s114 = sphi 0, %s98
    %s122 = sphi 0, %s124
    %s125 = sphi 0, %s122
    %s126 = sphi 0, %s125
    %s142 = sphi 0, %s126
  $region4: #{sqldepth_forward.47} parent=0 // loop_header_branch
    %12 = sbr.rel (%p10) target = $region8
  $region5: #{sqldepth_forward.47} parent=0 // loop_body
    %s14 = ssub.s32 %s9, 1
    %s15 = ssub.s32 %s9, 2
    %s25 = sadd.s32 1, %s18
    %p26 = scmp.ge.s32.totalorder %s25, 2
    %s27 = scalar_select %p26, 0, %s25
    %s28 = sadd.s32 1, %s17
    %s29 = scalar_select %p26, %s28, %s17
    %p30 = scmp.ge.s32.totalorder %s29, 1
    %s31 = scalar_select %p30, 0, %s29
    %s32 = sadd.s32 1, %s16
    %s33 = scalar_select %p30, %s32, %s16
    %p34 = scmp.ge.s32.totalorder %s33, 1
    %s35 = scalar_select %p34, 0, %s33
    %s36 = ssub.s32 %s16, %s35
    %s37 = ssub.s32 %s18, %s27
    %s38 = sor.u32 %s36, %s37
    %p39 = scmp.eq.s32.totalorder %s38, 0
    %s41 = sadd.s32 %s40, 1
    %s42 = scalar_select %p39, %s40, %s41
    %p45 = pneg %p39
    %p46 = scmp.eq.s32.totalorder %s9, 1
    %p47 = por %p45, %p46
    %p48 = scmp.ne.s32.totalorder %s40, %s43
    %p49 = scmp.eq.s32.totalorder %s9, 0
    %p50 = por %p48, %p49
    %p51 = scmp.ne.s32.totalorder %s40, %s43
    %p52 = scmp.eq.s32.totalorder %s14, 1
    %p53 = por %p51, %p52
    %p54 = scmp.ne.s32.totalorder %s43, %s44
    %p55 = scmp.eq.s32.totalorder %s14, 0
    %p56 = por %p54, %p55
    %p57 = scmp.ne.s32.totalorder %s43, %s44
    %p58 = scmp.eq.s32.totalorder %s15, 1
    %p59 = por %p57, %p58
    %p61 = scmp.ne.s32.totalorder %s44, %s60
    %p62 = scmp.eq.s32.totalorder %s15, 0
    %p63 = por %p61, %p62
    %s64 = ssub.s32 %s18, %s27
    %s65 = ssub.s32 %s17, %s31
    %s66 = sor.u32 %s64, %s65
    %p67 = scmp.eq.s32.totalorder %s66, 0
    %s69 = sadd.s32 %s68, 1
    %s70 = scalar_select %p67, %s68, %s69
    %p73 = pneg %p67
    %p74 = scmp.eq.s32.totalorder %s9, 1
    %p75 = por %p73, %p74
    %p76 = scmp.ne.s32.totalorder %s68, %s71
    %p77 = scmp.eq.s32.totalorder %s9, 0
    %p78 = por %p76, %p77
    %p79 = scmp.ne.s32.totalorder %s68, %s71
    %p80 = scmp.eq.s32.totalorder %s14, 1
    %p81 = por %p79, %p80
    %p82 = scmp.ne.s32.totalorder %s71, %s72
    %p83 = scmp.eq.s32.totalorder %s14, 0
    %p84 = por %p82, %p83
    %p85 = scmp.ne.s32.totalorder %s71, %s72
    %p86 = scmp.eq.s32.totalorder %s15, 1
    %p87 = por %p85, %p86
    %p89 = scmp.ne.s32.totalorder %s72, %s88
    %p90 = scmp.eq.s32.totalorder %s15, 0
    %p91 = por %p89, %p90
    %s92 = ssub.s32 %s17, %s31
    %p93 = scmp.eq.s32.totalorder %s92, 0
    %s95 = sadd.s32 %s94, 1
    %s96 = scalar_select %p93, %s94, %s95
    %p99 = pneg %p93
    %p100 = scmp.eq.s32.totalorder %s9, 1
    %p101 = por %p99, %p100
    %p102 = scmp.ne.s32.totalorder %s94, %s97
    %p103 = scmp.eq.s32.totalorder %s9, 0
    %p104 = por %p102, %p103
    %p105 = scmp.ne.s32.totalorder %s94, %s97
    %p106 = scmp.eq.s32.totalorder %s14, 1
    %p107 = por %p105, %p106
    %p108 = scmp.ne.s32.totalorder %s97, %s98
    %p109 = scmp.eq.s32.totalorder %s14, 0
    %p110 = por %p108, %p109
    %p111 = scmp.ne.s32.totalorder %s97, %s98
    %p112 = scmp.eq.s32.totalorder %s15, 1
    %p113 = por %p111, %p112
    %p115 = scmp.ne.s32.totalorder %s98, %s114
    %p116 = scmp.eq.s32.totalorder %s15, 0
    %p117 = por %p115, %p116
    %s118 = ssub.s32 %s16, %s35
    %s119 = ssub.s32 %s17, %s31
    %s120 = sor.u32 %s118, %s119
    %p121 = scmp.eq.s32.totalorder %s120, 0
    %s123 = sadd.s32 %s122, 1
    %s124 = scalar_select %p121, %s122, %s123
    %p127 = pneg %p121
    %p128 = scmp.eq.s32.totalorder %s9, 1
    %p129 = por %p127, %p128
    %p130 = scmp.ne.s32.totalorder %s122, %s125
    %p131 = scmp.eq.s32.totalorder %s9, 0
    %p132 = por %p130, %p131
    %p133 = scmp.ne.s32.totalorder %s122, %s125
    %p134 = scmp.eq.s32.totalorder %s14, 1
    %p135 = por %p133, %p134
    %p136 = scmp.ne.s32.totalorder %s125, %s126
    %p137 = scmp.eq.s32.totalorder %s14, 0
    %p138 = por %p136, %p137
    %p139 = scmp.ne.s32.totalorder %s125, %s126
    %p140 = scmp.eq.s32.totalorder %s15, 1
    %p141 = por %p139, %p140
    %p143 = scmp.ne.s32.totalorder %s126, %s142
    %p144 = scmp.eq.s32.totalorder %s15, 0
    %p145 = por %p143, %p144
    %p146 = scmp.le.s32.totalorder 1, %s9
    %p147 = scmp.lt.s32.totalorder %s9, 3
    %p148 = pnand %p146, %p147
    %p149 = pneg %p148
    // Predicated region
    $region9: #{sqldepth_forward.47} parent=5 // pred_check
      _
    $region10: #{sqldepth_forward.47} parent=5 // pred_check_branch
      %151 = sbr.rel (%p148) target = $region12
    $region11: #{sqldepth_forward.47} parent=5 // pred_region
      %s152 = ssub.s32 %s9, 1
      // Predicated region
      $region13: #{sqldepth_forward.47} parent=11 // pred_check
        %p153 = pneg %p110
      $region14: #{sqldepth_forward.47} parent=11 // pred_check_branch
        %155 = sbr.rel (%p153) target = $region16
      $region15: #{sqldepth_forward.47} parent=11 // pred_region
        %p156 = scmp.lt.s32.totalorder %s20, 0
        %s157 = scalar_select %p156, %s20, 0
        %s158 = scalar_lea.vmem %s2, %s157
      $region16: #{sqldepth_forward.47} parent=11 // pred_fallthru
        _
    $region12: #{sqldepth_forward.47} parent=5 // pred_fallthru
      _
    %p159 = scmp.lt.s32.totalorder %s9, 2
    // Predicated region
    $region17: #{sqldepth_forward.47} parent=5 // pred_check
      %p160 = pneg %p159
    $region18: #{sqldepth_forward.47} parent=5 // pred_check_branch
      %162 = sbr.rel (%p160) target = $region20
    $region19: #{sqldepth_forward.47} parent=5 // pred_region
      // Predicated region
      $region21: #{sqldepth_forward.47} parent=19 // pred_check
        %p163 = pneg %p50
      $region22: #{sqldepth_forward.47} parent=19 // pred_check_branch
        %165 = sbr.rel (%p163) target = $region24
      $region23: #{sqldepth_forward.47} parent=19 // pred_region
        %s166 = smul.u32 4, %s18
        %p167 = scmp.lt.s32.totalorder %s16, 0
        %s168 = scalar_select %p167, %s16, 0
        %p169 = scmp.lt.s32.totalorder %s166, 7
        %s170 = scalar_select %p169, %s166, 7
        %s171 = smul.addr %s168, 8
        %s172 = sadd.s32 %s170, %s171
        %s173 = smul.addr %s172, 4
        %s174 = scalar_lea.vmem %s0, %s173
        %s175 = smul.u32 4, %s18
      $region24: #{sqldepth_forward.47} parent=19 // pred_fallthru
        _
      // Predicated region
      $region25: #{sqldepth_forward.47} parent=19 // pred_check
        %p176 = pneg %p78
      $region26: #{sqldepth_forward.47} parent=19 // pred_check_branch
        %178 = sbr.rel (%p176) target = $region28
      $region27: #{sqldepth_forward.47} parent=19 // pred_region
        %s179 = smul.u32 64, %s18
        %p180 = scmp.lt.s32.totalorder %s179, 127
        %s181 = scalar_select %p180, %s179, 127
        %p182 = scmp.lt.s32.totalorder %s17, 0
        %s183 = scalar_select %p182, %s17, 0
        %s184 = sadd.s32 %s183, %s181
        %s185 = smul.addr %s184, 4
        %s186 = scalar_lea.vmem %s1, %s185
        %s187 = smul.u32 64, %s18
      $region28: #{sqldepth_forward.47} parent=19 // pred_fallthru
        _
    $region20: #{sqldepth_forward.47} parent=5 // pred_fallthru
      _
    %p188 = scmp.le.s32.totalorder 1, %s9
    %p189 = scmp.lt.s32.totalorder %s9, 3
    %p190 = pnand %p188, %p189
    %p191 = pneg %p190
    // Predicated region
    $region29: #{sqldepth_forward.47} parent=5 // pred_check
      _
    $region30: #{sqldepth_forward.47} parent=5 // pred_check_branch
      %193 = sbr.rel (%p190) target = $region32
    $region31: #{sqldepth_forward.47} parent=5 // pred_region
      %s194 = ssub.s32 %s9, 1
      %s195 = smul.u32 4, %s21
      %p196 = scmp.lt.s32.totalorder %s19, 0
      %s197 = scalar_select %p196, %s19, 0
      %p198 = scmp.lt.s32.totalorder %s195, 7
      %s199 = scalar_select %p198, %s195, 7
      %s200 = smul.addr %s197, 8
      %s201 = sadd.s32 %s199, %s200
      %s202 = smul.addr %s201, 4
      %s203 = scalar_lea.vmem %s0, %s202
      %p204 = pneg %p56
      %p205 = pneg %p53
      %s206 = smul.u32 64, %s21
      %p207 = scmp.lt.s32.totalorder %s206, 127
      %s208 = scalar_select %p207, %s206, 127
      %p209 = scmp.lt.s32.totalorder %s20, 0
      %s210 = scalar_select %p209, %s20, 0
      %s211 = sadd.s32 %s210, %s208
      %s212 = smul.addr %s211, 4
      %s213 = scalar_lea.vmem %s1, %s212
      %p214 = pneg %p84
      %p215 = pneg %p81
      %p216 = scmp.lt.s32.totalorder %s20, 0
      %s217 = scalar_select %p216, %s20, 0
      %s218 = scalar_lea.vmem %s2, %s217
      %p219 = pneg %p110
      %p220 = pneg %p107
      %p221 = pneg %p138
      %p222 = pneg %p135
      %p223 = scmp.lt.s32.totalorder %s19, 0
      %s224 = scalar_select %p223, %s19, 0
      %p225 = scmp.lt.s32.totalorder %s20, 0
      %s226 = scalar_select %p225, %s20, 0
      %s227 = sadd.s32 %s226, %s224
      %s228 = smul.addr %s227, 8
      %s229 = scalar_lea.vmem %s3, %s228
      %s230 = smul.u32 4, %s21
      %p231 = scmp.lt.s32.totalorder %s19, 0
      %s232 = scalar_select %p231, %s19, 0
      %p233 = scmp.lt.s32.totalorder %s230, 7
      %s234 = scalar_select %p233, %s230, 7
      %s235 = smul.addr %s232, 8
      %s236 = sadd.s32 %s234, %s235
      %s237 = smul.addr %s236, 4
      %s238 = scalar_lea.vmem %s0, %s237
      %s239 = smul.u32 4, %s21
      %s240 = smul.u32 64, %s21
      %p241 = scmp.lt.s32.totalorder %s240, 127
      %s242 = scalar_select %p241, %s240, 127
      %p243 = scmp.lt.s32.totalorder %s20, 0
      %s244 = scalar_select %p243, %s20, 0
      %s245 = sadd.s32 %s244, %s242
      %s246 = smul.addr %s245, 4
      %s247 = scalar_lea.vmem %s1, %s246
      %s248 = smul.u32 64, %s21
      %p249 = scmp.lt.s32.totalorder %s20, 0
      %s250 = scalar_select %p249, %s20, 0
      %s251 = scalar_lea.vmem %s2, %s250
      %p252 = scmp.lt.s32.totalorder %s19, 0
      %s253 = scalar_select %p252, %s19, 0
      %p254 = scmp.lt.s32.totalorder %s20, 0
      %s255 = scalar_select %p254, %s20, 0
      %s256 = sadd.s32 %s255, %s253
      %s257 = smul.addr %s256, 8
      %s258 = scalar_lea.vmem %s3, %s257
      %p260 = scmp.eq.s32.totalorder %s21, 0
      // Predicated region
      $region33: #{sqldepth_forward.47} parent=31 // pred_check
        %p261 = pneg %p260
      $region34: #{sqldepth_forward.47} parent=31 // pred_check_branch
        %263 = sbr.rel (%p261) target = $region36
      $region35: #{sqldepth_forward.47} parent=31 // pred_region
        %264 = vst [vmem:[#allocation2] sm:$0xff] 0.0
      $region36: #{sqldepth_forward.47} parent=31 // pred_fallthru
        _
      %v265 = vld [vmem:[#allocation2] sm:$0xff]
      %v266 = vld [vmem:[%s238] sm:$0xff]
      %v267 = vld [vmem:[%s238 + $0x8] sm:$0xff]
      %v268 = vld [vmem:[%s247] sm:$0xf]
      %v269 = vld [vmem:[%s247 + $0x4] sm:$0xf]
      %v270 = vld [vmem:[%s247 + $0x8] sm:$0xf]
      %v271 = vld [vmem:[%s247 + $0xc] sm:$0xf]
      %v272 = vld [vmem:[%s247 + $0x10] sm:$0xf]
      %v273 = vld [vmem:[%s247 + $0x14] sm:$0xf]
      %v274 = vld [vmem:[%s247 + $0x18] sm:$0xf]
      %v275 = vld [vmem:[%s247 + $0x1c] sm:$0xf]
      %v276 = vld [vmem:[%s247 + $0x20] sm:$0xf]
      %v277 = vld [vmem:[%s247 + $0x24] sm:$0xf]
      %v278 = vld [vmem:[%s247 + $0x28] sm:$0xf]
      %v279 = vld [vmem:[%s247 + $0x2c] sm:$0xf]
      %v280 = vld [vmem:[%s247 + $0x30] sm:$0xf]
      %v281 = vld [vmem:[%s247 + $0x34] sm:$0xf]
      %v282 = vld [vmem:[%s247 + $0x38] sm:$0xf]
      %v283 = vld [vmem:[%s247 + $0x3c] sm:$0xf]
      %v284 = vld [vmem:[%s247 + $0x40] sm:$0xf]
      %v285 = vld [vmem:[%s247 + $0x44] sm:$0xf]
      %v286 = vld [vmem:[%s247 + $0x48] sm:$0xf]
      %v287 = vld [vmem:[%s247 + $0x4c] sm:$0xf]
      %v288 = vld [vmem:[%s247 + $0x50] sm:$0xf]
      %v289 = vld [vmem:[%s247 + $0x54] sm:$0xf]
      %v290 = vld [vmem:[%s247 + $0x58] sm:$0xf]
      %v291 = vld [vmem:[%s247 + $0x5c] sm:$0xf]
      %v292 = vld [vmem:[%s247 + $0x60] sm:$0xf]
      %v293 = vld [vmem:[%s247 + $0x64] sm:$0xf]
      %v294 = vld [vmem:[%s247 + $0x68] sm:$0xf]
      %v295 = vld [vmem:[%s247 + $0x6c] sm:$0xf]
      %v296 = vld [vmem:[%s247 + $0x70] sm:$0xf]
      %v297 = vld [vmem:[%s247 + $0x74] sm:$0xf]
      %v298 = vld [vmem:[%s247 + $0x78] sm:$0xf]
      %v299 = vld [vmem:[%s247 + $0x7c] sm:$0xf]
      %v300 = vld [vmem:[%s247 + $0x80] sm:$0xf]
      %v301 = vld [vmem:[%s247 + $0x84] sm:$0xf]
      %v302 = vld [vmem:[%s247 + $0x88] sm:$0xf]
      %v303 = vld [vmem:[%s247 + $0x8c] sm:$0xf]
      %v304 = vld [vmem:[%s247 + $0x90] sm:$0xf]
      %v305 = vld [vmem:[%s247 + $0x94] sm:$0xf]
      %v306 = vld [vmem:[%s247 + $0x98] sm:$0xf]
      %v307 = vld [vmem:[%s247 + $0x9c] sm:$0xf]
      %v308 = vld [vmem:[%s247 + $0xa0] sm:$0xf]
      %v309 = vld [vmem:[%s247 + $0xa4] sm:$0xf]
      %v310 = vld [vmem:[%s247 + $0xa8] sm:$0xf]
      %v311 = vld [vmem:[%s247 + $0xac] sm:$0xf]
      %v312 = vld [vmem:[%s247 + $0xb0] sm:$0xf]
      %v313 = vld [vmem:[%s247 + $0xb4] sm:$0xf]
      %v314 = vld [vmem:[%s247 + $0xb8] sm:$0xf]
      %v315 = vld [vmem:[%s247 + $0xbc] sm:$0xf]
      %v316 = vld [vmem:[%s247 + $0xc0] sm:$0xf]
      %v317 = vld [vmem:[%s247 + $0xc4] sm:$0xf]
      %v318 = vld [vmem:[%s247 + $0xc8] sm:$0xf]
      %v319 = vld [vmem:[%s247 + $0xcc] sm:$0xf]
      %v320 = vld [vmem:[%s247 + $0xd0] sm:$0xf]
      %v321 = vld [vmem:[%s247 + $0xd4] sm:$0xf]
      %v322 = vld [vmem:[%s247 + $0xd8] sm:$0xf]
      %v323 = vld [vmem:[%s247 + $0xdc] sm:$0xf]
      %v324 = vld [vmem:[%s247 + $0xe0] sm:$0xf]
      %v325 = vld [vmem:[%s247 + $0xe4] sm:$0xf]
      %v326 = vld [vmem:[%s247 + $0xe8] sm:$0xf]
      %v327 = vld [vmem:[%s247 + $0xec] sm:$0xf]
      %v328 = vld [vmem:[%s247 + $0xf0] sm:$0xf]
      %v329 = vld [vmem:[%s247 + $0xf4] sm:$0xf]
      %v330 = vld [vmem:[%s247 + $0xf8] sm:$0xf]
      %v331 = vld [vmem:[%s247 + $0xfc] sm:$0xf]
      %v334 = vunpack.c.l.b16 %v266
      %v335 = vunpack.c.h.b16 %v266
      %v336 = vunpack.c.l.b16 %v267
      %v337 = vunpack.c.h.b16 %v267
      %v338 = vpack.c.b16 %v334, %v334
      %v339 = vpack.c.b16 %v335, %v335
      %v340 = vpack.c.b16 %v336, %v336
      %v341 = vpack.c.b16 %v337, %v337
      %v410 = vunpack.c.l.b16 %v268
      %v411 = vunpack.c.l.b16 %v269
      %v412 = vunpack.c.l.b16 %v270
      %v413 = vunpack.c.l.b16 %v271
      %v414 = vunpack.c.l.b16 %v272
      %v415 = vunpack.c.l.b16 %v273
      %v416 = vunpack.c.l.b16 %v274
      %v417 = vunpack.c.l.b16 %v275
      %v418 = vunpack.c.l.b16 %v276
      %v419 = vunpack.c.l.b16 %v277
      %v420 = vunpack.c.l.b16 %v278
      %v421 = vunpack.c.l.b16 %v279
      %v422 = vunpack.c.l.b16 %v280
      %v423 = vunpack.c.l.b16 %v281
      %v424 = vunpack.c.l.b16 %v282
      %v425 = vunpack.c.l.b16 %v283
      %v426 = vunpack.c.l.b16 %v284
      %v427 = vunpack.c.l.b16 %v285
      %v428 = vunpack.c.l.b16 %v286
      %v429 = vunpack.c.l.b16 %v287
      %v430 = vunpack.c.l.b16 %v288
      %v431 = vunpack.c.l.b16 %v289
      %v432 = vunpack.c.l.b16 %v290
      %v433 = vunpack.c.l.b16 %v291
      %v434 = vunpack.c.l.b16 %v292
      %v435 = vunpack.c.l.b16 %v293
      %v436 = vunpack.c.l.b16 %v294
      %v437 = vunpack.c.l.b16 %v295
      %v438 = vunpack.c.l.b16 %v296
      %v439 = vunpack.c.l.b16 %v297
      %v440 = vunpack.c.l.b16 %v298
      %v441 = vunpack.c.l.b16 %v299
      %v442 = vunpack.c.l.b16 %v300
      %v443 = vunpack.c.l.b16 %v301
      %v444 = vunpack.c.l.b16 %v302
      %v445 = vunpack.c.l.b16 %v303
      %v446 = vunpack.c.l.b16 %v304
      %v447 = vunpack.c.l.b16 %v305
      %v448 = vunpack.c.l.b16 %v306
      %v449 = vunpack.c.l.b16 %v307
      %v450 = vunpack.c.l.b16 %v308
      %v451 = vunpack.c.l.b16 %v309
      %v452 = vunpack.c.l.b16 %v310
      %v453 = vunpack.c.l.b16 %v311
      %v454 = vunpack.c.l.b16 %v312
      %v455 = vunpack.c.l.b16 %v313
      %v456 = vunpack.c.l.b16 %v314
      %v457 = vunpack.c.l.b16 %v315
      %v458 = vunpack.c.l.b16 %v316
      %v459 = vunpack.c.l.b16 %v317
      %v460 = vunpack.c.l.b16 %v318
      %v461 = vunpack.c.l.b16 %v319
      %v462 = vunpack.c.l.b16 %v320
      %v463 = vunpack.c.l.b16 %v321
      %v464 = vunpack.c.l.b16 %v322
      %v465 = vunpack.c.l.b16 %v323
      %v466 = vunpack.c.l.b16 %v324
      %v467 = vunpack.c.l.b16 %v325
      %v468 = vunpack.c.l.b16 %v326
      %v469 = vunpack.c.l.b16 %v327
      %v470 = vunpack.c.l.b16 %v328
      %v471 = vunpack.c.l.b16 %v329
      %v472 = vunpack.c.l.b16 %v330
      %v473 = vunpack.c.l.b16 %v331
      %v474 = vpack.c.b16 %v411, %v410
      %v475 = vpack.c.b16 %v413, %v412
      %v476 = vpack.c.b16 %v415, %v414
      %v477 = vpack.c.b16 %v417, %v416
      %v478 = vpack.c.b16 %v419, %v418
      %v479 = vpack.c.b16 %v421, %v420
      %v480 = vpack.c.b16 %v423, %v422
      %v481 = vpack.c.b16 %v425, %v424
      %v482 = vpack.c.b16 %v427, %v426
      %v483 = vpack.c.b16 %v429, %v428
      %v484 = vpack.c.b16 %v431, %v430
      %v485 = vpack.c.b16 %v433, %v432
      %v486 = vpack.c.b16 %v435, %v434
      %v487 = vpack.c.b16 %v437, %v436
      %v488 = vpack.c.b16 %v439, %v438
      %v489 = vpack.c.b16 %v441, %v440
      %v490 = vpack.c.b16 %v443, %v442
      %v491 = vpack.c.b16 %v445, %v444
      %v492 = vpack.c.b16 %v447, %v446
      %v493 = vpack.c.b16 %v449, %v448
      %v494 = vpack.c.b16 %v451, %v450
      %v495 = vpack.c.b16 %v453, %v452
      %v496 = vpack.c.b16 %v455, %v454
      %v497 = vpack.c.b16 %v457, %v456
      %v498 = vpack.c.b16 %v459, %v458
      %v499 = vpack.c.b16 %v461, %v460
      %v500 = vpack.c.b16 %v463, %v462
      %v501 = vpack.c.b16 %v465, %v464
      %v502 = vpack.c.b16 %v467, %v466
      %v503 = vpack.c.b16 %v469, %v468
      %v504 = vpack.c.b16 %v471, %v470
      %v505 = vpack.c.b16 %v473, %v472
      %538 = vmatprep.subr.bf16.mxu0 0
      %539 = vmatpush1.bf16.msra.mxu0 %v474
      %540 = vmatprep.subr.bf16.mxu0 0
      %541 = vmatpush1.bf16.msra.mxu0 %v475
      %542 = vmatprep.subr.bf16.mxu0 0
      %543 = vmatpush1.bf16.msra.mxu0 %v476
      %544 = vmatprep.subr.bf16.mxu0 0
      %545 = vmatpush1.bf16.msra.mxu0 %v477
      %546 = vmatprep.subr.bf16.mxu0 0
      %547 = vmatpush1.bf16.msra.mxu0 %v478
      %548 = vmatprep.subr.bf16.mxu0 0
      %549 = vmatpush1.bf16.msra.mxu0 %v479
      %550 = vmatprep.subr.bf16.mxu0 0
      %551 = vmatpush1.bf16.msra.mxu0 %v480
      %552 = vmatprep.subr.bf16.mxu0 0
      %553 = vmatpush1.bf16.msra.mxu0 %v481
      %554 = vmatprep.subr.bf16.mxu0 0
      %555 = vmatpush1.bf16.msra.mxu0 %v482
      %556 = vmatprep.subr.bf16.mxu0 0
      %557 = vmatpush1.bf16.msra.mxu0 %v483
      %558 = vmatprep.subr.bf16.mxu0 0
      %559 = vmatpush1.bf16.msra.mxu0 %v484
      %560 = vmatprep.subr.bf16.mxu0 0
      %561 = vmatpush1.bf16.msra.mxu0 %v485
      %562 = vmatprep.subr.bf16.mxu0 0
      %563 = vmatpush1.bf16.msra.mxu0 %v486
      %564 = vmatprep.subr.bf16.mxu0 0
      %565 = vmatpush1.bf16.msra.mxu0 %v487
      %566 = vmatprep.subr.bf16.mxu0 0
      %567 = vmatpush1.bf16.msra.mxu0 %v488
      %568 = vmatprep.subr.bf16.mxu0 0
      %569 = vmatpush1.bf16.msra.mxu0 %v489
      %570 = vmatprep.mubr.bf16.mxu0 %v339
      %571 = vmatmul.mubr.bf16.gmra.mrb[0].mxu0 %v338
      %v572 = vpop.f32.mrb[0].mxu0
      %v573 = vadd.f32 0.0, %v572
      %v574 = vpop.f32.mrb[0].mxu0
      %v575 = vpop.f32.mrb[0].mxu0
      %v576 = vpop.f32.mrb[0].mxu0
      %577 = vdwg.mxu0
      %578 = vmatprep.subr.bf16.mxu0 0
      %579 = vmatpush1.bf16.msra.mxu0 %v490
      %580 = vmatprep.subr.bf16.mxu0 0
      %581 = vmatpush1.bf16.msra.mxu0 %v491
      %582 = vmatprep.subr.bf16.mxu0 0
      %583 = vmatpush1.bf16.msra.mxu0 %v492
      %584 = vmatprep.subr.bf16.mxu0 0
      %585 = vmatpush1.bf16.msra.mxu0 %v493
      %586 = vmatprep.subr.bf16.mxu0 0
      %587 = vmatpush1.bf16.msra.mxu0 %v494
      %588 = vmatprep.subr.bf16.mxu0 0
      %589 = vmatpush1.bf16.msra.mxu0 %v495
      %590 = vmatprep.subr.bf16.mxu0 0
      %591 = vmatpush1.bf16.msra.mxu0 %v496
      %592 = vmatprep.subr.bf16.mxu0 0
      %593 = vmatpush1.bf16.msra.mxu0 %v497
      %594 = vmatprep.subr.bf16.mxu0 0
      %595 = vmatpush1.bf16.msra.mxu0 %v498
      %596 = vmatprep.subr.bf16.mxu0 0
      %597 = vmatpush1.bf16.msra.mxu0 %v499
      %598 = vmatprep.subr.bf16.mxu0 0
      %599 = vmatpush1.bf16.msra.mxu0 %v500
      %600 = vmatprep.subr.bf16.mxu0 0
      %601 = vmatpush1.bf16.msra.mxu0 %v501
      %602 = vmatprep.subr.bf16.mxu0 0
      %603 = vmatpush1.bf16.msra.mxu0 %v502
      %604 = vmatprep.subr.bf16.mxu0 0
      %605 = vmatpush1.bf16.msra.mxu0 %v503
      %606 = vmatprep.subr.bf16.mxu0 0
      %607 = vmatpush1.bf16.msra.mxu0 %v504
      %608 = vmatprep.subr.bf16.mxu0 0
      %609 = vmatpush1.bf16.msra.mxu0 %v505
      %610 = vmatprep.mubr.bf16.mxu0 %v341
      %611 = vmatmul.mubr.bf16.gmra.mrb[0].mxu0 %v340
      %v612 = vpop.f32.mrb[0].mxu0
      %v613 = vadd.f32 %v573, %v612
      %v614 = vpop.f32.mrb[0].mxu0
      %v615 = vpop.f32.mrb[0].mxu0
      %v616 = vpop.f32.mrb[0].mxu0
      %617 = vdwg.mxu0
      %v618 = vadd.f32 %v265, %v613
      %619 = vst [vmem:[#allocation2] sm:$0xff] %v618
      %p620 = scmp.eq.s32.totalorder %s21, 1
      // Predicated region
      $region37: #{sqldepth_forward.47} parent=31 // pred_check
        %p621 = pneg %p620
      $region38: #{sqldepth_forward.47} parent=31 // pred_check_branch
        %623 = sbr.rel (%p621) target = $region40
      $region39: #{sqldepth_forward.47} parent=31 // pred_region
        %v624 = vld [vmem:[#allocation2] sm:$0xff]
        %v625 = vld [vmem:[%s251] sm:$0x1]
        %v627 = vlaneseq
        %v628 = vshrl.u32 %v627, 7
        %v629 = vsub.s32 0, %v628
        %v630 = vrot.slane %v625, %v629
        %v632 = vadd.f32 %v624, %v630
        %633 = vst [vmem:[%s258] sm:$0xff] %v632
      $region40: #{sqldepth_forward.47} parent=31 // pred_fallthru
        _
      %p634 = scmp.lt.s32.totalorder %s19, 0
      %s635 = scalar_select %p634, %s19, 0
      %p636 = scmp.lt.s32.totalorder %s20, 0
      %s637 = scalar_select %p636, %s20, 0
      %s638 = sadd.s32 %s637, %s635
      %s639 = smul.addr %s638, 8
      %s640 = scalar_lea.vmem %s3, %s639
      // Predicated region
      $region41: #{sqldepth_forward.47} parent=31 // pred_check
        %p641 = pneg %p135
      $region42: #{sqldepth_forward.47} parent=31 // pred_check_branch
        %643 = sbr.rel (%p641) target = $region44
      $region43: #{sqldepth_forward.47} parent=31 // pred_region
        _
      $region44: #{sqldepth_forward.47} parent=31 // pred_fallthru
        _
      // Predicated region
      $region45: #{sqldepth_forward.47} parent=31 // pred_check
        %p644 = pneg %p135
      $region46: #{sqldepth_forward.47} parent=31 // pred_check_branch
        %646 = sbr.rel (%p644) target = $region48
      $region47: #{sqldepth_forward.47} parent=31 // pred_region
        %p647 = scmp.lt.s32.totalorder %s19, 0
        %s648 = scalar_select %p647, %s19, 0
        %p649 = scmp.lt.s32.totalorder %s20, 0
        %s650 = scalar_select %p649, %s20, 0
        %s651 = sadd.s32 %s650, %s648
        %s652 = smul.addr %s651, 8
        %s653 = scalar_lea.vmem %s3, %s652
      $region48: #{sqldepth_forward.47} parent=31 // pred_fallthru
        _
    $region32: #{sqldepth_forward.47} parent=5 // pred_fallthru
      _
    %p654 = scmp.le.s32.totalorder 2, %s9
    // Predicated region
    $region49: #{sqldepth_forward.47} parent=5 // pred_check
      %p655 = pneg %p654
    $region50: #{sqldepth_forward.47} parent=5 // pred_check_branch
      %657 = sbr.rel (%p655) target = $region52
    $region51: #{sqldepth_forward.47} parent=5 // pred_region
      %s658 = ssub.s32 %s9, 2
    $region52: #{sqldepth_forward.47} parent=5 // pred_fallthru
      _
  $region6: #{sqldepth_forward.47} parent=0 // loop_footer
    %s13 = sadd.s32 1, %s9
  $region7: #{sqldepth_forward.47} parent=0 // loop_footer_branch
    %8 = sbr.rel target = $region3
  $region8: #{sqldepth_forward.47} parent=0 // loop_exit
    _

// kernel: sqldepth_forward.73
$region0: #{sqldepth_forward.73}
  #allocation0 [shape = 'u32[]', space=smem, size = 0x4, offset = 0x4, fixed_abs, tag = 'smem constant byte address 0x4 - core index']
  #allocation1 [shape = 'u32[144,128]{1,0:T(1,128)}', space=vmem, size = 0x12000, scoped, tag = 'internal scratch']
  #allocation2 [shape = 'f32[4,32]{1,0:T(4,128)}', space=vmem, size = 0x800, scoped, tag = 'scratch operand']
  %s0 = inlined_call_operand.vmem [shape: bf16[2,4,256], index: 0, kind: input, shape index: {}]
  %s1 = inlined_call_operand.vmem [shape: bf16[2,256,32], index: 1, kind: input, shape index: {}]
  %s2 = inlined_call_operand.vmem [shape: f32[2,4,32], index: 2, kind: output, shape index: {}]
  %s3 = sld [smem:[#allocation0]]
  $region49: #{sqldepth_forward.73} parent=0
    _
  %s5 = ssub.s32 1, %s3
  %s6 = scalar_select 0, %s5, %s3
  loop: start=0, step=1, limit=4
  $region2: #{sqldepth_forward.73} parent=0 // loop_pre_header
    _
  $region3: #{sqldepth_forward.73} parent=0 // loop_header
    %s8 = sphi 0, %s12
    %p9 = scmp.ge.s32.totalorder %s8, 4
    %s15 = sphi 0, %s27
    %s16 = sphi 0, %s23
    %s17 = sphi 0, %s15
    %s18 = sphi 0, %s16
    %s19 = sphi 0, %s17
    %s20 = sphi 0, %s18
    %s32 = sphi 0, %s34
    %s35 = sphi 0, %s32
    %s36 = sphi 0, %s35
    %s52 = sphi 0, %s36
    %s60 = sphi 0, %s62
    %s63 = sphi 0, %s60
    %s64 = sphi 0, %s63
    %s80 = sphi 0, %s64
    %s86 = sphi 0, %s88
    %s89 = sphi 0, %s86
    %s90 = sphi 0, %s89
    %s106 = sphi 0, %s90
  $region4: #{sqldepth_forward.73} parent=0 // loop_header_branch
    %11 = sbr.rel (%p9) target = $region8
  $region5: #{sqldepth_forward.73} parent=0 // loop_body
    %s13 = ssub.s32 %s8, 1
    %s14 = ssub.s32 %s8, 2
    %s21 = sadd.s32 1, %s16
    %p22 = scmp.ge.s32.totalorder %s21, 1
    %s23 = scalar_select %p22, 0, %s21
    %s24 = sadd.s32 1, %s15
    %s25 = scalar_select %p22, %s24, %s15
    %p26 = scmp.ge.s32.totalorder %s25, 2
    %s27 = scalar_select %p26, 0, %s25
    %s28 = ssub.s32 %s15, %s27
    %s29 = ssub.s32 %s16, %s23
    %s30 = sor.u32 %s28, %s29
    %p31 = scmp.eq.s32.totalorder %s30, 0
    %s33 = sadd.s32 %s32, 1
    %s34 = scalar_select %p31, %s32, %s33
    %p37 = pneg %p31
    %p38 = scmp.eq.s32.totalorder %s8, 1
    %p39 = por %p37, %p38
    %p40 = scmp.ne.s32.totalorder %s32, %s35
    %p41 = scmp.eq.s32.totalorder %s8, 0
    %p42 = por %p40, %p41
    %p43 = scmp.ne.s32.totalorder %s32, %s35
    %p44 = scmp.eq.s32.totalorder %s13, 1
    %p45 = por %p43, %p44
    %p46 = scmp.ne.s32.totalorder %s35, %s36
    %p47 = scmp.eq.s32.totalorder %s13, 0
    %p48 = por %p46, %p47
    %p49 = scmp.ne.s32.totalorder %s35, %s36
    %p50 = scmp.eq.s32.totalorder %s14, 1
    %p51 = por %p49, %p50
    %p53 = scmp.ne.s32.totalorder %s36, %s52
    %p54 = scmp.eq.s32.totalorder %s14, 0
    %p55 = por %p53, %p54
    %s56 = ssub.s32 %s15, %s27
    %s57 = ssub.s32 %s16, %s23
    %s58 = sor.u32 %s56, %s57
    %p59 = scmp.eq.s32.totalorder %s58, 0
    %s61 = sadd.s32 %s60, 1
    %s62 = scalar_select %p59, %s60, %s61
    %p65 = pneg %p59
    %p66 = scmp.eq.s32.totalorder %s8, 1
    %p67 = por %p65, %p66
    %p68 = scmp.ne.s32.totalorder %s60, %s63
    %p69 = scmp.eq.s32.totalorder %s8, 0
    %p70 = por %p68, %p69
    %p71 = scmp.ne.s32.totalorder %s60, %s63
    %p72 = scmp.eq.s32.totalorder %s13, 1
    %p73 = por %p71, %p72
    %p74 = scmp.ne.s32.totalorder %s63, %s64
    %p75 = scmp.eq.s32.totalorder %s13, 0
    %p76 = por %p74, %p75
    %p77 = scmp.ne.s32.totalorder %s63, %s64
    %p78 = scmp.eq.s32.totalorder %s14, 1
    %p79 = por %p77, %p78
    %p81 = scmp.ne.s32.totalorder %s64, %s80
    %p82 = scmp.eq.s32.totalorder %s14, 0
    %p83 = por %p81, %p82
    %s84 = ssub.s32 %s15, %s27
    %p85 = scmp.eq.s32.totalorder %s84, 0
    %s87 = sadd.s32 %s86, 1
    %s88 = scalar_select %p85, %s86, %s87
    %p91 = pneg %p85
    %p92 = scmp.eq.s32.totalorder %s8, 1
    %p93 = por %p91, %p92
    %p94 = scmp.ne.s32.totalorder %s86, %s89
    %p95 = scmp.eq.s32.totalorder %s8, 0
    %p96 = por %p94, %p95
    %p97 = scmp.ne.s32.totalorder %s86, %s89
    %p98 = scmp.eq.s32.totalorder %s13, 1
    %p99 = por %p97, %p98
    %p100 = scmp.ne.s32.totalorder %s89, %s90
    %p101 = scmp.eq.s32.totalorder %s13, 0
    %p102 = por %p100, %p101
    %p103 = scmp.ne.s32.totalorder %s89, %s90
    %p104 = scmp.eq.s32.totalorder %s14, 1
    %p105 = por %p103, %p104
    %p107 = scmp.ne.s32.totalorder %s90, %s106
    %p108 = scmp.eq.s32.totalorder %s14, 0
    %p109 = por %p107, %p108
    %p110 = scmp.le.s32.totalorder 1, %s8
    %p111 = scmp.lt.s32.totalorder %s8, 3
    %p112 = pnand %p110, %p111
    %p113 = pneg %p112
    // Predicated region
    $region9: #{sqldepth_forward.73} parent=5 // pred_check
      _
    $region10: #{sqldepth_forward.73} parent=5 // pred_check_branch
      %115 = sbr.rel (%p112) target = $region12
    $region11: #{sqldepth_forward.73} parent=5 // pred_region
      %s116 = ssub.s32 %s8, 1
    $region12: #{sqldepth_forward.73} parent=5 // pred_fallthru
      _
    %p117 = scmp.lt.s32.totalorder %s8, 2
    // Predicated region
    $region13: #{sqldepth_forward.73} parent=5 // pred_check
      %p118 = pneg %p117
    $region14: #{sqldepth_forward.73} parent=5 // pred_check_branch
      %120 = sbr.rel (%p118) target = $region16
    $region15: #{sqldepth_forward.73} parent=5 // pred_region
      // Predicated region
      $region17: #{sqldepth_forward.73} parent=15 // pred_check
        %p121 = pneg %p42
      $region18: #{sqldepth_forward.73} parent=15 // pred_check_branch
        %123 = sbr.rel (%p121) target = $region20
      $region19: #{sqldepth_forward.73} parent=15 // pred_region
        %s124 = smul.u32 2, %s16
        %p125 = scmp.lt.s32.totalorder %s15, 1
        %s126 = scalar_select %p125, %s15, 1
        %p127 = scmp.lt.s32.totalorder %s124, 1
        %s128 = scalar_select %p127, %s124, 1
        %s129 = smul.addr %s126, 2
        %s130 = sadd.s32 %s128, %s129
        %s131 = smul.addr %s130, 2
        %s132 = scalar_lea.vmem %s0, %s131
        %s133 = smul.u32 2, %s16
      $region20: #{sqldepth_forward.73} parent=15 // pred_fallthru
        _
      // Predicated region
      $region21: #{sqldepth_forward.73} parent=15 // pred_check
        %p134 = pneg %p70
      $region22: #{sqldepth_forward.73} parent=15 // pred_check_branch
        %136 = sbr.rel (%p134) target = $region24
      $region23: #{sqldepth_forward.73} parent=15 // pred_region
        %s137 = smul.u32 32, %s16
        %p138 = scmp.lt.s32.totalorder %s15, 1
        %s139 = scalar_select %p138, %s15, 1
        %p140 = scmp.lt.s32.totalorder %s137, 31
        %s141 = scalar_select %p140, %s137, 31
        %s142 = smul.addr %s139, 32
        %s143 = sadd.s32 %s141, %s142
        %s144 = smul.addr %s143, 4
        %s145 = scalar_lea.vmem %s1, %s144
        %s146 = smul.u32 32, %s16
      $region24: #{sqldepth_forward.73} parent=15 // pred_fallthru
        _
    $region16: #{sqldepth_forward.73} parent=5 // pred_fallthru
      _
    %p147 = scmp.le.s32.totalorder 1, %s8
    %p148 = scmp.lt.s32.totalorder %s8, 3
    %p149 = pnand %p147, %p148
    %p150 = pneg %p149
    // Predicated region
    $region25: #{sqldepth_forward.73} parent=5 // pred_check
      _
    $region26: #{sqldepth_forward.73} parent=5 // pred_check_branch
      %152 = sbr.rel (%p149) target = $region28
    $region27: #{sqldepth_forward.73} parent=5 // pred_region
      %s153 = ssub.s32 %s8, 1
      %s154 = smul.u32 2, %s18
      %p155 = scmp.lt.s32.totalorder %s17, 1
      %s156 = scalar_select %p155, %s17, 1
      %p157 = scmp.lt.s32.totalorder %s154, 1
      %s158 = scalar_select %p157, %s154, 1
      %s159 = smul.addr %s156, 2
      %s160 = sadd.s32 %s158, %s159
      %s161 = smul.addr %s160, 2
      %s162 = scalar_lea.vmem %s0, %s161
      %p163 = pneg %p48
      %p164 = pneg %p45
      %s165 = smul.u32 32, %s18
      %p166 = scmp.lt.s32.totalorder %s17, 1
      %s167 = scalar_select %p166, %s17, 1
      %p168 = scmp.lt.s32.totalorder %s165, 31
      %s169 = scalar_select %p168, %s165, 31
      %s170 = smul.addr %s167, 32
      %s171 = sadd.s32 %s169, %s170
      %s172 = smul.addr %s171, 4
      %s173 = scalar_lea.vmem %s1, %s172
      %p174 = pneg %p76
      %p175 = pneg %p73
      %p176 = pneg %p102
      %p177 = pneg %p99
      %p178 = scmp.lt.s32.totalorder %s17, 1
      %s179 = scalar_select %p178, %s17, 1
      %s180 = smul.addr %s179, 4
      %s181 = scalar_lea.vmem %s2, %s180
      %s182 = smul.u32 2, %s18
      %p183 = scmp.lt.s32.totalorder %s17, 1
      %s184 = scalar_select %p183, %s17, 1
      %p185 = scmp.lt.s32.totalorder %s182, 1
      %s186 = scalar_select %p185, %s182, 1
      %s187 = smul.addr %s184, 2
      %s188 = sadd.s32 %s186, %s187
      %s189 = smul.addr %s188, 2
      %s190 = scalar_lea.vmem %s0, %s189
      %s191 = smul.u32 2, %s18
      %s192 = smul.u32 32, %s18
      %p193 = scmp.lt.s32.totalorder %s17, 1
      %s194 = scalar_select %p193, %s17, 1
      %p195 = scmp.lt.s32.totalorder %s192, 31
      %s196 = scalar_select %p195, %s192, 31
      %s197 = smul.addr %s194, 32
      %s198 = sadd.s32 %s196, %s197
      %s199 = smul.addr %s198, 4
      %s200 = scalar_lea.vmem %s1, %s199
      %s201 = smul.u32 32, %s18
      %p202 = scmp.lt.s32.totalorder %s17, 1
      %s203 = scalar_select %p202, %s17, 1
      %s204 = smul.addr %s203, 4
      %s205 = scalar_lea.vmem %s2, %s204
      %p207 = scmp.eq.s32.totalorder %s18, 0
      // Predicated region
      $region29: #{sqldepth_forward.73} parent=27 // pred_check
        %p208 = pneg %p207
      $region30: #{sqldepth_forward.73} parent=27 // pred_check_branch
        %210 = sbr.rel (%p208) target = $region32
      $region31: #{sqldepth_forward.73} parent=27 // pred_region
        %vm211 = vcmask 257024
        %212 = vst.msk [vmem:[#allocation2] sm:$0xf] %vm211, 0.0
      $region32: #{sqldepth_forward.73} parent=27 // pred_fallthru
        _
      %v213 = vld [vmem:[#allocation2] sm:$0xf]
      %v214 = vld [vmem:[%s190] sm:$0xf]
      %v215 = vld [vmem:[%s200] sm:$0xf]
      %v216 = vld [vmem:[%s200 + $0x4] sm:$0xf]
      %v217 = vld [vmem:[%s200 + $0x8] sm:$0xf]
      %v218 = vld [vmem:[%s200 + $0xc] sm:$0xf]
      %v219 = vld [vmem:[%s200 + $0x10] sm:$0xf]
      %v220 = vld [vmem:[%s200 + $0x14] sm:$0xf]
      %v221 = vld [vmem:[%s200 + $0x18] sm:$0xf]
      %v222 = vld [vmem:[%s200 + $0x1c] sm:$0xf]
      %v223 = vld [vmem:[%s200 + $0x20] sm:$0xf]
      %v224 = vld [vmem:[%s200 + $0x24] sm:$0xf]
      %v225 = vld [vmem:[%s200 + $0x28] sm:$0xf]
      %v226 = vld [vmem:[%s200 + $0x2c] sm:$0xf]
      %v227 = vld [vmem:[%s200 + $0x30] sm:$0xf]
      %v228 = vld [vmem:[%s200 + $0x34] sm:$0xf]
      %v229 = vld [vmem:[%s200 + $0x38] sm:$0xf]
      %v230 = vld [vmem:[%s200 + $0x3c] sm:$0xf]
      %v231 = vld [vmem:[%s200 + $0x40] sm:$0xf]
      %v232 = vld [vmem:[%s200 + $0x44] sm:$0xf]
      %v233 = vld [vmem:[%s200 + $0x48] sm:$0xf]
      %v234 = vld [vmem:[%s200 + $0x4c] sm:$0xf]
      %v235 = vld [vmem:[%s200 + $0x50] sm:$0xf]
      %v236 = vld [vmem:[%s200 + $0x54] sm:$0xf]
      %v237 = vld [vmem:[%s200 + $0x58] sm:$0xf]
      %v238 = vld [vmem:[%s200 + $0x5c] sm:$0xf]
      %v239 = vld [vmem:[%s200 + $0x60] sm:$0xf]
      %v240 = vld [vmem:[%s200 + $0x64] sm:$0xf]
      %v241 = vld [vmem:[%s200 + $0x68] sm:$0xf]
      %v242 = vld [vmem:[%s200 + $0x6c] sm:$0xf]
      %v243 = vld [vmem:[%s200 + $0x70] sm:$0xf]
      %v244 = vld [vmem:[%s200 + $0x74] sm:$0xf]
      %v245 = vld [vmem:[%s200 + $0x78] sm:$0xf]
      %v246 = vld [vmem:[%s200 + $0x7c] sm:$0xf]
      %v249 = vunpack.c.l.s4 1983009808
      %v250 = vunpack.c.0.s8 %v249
      %v251 = vlaneseq
      %v252 = vshrl.u32 %v251, 7
      %v253 = vsub.s32 %v250, %v252
      %v254 = vrot.slane %v214, %v253
      %v255 = vcombine.high %v254, %v254
      %v290 = vunpack.c.l.b16 %v215
      %v291 = vunpack.c.l.b16 %v216
      %v292 = vunpack.c.l.b16 %v217
      %v293 = vunpack.c.l.b16 %v218
      %v294 = vunpack.c.l.b16 %v219
      %v295 = vunpack.c.l.b16 %v220
      %v296 = vunpack.c.l.b16 %v221
      %v297 = vunpack.c.l.b16 %v222
      %v298 = vunpack.c.l.b16 %v223
      %v299 = vunpack.c.l.b16 %v224
      %v300 = vunpack.c.l.b16 %v225
      %v301 = vunpack.c.l.b16 %v226
      %v302 = vunpack.c.l.b16 %v227
      %v303 = vunpack.c.l.b16 %v228
      %v304 = vunpack.c.l.b16 %v229
      %v305 = vunpack.c.l.b16 %v230
      %v306 = vunpack.c.l.b16 %v231
      %v307 = vunpack.c.l.b16 %v232
      %v308 = vunpack.c.l.b16 %v233
      %v309 = vunpack.c.l.b16 %v234
      %v310 = vunpack.c.l.b16 %v235
      %v311 = vunpack.c.l.b16 %v236
      %v312 = vunpack.c.l.b16 %v237
      %v313 = vunpack.c.l.b16 %v238
      %v314 = vunpack.c.l.b16 %v239
      %v315 = vunpack.c.l.b16 %v240
      %v316 = vunpack.c.l.b16 %v241
      %v317 = vunpack.c.l.b16 %v242
      %v318 = vunpack.c.l.b16 %v243
      %v319 = vunpack.c.l.b16 %v244
      %v320 = vunpack.c.l.b16 %v245
      %v321 = vunpack.c.l.b16 %v246
      %v322 = vpack.c.b16 %v291, %v290
      %v323 = vpack.c.b16 %v293, %v292
      %v324 = vpack.c.b16 %v295, %v294
      %v325 = vpack.c.b16 %v297, %v296
      %v326 = vpack.c.b16 %v299, %v298
      %v327 = vpack.c.b16 %v301, %v300
      %v328 = vpack.c.b16 %v303, %v302
      %v329 = vpack.c.b16 %v305, %v304
      %v330 = vpack.c.b16 %v307, %v306
      %v331 = vpack.c.b16 %v309, %v308
      %v332 = vpack.c.b16 %v311, %v310
      %v333 = vpack.c.b16 %v313, %v312
      %v334 = vpack.c.b16 %v315, %v314
      %v335 = vpack.c.b16 %v317, %v316
      %v336 = vpack.c.b16 %v319, %v318
      %v337 = vpack.c.b16 %v321, %v320
      %354 = vmatprep.subr.bf16.mxu0 0
      %355 = vmatpush1.bf16.msra.mxu0 %v322
      %356 = vmatprep.subr.bf16.mxu0 0
      %357 = vmatpush1.bf16.msra.mxu0 %v323
      %358 = vmatprep.subr.bf16.mxu0 0
      %359 = vmatpush1.bf16.msra.mxu0 %v324
      %360 = vmatprep.subr.bf16.mxu0 0
      %361 = vmatpush1.bf16.msra.mxu0 %v325
      %362 = vmatprep.subr.bf16.mxu0 0
      %363 = vmatpush1.bf16.msra.mxu0 %v326
      %364 = vmatprep.subr.bf16.mxu0 0
      %365 = vmatpush1.bf16.msra.mxu0 %v327
      %366 = vmatprep.subr.bf16.mxu0 0
      %367 = vmatpush1.bf16.msra.mxu0 %v328
      %368 = vmatprep.subr.bf16.mxu0 0
      %369 = vmatpush1.bf16.msra.mxu0 %v329
      %370 = vmatprep.subr.bf16.mxu0 0
      %371 = vmatpush1.bf16.msra.mxu0 %v330
      %372 = vmatprep.subr.bf16.mxu0 0
      %373 = vmatpush1.bf16.msra.mxu0 %v331
      %374 = vmatprep.subr.bf16.mxu0 0
      %375 = vmatpush1.bf16.msra.mxu0 %v332
      %376 = vmatprep.subr.bf16.mxu0 0
      %377 = vmatpush1.bf16.msra.mxu0 %v333
      %378 = vmatprep.subr.bf16.mxu0 0
      %379 = vmatpush1.bf16.msra.mxu0 %v334
      %380 = vmatprep.subr.bf16.mxu0 0
      %381 = vmatpush1.bf16.msra.mxu0 %v335
      %382 = vmatprep.subr.bf16.mxu0 0
      %383 = vmatpush1.bf16.msra.mxu0 %v336
      %384 = vmatprep.subr.bf16.mxu0 0
      %385 = vmatpush1.bf16.msra.mxu0 %v337
      %386 = vmatprep.mubr.bf16.mxu0 %v255
      %387 = vmatmul.mubr.bf16.gmra.mrb[0].mxu0 %v254
      %v388 = vpop.f32.mrb[0].mxu0
      %v389 = vadd.f32 0.0, %v388
      %v390 = vpop.f32.mrb[0].mxu0
      %v391 = vpop.f32.mrb[0].mxu0
      %v392 = vpop.f32.mrb[0].mxu0
      %393 = vdwg.mxu0
      %v394 = vadd.f32 %v213, %v389
      %vm395 = vcmask 257024
      %396 = vst.msk [vmem:[#allocation2] sm:$0xf] %vm395, %v394
      // Predicated region
      $region33: #{sqldepth_forward.73} parent=27 // pred_check
        %p397 = pneg %p207
      $region34: #{sqldepth_forward.73} parent=27 // pred_check_branch
        %399 = sbr.rel (%p397) target = $region36
      $region35: #{sqldepth_forward.73} parent=27 // pred_region
        %v400 = vld [vmem:[#allocation2] sm:$0xf]
        %401 = vst.msk [vmem:[%s205] sm:$0xf] %vm395, %v400
      $region36: #{sqldepth_forward.73} parent=27 // pred_fallthru
        _
      %p402 = scmp.lt.s32.totalorder %s17, 1
      %s403 = scalar_select %p402, %s17, 1
      %s404 = smul.addr %s403, 4
      %s405 = scalar_lea.vmem %s2, %s404
      // Predicated region
      $region37: #{sqldepth_forward.73} parent=27 // pred_check
        %p406 = pneg %p99
      $region38: #{sqldepth_forward.73} parent=27 // pred_check_branch
        %408 = sbr.rel (%p406) target = $region40
      $region39: #{sqldepth_forward.73} parent=27 // pred_region
        _
      $region40: #{sqldepth_forward.73} parent=27 // pred_fallthru
        _
    $region28: #{sqldepth_forward.73} parent=5 // pred_fallthru
      _
    %p409 = scmp.le.s32.totalorder 2, %s8
    // Predicated region
    $region41: #{sqldepth_forward.73} parent=5 // pred_check
      %p410 = pneg %p409
    $region42: #{sqldepth_forward.73} parent=5 // pred_check_branch
      %412 = sbr.rel (%p410) target = $region44
    $region43: #{sqldepth_forward.73} parent=5 // pred_region
      %s413 = ssub.s32 %s8, 2
      // Predicated region
      $region45: #{sqldepth_forward.73} parent=43 // pred_check
        %p414 = pneg %p105
      $region46: #{sqldepth_forward.73} parent=43 // pred_check_branch
        %416 = sbr.rel (%p414) target = $region48
      $region47: #{sqldepth_forward.73} parent=43 // pred_region
        %p417 = scmp.lt.s32.totalorder %s19, 1
        %s418 = scalar_select %p417, %s19, 1
        %s419 = smul.addr %s418, 4
        %s420 = scalar_lea.vmem %s2, %s419
      $region48: #{sqldepth_forward.73} parent=43 // pred_fallthru
        _
    $region44: #{sqldepth_forward.73} parent=5 // pred_fallthru
      _
  $region6: #{sqldepth_forward.73} parent=0 // loop_footer
    %s12 = sadd.s32 1, %s8
  $region7: #{sqldepth_forward.73} parent=0 // loop_footer_branch
    %7 = sbr.rel target = $region3
  $region8: #{sqldepth_forward.73} parent=0 // loop_exit
    _

// kernel: sqldepth_forward.74
$region0: #{sqldepth_forward.74}
  #allocation0 [shape = 'u32[]', space=smem, size = 0x4, offset = 0x4, fixed_abs, tag = 'smem constant byte address 0x4 - core index']
  #allocation1 [shape = 'u32[144,128]{1,0:T(1,128)}', space=vmem, size = 0x12000, scoped, tag = 'internal scratch']
  #allocation2 [shape = 'f32[8,128]{1,0:T(8,128)}', space=vmem, size = 0x1000, scoped, tag = 'scratch operand']
  %s0 = inlined_call_operand.vmem [shape: bf16[8,128], index: 0, kind: input, shape index: {}]
  %s1 = inlined_call_operand.vmem [shape: bf16[128,128], index: 1, kind: input, shape index: {}]
  %s2 = inlined_call_operand.vmem [shape: f32[1,128], index: 2, kind: input, shape index: {}]
  %s3 = inlined_call_operand.vmem [shape: f32[8,128], index: 3, kind: output, shape index: {}]
  %s4 = sld [smem:[#allocation0]]
  $region30: #{sqldepth_forward.74} parent=0
    _
  %s6 = ssub.s32 1, %s4
  %s7 = scalar_select 0, %s6, %s4
  // Predicated region
  $region2: #{sqldepth_forward.74} parent=0 // pred_check
    _
  $region3: #{sqldepth_forward.74} parent=0 // pred_check_branch
    %9 = sbr.rel (0) target = $region5
  $region4: #{sqldepth_forward.74} parent=0 // pred_region
    _
  $region5: #{sqldepth_forward.74} parent=0 // pred_fallthru
    _
  // Predicated region
  $region6: #{sqldepth_forward.74} parent=0 // pred_check
    _
  $region7: #{sqldepth_forward.74} parent=0 // pred_check_branch
    %11 = sbr.rel (0) target = $region9
  $region8: #{sqldepth_forward.74} parent=0 // pred_region
    _
  $region9: #{sqldepth_forward.74} parent=0 // pred_fallthru
    _
  // Predicated region
  $region10: #{sqldepth_forward.74} parent=0 // pred_check
    _
  $region11: #{sqldepth_forward.74} parent=0 // pred_check_branch
    %13 = sbr.rel (0) target = $region13
  $region12: #{sqldepth_forward.74} parent=0 // pred_region
    _
  $region13: #{sqldepth_forward.74} parent=0 // pred_fallthru
    _
  %p15 = scmp.eq.s32.totalorder 0, 0
  // Predicated region
  $region14: #{sqldepth_forward.74} parent=0 // pred_check
    %p16 = pneg %p15
  $region15: #{sqldepth_forward.74} parent=0 // pred_check_branch
    %18 = sbr.rel (%p16) target = $region17
  $region16: #{sqldepth_forward.74} parent=0 // pred_region
    %19 = vst [vmem:[#allocation2] sm:$0xff] 0.0
  $region17: #{sqldepth_forward.74} parent=0 // pred_fallthru
    _
  %v20 = vld [vmem:[#allocation2] sm:$0xff]
  %v21 = vld [vmem:[%s0] sm:$0xf]
  %v22 = vld [vmem:[%s1] sm:$0xf]
  %v23 = vld [vmem:[%s1 + $0x4] sm:$0xf]
  %v24 = vld [vmem:[%s1 + $0x8] sm:$0xf]
  %v25 = vld [vmem:[%s1 + $0xc] sm:$0xf]
  %v26 = vld [vmem:[%s1 + $0x10] sm:$0xf]
  %v27 = vld [vmem:[%s1 + $0x14] sm:$0xf]
  %v28 = vld [vmem:[%s1 + $0x18] sm:$0xf]
  %v29 = vld [vmem:[%s1 + $0x1c] sm:$0xf]
  %v30 = vld [vmem:[%s1 + $0x20] sm:$0xf]
  %v31 = vld [vmem:[%s1 + $0x24] sm:$0xf]
  %v32 = vld [vmem:[%s1 + $0x28] sm:$0xf]
  %v33 = vld [vmem:[%s1 + $0x2c] sm:$0xf]
  %v34 = vld [vmem:[%s1 + $0x30] sm:$0xf]
  %v35 = vld [vmem:[%s1 + $0x34] sm:$0xf]
  %v36 = vld [vmem:[%s1 + $0x38] sm:$0xf]
  %v37 = vld [vmem:[%s1 + $0x3c] sm:$0xf]
  %v54 = vunpack.c.l.b16 %v22
  %v55 = vunpack.c.l.b16 %v23
  %v56 = vunpack.c.l.b16 %v24
  %v57 = vunpack.c.l.b16 %v25
  %v58 = vunpack.c.l.b16 %v26
  %v59 = vunpack.c.l.b16 %v27
  %v60 = vunpack.c.l.b16 %v28
  %v61 = vunpack.c.l.b16 %v29
  %v62 = vunpack.c.l.b16 %v30
  %v63 = vunpack.c.l.b16 %v31
  %v64 = vunpack.c.l.b16 %v32
  %v65 = vunpack.c.l.b16 %v33
  %v66 = vunpack.c.l.b16 %v34
  %v67 = vunpack.c.l.b16 %v35
  %v68 = vunpack.c.l.b16 %v36
  %v69 = vunpack.c.l.b16 %v37
  %v70 = vpack.c.b16 %v55, %v54
  %v71 = vpack.c.b16 %v57, %v56
  %v72 = vpack.c.b16 %v59, %v58
  %v73 = vpack.c.b16 %v61, %v60
  %v74 = vpack.c.b16 %v63, %v62
  %v75 = vpack.c.b16 %v65, %v64
  %v76 = vpack.c.b16 %v67, %v66
  %v77 = vpack.c.b16 %v69, %v68
  %86 = vmatprep.subr.bf16.mxu0 0
  %87 = vmatpush1.bf16.msra.mxu0 %v70
  %88 = vmatprep.subr.bf16.mxu0 0
  %89 = vmatpush1.bf16.msra.mxu0 %v71
  %90 = vmatprep.subr.bf16.mxu0 0
  %91 = vmatpush1.bf16.msra.mxu0 %v72
  %92 = vmatprep.subr.bf16.mxu0 0
  %93 = vmatpush1.bf16.msra.mxu0 %v73
  %94 = vmatprep.subr.bf16.mxu0 0
  %95 = vmatpush1.bf16.msra.mxu0 %v74
  %96 = vmatprep.subr.bf16.mxu0 0
  %97 = vmatpush1.bf16.msra.mxu0 %v75
  %98 = vmatprep.subr.bf16.mxu0 0
  %99 = vmatpush1.bf16.msra.mxu0 %v76
  %100 = vmatprep.subr.bf16.mxu0 0
  %101 = vmatpush1.bf16.msra.mxu0 %v77
  %102 = vmatprep.subr.bf16.mxu0 0
  %103 = vmatpush1.bf16.msra.mxu0 0
  %104 = vmatprep.subr.bf16.mxu0 0
  %105 = vmatpush1.bf16.msra.mxu0 0
  %106 = vmatprep.subr.bf16.mxu0 0
  %107 = vmatpush1.bf16.msra.mxu0 0
  %108 = vmatprep.subr.bf16.mxu0 0
  %109 = vmatpush1.bf16.msra.mxu0 0
  %110 = vmatprep.subr.bf16.mxu0 0
  %111 = vmatpush1.bf16.msra.mxu0 0
  %112 = vmatprep.subr.bf16.mxu0 0
  %113 = vmatpush1.bf16.msra.mxu0 0
  %114 = vmatprep.subr.bf16.mxu0 0
  %115 = vmatpush1.bf16.msra.mxu0 0
  %116 = vmatprep.subr.bf16.mxu0 0
  %117 = vmatpush1.bf16.msra.mxu0 0
  %118 = vmatprep.mubr.bf16.mxu0 0
  %119 = vmatmul.mubr.bf16.gmra.mrb[0].mxu0 %v21
  %v120 = vpop.f32.mrb[0].mxu0
  %v121 = vadd.f32 0.0, %v120
  %v122 = vpop.f32.mrb[0].mxu0
  %v123 = vpop.f32.mrb[0].mxu0
  %v124 = vpop.f32.mrb[0].mxu0
  %125 = vdwg.mxu0
  %v126 = vadd.f32 %v20, %v121
  %127 = vst [vmem:[#allocation2] sm:$0xff] %v126
  // Predicated region
  $region18: #{sqldepth_forward.74} parent=0 // pred_check
    %p128 = pneg %p15
  $region19: #{sqldepth_forward.74} parent=0 // pred_check_branch
    %130 = sbr.rel (%p128) target = $region21
  $region20: #{sqldepth_forward.74} parent=0 // pred_region
    %v131 = vld [vmem:[#allocation2] sm:$0xff]
    %v132 = vld [vmem:[%s2] sm:$0x1]
    %v134 = vlaneseq
    %v135 = vshrl.u32 %v134, 7
    %v136 = vsub.s32 0, %v135
    %v137 = vrot.slane %v132, %v136
    %v139 = vadd.f32 %v131, %v137
    %vm140 = vcmp.ge.f32.partialorder %v139, 0.0
    %v141 = vmul.f32 %v139, 0.01
    %v142 = vsel %vm140, %v139, %v141
    %143 = vst [vmem:[%s3] sm:$0xff] %v142
  $region21: #{sqldepth_forward.74} parent=0 // pred_fallthru
    _
  // Predicated region
  $region22: #{sqldepth_forward.74} parent=0 // pred_check
    _
  $region23: #{sqldepth_forward.74} parent=0 // pred_check_branch
    %145 = sbr.rel (0) target = $region25
  $region24: #{sqldepth_forward.74} parent=0 // pred_region
    _
  $region25: #{sqldepth_forward.74} parent=0 // pred_fallthru
    _
  // Predicated region
  $region26: #{sqldepth_forward.74} parent=0 // pred_check
    _
  $region27: #{sqldepth_forward.74} parent=0 // pred_check_branch
    %147 = sbr.rel (0) target = $region29
  $region28: #{sqldepth_forward.74} parent=0 // pred_region
    _
  $region29: #{sqldepth_forward.74} parent=0 // pred_fallthru
    _

// kernel: sqldepth_forward.75
$region0: #{sqldepth_forward.75}
  #allocation0 [shape = 'u32[]', space=smem, size = 0x4, offset = 0x4, fixed_abs, tag = 'smem constant byte address 0x4 - core index']
  #allocation1 [shape = 'u32[144,128]{1,0:T(1,128)}', space=vmem, size = 0x12000, scoped, tag = 'internal scratch']
  #allocation2 [shape = 'f32[8,256]{1,0:T(8,128)}', space=vmem, size = 0x2000, scoped, tag = 'scratch operand']
  %s0 = inlined_call_operand.vmem [shape: bf16[8,128], index: 0, kind: input, shape index: {}]
  %s1 = inlined_call_operand.vmem [shape: bf16[128,256], index: 1, kind: input, shape index: {}]
  %s2 = inlined_call_operand.vmem [shape: f32[1,256], index: 2, kind: input, shape index: {}]
  %s3 = inlined_call_operand.vmem [shape: f32[8,256], index: 3, kind: output, shape index: {}]
  %s4 = sld [smem:[#allocation0]]
  $region30: #{sqldepth_forward.75} parent=0
    _
  %s6 = ssub.s32 1, %s4
  %s7 = scalar_select 0, %s6, %s4
  // Predicated region
  $region2: #{sqldepth_forward.75} parent=0 // pred_check
    _
  $region3: #{sqldepth_forward.75} parent=0 // pred_check_branch
    %9 = sbr.rel (0) target = $region5
  $region4: #{sqldepth_forward.75} parent=0 // pred_region
    _
  $region5: #{sqldepth_forward.75} parent=0 // pred_fallthru
    _
  // Predicated region
  $region6: #{sqldepth_forward.75} parent=0 // pred_check
    _
  $region7: #{sqldepth_forward.75} parent=0 // pred_check_branch
    %11 = sbr.rel (0) target = $region9
  $region8: #{sqldepth_forward.75} parent=0 // pred_region
    _
  $region9: #{sqldepth_forward.75} parent=0 // pred_fallthru
    _
  // Predicated region
  $region10: #{sqldepth_forward.75} parent=0 // pred_check
    _
  $region11: #{sqldepth_forward.75} parent=0 // pred_check_branch
    %13 = sbr.rel (0) target = $region13
  $region12: #{sqldepth_forward.75} parent=0 // pred_region
    _
  $region13: #{sqldepth_forward.75} parent=0 // pred_fallthru
    _
  %p15 = scmp.eq.s32.totalorder 0, 0
  // Predicated region
  $region14: #{sqldepth_forward.75} parent=0 // pred_check
    %p16 = pneg %p15
  $region15: #{sqldepth_forward.75} parent=0 // pred_check_branch
    %18 = sbr.rel (%p16) target = $region17
  $region16: #{sqldepth_forward.75} parent=0 // pred_region
    %19 = vst [vmem:[#allocation2] sm:$0xff] 0.0
    %20 = vst [vmem:[#allocation2 + $0x8] sm:$0xff] 0.0
  $region17: #{sqldepth_forward.75} parent=0 // pred_fallthru
    _
  %v21 = vld [vmem:[#allocation2] sm:$0xff]
  %v22 = vld [vmem:[#allocation2 + $0x8] sm:$0xff]
  %v23 = vld [vmem:[%s0] sm:$0xf]
  %v24 = vld [vmem:[%s1] sm:$0xff]
  %v25 = vld [vmem:[%s1 + $0x8] sm:$0xff]
  %v26 = vld [vmem:[%s1 + $0x10] sm:$0xff]
  %v27 = vld [vmem:[%s1 + $0x18] sm:$0xff]
  %v28 = vld [vmem:[%s1 + $0x20] sm:$0xff]
  %v29 = vld [vmem:[%s1 + $0x28] sm:$0xff]
  %v30 = vld [vmem:[%s1 + $0x30] sm:$0xff]
  %v31 = vld [vmem:[%s1 + $0x38] sm:$0xff]
  %v32 = vld [vmem:[%s1 + $0x40] sm:$0xff]
  %v33 = vld [vmem:[%s1 + $0x48] sm:$0xff]
  %v34 = vld [vmem:[%s1 + $0x50] sm:$0xff]
  %v35 = vld [vmem:[%s1 + $0x58] sm:$0xff]
  %v36 = vld [vmem:[%s1 + $0x60] sm:$0xff]
  %v37 = vld [vmem:[%s1 + $0x68] sm:$0xff]
  %v38 = vld [vmem:[%s1 + $0x70] sm:$0xff]
  %v39 = vld [vmem:[%s1 + $0x78] sm:$0xff]
  %v56 = vunpack.c.l.b16 %v24
  %v57 = vunpack.c.h.b16 %v24
  %v58 = vunpack.c.l.b16 %v25
  %v59 = vunpack.c.h.b16 %v25
  %v60 = vunpack.c.l.b16 %v26
  %v61 = vunpack.c.h.b16 %v26
  %v62 = vunpack.c.l.b16 %v27
  %v63 = vunpack.c.h.b16 %v27
  %v64 = vunpack.c.l.b16 %v28
  %v65 = vunpack.c.h.b16 %v28
  %v66 = vunpack.c.l.b16 %v29
  %v67 = vunpack.c.h.b16 %v29
  %v68 = vunpack.c.l.b16 %v30
  %v69 = vunpack.c.h.b16 %v30
  %v70 = vunpack.c.l.b16 %v31
  %v71 = vunpack.c.h.b16 %v31
  %v72 = vunpack.c.l.b16 %v32
  %v73 = vunpack.c.h.b16 %v32
  %v74 = vunpack.c.l.b16 %v33
  %v75 = vunpack.c.h.b16 %v33
  %v76 = vunpack.c.l.b16 %v34
  %v77 = vunpack.c.h.b16 %v34
  %v78 = vunpack.c.l.b16 %v35
  %v79 = vunpack.c.h.b16 %v35
  %v80 = vunpack.c.l.b16 %v36
  %v81 = vunpack.c.h.b16 %v36
  %v82 = vunpack.c.l.b16 %v37
  %v83 = vunpack.c.h.b16 %v37
  %v84 = vunpack.c.l.b16 %v38
  %v85 = vunpack.c.h.b16 %v38
  %v86 = vunpack.c.l.b16 %v39
  %v87 = vunpack.c.h.b16 %v39
  %v88 = vpack.c.b16 %v58, %v56
  %v89 = vpack.c.b16 %v59, %v57
  %v90 = vpack.c.b16 %v62, %v60
  %v91 = vpack.c.b16 %v63, %v61
  %v92 = vpack.c.b16 %v66, %v64
  %v93 = vpack.c.b16 %v67, %v65
  %v94 = vpack.c.b16 %v70, %v68
  %v95 = vpack.c.b16 %v71, %v69
  %v96 = vpack.c.b16 %v74, %v72
  %v97 = vpack.c.b16 %v75, %v73
  %v98 = vpack.c.b16 %v78, %v76
  %v99 = vpack.c.b16 %v79, %v77
  %v100 = vpack.c.b16 %v82, %v80
  %v101 = vpack.c.b16 %v83, %v81
  %v102 = vpack.c.b16 %v86, %v84
  %v103 = vpack.c.b16 %v87, %v85
  %120 = vmatprep.subr.bf16.mxu0 %v89
  %121 = vmatpush1.bf16.msra.mxu0 %v88
  %122 = vmatprep.subr.bf16.mxu0 %v91
  %123 = vmatpush1.bf16.msra.mxu0 %v90
  %124 = vmatprep.subr.bf16.mxu0 %v93
  %125 = vmatpush1.bf16.msra.mxu0 %v92
  %126 = vmatprep.subr.bf16.mxu0 %v95
  %127 = vmatpush1.bf16.msra.mxu0 %v94
  %128 = vmatprep.subr.bf16.mxu0 %v97
  %129 = vmatpush1.bf16.msra.mxu0 %v96
  %130 = vmatprep.subr.bf16.mxu0 %v99
  %131 = vmatpush1.bf16.msra.mxu0 %v98
  %132 = vmatprep.subr.bf16.mxu0 %v101
  %133 = vmatpush1.bf16.msra.mxu0 %v100
  %134 = vmatprep.subr.bf16.mxu0 %v103
  %135 = vmatpush1.bf16.msra.mxu0 %v102
  %136 = vmatprep.subr.bf16.mxu0 0
  %137 = vmatpush1.bf16.msra.mxu0 0
  %138 = vmatprep.subr.bf16.mxu0 0
  %139 = vmatpush1.bf16.msra.mxu0 0
  %140 = vmatprep.subr.bf16.mxu0 0
  %141 = vmatpush1.bf16.msra.mxu0 0
  %142 = vmatprep.subr.bf16.mxu0 0
  %143 = vmatpush1.bf16.msra.mxu0 0
  %144 = vmatprep.subr.bf16.mxu0 0
  %145 = vmatpush1.bf16.msra.mxu0 0
  %146 = vmatprep.subr.bf16.mxu0 0
  %147 = vmatpush1.bf16.msra.mxu0 0
  %148 = vmatprep.subr.bf16.mxu0 0
  %149 = vmatpush1.bf16.msra.mxu0 0
  %150 = vmatprep.subr.bf16.mxu0 0
  %151 = vmatpush1.bf16.msra.mxu0 0
  %152 = vmatprep.mubr.bf16.mxu0 0
  %153 = vmatmul.mubr.bf16.gmra.mrb[0].mxu0 %v23
  %v154 = vpop.f32.mrb[0].mxu0
  %v155 = vadd.f32 0.0, %v154
  %v156 = vpop.f32.mrb[0].mxu0
  %v157 = vadd.f32 0.0, %v156
  %v158 = vpop.f32.mrb[0].mxu0
  %v159 = vpop.f32.mrb[0].mxu0
  %160 = vdwg.mxu0
  %v161 = vadd.f32 %v21, %v155
  %v162 = vadd.f32 %v22, %v157
  %163 = vst [vmem:[#allocation2] sm:$0xff] %v161
  %164 = vst [vmem:[#allocation2 + $0x8] sm:$0xff] %v162
  // Predicated region
  $region18: #{sqldepth_forward.75} parent=0 // pred_check
    %p165 = pneg %p15
  $region19: #{sqldepth_forward.75} parent=0 // pred_check_branch
    %167 = sbr.rel (%p165) target = $region21
  $region20: #{sqldepth_forward.75} parent=0 // pred_region
    %v168 = vld [vmem:[#allocation2] sm:$0xff]
    %v169 = vld [vmem:[#allocation2 + $0x8] sm:$0xff]
    %v170 = vld [vmem:[%s2] sm:$0x3]
    %v172 = vlaneseq
    %v173 = vshrl.u32 %v172, 7
    %v174 = vsub.s32 0, %v173
    %v175 = vrot.slane %v170, %v174
    %v176 = vlaneseq
    %v177 = vshrl.u32 %v176, 7
    %v178 = vsub.s32 1, %v177
    %v179 = vrot.slane %v170, %v178
    %v182 = vadd.f32 %v168, %v175
    %v183 = vadd.f32 %v169, %v179
    %vm184 = vcmp.ge.f32.partialorder %v182, 0.0
    %vm185 = vcmp.ge.f32.partialorder %v183, 0.0
    %v186 = vmul.f32 %v182, 0.01
    %v187 = vmul.f32 %v183, 0.01
    %v188 = vsel %vm184, %v182, %v186
    %v189 = vsel %vm185, %v183, %v187
    %190 = vst [vmem:[%s3] sm:$0xff] %v188
    %191 = vst [vmem:[%s3 + $0x8] sm:$0xff] %v189
  $region21: #{sqldepth_forward.75} parent=0 // pred_fallthru
    _
  // Predicated region
  $region22: #{sqldepth_forward.75} parent=0 // pred_check
    _
  $region23: #{sqldepth_forward.75} parent=0 // pred_check_branch
    %193 = sbr.rel (0) target = $region25
  $region24: #{sqldepth_forward.75} parent=0 // pred_region
    _
  $region25: #{sqldepth_forward.75} parent=0 // pred_fallthru
    _
  // Predicated region
  $region26: #{sqldepth_forward.75} parent=0 // pred_check
    _
  $region27: #{sqldepth_forward.75} parent=0 // pred_check_branch
    %195 = sbr.rel (0) target = $region29
  $region28: #{sqldepth_forward.75} parent=0 // pred_region
    _
  $region29: #{sqldepth_forward.75} parent=0 // pred_fallthru
    _

// kernel: sqldepth_forward.76
$region0: #{sqldepth_forward.76}
  #allocation0 [shape = 'u32[]', space=smem, size = 0x4, offset = 0x4, fixed_abs, tag = 'smem constant byte address 0x4 - core index']
  #allocation1 [shape = 'u32[144,128]{1,0:T(1,128)}', space=vmem, size = 0x12000, scoped, tag = 'internal scratch']
  #allocation2 [shape = 'f32[8,128]{1,0:T(8,128)}', space=vmem, size = 0x1000, scoped, tag = 'scratch operand']
  %s0 = inlined_call_operand.vmem [shape: bf16[8,256], index: 0, kind: input, shape index: {}]
  %s1 = inlined_call_operand.vmem [shape: bf16[256,128], index: 1, kind: input, shape index: {}]
  %s2 = inlined_call_operand.vmem [shape: f32[1,128], index: 2, kind: input, shape index: {}]
  %s3 = inlined_call_operand.vmem [shape: f32[8,128], index: 3, kind: output, shape index: {}]
  %s4 = sld [smem:[#allocation0]]
  $region30: #{sqldepth_forward.76} parent=0
    _
  %s6 = ssub.s32 1, %s4
  %s7 = scalar_select 0, %s6, %s4
  // Predicated region
  $region2: #{sqldepth_forward.76} parent=0 // pred_check
    _
  $region3: #{sqldepth_forward.76} parent=0 // pred_check_branch
    %9 = sbr.rel (0) target = $region5
  $region4: #{sqldepth_forward.76} parent=0 // pred_region
    _
  $region5: #{sqldepth_forward.76} parent=0 // pred_fallthru
    _
  // Predicated region
  $region6: #{sqldepth_forward.76} parent=0 // pred_check
    _
  $region7: #{sqldepth_forward.76} parent=0 // pred_check_branch
    %11 = sbr.rel (0) target = $region9
  $region8: #{sqldepth_forward.76} parent=0 // pred_region
    _
  $region9: #{sqldepth_forward.76} parent=0 // pred_fallthru
    _
  // Predicated region
  $region10: #{sqldepth_forward.76} parent=0 // pred_check
    _
  $region11: #{sqldepth_forward.76} parent=0 // pred_check_branch
    %13 = sbr.rel (0) target = $region13
  $region12: #{sqldepth_forward.76} parent=0 // pred_region
    _
  $region13: #{sqldepth_forward.76} parent=0 // pred_fallthru
    _
  %p15 = scmp.eq.s32.totalorder 0, 0
  // Predicated region
  $region14: #{sqldepth_forward.76} parent=0 // pred_check
    %p16 = pneg %p15
  $region15: #{sqldepth_forward.76} parent=0 // pred_check_branch
    %18 = sbr.rel (%p16) target = $region17
  $region16: #{sqldepth_forward.76} parent=0 // pred_region
    %19 = vst [vmem:[#allocation2] sm:$0xff] 0.0
  $region17: #{sqldepth_forward.76} parent=0 // pred_fallthru
    _
  %v20 = vld [vmem:[#allocation2] sm:$0xff]
  %v21 = vld [vmem:[%s0] sm:$0xff]
  %v22 = vld [vmem:[%s1] sm:$0xf]
  %v23 = vld [vmem:[%s1 + $0x4] sm:$0xf]
  %v24 = vld [vmem:[%s1 + $0x8] sm:$0xf]
  %v25 = vld [vmem:[%s1 + $0xc] sm:$0xf]
  %v26 = vld [vmem:[%s1 + $0x10] sm:$0xf]
  %v27 = vld [vmem:[%s1 + $0x14] sm:$0xf]
  %v28 = vld [vmem:[%s1 + $0x18] sm:$0xf]
  %v29 = vld [vmem:[%s1 + $0x1c] sm:$0xf]
  %v30 = vld [vmem:[%s1 + $0x20] sm:$0xf]
  %v31 = vld [vmem:[%s1 + $0x24] sm:$0xf]
  %v32 = vld [vmem:[%s1 + $0x28] sm:$0xf]
  %v33 = vld [vmem:[%s1 + $0x2c] sm:$0xf]
  %v34 = vld [vmem:[%s1 + $0x30] sm:$0xf]
  %v35 = vld [vmem:[%s1 + $0x34] sm:$0xf]
  %v36 = vld [vmem:[%s1 + $0x38] sm:$0xf]
  %v37 = vld [vmem:[%s1 + $0x3c] sm:$0xf]
  %v38 = vld [vmem:[%s1 + $0x40] sm:$0xf]
  %v39 = vld [vmem:[%s1 + $0x44] sm:$0xf]
  %v40 = vld [vmem:[%s1 + $0x48] sm:$0xf]
  %v41 = vld [vmem:[%s1 + $0x4c] sm:$0xf]
  %v42 = vld [vmem:[%s1 + $0x50] sm:$0xf]
  %v43 = vld [vmem:[%s1 + $0x54] sm:$0xf]
  %v44 = vld [vmem:[%s1 + $0x58] sm:$0xf]
  %v45 = vld [vmem:[%s1 + $0x5c] sm:$0xf]
  %v46 = vld [vmem:[%s1 + $0x60] sm:$0xf]
  %v47 = vld [vmem:[%s1 + $0x64] sm:$0xf]
  %v48 = vld [vmem:[%s1 + $0x68] sm:$0xf]
  %v49 = vld [vmem:[%s1 + $0x6c] sm:$0xf]
  %v50 = vld [vmem:[%s1 + $0x70] sm:$0xf]
  %v51 = vld [vmem:[%s1 + $0x74] sm:$0xf]
  %v52 = vld [vmem:[%s1 + $0x78] sm:$0xf]
  %v53 = vld [vmem:[%s1 + $0x7c] sm:$0xf]
  %v55 = vunpack.c.l.b16 %v21
  %v56 = vunpack.c.h.b16 %v21
  %v57 = vpack.c.b16 %v55, %v55
  %v58 = vpack.c.b16 %v56, %v56
  %v93 = vunpack.c.l.b16 %v22
  %v94 = vunpack.c.l.b16 %v23
  %v95 = vunpack.c.l.b16 %v24
  %v96 = vunpack.c.l.b16 %v25
  %v97 = vunpack.c.l.b16 %v26
  %v98 = vunpack.c.l.b16 %v27
  %v99 = vunpack.c.l.b16 %v28
  %v100 = vunpack.c.l.b16 %v29
  %v101 = vunpack.c.l.b16 %v30
  %v102 = vunpack.c.l.b16 %v31
  %v103 = vunpack.c.l.b16 %v32
  %v104 = vunpack.c.l.b16 %v33
  %v105 = vunpack.c.l.b16 %v34
  %v106 = vunpack.c.l.b16 %v35
  %v107 = vunpack.c.l.b16 %v36
  %v108 = vunpack.c.l.b16 %v37
  %v109 = vunpack.c.l.b16 %v38
  %v110 = vunpack.c.l.b16 %v39
  %v111 = vunpack.c.l.b16 %v40
  %v112 = vunpack.c.l.b16 %v41
  %v113 = vunpack.c.l.b16 %v42
  %v114 = vunpack.c.l.b16 %v43
  %v115 = vunpack.c.l.b16 %v44
  %v116 = vunpack.c.l.b16 %v45
  %v117 = vunpack.c.l.b16 %v46
  %v118 = vunpack.c.l.b16 %v47
  %v119 = vunpack.c.l.b16 %v48
  %v120 = vunpack.c.l.b16 %v49
  %v121 = vunpack.c.l.b16 %v50
  %v122 = vunpack.c.l.b16 %v51
  %v123 = vunpack.c.l.b16 %v52
  %v124 = vunpack.c.l.b16 %v53
  %v125 = vpack.c.b16 %v94, %v93
  %v126 = vpack.c.b16 %v96, %v95
  %v127 = vpack.c.b16 %v98, %v97
  %v128 = vpack.c.b16 %v100, %v99
  %v129 = vpack.c.b16 %v102, %v101
  %v130 = vpack.c.b16 %v104, %v103
  %v131 = vpack.c.b16 %v106, %v105
  %v132 = vpack.c.b16 %v108, %v107
  %v133 = vpack.c.b16 %v110, %v109
  %v134 = vpack.c.b16 %v112, %v111
  %v135 = vpack.c.b16 %v114, %v113
  %v136 = vpack.c.b16 %v116, %v115
  %v137 = vpack.c.b16 %v118, %v117
  %v138 = vpack.c.b16 %v120, %v119
  %v139 = vpack.c.b16 %v122, %v121
  %v140 = vpack.c.b16 %v124, %v123
  %157 = vmatprep.subr.bf16.mxu0 0
  %158 = vmatpush1.bf16.msra.mxu0 %v125
  %159 = vmatprep.subr.bf16.mxu0 0
  %160 = vmatpush1.bf16.msra.mxu0 %v126
  %161 = vmatprep.subr.bf16.mxu0 0
  %162 = vmatpush1.bf16.msra.mxu0 %v127
  %163 = vmatprep.subr.bf16.mxu0 0
  %164 = vmatpush1.bf16.msra.mxu0 %v128
  %165 = vmatprep.subr.bf16.mxu0 0
  %166 = vmatpush1.bf16.msra.mxu0 %v129
  %167 = vmatprep.subr.bf16.mxu0 0
  %168 = vmatpush1.bf16.msra.mxu0 %v130
  %169 = vmatprep.subr.bf16.mxu0 0
  %170 = vmatpush1.bf16.msra.mxu0 %v131
  %171 = vmatprep.subr.bf16.mxu0 0
  %172 = vmatpush1.bf16.msra.mxu0 %v132
  %173 = vmatprep.subr.bf16.mxu0 0
  %174 = vmatpush1.bf16.msra.mxu0 %v133
  %175 = vmatprep.subr.bf16.mxu0 0
  %176 = vmatpush1.bf16.msra.mxu0 %v134
  %177 = vmatprep.subr.bf16.mxu0 0
  %178 = vmatpush1.bf16.msra.mxu0 %v135
  %179 = vmatprep.subr.bf16.mxu0 0
  %180 = vmatpush1.bf16.msra.mxu0 %v136
  %181 = vmatprep.subr.bf16.mxu0 0
  %182 = vmatpush1.bf16.msra.mxu0 %v137
  %183 = vmatprep.subr.bf16.mxu0 0
  %184 = vmatpush1.bf16.msra.mxu0 %v138
  %185 = vmatprep.subr.bf16.mxu0 0
  %186 = vmatpush1.bf16.msra.mxu0 %v139
  %187 = vmatprep.subr.bf16.mxu0 0
  %188 = vmatpush1.bf16.msra.mxu0 %v140
  %189 = vmatprep.mubr.bf16.mxu0 %v58
  %190 = vmatmul.mubr.bf16.gmra.mrb[0].mxu0 %v57
  %v191 = vpop.f32.mrb[0].mxu0
  %v192 = vadd.f32 0.0, %v191
  %v193 = vpop.f32.mrb[0].mxu0
  %v194 = vpop.f32.mrb[0].mxu0
  %v195 = vpop.f32.mrb[0].mxu0
  %196 = vdwg.mxu0
  %v197 = vadd.f32 %v20, %v192
  %198 = vst [vmem:[#allocation2] sm:$0xff] %v197
  // Predicated region
  $region18: #{sqldepth_forward.76} parent=0 // pred_check
    %p199 = pneg %p15
  $region19: #{sqldepth_forward.76} parent=0 // pred_check_branch
    %201 = sbr.rel (%p199) target = $region21
  $region20: #{sqldepth_forward.76} parent=0 // pred_region
    %v202 = vld [vmem:[#allocation2] sm:$0xff]
    %v203 = vld [vmem:[%s2] sm:$0x1]
    %v205 = vlaneseq
    %v206 = vshrl.u32 %v205, 7
    %v207 = vsub.s32 0, %v206
    %v208 = vrot.slane %v203, %v207
    %v210 = vadd.f32 %v202, %v208
    %211 = vst [vmem:[%s3] sm:$0xff] %v210
  $region21: #{sqldepth_forward.76} parent=0 // pred_fallthru
    _
  // Predicated region
  $region22: #{sqldepth_forward.76} parent=0 // pred_check
    _
  $region23: #{sqldepth_forward.76} parent=0 // pred_check_branch
    %213 = sbr.rel (0) target = $region25
  $region24: #{sqldepth_forward.76} parent=0 // pred_region
    _
  $region25: #{sqldepth_forward.76} parent=0 // pred_fallthru
    _
  // Predicated region
  $region26: #{sqldepth_forward.76} parent=0 // pred_check
    _
  $region27: #{sqldepth_forward.76} parent=0 // pred_check_branch
    %215 = sbr.rel (0) target = $region29
  $region28: #{sqldepth_forward.76} parent=0 // pred_region
    _
  $region29: #{sqldepth_forward.76} parent=0 // pred_fallthru
    _

// kernel: sqldepth_forward.77
$region0: #{sqldepth_forward.77}
  #allocation0 [shape = 'u32[]', space=smem, size = 0x4, offset = 0x4, fixed_abs, tag = 'smem constant byte address 0x4 - core index']
  #allocation1 [shape = 'u32[144,128]{1,0:T(1,128)}', space=vmem, size = 0x12000, scoped, tag = 'internal scratch']
  %s0 = inlined_call_operand.vmem [shape: bf16[2,4,256], index: 0, kind: input, shape index: {}]
  %s1 = inlined_call_operand.vmem [shape: bf16[16,4], index: 1, kind: input, shape index: {}]
  %s2 = inlined_call_operand.vmem [shape: f32[16,1], index: 2, kind: input, shape index: {}]
  %s3 = inlined_call_operand.vmem [shape: f32[2,1,16], index: 3, kind: input, shape index: {}]
  %s4 = inlined_call_operand.vmem [shape: f32[2,1,256], index: 4, kind: output, shape index: {}]
  %s5 = sld [smem:[#allocation0]]
  $region49: #{sqldepth_forward.77} parent=0
    _
  %s7 = ssub.s32 1, %s5
  %s8 = scalar_select 0, %s7, %s5
  loop: start=0, step=1, limit=4
  $region2: #{sqldepth_forward.77} parent=0 // loop_pre_header
    _
  $region3: #{sqldepth_forward.77} parent=0 // loop_header
    %s10 = sphi 0, %s14
    %p11 = scmp.ge.s32.totalorder %s10, 4
    %s17 = sphi 0, %s29
    %s18 = sphi 0, %s25
    %s19 = sphi 0, %s17
    %s20 = sphi 0, %s18
    %s21 = sphi 0, %s19
    %s22 = sphi 0, %s20
    %s34 = sphi 0, %s36
    %s37 = sphi 0, %s34
    %s38 = sphi 0, %s37
    %s54 = sphi 0, %s38
    %s58 = sphi 0, %s58
    %s60 = sphi 0, %s58
    %s61 = sphi 0, %s60
    %s75 = sphi 0, %s61
    %s79 = sphi 0, %s79
    %s81 = sphi 0, %s79
    %s82 = sphi 0, %s81
    %s96 = sphi 0, %s82
    %s102 = sphi 0, %s104
    %s105 = sphi 0, %s102
    %s106 = sphi 0, %s105
    %s122 = sphi 0, %s106
    %s130 = sphi 0, %s132
    %s133 = sphi 0, %s130
    %s134 = sphi 0, %s133
    %s150 = sphi 0, %s134
  $region4: #{sqldepth_forward.77} parent=0 // loop_header_branch
    %13 = sbr.rel (%p11) target = $region8
  $region5: #{sqldepth_forward.77} parent=0 // loop_body
    %s15 = ssub.s32 %s10, 1
    %s16 = ssub.s32 %s10, 2
    %s23 = sadd.s32 1, %s18
    %p24 = scmp.ge.s32.totalorder %s23, 1
    %s25 = scalar_select %p24, 0, %s23
    %s26 = sadd.s32 1, %s17
    %s27 = scalar_select %p24, %s26, %s17
    %p28 = scmp.ge.s32.totalorder %s27, 2
    %s29 = scalar_select %p28, 0, %s27
    %s30 = ssub.s32 %s17, %s29
    %s31 = ssub.s32 %s18, %s25
    %s32 = sor.u32 %s30, %s31
    %p33 = scmp.eq.s32.totalorder %s32, 0
    %s35 = sadd.s32 %s34, 1
    %s36 = scalar_select %p33, %s34, %s35
    %p39 = pneg %p33
    %p40 = scmp.eq.s32.totalorder %s10, 1
    %p41 = por %p39, %p40
    %p42 = scmp.ne.s32.totalorder %s34, %s37
    %p43 = scmp.eq.s32.totalorder %s10, 0
    %p44 = por %p42, %p43
    %p45 = scmp.ne.s32.totalorder %s34, %s37
    %p46 = scmp.eq.s32.totalorder %s15, 1
    %p47 = por %p45, %p46
    %p48 = scmp.ne.s32.totalorder %s37, %s38
    %p49 = scmp.eq.s32.totalorder %s15, 0
    %p50 = por %p48, %p49
    %p51 = scmp.ne.s32.totalorder %s37, %s38
    %p52 = scmp.eq.s32.totalorder %s16, 1
    %p53 = por %p51, %p52
    %p55 = scmp.ne.s32.totalorder %s38, %s54
    %p56 = scmp.eq.s32.totalorder %s16, 0
    %p57 = por %p55, %p56
    %s59 = sadd.s32 %s58, 1
    %p62 = scmp.eq.s32.totalorder %s10, 1
    %p63 = scmp.ne.s32.totalorder %s58, %s60
    %p64 = scmp.eq.s32.totalorder %s10, 0
    %p65 = por %p63, %p64
    %p66 = scmp.ne.s32.totalorder %s58, %s60
    %p67 = scmp.eq.s32.totalorder %s15, 1
    %p68 = por %p66, %p67
    %p69 = scmp.ne.s32.totalorder %s60, %s61
    %p70 = scmp.eq.s32.totalorder %s15, 0
    %p71 = por %p69, %p70
    %p72 = scmp.ne.s32.totalorder %s60, %s61
    %p73 = scmp.eq.s32.totalorder %s16, 1
    %p74 = por %p72, %p73
    %p76 = scmp.ne.s32.totalorder %s61, %s75
    %p77 = scmp.eq.s32.totalorder %s16, 0
    %p78 = por %p76, %p77
    %s80 = sadd.s32 %s79, 1
    %p83 = scmp.eq.s32.totalorder %s10, 1
    %p84 = scmp.ne.s32.totalorder %s79, %s81
    %p85 = scmp.eq.s32.totalorder %s10, 0
    %p86 = por %p84, %p85
    %p87 = scmp.ne.s32.totalorder %s79, %s81
    %p88 = scmp.eq.s32.totalorder %s15, 1
    %p89 = por %p87, %p88
    %p90 = scmp.ne.s32.totalorder %s81, %s82
    %p91 = scmp.eq.s32.totalorder %s15, 0
    %p92 = por %p90, %p91
    %p93 = scmp.ne.s32.totalorder %s81, %s82
    %p94 = scmp.eq.s32.totalorder %s16, 1
    %p95 = por %p93, %p94
    %p97 = scmp.ne.s32.totalorder %s82, %s96
    %p98 = scmp.eq.s32.totalorder %s16, 0
    %p99 = por %p97, %p98
    %s100 = ssub.s32 %s17, %s29
    %p101 = scmp.eq.s32.totalorder %s100, 0
    %s103 = sadd.s32 %s102, 1
    %s104 = scalar_select %p101, %s102, %s103
    %p107 = pneg %p101
    %p108 = scmp.eq.s32.totalorder %s10, 1
    %p109 = por %p107, %p108
    %p110 = scmp.ne.s32.totalorder %s102, %s105
    %p111 = scmp.eq.s32.totalorder %s10, 0
    %p112 = por %p110, %p111
    %p113 = scmp.ne.s32.totalorder %s102, %s105
    %p114 = scmp.eq.s32.totalorder %s15, 1
    %p115 = por %p113, %p114
    %p116 = scmp.ne.s32.totalorder %s105, %s106
    %p117 = scmp.eq.s32.totalorder %s15, 0
    %p118 = por %p116, %p117
    %p119 = scmp.ne.s32.totalorder %s105, %s106
    %p120 = scmp.eq.s32.totalorder %s16, 1
    %p121 = por %p119, %p120
    %p123 = scmp.ne.s32.totalorder %s106, %s122
    %p124 = scmp.eq.s32.totalorder %s16, 0
    %p125 = por %p123, %p124
    %s126 = ssub.s32 %s17, %s29
    %s127 = ssub.s32 %s18, %s25
    %s128 = sor.u32 %s126, %s127
    %p129 = scmp.eq.s32.totalorder %s128, 0
    %s131 = sadd.s32 %s130, 1
    %s132 = scalar_select %p129, %s130, %s131
    %p135 = pneg %p129
    %p136 = scmp.eq.s32.totalorder %s10, 1
    %p137 = por %p135, %p136
    %p138 = scmp.ne.s32.totalorder %s130, %s133
    %p139 = scmp.eq.s32.totalorder %s10, 0
    %p140 = por %p138, %p139
    %p141 = scmp.ne.s32.totalorder %s130, %s133
    %p142 = scmp.eq.s32.totalorder %s15, 1
    %p143 = por %p141, %p142
    %p144 = scmp.ne.s32.totalorder %s133, %s134
    %p145 = scmp.eq.s32.totalorder %s15, 0
    %p146 = por %p144, %p145
    %p147 = scmp.ne.s32.totalorder %s133, %s134
    %p148 = scmp.eq.s32.totalorder %s16, 1
    %p149 = por %p147, %p148
    %p151 = scmp.ne.s32.totalorder %s134, %s150
    %p152 = scmp.eq.s32.totalorder %s16, 0
    %p153 = por %p151, %p152
    %p154 = scmp.le.s32.totalorder 1, %s10
    %p155 = scmp.lt.s32.totalorder %s10, 3
    %p156 = pnand %p154, %p155
    %p157 = pneg %p156
    // Predicated region
    $region9: #{sqldepth_forward.77} parent=5 // pred_check
      _
    $region10: #{sqldepth_forward.77} parent=5 // pred_check_branch
      %159 = sbr.rel (%p156) target = $region12
    $region11: #{sqldepth_forward.77} parent=5 // pred_region
      %s160 = ssub.s32 %s10, 1
      // Predicated region
      $region13: #{sqldepth_forward.77} parent=11 // pred_check
        %p161 = pneg %p71
      $region14: #{sqldepth_forward.77} parent=11 // pred_check_branch
        %163 = sbr.rel (%p161) target = $region16
      $region15: #{sqldepth_forward.77} parent=11 // pred_region
        _
      $region16: #{sqldepth_forward.77} parent=11 // pred_fallthru
        _
      // Predicated region
      $region17: #{sqldepth_forward.77} parent=11 // pred_check
        %p164 = pneg %p92
      $region18: #{sqldepth_forward.77} parent=11 // pred_check_branch
        %166 = sbr.rel (%p164) target = $region20
      $region19: #{sqldepth_forward.77} parent=11 // pred_region
        _
      $region20: #{sqldepth_forward.77} parent=11 // pred_fallthru
        _
    $region12: #{sqldepth_forward.77} parent=5 // pred_fallthru
      _
    %p167 = scmp.lt.s32.totalorder %s10, 2
    // Predicated region
    $region21: #{sqldepth_forward.77} parent=5 // pred_check
      %p168 = pneg %p167
    $region22: #{sqldepth_forward.77} parent=5 // pred_check_branch
      %170 = sbr.rel (%p168) target = $region24
    $region23: #{sqldepth_forward.77} parent=5 // pred_region
      // Predicated region
      $region25: #{sqldepth_forward.77} parent=23 // pred_check
        %p171 = pneg %p44
      $region26: #{sqldepth_forward.77} parent=23 // pred_check_branch
        %173 = sbr.rel (%p171) target = $region28
      $region27: #{sqldepth_forward.77} parent=23 // pred_region
        %s174 = smul.u32 2, %s18
        %p175 = scmp.lt.s32.totalorder %s17, 1
        %s176 = scalar_select %p175, %s17, 1
        %p177 = scmp.lt.s32.totalorder %s174, 1
        %s178 = scalar_select %p177, %s174, 1
        %s179 = smul.addr %s176, 2
        %s180 = sadd.s32 %s178, %s179
        %s181 = smul.addr %s180, 2
        %s182 = scalar_lea.vmem %s0, %s181
        %s183 = smul.u32 2, %s18
      $region28: #{sqldepth_forward.77} parent=23 // pred_fallthru
        _
      // Predicated region
      $region29: #{sqldepth_forward.77} parent=23 // pred_check
        %p184 = pneg %p112
      $region30: #{sqldepth_forward.77} parent=23 // pred_check_branch
        %186 = sbr.rel (%p184) target = $region32
      $region31: #{sqldepth_forward.77} parent=23 // pred_region
        %p187 = scmp.lt.s32.totalorder %s17, 1
        %s188 = scalar_select %p187, %s17, 1
        %s189 = scalar_lea.vmem %s3, %s188
      $region32: #{sqldepth_forward.77} parent=23 // pred_fallthru
        _
    $region24: #{sqldepth_forward.77} parent=5 // pred_fallthru
      _
    %p190 = scmp.le.s32.totalorder 1, %s10
    %p191 = scmp.lt.s32.totalorder %s10, 3
    %p192 = pnand %p190, %p191
    %p193 = pneg %p192
    // Predicated region
    $region33: #{sqldepth_forward.77} parent=5 // pred_check
      _
    $region34: #{sqldepth_forward.77} parent=5 // pred_check_branch
      %195 = sbr.rel (%p192) target = $region36
    $region35: #{sqldepth_forward.77} parent=5 // pred_region
      %s196 = ssub.s32 %s10, 1
      %s197 = smul.u32 2, %s20
      %p198 = scmp.lt.s32.totalorder %s19, 1
      %s199 = scalar_select %p198, %s19, 1
      %p200 = scmp.lt.s32.totalorder %s197, 1
      %s201 = scalar_select %p200, %s197, 1
      %s202 = smul.addr %s199, 2
      %s203 = sadd.s32 %s201, %s202
      %s204 = smul.addr %s203, 2
      %s205 = scalar_lea.vmem %s0, %s204
      %p206 = pneg %p50
      %p207 = pneg %p47
      %p208 = pneg %p71
      %p209 = pneg %p68
      %p210 = pneg %p92
      %p211 = pneg %p89
      %p212 = scmp.lt.s32.totalorder %s19, 1
      %s213 = scalar_select %p212, %s19, 1
      %s214 = scalar_lea.vmem %s3, %s213
      %p215 = pneg %p118
      %p216 = pneg %p115
      %p217 = pneg %p146
      %p218 = pneg %p143
      %s219 = smul.u32 2, %s20
      %p220 = scmp.lt.s32.totalorder %s19, 1
      %s221 = scalar_select %p220, %s19, 1
      %p222 = scmp.lt.s32.totalorder %s219, 1
      %s223 = scalar_select %p222, %s219, 1
      %s224 = smul.addr %s221, 2
      %s225 = sadd.s32 %s223, %s224
      %s226 = scalar_lea.vmem %s4, %s225
      %s227 = smul.u32 2, %s20
      %p228 = scmp.lt.s32.totalorder %s19, 1
      %s229 = scalar_select %p228, %s19, 1
      %p230 = scmp.lt.s32.totalorder %s227, 1
      %s231 = scalar_select %p230, %s227, 1
      %s232 = smul.addr %s229, 2
      %s233 = sadd.s32 %s231, %s232
      %s234 = smul.addr %s233, 2
      %s235 = scalar_lea.vmem %s0, %s234
      %s236 = smul.u32 2, %s20
      %p237 = scmp.lt.s32.totalorder %s19, 1
      %s238 = scalar_select %p237, %s19, 1
      %s239 = scalar_lea.vmem %s3, %s238
      %s240 = smul.u32 2, %s20
      %p241 = scmp.lt.s32.totalorder %s19, 1
      %s242 = scalar_select %p241, %s19, 1
      %p243 = scmp.lt.s32.totalorder %s240, 1
      %s244 = scalar_select %p243, %s240, 1
      %s245 = smul.addr %s242, 2
      %s246 = sadd.s32 %s244, %s245
      %s247 = scalar_lea.vmem %s4, %s246
      %s248 = smul.u32 2, %s20
      %v250 = vld [vmem:[%s235] sm:$0xf]
      %v251 = vld [vmem:[%s1] sm:$0xf]
      %v252 = vld [vmem:[%s1 + $0x4] sm:$0xf]
      %v253 = vld [vmem:[%s2] sm:$0xff]
      %v254 = vld [vmem:[%s2 + $0x8] sm:$0xff]
      %256 = vset.pattern.permute.xlu0 0
      %257 = vperm.xlu0 %256, %v253
      %v258 = vpop.permute.xlu0 %257
      %261 = vset.pattern.permute.xlu0 0
      %262 = vperm.xlu0 %261, %v254
      %v263 = vpop.permute.xlu0 %262
      %v267 = vunpack.c.l.b16 %v251
      %v268 = vunpack.c.l.b16 %v252
      %v269 = vpack.c.b16 %v268, %v267
      %v272 = vunpack.c.l.s4 1983009808
      %v273 = vunpack.c.0.s8 %v272
      %v274 = vlaneseq
      %v275 = vshrl.u32 %v274, 7
      %v276 = vsub.s32 %v273, %v275
      %v277 = vrot.slane %v250, %v276
      %v278 = vcombine.high %v277, %v277
      %vm279 = vcmask 31744
      %v281 = vsel %vm279, %v269, 0
      %vm283 = vcmask 1041408
      %v285 = vsel %vm283, %v277, 0
      %v288 = vsel %vm283, %v278, 0
      %290 = vmatprep.subr.bf16.mxu0 %v288
      %291 = vmatpush1.bf16.msra.mxu0 %v285
      %292 = vmatprep.subr.bf16.mxu0 0
      %293 = vmatpush1.bf16.msra.mxu0 0
      %294 = vmatprep.subr.bf16.mxu0 0
      %295 = vmatpush1.bf16.msra.mxu0 0
      %296 = vmatprep.subr.bf16.mxu0 0
      %297 = vmatpush1.bf16.msra.mxu0 0
      %298 = vmatprep.subr.bf16.mxu0 0
      %299 = vmatpush1.bf16.msra.mxu0 0
      %300 = vmatprep.subr.bf16.mxu0 0
      %301 = vmatpush1.bf16.msra.mxu0 0
      %302 = vmatprep.subr.bf16.mxu0 0
      %303 = vmatpush1.bf16.msra.mxu0 0
      %304 = vmatprep.subr.bf16.mxu0 0
      %305 = vmatpush1.bf16.msra.mxu0 0
      %306 = vmatprep.subr.bf16.mxu0 0
      %307 = vmatpush1.bf16.msra.mxu0 0
      %308 = vmatprep.subr.bf16.mxu0 0
      %309 = vmatpush1.bf16.msra.mxu0 0
      %310 = vmatprep.subr.bf16.mxu0 0
      %311 = vmatpush1.bf16.msra.mxu0 0
      %312 = vmatprep.subr.bf16.mxu0 0
      %313 = vmatpush1.bf16.msra.mxu0 0
      %314 = vmatprep.subr.bf16.mxu0 0
      %315 = vmatpush1.bf16.msra.mxu0 0
      %316 = vmatprep.subr.bf16.mxu0 0
      %317 = vmatpush1.bf16.msra.mxu0 0
      %318 = vmatprep.subr.bf16.mxu0 0
      %319 = vmatpush1.bf16.msra.mxu0 0
      %320 = vmatprep.subr.bf16.mxu0 0
      %321 = vmatpush1.bf16.msra.mxu0 0
      %322 = vmatprep.mubr.bf16.mxu0 0
      %323 = vmatmul.mubr.bf16.gmra.mrb[0].mxu0 %v281
      %v324 = vpop.f32.mrb[0].mxu0
      %v325 = vadd.f32 %v258, %v324
      %v326 = vpop.f32.mrb[0].mxu0
      %v327 = vadd.f32 %v258, %v326
      %v328 = vpop.f32.mrb[0].mxu0
      %v329 = vadd.f32 %v263, %v328
      %v330 = vpop.f32.mrb[0].mxu0
      %v331 = vadd.f32 %v263, %v330
      %332 = vdwg.mxu0
      %v333 = vmax.f32 %v325, %v329
      %v334 = vrot.slane %v333, 4
      %v335 = vmax.f32 %v333, %v334
      %v336 = vrot.slane %v335, 2
      %v337 = vmax.f32 %v335, %v336
      %v338 = vrot.slane %v337, 1
      %v339 = vmax.f32 %v337, %v338
      %v340 = vmax.f32 %v327, %v331
      %v341 = vrot.slane %v340, 4
      %v342 = vmax.f32 %v340, %v341
      %v343 = vrot.slane %v342, 2
      %v344 = vmax.f32 %v342, %v343
      %v345 = vrot.slane %v344, 1
      %v346 = vmax.f32 %v344, %v345
      %v347 = vsub.f32 %v325, %v339
      %v348 = vsub.f32 %v327, %v346
      %v349 = vsub.f32 %v329, %v339
      %v350 = vsub.f32 %v331, %v346
      %v351 = vmul.f32 %v347, 1.442695
      %v352 = vpow.pop %v351
      %v353 = vmul.f32 %v348, 1.442695
      %v354 = vpow.pop %v353
      %v355 = vmul.f32 %v349, 1.442695
      %v356 = vpow.pop %v355
      %v357 = vmul.f32 %v350, 1.442695
      %v358 = vpow.pop %v357
      %v359 = vadd.f32 %v352, %v356
      %v360 = vrot.slane %v359, 4
      %v361 = vadd.f32 %v359, %v360
      %v362 = vrot.slane %v361, 2
      %v363 = vadd.f32 %v361, %v362
      %v364 = vrot.slane %v363, 1
      %v365 = vadd.f32 %v363, %v364
      %v366 = vadd.f32 %v354, %v358
      %v367 = vrot.slane %v366, 4
      %v368 = vadd.f32 %v366, %v367
      %v369 = vrot.slane %v368, 2
      %v370 = vadd.f32 %v368, %v369
      %v371 = vrot.slane %v370, 1
      %v372 = vadd.f32 %v370, %v371
      %v373 = vrcp.pop %v365
      %v374 = vmul.f32 %v352, %v373
      %v375 = vrcp.pop %v372
      %v376 = vmul.f32 %v354, %v375
      %v377 = vmul.f32 %v356, %v373
      %v378 = vmul.f32 %v358, %v375
      %v379 = vld [vmem:[%s239] sm:$0x1]
      %vm380 = vcmask 130048
      %v382 = vsel %vm380, %v379, 0
      %384 = vmatprep.subr.mxu0 %v376
      %385 = vmatpush1.msra.mxu0 %v374
      %386 = vmatprep.subr.mxu0 %v378
      %387 = vmatpush1.msra.mxu0 %v377
      %388 = vmatprep.subr.mxu0 0.0
      %389 = vmatpush1.msra.mxu0 0.0
      %390 = vmatprep.subr.mxu0 0.0
      %391 = vmatpush1.msra.mxu0 0.0
      %392 = vmatprep.subr.mxu0 0.0
      %393 = vmatpush1.msra.mxu0 0.0
      %394 = vmatprep.subr.mxu0 0.0
      %395 = vmatpush1.msra.mxu0 0.0
      %396 = vmatprep.subr.mxu0 0.0
      %397 = vmatpush1.msra.mxu0 0.0
      %398 = vmatprep.subr.mxu0 0.0
      %399 = vmatpush1.msra.mxu0 0.0
      %400 = vmatprep.subr.mxu0 0.0
      %401 = vmatpush1.msra.mxu0 0.0
      %402 = vmatprep.subr.mxu0 0.0
      %403 = vmatpush1.msra.mxu0 0.0
      %404 = vmatprep.subr.mxu0 0.0
      %405 = vmatpush1.msra.mxu0 0.0
      %406 = vmatprep.subr.mxu0 0.0
      %407 = vmatpush1.msra.mxu0 0.0
      %408 = vmatprep.subr.mxu0 0.0
      %409 = vmatpush1.msra.mxu0 0.0
      %410 = vmatprep.subr.mxu0 0.0
      %411 = vmatpush1.msra.mxu0 0.0
      %412 = vmatprep.subr.mxu0 0.0
      %413 = vmatpush1.msra.mxu0 0.0
      %414 = vmatprep.subr.mxu0 0.0
      %415 = vmatpush1.msra.mxu0 0.0
      %416 = vmatprep.subr.mxu0 0.0
      %417 = vmatpush1.msra.mxu0 0.0
      %418 = vmatprep.subr.mxu0 0.0
      %419 = vmatpush1.msra.mxu0 0.0
      %420 = vmatprep.subr.mxu0 0.0
      %421 = vmatpush1.msra.mxu0 0.0
      %422 = vmatprep.subr.mxu0 0.0
      %423 = vmatpush1.msra.mxu0 0.0
      %424 = vmatprep.subr.mxu0 0.0
      %425 = vmatpush1.msra.mxu0 0.0
      %426 = vmatprep.subr.mxu0 0.0
      %427 = vmatpush1.msra.mxu0 0.0
      %428 = vmatprep.subr.mxu0 0.0
      %429 = vmatpush1.msra.mxu0 0.0
      %430 = vmatprep.subr.mxu0 0.0
      %431 = vmatpush1.msra.mxu0 0.0
      %432 = vmatprep.subr.mxu0 0.0
      %433 = vmatpush1.msra.mxu0 0.0
      %434 = vmatprep.subr.mxu0 0.0
      %435 = vmatpush1.msra.mxu0 0.0
      %436 = vmatprep.subr.mxu0 0.0
      %437 = vmatpush1.msra.mxu0 0.0
      %438 = vmatprep.subr.mxu0 0.0
      %439 = vmatpush1.msra.mxu0 0.0
      %440 = vmatprep.subr.mxu0 0.0
      %441 = vmatpush1.msra.mxu0 0.0
      %442 = vmatprep.subr.mxu0 0.0
      %443 = vmatpush1.msra.mxu0 0.0
      %444 = vmatprep.subr.mxu0 0.0
      %445 = vmatpush1.msra.mxu0 0.0
      %446 = vmatprep.subr.mxu0 0.0
      %447 = vmatpush1.msra.mxu0 0.0
      %448 = vmatprep.mubr.f32.mxu0 0.0
      %449 = vmatmul.mubr.f32.gmra.mrb[0].mxu0 %v382
      %v450 = vpop.f32.mrb[0].mxu0
      %v451 = vadd.f32 0.0, %v450
      %v452 = vpop.f32.mrb[0].mxu0
      %v453 = vadd.f32 0.0, %v452
      %454 = vdwg.mxu0
      %v457 = vcombine.low %v451, %v453
      %v459 = vunpack.c.l.s4 1966171168
      %v460 = vunpack.c.0.s8 %v459
      %v461 = vlaneseq
      %v462 = vshrl.u32 %v461, 7
      %v463 = vsub.s32 %v460, %v462
      %v464 = vrot.slane %v457, %v463
      %v466 = vunpack.c.l.s4 1966171168
      %v467 = vunpack.c.0.s8 %v466
      %v468 = vlaneseq
      %v469 = vshrl.u32 %v468, 7
      %v470 = vsub.s32 %v467, %v469
      %v471 = vrot.slane %v464, %v470
      %v473 = vlaneseq
      %vm474 = vcmp.ge.s32.totalorder %v473, 0
      %vm475 = vcmp.lt.s32.totalorder %v473, 256
      %vm476 = vmand %vm474, %vm475
      %477 = vst.msk [vmem:[%s247] sm:$0x3] %vm476, %v471
      %s478 = smul.u32 2, %s20
      %p479 = scmp.lt.s32.totalorder %s19, 1
      %s480 = scalar_select %p479, %s19, 1
      %p481 = scmp.lt.s32.totalorder %s478, 1
      %s482 = scalar_select %p481, %s478, 1
      %s483 = smul.addr %s480, 2
      %s484 = sadd.s32 %s482, %s483
      %s485 = scalar_lea.vmem %s4, %s484
      // Predicated region
      $region37: #{sqldepth_forward.77} parent=35 // pred_check
        %p486 = pneg %p143
      $region38: #{sqldepth_forward.77} parent=35 // pred_check_branch
        %488 = sbr.rel (%p486) target = $region40
      $region39: #{sqldepth_forward.77} parent=35 // pred_region
        %s489 = smul.u32 2, %s20
      $region40: #{sqldepth_forward.77} parent=35 // pred_fallthru
        _
    $region36: #{sqldepth_forward.77} parent=5 // pred_fallthru
      _
    %p490 = scmp.le.s32.totalorder 2, %s10
    // Predicated region
    $region41: #{sqldepth_forward.77} parent=5 // pred_check
      %p491 = pneg %p490
    $region42: #{sqldepth_forward.77} parent=5 // pred_check_branch
      %493 = sbr.rel (%p491) target = $region44
    $region43: #{sqldepth_forward.77} parent=5 // pred_region
      %s494 = ssub.s32 %s10, 2
      // Predicated region
      $region45: #{sqldepth_forward.77} parent=43 // pred_check
        %p495 = pneg %p149
      $region46: #{sqldepth_forward.77} parent=43 // pred_check_branch
        %497 = sbr.rel (%p495) target = $region48
      $region47: #{sqldepth_forward.77} parent=43 // pred_region
        %s498 = smul.u32 2, %s22
        %p499 = scmp.lt.s32.totalorder %s21, 1
        %s500 = scalar_select %p499, %s21, 1
        %p501 = scmp.lt.s32.totalorder %s498, 1
        %s502 = scalar_select %p501, %s498, 1
        %s503 = smul.addr %s500, 2
        %s504 = sadd.s32 %s502, %s503
        %s505 = scalar_lea.vmem %s4, %s504
      $region48: #{sqldepth_forward.77} parent=43 // pred_fallthru
        _
    $region44: #{sqldepth_forward.77} parent=5 // pred_fallthru
      _
  $region6: #{sqldepth_forward.77} parent=0 // loop_footer
    %s14 = sadd.s32 1, %s10
  $region7: #{sqldepth_forward.77} parent=0 // loop_footer_branch
    %9 = sbr.rel target = $region3
  $region8: #{sqldepth_forward.77} parent=0 // loop_exit
    _

</llo_original>
